<compile_context>
chip_gen: v7x
topology: tpu7x:2x2x1
jax: 0.10.0
libtpu: 0.0.40
codegen_flags: <defaults>
</compile_context>

<pallas_src>
import jax
import jax.numpy as jnp
import numpy as np
from jax.experimental import pallas as pl
from jax.experimental.pallas import tpu as pltpu


# ----------------------------------------------------------------------------
# Fused Q-network kernel: conv(4->32,k8,s4) ReLU, conv(32->64,k4,s2) ReLU,
# conv(64->64,k3,s1) ReLU, Linear(3136->512) ReLU, Linear(512->A), argmax.
# ----------------------------------------------------------------------------
def _fused_qnet_kernel(p1_ref, w1_ref, b1_ref, w2_ref, b2_ref, w3_ref, b3_ref,
                       wf1_ref, bf1_ref, wf2_ref, bf2_ref,
                       qs_ref, act_ref,
                       a1_ref, p2_ref, a2_ref, p3_ref, a3_ref, flat_ref):
    f32 = jnp.float32
    bf16 = jnp.bfloat16

    # ---- conv1: single (408,256)@(256,32) matmul.  Rows are parity-ordered:
    # row = pr*200 + pc*100 + r*10 + s  for spatial (Y,X) = (2r+pr, 2s+pc); rows 400..407 pad.
    a1_ref[...] = jnp.maximum(
        jnp.dot(p1_ref[...], w1_ref[...], preferred_element_type=f32) + b1_ref[...], 0.0)

    # ---- conv2 im2col: 16 contiguous row-slices of a1 -> (90,512) bf16 patch.
    # P2 row = y*10 + x (x=9 is junk), column block (i*4+j)*32 holds a1[2y+i, 2x+j, :].
    for i in range(4):
        for j in range(4):
            base = (i % 2) * 200 + (j % 2) * 100 + (i // 2) * 10 + (j // 2)
            blk = (i * 4 + j) * 32
            p2_ref[:, blk:blk + 32] = a1_ref[base:base + 90, :].astype(bf16)

    # ---- conv2: single (90,512)@(512,64) matmul.
    a2 = jnp.maximum(
        jnp.dot(p2_ref[...], w2_ref[...], preferred_element_type=f32) + b2_ref[...], 0.0)
    a2_ref[0:90, :] = a2
    a2_ref[90:96, :] = jnp.zeros((6, 64), f32)       # finite pad rows for conv3's last slices

    # ---- conv3 im2col: 9 contiguous row-slices of a2 -> (70,576) bf16 patch.
    # P3 row = y*10 + x (valid x,y in [0,7)), column block (i*3+j)*64 holds a2[y+i, x+j, :].
    for i in range(3):
        for j in range(3):
            st = i * 10 + j
            blk = (i * 3 + j) * 64
            p3_ref[:, blk:blk + 64] = a2_ref[st:st + 70, :].astype(bf16)

    # ---- conv3: single (70,576)@(576,64) matmul.
    a3_ref[...] = jnp.maximum(
        jnp.dot(p3_ref[...], w3_ref[...], preferred_element_type=f32) + b3_ref[...], 0.0)

    # ---- flatten the valid 7x7x64 into a lane-dense (1,3136) bf16 row, (p = y*7+x, c) order.
    for y in range(7):
        for x in range(7):
            p = y * 7 + x
            src = y * 10 + x
            flat_ref[0:1, p * 64:(p + 1) * 64] = a3_ref[src:src + 1, :].astype(bf16)

    # ---- fc1: single (1,3136)@(3136,512) matmul, ReLU.
    h = jnp.maximum(
        jnp.dot(flat_ref[...], wf1_ref[...], preferred_element_type=f32) + bf1_ref[...], 0.0)

    # ---- fc2 + greedy argmax (first max index, matching torch/np argmax).
    q = jnp.dot(h.astype(bf16), wf2_ref[...], preferred_element_type=f32) + bf2_ref[...]
    qs_ref[...] = q
    num_a = q.shape[1]
    lane = jax.lax.broadcasted_iota(jnp.int32, q.shape, 1)
    qmax = jnp.max(q, axis=1, keepdims=True)
    act_ref[...] = jnp.min(jnp.where(q >= qmax, lane, num_a),
                           axis=1, keepdims=True).astype(jnp.int32)


# ----------------------------------------------------------------------------
# One-time (outside-jit) weight re-layout: exactly the layouts the kernel consumes.
# ----------------------------------------------------------------------------
def prepare_params(p):
    def conv_w(w):  # (O, I, kh, kw) -> (kh*kw*I, O), row order (i, j, c), bf16
        o, i, kh, kw = w.shape
        return jnp.asarray(w).transpose(2, 3, 1, 0).reshape(kh * kw * i, o).astype(jnp.bfloat16)

    # fc1 rows ordered (p = y*7+x, c) to match the kernel's flatten; torch flatten is (c, y, x).
    wf1 = (jnp.asarray(p["fc1_w"]).reshape(512, 64, 7, 7)
           .transpose(2, 3, 1, 0).reshape(49 * 64, 512).astype(jnp.bfloat16))
    return {
        "w1": conv_w(p["conv1_w"]), "b1": p["conv1_b"].reshape(1, -1).astype(jnp.float32),
        "w2": conv_w(p["conv2_w"]), "b2": p["conv2_b"].reshape(1, -1).astype(jnp.float32),
        "w3": conv_w(p["conv3_w"]), "b3": p["conv3_b"].reshape(1, -1).astype(jnp.float32),
        "wf1": wf1, "bf1": p["fc1_b"].reshape(1, -1).astype(jnp.float32),
        "wf2": jnp.asarray(p["fc2_w"]).T.astype(jnp.bfloat16),
        "bf2": p["fc2_b"].reshape(1, -1).astype(jnp.float32),
    }


def conv1_patches(state_chw):
    """(4,84,84) -> (408,256) bf16 im2col patches for conv1 (k=8, s=4).

    Columns ordered (kh, kw, c).  Rows ordered by output-position parity:
    row = pr*200 + pc*100 + r*10 + s for (Y, X) = (2r+pr, 2s+pc); rows 400..407 are zero pad,
    so every conv2 im2col offset inside the kernel is ONE contiguous 90-row slice.
    """
    c, h, w = state_chw.shape
    k, s = 8, 4
    ho, wo = (h - k) // s + 1, (w - k) // s + 1          # 20, 20
    cols = jnp.stack([state_chw[:, i:i + s * ho:s, j:j + s * wo:s]
                      for i in range(k) for j in range(k)], axis=0)      # (64, 4, 20, 20)
    pat = cols.transpose(2, 3, 0, 1).reshape(ho, wo, k * k * c)          # (20, 20, 256)
    pat = (pat.reshape(10, 2, 10, 2, k * k * c)                          # (r, pr, s, pc, K)
              .transpose(1, 3, 0, 2, 4)                                  # (pr, pc, r, s, K)
              .reshape(400, k * k * c))
    pat = jnp.concatenate([pat, jnp.zeros((8, k * k * c), pat.dtype)], axis=0)
    return pat.astype(jnp.bfloat16)                                      # (408, 256)


def agent_forward_greedy(state_chw, kp):
    """Greedy branch of Agent.forward: action = argmax(network(state[None]), -1)."""
    p1 = conv1_patches(state_chw)                                        # (408, 256) bf16
    num_actions = kp["wf2"].shape[1]
    qs, act = pl.pallas_call(
        _fused_qnet_kernel,
        out_shape=(jax.ShapeDtypeStruct((1, num_actions), jnp.float32),
                   jax.ShapeDtypeStruct((1, 1), jnp.int32)),
        in_specs=[
            pl.BlockSpec((408, 256), lambda: (0, 0)),
            pl.BlockSpec((256, 32), lambda: (0, 0)),
            pl.BlockSpec((1, 32), lambda: (0, 0)),
            pl.BlockSpec((512, 64), lambda: (0, 0)),
            pl.BlockSpec((1, 64), lambda: (0, 0)),
            pl.BlockSpec((576, 64), lambda: (0, 0)),
            pl.BlockSpec((1, 64), lambda: (0, 0)),
            pl.BlockSpec((3136, 512), lambda: (0, 0)),
            pl.BlockSpec((1, 512), lambda: (0, 0)),
            pl.BlockSpec((512, num_actions), lambda: (0, 0)),
            pl.BlockSpec((1, num_actions), lambda: (0, 0)),
        ],
        out_specs=(
            pl.BlockSpec((1, num_actions), lambda: (0, 0)),
            pl.BlockSpec((1, 1), lambda: (0, 0)),
        ),
        scratch_shapes=[
            pltpu.VMEM((408, 32), jnp.float32),    # a1: conv1 output, parity row order
            pltpu.VMEM((90, 512), jnp.bfloat16),   # conv2 im2col patch
            pltpu.VMEM((96, 64), jnp.float32),     # a2: conv2 output (10-wide row pitch + pad)
            pltpu.VMEM((70, 576), jnp.bfloat16),   # conv3 im2col patch
            pltpu.VMEM((70, 64), jnp.float32),     # a3: conv3 output (10-wide row pitch)
            pltpu.VMEM((1, 3136), jnp.bfloat16),   # flattened fc1 input
        ],
        compiler_params=pltpu.CompilerParams(vmem_limit_bytes=12 * 1024 * 1024),
    )(p1, kp["w1"], kp["b1"], kp["w2"], kp["b2"], kp["w3"], kp["b3"],
      kp["wf1"], kp["bf1"], kp["wf2"], kp["bf2"])
    return act[0, 0], qs


# ----------------------------------------------------------------------------
# Pure-JAX f32 reference (lax.conv) for a sanity check of the fused Pallas kernel.
# ----------------------------------------------------------------------------
def q_network_ref(state_nchw, p):
    dn = ("NCHW", "OIHW", "NCHW")
    x = jax.lax.conv_general_dilated(state_nchw, p["conv1_w"], (4, 4), "VALID", dimension_numbers=dn)
    x = jnp.maximum(x + p["conv1_b"][None, :, None, None], 0.0)
    x = jax.lax.conv_general_dilated(x, p["conv2_w"], (2, 2), "VALID", dimension_numbers=dn)
    x = jnp.maximum(x + p["conv2_b"][None, :, None, None], 0.0)
    x = jax.lax.conv_general_dilated(x, p["conv3_w"], (1, 1), "VALID", dimension_numbers=dn)
    x = jnp.maximum(x + p["conv3_b"][None, :, None, None], 0.0)
    x = x.reshape(1, -1)
    x = jnp.maximum(x @ p["fc1_w"].T + p["fc1_b"], 0.0)
    return x @ p["fc2_w"].T + p["fc2_b"]


def init_params(key, num_actions):
    ks = jax.random.split(key, 10)

    def w(k, shape, fan_in):
        return (jax.random.normal(k, shape, jnp.float32) * np.sqrt(2.0 / fan_in)).astype(jnp.float32)

    return {
        "conv1_w": w(ks[0], (32, 4, 8, 8), 4 * 8 * 8),
        "conv1_b": jnp.zeros((32,), jnp.float32),
        "conv2_w": w(ks[1], (64, 32, 4, 4), 32 * 4 * 4),
        "conv2_b": jnp.zeros((64,), jnp.float32),
        "conv3_w": w(ks[2], (64, 64, 3, 3), 64 * 3 * 3),
        "conv3_b": jnp.zeros((64,), jnp.float32),
        "fc1_w": w(ks[3], (512, 64 * 7 * 7), 64 * 7 * 7),
        "fc1_b": jnp.zeros((512,), jnp.float32),
        "fc2_w": w(ks[4], (num_actions, 512), 512),
        "fc2_b": jnp.zeros((num_actions,), jnp.float32),
    }


if __name__ == "__main__":
    num_actions = 6
    key = jax.random.PRNGKey(0)
    k_param, k_state = jax.random.split(key)

    params = init_params(k_param, num_actions)
    # Atari-style preprocessed frame stack: 4 x 84 x 84 in [0, 1]
    # (84x84 is required by the hard-coded Linear(64*7*7, 512)).
    state = jax.random.uniform(k_state, (4, 84, 84), jnp.float32)

    kparams = prepare_params(params)          # one-time offline re-layout (bf16)

    fwd = jax.jit(agent_forward_greedy)
    action, qs = fwd(state, kparams)
    action = jax.block_until_ready(action)
    qs = jax.block_until_ready(qs)

    qs_ref = jax.block_until_ready(q_network_ref(state[None], params))
    qs_np, ref_np = np.asarray(qs), np.asarray(qs_ref)
    assert qs.shape == (1, num_actions)
    assert np.all(np.isfinite(qs_np))
    assert np.allclose(qs_np, ref_np, rtol=5e-2, atol=5e-2), (qs_np, ref_np)
    assert int(action) == int(np.argmax(qs_np, axis=-1)[0])

    print("KERNEL_OK")
</pallas_src>

<mosaic_0001>
module attributes {stable_mosaic.version = 11 : i64} {
  func.func @_fused_qnet_kernel(%arg0: memref<408x256xbf16, #tpu.memory_space<vmem>>, %arg1: memref<256x32xbf16, #tpu.memory_space<vmem>>, %arg2: memref<1x32xf32, #tpu.memory_space<vmem>>, %arg3: memref<512x64xbf16, #tpu.memory_space<vmem>>, %arg4: memref<1x64xf32, #tpu.memory_space<vmem>>, %arg5: memref<576x64xbf16, #tpu.memory_space<vmem>>, %arg6: memref<1x64xf32, #tpu.memory_space<vmem>>, %arg7: memref<3136x512xbf16, #tpu.memory_space<vmem>>, %arg8: memref<1x512xf32, #tpu.memory_space<vmem>>, %arg9: memref<512x6xbf16, #tpu.memory_space<vmem>>, %arg10: memref<1x6xf32, #tpu.memory_space<vmem>>, %arg11: memref<1x6xf32, #tpu.memory_space<vmem>>, %arg12: memref<1x1xi32, #tpu.memory_space<vmem>>, %arg13: memref<408x32xf32, #tpu.memory_space<vmem>>, %arg14: memref<90x512xbf16, #tpu.memory_space<vmem>>, %arg15: memref<96x64xf32, #tpu.memory_space<vmem>>, %arg16: memref<70x576xbf16, #tpu.memory_space<vmem>>, %arg17: memref<70x64xf32, #tpu.memory_space<vmem>>, %arg18: memref<1x3136xbf16, #tpu.memory_space<vmem>>) attributes {dimension_semantics = [], scalar_prefetch = 0 : i64, scratch_operands = 6 : i64, tpu.core_type = #tpu.core_type<tc>} {
    %c0 = arith.constant 0 : index
    %c0_0 = arith.constant 0 : index
    %0 = vector.load %arg0[%c0, %c0_0] : memref<408x256xbf16, #tpu.memory_space<vmem>>, vector<408x256xbf16>
    %c0_1 = arith.constant 0 : index
    %c0_2 = arith.constant 0 : index
    %1 = vector.load %arg1[%c0_1, %c0_2] : memref<256x32xbf16, #tpu.memory_space<vmem>>, vector<256x32xbf16>
    %cst = arith.constant dense<0.000000e+00> : vector<408x32xf32>
    %2 = tpu.matmul %0, %1, %cst {dimension_numbers = #tpu.dot_dimension_numbers<[1], [0], [0], [1], [0, 0, 1, 1], [], []>} : vector<408x256xbf16>, vector<256x32xbf16>, vector<408x32xf32> -> vector<408x32xf32>
    %c0_3 = arith.constant 0 : index
    %c0_4 = arith.constant 0 : index
    %3 = vector.load %arg2[%c0_3, %c0_4] : memref<1x32xf32, #tpu.memory_space<vmem>>, vector<1x32xf32>
    %4 = vector.broadcast %3 : vector<1x32xf32> to vector<408x32xf32>
    %5 = arith.addf %2, %4 : vector<408x32xf32>
    %cst_5 = arith.constant 0.000000e+00 : f32
    %6 = vector.broadcast %cst_5 : f32 to vector<408x32xf32>
    %7 = arith.maximumf %5, %6 : vector<408x32xf32>
    %c0_6 = arith.constant 0 : index
    %c0_7 = arith.constant 0 : index
    %8 = vector.load %arg13[%c0_6, %c0_7] : memref<408x32xf32, #tpu.memory_space<vmem>>, vector<408x32xf32>
    tpu.vector_store %arg13[%c0_6, %c0_7], %7 {strides = array<i32>} : memref<408x32xf32, #tpu.memory_space<vmem>>, vector<408x32xf32>,
    %c0_8 = arith.constant 0 : index
    %c0_9 = arith.constant 0 : index
    %9 = vector.load %arg13[%c0_8, %c0_9] : memref<408x32xf32, #tpu.memory_space<vmem>>, vector<90x32xf32>
    %10 = arith.truncf %9 : vector<90x32xf32> to vector<90x32xbf16>
    %c0_10 = arith.constant 0 : index
    %c0_11 = arith.constant 0 : index
    %11 = vector.load %arg14[%c0_10, %c0_11] : memref<90x512xbf16, #tpu.memory_space<vmem>>, vector<90x32xbf16>
    tpu.vector_store %arg14[%c0_10, %c0_11], %10 {strides = array<i32>} : memref<90x512xbf16, #tpu.memory_space<vmem>>, vector<90x32xbf16>,
    %c100 = arith.constant 100 : index
    %c0_12 = arith.constant 0 : index
    %12 = vector.load %arg13[%c100, %c0_12] : memref<408x32xf32, #tpu.memory_space<vmem>>, vector<90x32xf32>
    %13 = arith.truncf %12 : vector<90x32xf32> to vector<90x32xbf16>
    %c0_13 = arith.constant 0 : index
    %c32 = arith.constant 32 : index
    %14 = vector.load %arg14[%c0_13, %c32] : memref<90x512xbf16, #tpu.memory_space<vmem>>, vector<90x32xbf16>
    tpu.vector_store %arg14[%c0_13, %c32], %13 {strides = array<i32>} : memref<90x512xbf16, #tpu.memory_space<vmem>>, vector<90x32xbf16>,
    %c1 = arith.constant 1 : index
    %c0_14 = arith.constant 0 : index
    %15 = vector.load %arg13[%c1, %c0_14] : memref<408x32xf32, #tpu.memory_space<vmem>>, vector<90x32xf32>
    %16 = arith.truncf %15 : vector<90x32xf32> to vector<90x32xbf16>
    %c0_15 = arith.constant 0 : index
    %c64 = arith.constant 64 : index
    %17 = vector.load %arg14[%c0_15, %c64] : memref<90x512xbf16, #tpu.memory_space<vmem>>, vector<90x32xbf16>
    tpu.vector_store %arg14[%c0_15, %c64], %16 {strides = array<i32>} : memref<90x512xbf16, #tpu.memory_space<vmem>>, vector<90x32xbf16>,
    %c101 = arith.constant 101 : index
    %c0_16 = arith.constant 0 : index
    %18 = vector.load %arg13[%c101, %c0_16] : memref<408x32xf32, #tpu.memory_space<vmem>>, vector<90x32xf32>
    %19 = arith.truncf %18 : vector<90x32xf32> to vector<90x32xbf16>
    %c0_17 = arith.constant 0 : index
    %c96 = arith.constant 96 : index
    %20 = vector.load %arg14[%c0_17, %c96] : memref<90x512xbf16, #tpu.memory_space<vmem>>, vector<90x32xbf16>
    tpu.vector_store %arg14[%c0_17, %c96], %19 {strides = array<i32>} : memref<90x512xbf16, #tpu.memory_space<vmem>>, vector<90x32xbf16>,
    %c200 = arith.constant 200 : index
    %c0_18 = arith.constant 0 : index
    %21 = vector.load %arg13[%c200, %c0_18] : memref<408x32xf32, #tpu.memory_space<vmem>>, vector<90x32xf32>
    %22 = arith.truncf %21 : vector<90x32xf32> to vector<90x32xbf16>
    %c0_19 = arith.constant 0 : index
    %c128 = arith.constant 128 : index
    %23 = vector.load %arg14[%c0_19, %c128] : memref<90x512xbf16, #tpu.memory_space<vmem>>, vector<90x32xbf16>
    tpu.vector_store %arg14[%c0_19, %c128], %22 {strides = array<i32>} : memref<90x512xbf16, #tpu.memory_space<vmem>>, vector<90x32xbf16>,
    %c300 = arith.constant 300 : index
    %c0_20 = arith.constant 0 : index
    %24 = vector.load %arg13[%c300, %c0_20] : memref<408x32xf32, #tpu.memory_space<vmem>>, vector<90x32xf32>
    %25 = arith.truncf %24 : vector<90x32xf32> to vector<90x32xbf16>
    %c0_21 = arith.constant 0 : index
    %c160 = arith.constant 160 : index
    %26 = vector.load %arg14[%c0_21, %c160] : memref<90x512xbf16, #tpu.memory_space<vmem>>, vector<90x32xbf16>
    tpu.vector_store %arg14[%c0_21, %c160], %25 {strides = array<i32>} : memref<90x512xbf16, #tpu.memory_space<vmem>>, vector<90x32xbf16>,
    %c201 = arith.constant 201 : index
    %c0_22 = arith.constant 0 : index
    %27 = vector.load %arg13[%c201, %c0_22] : memref<408x32xf32, #tpu.memory_space<vmem>>, vector<90x32xf32>
    %28 = arith.truncf %27 : vector<90x32xf32> to vector<90x32xbf16>
    %c0_23 = arith.constant 0 : index
    %c192 = arith.constant 192 : index
    %29 = vector.load %arg14[%c0_23, %c192] : memref<90x512xbf16, #tpu.memory_space<vmem>>, vector<90x32xbf16>
    tpu.vector_store %arg14[%c0_23, %c192], %28 {strides = array<i32>} : memref<90x512xbf16, #tpu.memory_space<vmem>>, vector<90x32xbf16>,
    %c301 = arith.constant 301 : index
    %c0_24 = arith.constant 0 : index
    %30 = vector.load %arg13[%c301, %c0_24] : memref<408x32xf32, #tpu.memory_space<vmem>>, vector<90x32xf32>
    %31 = arith.truncf %30 : vector<90x32xf32> to vector<90x32xbf16>
    %c0_25 = arith.constant 0 : index
    %c224 = arith.constant 224 : index
    %32 = vector.load %arg14[%c0_25, %c224] : memref<90x512xbf16, #tpu.memory_space<vmem>>, vector<90x32xbf16>
    tpu.vector_store %arg14[%c0_25, %c224], %31 {strides = array<i32>} : memref<90x512xbf16, #tpu.memory_space<vmem>>, vector<90x32xbf16>,
    %c10 = arith.constant 10 : index
    %c0_26 = arith.constant 0 : index
    %33 = vector.load %arg13[%c10, %c0_26] : memref<408x32xf32, #tpu.memory_space<vmem>>, vector<90x32xf32>
    %34 = arith.truncf %33 : vector<90x32xf32> to vector<90x32xbf16>
    %c0_27 = arith.constant 0 : index
    %c256 = arith.constant 256 : index
    %35 = vector.load %arg14[%c0_27, %c256] : memref<90x512xbf16, #tpu.memory_space<vmem>>, vector<90x32xbf16>
    tpu.vector_store %arg14[%c0_27, %c256], %34 {strides = array<i32>} : memref<90x512xbf16, #tpu.memory_space<vmem>>, vector<90x32xbf16>,
    %c110 = arith.constant 110 : index
    %c0_28 = arith.constant 0 : index
    %36 = vector.load %arg13[%c110, %c0_28] : memref<408x32xf32, #tpu.memory_space<vmem>>, vector<90x32xf32>
    %37 = arith.truncf %36 : vector<90x32xf32> to vector<90x32xbf16>
    %c0_29 = arith.constant 0 : index
    %c288 = arith.constant 288 : index
    %38 = vector.load %arg14[%c0_29, %c288] : memref<90x512xbf16, #tpu.memory_space<vmem>>, vector<90x32xbf16>
    tpu.vector_store %arg14[%c0_29, %c288], %37 {strides = array<i32>} : memref<90x512xbf16, #tpu.memory_space<vmem>>, vector<90x32xbf16>,
    %c11 = arith.constant 11 : index
    %c0_30 = arith.constant 0 : index
    %39 = vector.load %arg13[%c11, %c0_30] : memref<408x32xf32, #tpu.memory_space<vmem>>, vector<90x32xf32>
    %40 = arith.truncf %39 : vector<90x32xf32> to vector<90x32xbf16>
    %c0_31 = arith.constant 0 : index
    %c320 = arith.constant 320 : index
    %41 = vector.load %arg14[%c0_31, %c320] : memref<90x512xbf16, #tpu.memory_space<vmem>>, vector<90x32xbf16>
    tpu.vector_store %arg14[%c0_31, %c320], %40 {strides = array<i32>} : memref<90x512xbf16, #tpu.memory_space<vmem>>, vector<90x32xbf16>,
    %c111 = arith.constant 111 : index
    %c0_32 = arith.constant 0 : index
    %42 = vector.load %arg13[%c111, %c0_32] : memref<408x32xf32, #tpu.memory_space<vmem>>, vector<90x32xf32>
    %43 = arith.truncf %42 : vector<90x32xf32> to vector<90x32xbf16>
    %c0_33 = arith.constant 0 : index
    %c352 = arith.constant 352 : index
    %44 = vector.load %arg14[%c0_33, %c352] : memref<90x512xbf16, #tpu.memory_space<vmem>>, vector<90x32xbf16>
    tpu.vector_store %arg14[%c0_33, %c352], %43 {strides = array<i32>} : memref<90x512xbf16, #tpu.memory_space<vmem>>, vector<90x32xbf16>,
    %c210 = arith.constant 210 : index
    %c0_34 = arith.constant 0 : index
    %45 = vector.load %arg13[%c210, %c0_34] : memref<408x32xf32, #tpu.memory_space<vmem>>, vector<90x32xf32>
    %46 = arith.truncf %45 : vector<90x32xf32> to vector<90x32xbf16>
    %c0_35 = arith.constant 0 : index
    %c384 = arith.constant 384 : index
    %47 = vector.load %arg14[%c0_35, %c384] : memref<90x512xbf16, #tpu.memory_space<vmem>>, vector<90x32xbf16>
    tpu.vector_store %arg14[%c0_35, %c384], %46 {strides = array<i32>} : memref<90x512xbf16, #tpu.memory_space<vmem>>, vector<90x32xbf16>,
    %c310 = arith.constant 310 : index
    %c0_36 = arith.constant 0 : index
    %48 = vector.load %arg13[%c310, %c0_36] : memref<408x32xf32, #tpu.memory_space<vmem>>, vector<90x32xf32>
    %49 = arith.truncf %48 : vector<90x32xf32> to vector<90x32xbf16>
    %c0_37 = arith.constant 0 : index
    %c416 = arith.constant 416 : index
    %50 = vector.load %arg14[%c0_37, %c416] : memref<90x512xbf16, #tpu.memory_space<vmem>>, vector<90x32xbf16>
    tpu.vector_store %arg14[%c0_37, %c416], %49 {strides = array<i32>} : memref<90x512xbf16, #tpu.memory_space<vmem>>, vector<90x32xbf16>,
    %c211 = arith.constant 211 : index
    %c0_38 = arith.constant 0 : index
    %51 = vector.load %arg13[%c211, %c0_38] : memref<408x32xf32, #tpu.memory_space<vmem>>, vector<90x32xf32>
    %52 = arith.truncf %51 : vector<90x32xf32> to vector<90x32xbf16>
    %c0_39 = arith.constant 0 : index
    %c448 = arith.constant 448 : index
    %53 = vector.load %arg14[%c0_39, %c448] : memref<90x512xbf16, #tpu.memory_space<vmem>>, vector<90x32xbf16>
    tpu.vector_store %arg14[%c0_39, %c448], %52 {strides = array<i32>} : memref<90x512xbf16, #tpu.memory_space<vmem>>, vector<90x32xbf16>,
    %c311 = arith.constant 311 : index
    %c0_40 = arith.constant 0 : index
    %54 = vector.load %arg13[%c311, %c0_40] : memref<408x32xf32, #tpu.memory_space<vmem>>, vector<90x32xf32>
    %55 = arith.truncf %54 : vector<90x32xf32> to vector<90x32xbf16>
    %c0_41 = arith.constant 0 : index
    %c480 = arith.constant 480 : index
    %56 = vector.load %arg14[%c0_41, %c480] : memref<90x512xbf16, #tpu.memory_space<vmem>>, vector<90x32xbf16>
    tpu.vector_store %arg14[%c0_41, %c480], %55 {strides = array<i32>} : memref<90x512xbf16, #tpu.memory_space<vmem>>, vector<90x32xbf16>,
    %c0_42 = arith.constant 0 : index
    %c0_43 = arith.constant 0 : index
    %57 = vector.load %arg14[%c0_42, %c0_43] : memref<90x512xbf16, #tpu.memory_space<vmem>>, vector<90x512xbf16>
    %c0_44 = arith.constant 0 : index
    %c0_45 = arith.constant 0 : index
    %58 = vector.load %arg3[%c0_44, %c0_45] : memref<512x64xbf16, #tpu.memory_space<vmem>>, vector<512x64xbf16>
    %cst_46 = arith.constant dense<0.000000e+00> : vector<90x64xf32>
    %59 = tpu.matmul %57, %58, %cst_46 {dimension_numbers = #tpu.dot_dimension_numbers<[1], [0], [0], [1], [0, 0, 1, 1], [], []>} : vector<90x512xbf16>, vector<512x64xbf16>, vector<90x64xf32> -> vector<90x64xf32>
    %c0_47 = arith.constant 0 : index
    %c0_48 = arith.constant 0 : index
    %60 = vector.load %arg4[%c0_47, %c0_48] : memref<1x64xf32, #tpu.memory_space<vmem>>, vector<1x64xf32>
    %61 = vector.broadcast %60 : vector<1x64xf32> to vector<90x64xf32>
    %62 = arith.addf %59, %61 : vector<90x64xf32>
    %cst_49 = arith.constant 0.000000e+00 : f32
    %63 = vector.broadcast %cst_49 : f32 to vector<90x64xf32>
    %64 = arith.maximumf %62, %63 : vector<90x64xf32>
    %c0_50 = arith.constant 0 : index
    %c0_51 = arith.constant 0 : index
    %65 = vector.load %arg15[%c0_50, %c0_51] : memref<96x64xf32, #tpu.memory_space<vmem>>, vector<90x64xf32>
    tpu.vector_store %arg15[%c0_50, %c0_51], %64 {strides = array<i32>} : memref<96x64xf32, #tpu.memory_space<vmem>>, vector<90x64xf32>,
    %cst_52 = arith.constant 0.000000e+00 : f32
    %66 = vector.broadcast %cst_52 : f32 to vector<6x64xf32>
    %c90 = arith.constant 90 : index
    %c0_53 = arith.constant 0 : index
    %67 = vector.load %arg15[%c90, %c0_53] : memref<96x64xf32, #tpu.memory_space<vmem>>, vector<6x64xf32>
    tpu.vector_store %arg15[%c90, %c0_53], %66 {strides = array<i32>} : memref<96x64xf32, #tpu.memory_space<vmem>>, vector<6x64xf32>,
    %c0_54 = arith.constant 0 : index
    %c0_55 = arith.constant 0 : index
    %68 = vector.load %arg15[%c0_54, %c0_55] : memref<96x64xf32, #tpu.memory_space<vmem>>, vector<70x64xf32>
    %69 = arith.truncf %68 : vector<70x64xf32> to vector<70x64xbf16>
    %c0_56 = arith.constant 0 : index
    %c0_57 = arith.constant 0 : index
    %70 = vector.load %arg16[%c0_56, %c0_57] : memref<70x576xbf16, #tpu.memory_space<vmem>>, vector<70x64xbf16>
    tpu.vector_store %arg16[%c0_56, %c0_57], %69 {strides = array<i32>} : memref<70x576xbf16, #tpu.memory_space<vmem>>, vector<70x64xbf16>,
    %c1_58 = arith.constant 1 : index
    %c0_59 = arith.constant 0 : index
    %71 = vector.load %arg15[%c1_58, %c0_59] : memref<96x64xf32, #tpu.memory_space<vmem>>, vector<70x64xf32>
    %72 = arith.truncf %71 : vector<70x64xf32> to vector<70x64xbf16>
    %c0_60 = arith.constant 0 : index
    %c64_61 = arith.constant 64 : index
    %73 = vector.load %arg16[%c0_60, %c64_61] : memref<70x576xbf16, #tpu.memory_space<vmem>>, vector<70x64xbf16>
    tpu.vector_store %arg16[%c0_60, %c64_61], %72 {strides = array<i32>} : memref<70x576xbf16, #tpu.memory_space<vmem>>, vector<70x64xbf16>,
    %c2 = arith.constant 2 : index
    %c0_62 = arith.constant 0 : index
    %74 = vector.load %arg15[%c2, %c0_62] : memref<96x64xf32, #tpu.memory_space<vmem>>, vector<70x64xf32>
    %75 = arith.truncf %74 : vector<70x64xf32> to vector<70x64xbf16>
    %c0_63 = arith.constant 0 : index
    %c128_64 = arith.constant 128 : index
    %76 = vector.load %arg16[%c0_63, %c128_64] : memref<70x576xbf16, #tpu.memory_space<vmem>>, vector<70x64xbf16>
    tpu.vector_store %arg16[%c0_63, %c128_64], %75 {strides = array<i32>} : memref<70x576xbf16, #tpu.memory_space<vmem>>, vector<70x64xbf16>,
    %c10_65 = arith.constant 10 : index
    %c0_66 = arith.constant 0 : index
    %77 = vector.load %arg15[%c10_65, %c0_66] : memref<96x64xf32, #tpu.memory_space<vmem>>, vector<70x64xf32>
    %78 = arith.truncf %77 : vector<70x64xf32> to vector<70x64xbf16>
    %c0_67 = arith.constant 0 : index
    %c192_68 = arith.constant 192 : index
    %79 = vector.load %arg16[%c0_67, %c192_68] : memref<70x576xbf16, #tpu.memory_space<vmem>>, vector<70x64xbf16>
    tpu.vector_store %arg16[%c0_67, %c192_68], %78 {strides = array<i32>} : memref<70x576xbf16, #tpu.memory_space<vmem>>, vector<70x64xbf16>,
    %c11_69 = arith.constant 11 : index
    %c0_70 = arith.constant 0 : index
    %80 = vector.load %arg15[%c11_69, %c0_70] : memref<96x64xf32, #tpu.memory_space<vmem>>, vector<70x64xf32>
    %81 = arith.truncf %80 : vector<70x64xf32> to vector<70x64xbf16>
    %c0_71 = arith.constant 0 : index
    %c256_72 = arith.constant 256 : index
    %82 = vector.load %arg16[%c0_71, %c256_72] : memref<70x576xbf16, #tpu.memory_space<vmem>>, vector<70x64xbf16>
    tpu.vector_store %arg16[%c0_71, %c256_72], %81 {strides = array<i32>} : memref<70x576xbf16, #tpu.memory_space<vmem>>, vector<70x64xbf16>,
    %c12 = arith.constant 12 : index
    %c0_73 = arith.constant 0 : index
    %83 = vector.load %arg15[%c12, %c0_73] : memref<96x64xf32, #tpu.memory_space<vmem>>, vector<70x64xf32>
    %84 = arith.truncf %83 : vector<70x64xf32> to vector<70x64xbf16>
    %c0_74 = arith.constant 0 : index
    %c320_75 = arith.constant 320 : index
    %85 = vector.load %arg16[%c0_74, %c320_75] : memref<70x576xbf16, #tpu.memory_space<vmem>>, vector<70x64xbf16>
    tpu.vector_store %arg16[%c0_74, %c320_75], %84 {strides = array<i32>} : memref<70x576xbf16, #tpu.memory_space<vmem>>, vector<70x64xbf16>,
    %c20 = arith.constant 20 : index
    %c0_76 = arith.constant 0 : index
    %86 = vector.load %arg15[%c20, %c0_76] : memref<96x64xf32, #tpu.memory_space<vmem>>, vector<70x64xf32>
    %87 = arith.truncf %86 : vector<70x64xf32> to vector<70x64xbf16>
    %c0_77 = arith.constant 0 : index
    %c384_78 = arith.constant 384 : index
    %88 = vector.load %arg16[%c0_77, %c384_78] : memref<70x576xbf16, #tpu.memory_space<vmem>>, vector<70x64xbf16>
    tpu.vector_store %arg16[%c0_77, %c384_78], %87 {strides = array<i32>} : memref<70x576xbf16, #tpu.memory_space<vmem>>, vector<70x64xbf16>,
    %c21 = arith.constant 21 : index
    %c0_79 = arith.constant 0 : index
    %89 = vector.load %arg15[%c21, %c0_79] : memref<96x64xf32, #tpu.memory_space<vmem>>, vector<70x64xf32>
    %90 = arith.truncf %89 : vector<70x64xf32> to vector<70x64xbf16>
    %c0_80 = arith.constant 0 : index
    %c448_81 = arith.constant 448 : index
    %91 = vector.load %arg16[%c0_80, %c448_81] : memref<70x576xbf16, #tpu.memory_space<vmem>>, vector<70x64xbf16>
    tpu.vector_store %arg16[%c0_80, %c448_81], %90 {strides = array<i32>} : memref<70x576xbf16, #tpu.memory_space<vmem>>, vector<70x64xbf16>,
    %c22 = arith.constant 22 : index
    %c0_82 = arith.constant 0 : index
    %92 = vector.load %arg15[%c22, %c0_82] : memref<96x64xf32, #tpu.memory_space<vmem>>, vector<70x64xf32>
    %93 = arith.truncf %92 : vector<70x64xf32> to vector<70x64xbf16>
    %c0_83 = arith.constant 0 : index
    %c512 = arith.constant 512 : index
    %94 = vector.load %arg16[%c0_83, %c512] : memref<70x576xbf16, #tpu.memory_space<vmem>>, vector<70x64xbf16>
    tpu.vector_store %arg16[%c0_83, %c512], %93 {strides = array<i32>} : memref<70x576xbf16, #tpu.memory_space<vmem>>, vector<70x64xbf16>,
    %c0_84 = arith.constant 0 : index
    %c0_85 = arith.constant 0 : index
    %95 = vector.load %arg16[%c0_84, %c0_85] : memref<70x576xbf16, #tpu.memory_space<vmem>>, vector<70x576xbf16>
    %c0_86 = arith.constant 0 : index
    %c0_87 = arith.constant 0 : index
    %96 = vector.load %arg5[%c0_86, %c0_87] : memref<576x64xbf16, #tpu.memory_space<vmem>>, vector<576x64xbf16>
    %cst_88 = arith.constant dense<0.000000e+00> : vector<70x64xf32>
    %97 = tpu.matmul %95, %96, %cst_88 {dimension_numbers = #tpu.dot_dimension_numbers<[1], [0], [0], [1], [0, 0, 1, 1], [], []>} : vector<70x576xbf16>, vector<576x64xbf16>, vector<70x64xf32> -> vector<70x64xf32>
    %c0_89 = arith.constant 0 : index
    %c0_90 = arith.constant 0 : index
    %98 = vector.load %arg6[%c0_89, %c0_90] : memref<1x64xf32, #tpu.memory_space<vmem>>, vector<1x64xf32>
    %99 = vector.broadcast %98 : vector<1x64xf32> to vector<70x64xf32>
    %100 = arith.addf %97, %99 : vector<70x64xf32>
    %cst_91 = arith.constant 0.000000e+00 : f32
    %101 = vector.broadcast %cst_91 : f32 to vector<70x64xf32>
    %102 = arith.maximumf %100, %101 : vector<70x64xf32>
    %c0_92 = arith.constant 0 : index
    %c0_93 = arith.constant 0 : index
    %103 = vector.load %arg17[%c0_92, %c0_93] : memref<70x64xf32, #tpu.memory_space<vmem>>, vector<70x64xf32>
    tpu.vector_store %arg17[%c0_92, %c0_93], %102 {strides = array<i32>} : memref<70x64xf32, #tpu.memory_space<vmem>>, vector<70x64xf32>,
    %c0_94 = arith.constant 0 : index
    %c0_95 = arith.constant 0 : index
    %104 = vector.load %arg17[%c0_94, %c0_95] : memref<70x64xf32, #tpu.memory_space<vmem>>, vector<1x64xf32>
    %105 = arith.truncf %104 : vector<1x64xf32> to vector<1x64xbf16>
    %c0_96 = arith.constant 0 : index
    %c0_97 = arith.constant 0 : index
    %106 = vector.load %arg18[%c0_96, %c0_97] : memref<1x3136xbf16, #tpu.memory_space<vmem>>, vector<1x64xbf16>
    tpu.vector_store %arg18[%c0_96, %c0_97], %105 {strides = array<i32>} : memref<1x3136xbf16, #tpu.memory_space<vmem>>, vector<1x64xbf16>,
    %c1_98 = arith.constant 1 : index
    %c0_99 = arith.constant 0 : index
    %107 = vector.load %arg17[%c1_98, %c0_99] : memref<70x64xf32, #tpu.memory_space<vmem>>, vector<1x64xf32>
    %108 = arith.truncf %107 : vector<1x64xf32> to vector<1x64xbf16>
    %c0_100 = arith.constant 0 : index
    %c64_101 = arith.constant 64 : index
    %109 = vector.load %arg18[%c0_100, %c64_101] : memref<1x3136xbf16, #tpu.memory_space<vmem>>, vector<1x64xbf16>
    tpu.vector_store %arg18[%c0_100, %c64_101], %108 {strides = array<i32>} : memref<1x3136xbf16, #tpu.memory_space<vmem>>, vector<1x64xbf16>,
    %c2_102 = arith.constant 2 : index
    %c0_103 = arith.constant 0 : index
    %110 = vector.load %arg17[%c2_102, %c0_103] : memref<70x64xf32, #tpu.memory_space<vmem>>, vector<1x64xf32>
    %111 = arith.truncf %110 : vector<1x64xf32> to vector<1x64xbf16>
    %c0_104 = arith.constant 0 : index
    %c128_105 = arith.constant 128 : index
    %112 = vector.load %arg18[%c0_104, %c128_105] : memref<1x3136xbf16, #tpu.memory_space<vmem>>, vector<1x64xbf16>
    tpu.vector_store %arg18[%c0_104, %c128_105], %111 {strides = array<i32>} : memref<1x3136xbf16, #tpu.memory_space<vmem>>, vector<1x64xbf16>,
    %c3 = arith.constant 3 : index
    %c0_106 = arith.constant 0 : index
    %113 = vector.load %arg17[%c3, %c0_106] : memref<70x64xf32, #tpu.memory_space<vmem>>, vector<1x64xf32>
    %114 = arith.truncf %113 : vector<1x64xf32> to vector<1x64xbf16>
    %c0_107 = arith.constant 0 : index
    %c192_108 = arith.constant 192 : index
    %115 = vector.load %arg18[%c0_107, %c192_108] : memref<1x3136xbf16, #tpu.memory_space<vmem>>, vector<1x64xbf16>
    tpu.vector_store %arg18[%c0_107, %c192_108], %114 {strides = array<i32>} : memref<1x3136xbf16, #tpu.memory_space<vmem>>, vector<1x64xbf16>,
    %c4 = arith.constant 4 : index
    %c0_109 = arith.constant 0 : index
    %116 = vector.load %arg17[%c4, %c0_109] : memref<70x64xf32, #tpu.memory_space<vmem>>, vector<1x64xf32>
    %117 = arith.truncf %116 : vector<1x64xf32> to vector<1x64xbf16>
    %c0_110 = arith.constant 0 : index
    %c256_111 = arith.constant 256 : index
    %118 = vector.load %arg18[%c0_110, %c256_111] : memref<1x3136xbf16, #tpu.memory_space<vmem>>, vector<1x64xbf16>
    tpu.vector_store %arg18[%c0_110, %c256_111], %117 {strides = array<i32>} : memref<1x3136xbf16, #tpu.memory_space<vmem>>, vector<1x64xbf16>,
    %c5 = arith.constant 5 : index
    %c0_112 = arith.constant 0 : index
    %119 = vector.load %arg17[%c5, %c0_112] : memref<70x64xf32, #tpu.memory_space<vmem>>, vector<1x64xf32>
    %120 = arith.truncf %119 : vector<1x64xf32> to vector<1x64xbf16>
    %c0_113 = arith.constant 0 : index
    %c320_114 = arith.constant 320 : index
    %121 = vector.load %arg18[%c0_113, %c320_114] : memref<1x3136xbf16, #tpu.memory_space<vmem>>, vector<1x64xbf16>
    tpu.vector_store %arg18[%c0_113, %c320_114], %120 {strides = array<i32>} : memref<1x3136xbf16, #tpu.memory_space<vmem>>, vector<1x64xbf16>,
    %c6 = arith.constant 6 : index
    %c0_115 = arith.constant 0 : index
    %122 = vector.load %arg17[%c6, %c0_115] : memref<70x64xf32, #tpu.memory_space<vmem>>, vector<1x64xf32>
    %123 = arith.truncf %122 : vector<1x64xf32> to vector<1x64xbf16>
    %c0_116 = arith.constant 0 : index
    %c384_117 = arith.constant 384 : index
    %124 = vector.load %arg18[%c0_116, %c384_117] : memref<1x3136xbf16, #tpu.memory_space<vmem>>, vector<1x64xbf16>
    tpu.vector_store %arg18[%c0_116, %c384_117], %123 {strides = array<i32>} : memref<1x3136xbf16, #tpu.memory_space<vmem>>, vector<1x64xbf16>,
    %c10_118 = arith.constant 10 : index
    %c0_119 = arith.constant 0 : index
    %125 = vector.load %arg17[%c10_118, %c0_119] : memref<70x64xf32, #tpu.memory_space<vmem>>, vector<1x64xf32>
    %126 = arith.truncf %125 : vector<1x64xf32> to vector<1x64xbf16>
    %c0_120 = arith.constant 0 : index
    %c448_121 = arith.constant 448 : index
    %127 = vector.load %arg18[%c0_120, %c448_121] : memref<1x3136xbf16, #tpu.memory_space<vmem>>, vector<1x64xbf16>
    tpu.vector_store %arg18[%c0_120, %c448_121], %126 {strides = array<i32>} : memref<1x3136xbf16, #tpu.memory_space<vmem>>, vector<1x64xbf16>,
    %c11_122 = arith.constant 11 : index
    %c0_123 = arith.constant 0 : index
    %128 = vector.load %arg17[%c11_122, %c0_123] : memref<70x64xf32, #tpu.memory_space<vmem>>, vector<1x64xf32>
    %129 = arith.truncf %128 : vector<1x64xf32> to vector<1x64xbf16>
    %c0_124 = arith.constant 0 : index
    %c512_125 = arith.constant 512 : index
    %130 = vector.load %arg18[%c0_124, %c512_125] : memref<1x3136xbf16, #tpu.memory_space<vmem>>, vector<1x64xbf16>
    tpu.vector_store %arg18[%c0_124, %c512_125], %129 {strides = array<i32>} : memref<1x3136xbf16, #tpu.memory_space<vmem>>, vector<1x64xbf16>,
    %c12_126 = arith.constant 12 : index
    %c0_127 = arith.constant 0 : index
    %131 = vector.load %arg17[%c12_126, %c0_127] : memref<70x64xf32, #tpu.memory_space<vmem>>, vector<1x64xf32>
    %132 = arith.truncf %131 : vector<1x64xf32> to vector<1x64xbf16>
    %c0_128 = arith.constant 0 : index
    %c576 = arith.constant 576 : index
    %133 = vector.load %arg18[%c0_128, %c576] : memref<1x3136xbf16, #tpu.memory_space<vmem>>, vector<1x64xbf16>
    tpu.vector_store %arg18[%c0_128, %c576], %132 {strides = array<i32>} : memref<1x3136xbf16, #tpu.memory_space<vmem>>, vector<1x64xbf16>,
    %c13 = arith.constant 13 : index
    %c0_129 = arith.constant 0 : index
    %134 = vector.load %arg17[%c13, %c0_129] : memref<70x64xf32, #tpu.memory_space<vmem>>, vector<1x64xf32>
    %135 = arith.truncf %134 : vector<1x64xf32> to vector<1x64xbf16>
    %c0_130 = arith.constant 0 : index
    %c640 = arith.constant 640 : index
    %136 = vector.load %arg18[%c0_130, %c640] : memref<1x3136xbf16, #tpu.memory_space<vmem>>, vector<1x64xbf16>
    tpu.vector_store %arg18[%c0_130, %c640], %135 {strides = array<i32>} : memref<1x3136xbf16, #tpu.memory_space<vmem>>, vector<1x64xbf16>,
    %c14 = arith.constant 14 : index
    %c0_131 = arith.constant 0 : index
    %137 = vector.load %arg17[%c14, %c0_131] : memref<70x64xf32, #tpu.memory_space<vmem>>, vector<1x64xf32>
    %138 = arith.truncf %137 : vector<1x64xf32> to vector<1x64xbf16>
    %c0_132 = arith.constant 0 : index
    %c704 = arith.constant 704 : index
    %139 = vector.load %arg18[%c0_132, %c704] : memref<1x3136xbf16, #tpu.memory_space<vmem>>, vector<1x64xbf16>
    tpu.vector_store %arg18[%c0_132, %c704], %138 {strides = array<i32>} : memref<1x3136xbf16, #tpu.memory_space<vmem>>, vector<1x64xbf16>,
    %c15 = arith.constant 15 : index
    %c0_133 = arith.constant 0 : index
    %140 = vector.load %arg17[%c15, %c0_133] : memref<70x64xf32, #tpu.memory_space<vmem>>, vector<1x64xf32>
    %141 = arith.truncf %140 : vector<1x64xf32> to vector<1x64xbf16>
    %c0_134 = arith.constant 0 : index
    %c768 = arith.constant 768 : index
    %142 = vector.load %arg18[%c0_134, %c768] : memref<1x3136xbf16, #tpu.memory_space<vmem>>, vector<1x64xbf16>
    tpu.vector_store %arg18[%c0_134, %c768], %141 {strides = array<i32>} : memref<1x3136xbf16, #tpu.memory_space<vmem>>, vector<1x64xbf16>,
    %c16 = arith.constant 16 : index
    %c0_135 = arith.constant 0 : index
    %143 = vector.load %arg17[%c16, %c0_135] : memref<70x64xf32, #tpu.memory_space<vmem>>, vector<1x64xf32>
    %144 = arith.truncf %143 : vector<1x64xf32> to vector<1x64xbf16>
    %c0_136 = arith.constant 0 : index
    %c832 = arith.constant 832 : index
    %145 = vector.load %arg18[%c0_136, %c832] : memref<1x3136xbf16, #tpu.memory_space<vmem>>, vector<1x64xbf16>
    tpu.vector_store %arg18[%c0_136, %c832], %144 {strides = array<i32>} : memref<1x3136xbf16, #tpu.memory_space<vmem>>, vector<1x64xbf16>,
    %c20_137 = arith.constant 20 : index
    %c0_138 = arith.constant 0 : index
    %146 = vector.load %arg17[%c20_137, %c0_138] : memref<70x64xf32, #tpu.memory_space<vmem>>, vector<1x64xf32>
    %147 = arith.truncf %146 : vector<1x64xf32> to vector<1x64xbf16>
    %c0_139 = arith.constant 0 : index
    %c896 = arith.constant 896 : index
    %148 = vector.load %arg18[%c0_139, %c896] : memref<1x3136xbf16, #tpu.memory_space<vmem>>, vector<1x64xbf16>
    tpu.vector_store %arg18[%c0_139, %c896], %147 {strides = array<i32>} : memref<1x3136xbf16, #tpu.memory_space<vmem>>, vector<1x64xbf16>,
    %c21_140 = arith.constant 21 : index
    %c0_141 = arith.constant 0 : index
    %149 = vector.load %arg17[%c21_140, %c0_141] : memref<70x64xf32, #tpu.memory_space<vmem>>, vector<1x64xf32>
    %150 = arith.truncf %149 : vector<1x64xf32> to vector<1x64xbf16>
    %c0_142 = arith.constant 0 : index
    %c960 = arith.constant 960 : index
    %151 = vector.load %arg18[%c0_142, %c960] : memref<1x3136xbf16, #tpu.memory_space<vmem>>, vector<1x64xbf16>
    tpu.vector_store %arg18[%c0_142, %c960], %150 {strides = array<i32>} : memref<1x3136xbf16, #tpu.memory_space<vmem>>, vector<1x64xbf16>,
    %c22_143 = arith.constant 22 : index
    %c0_144 = arith.constant 0 : index
    %152 = vector.load %arg17[%c22_143, %c0_144] : memref<70x64xf32, #tpu.memory_space<vmem>>, vector<1x64xf32>
    %153 = arith.truncf %152 : vector<1x64xf32> to vector<1x64xbf16>
    %c0_145 = arith.constant 0 : index
    %c1024 = arith.constant 1024 : index
    %154 = vector.load %arg18[%c0_145, %c1024] : memref<1x3136xbf16, #tpu.memory_space<vmem>>, vector<1x64xbf16>
    tpu.vector_store %arg18[%c0_145, %c1024], %153 {strides = array<i32>} : memref<1x3136xbf16, #tpu.memory_space<vmem>>, vector<1x64xbf16>,
    %c23 = arith.constant 23 : index
    %c0_146 = arith.constant 0 : index
    %155 = vector.load %arg17[%c23, %c0_146] : memref<70x64xf32, #tpu.memory_space<vmem>>, vector<1x64xf32>
    %156 = arith.truncf %155 : vector<1x64xf32> to vector<1x64xbf16>
    %c0_147 = arith.constant 0 : index
    %c1088 = arith.constant 1088 : index
    %157 = vector.load %arg18[%c0_147, %c1088] : memref<1x3136xbf16, #tpu.memory_space<vmem>>, vector<1x64xbf16>
    tpu.vector_store %arg18[%c0_147, %c1088], %156 {strides = array<i32>} : memref<1x3136xbf16, #tpu.memory_space<vmem>>, vector<1x64xbf16>,
    %c24 = arith.constant 24 : index
    %c0_148 = arith.constant 0 : index
    %158 = vector.load %arg17[%c24, %c0_148] : memref<70x64xf32, #tpu.memory_space<vmem>>, vector<1x64xf32>
    %159 = arith.truncf %158 : vector<1x64xf32> to vector<1x64xbf16>
    %c0_149 = arith.constant 0 : index
    %c1152 = arith.constant 1152 : index
    %160 = vector.load %arg18[%c0_149, %c1152] : memref<1x3136xbf16, #tpu.memory_space<vmem>>, vector<1x64xbf16>
    tpu.vector_store %arg18[%c0_149, %c1152], %159 {strides = array<i32>} : memref<1x3136xbf16, #tpu.memory_space<vmem>>, vector<1x64xbf16>,
    %c25 = arith.constant 25 : index
    %c0_150 = arith.constant 0 : index
    %161 = vector.load %arg17[%c25, %c0_150] : memref<70x64xf32, #tpu.memory_space<vmem>>, vector<1x64xf32>
    %162 = arith.truncf %161 : vector<1x64xf32> to vector<1x64xbf16>
    %c0_151 = arith.constant 0 : index
    %c1216 = arith.constant 1216 : index
    %163 = vector.load %arg18[%c0_151, %c1216] : memref<1x3136xbf16, #tpu.memory_space<vmem>>, vector<1x64xbf16>
    tpu.vector_store %arg18[%c0_151, %c1216], %162 {strides = array<i32>} : memref<1x3136xbf16, #tpu.memory_space<vmem>>, vector<1x64xbf16>,
    %c26 = arith.constant 26 : index
    %c0_152 = arith.constant 0 : index
    %164 = vector.load %arg17[%c26, %c0_152] : memref<70x64xf32, #tpu.memory_space<vmem>>, vector<1x64xf32>
    %165 = arith.truncf %164 : vector<1x64xf32> to vector<1x64xbf16>
    %c0_153 = arith.constant 0 : index
    %c1280 = arith.constant 1280 : index
    %166 = vector.load %arg18[%c0_153, %c1280] : memref<1x3136xbf16, #tpu.memory_space<vmem>>, vector<1x64xbf16>
    tpu.vector_store %arg18[%c0_153, %c1280], %165 {strides = array<i32>} : memref<1x3136xbf16, #tpu.memory_space<vmem>>, vector<1x64xbf16>,
    %c30 = arith.constant 30 : index
    %c0_154 = arith.constant 0 : index
    %167 = vector.load %arg17[%c30, %c0_154] : memref<70x64xf32, #tpu.memory_space<vmem>>, vector<1x64xf32>
    %168 = arith.truncf %167 : vector<1x64xf32> to vector<1x64xbf16>
    %c0_155 = arith.constant 0 : index
    %c1344 = arith.constant 1344 : index
    %169 = vector.load %arg18[%c0_155, %c1344] : memref<1x3136xbf16, #tpu.memory_space<vmem>>, vector<1x64xbf16>
    tpu.vector_store %arg18[%c0_155, %c1344], %168 {strides = array<i32>} : memref<1x3136xbf16, #tpu.memory_space<vmem>>, vector<1x64xbf16>,
    %c31 = arith.constant 31 : index
    %c0_156 = arith.constant 0 : index
    %170 = vector.load %arg17[%c31, %c0_156] : memref<70x64xf32, #tpu.memory_space<vmem>>, vector<1x64xf32>
    %171 = arith.truncf %170 : vector<1x64xf32> to vector<1x64xbf16>
    %c0_157 = arith.constant 0 : index
    %c1408 = arith.constant 1408 : index
    %172 = vector.load %arg18[%c0_157, %c1408] : memref<1x3136xbf16, #tpu.memory_space<vmem>>, vector<1x64xbf16>
    tpu.vector_store %arg18[%c0_157, %c1408], %171 {strides = array<i32>} : memref<1x3136xbf16, #tpu.memory_space<vmem>>, vector<1x64xbf16>,
    %c32_158 = arith.constant 32 : index
    %c0_159 = arith.constant 0 : index
    %173 = vector.load %arg17[%c32_158, %c0_159] : memref<70x64xf32, #tpu.memory_space<vmem>>, vector<1x64xf32>
    %174 = arith.truncf %173 : vector<1x64xf32> to vector<1x64xbf16>
    %c0_160 = arith.constant 0 : index
    %c1472 = arith.constant 1472 : index
    %175 = vector.load %arg18[%c0_160, %c1472] : memref<1x3136xbf16, #tpu.memory_space<vmem>>, vector<1x64xbf16>
    tpu.vector_store %arg18[%c0_160, %c1472], %174 {strides = array<i32>} : memref<1x3136xbf16, #tpu.memory_space<vmem>>, vector<1x64xbf16>,
    %c33 = arith.constant 33 : index
    %c0_161 = arith.constant 0 : index
    %176 = vector.load %arg17[%c33, %c0_161] : memref<70x64xf32, #tpu.memory_space<vmem>>, vector<1x64xf32>
    %177 = arith.truncf %176 : vector<1x64xf32> to vector<1x64xbf16>
    %c0_162 = arith.constant 0 : index
    %c1536 = arith.constant 1536 : index
    %178 = vector.load %arg18[%c0_162, %c1536] : memref<1x3136xbf16, #tpu.memory_space<vmem>>, vector<1x64xbf16>
    tpu.vector_store %arg18[%c0_162, %c1536], %177 {strides = array<i32>} : memref<1x3136xbf16, #tpu.memory_space<vmem>>, vector<1x64xbf16>,
    %c34 = arith.constant 34 : index
    %c0_163 = arith.constant 0 : index
    %179 = vector.load %arg17[%c34, %c0_163] : memref<70x64xf32, #tpu.memory_space<vmem>>, vector<1x64xf32>
    %180 = arith.truncf %179 : vector<1x64xf32> to vector<1x64xbf16>
    %c0_164 = arith.constant 0 : index
    %c1600 = arith.constant 1600 : index
    %181 = vector.load %arg18[%c0_164, %c1600] : memref<1x3136xbf16, #tpu.memory_space<vmem>>, vector<1x64xbf16>
    tpu.vector_store %arg18[%c0_164, %c1600], %180 {strides = array<i32>} : memref<1x3136xbf16, #tpu.memory_space<vmem>>, vector<1x64xbf16>,
    %c35 = arith.constant 35 : index
    %c0_165 = arith.constant 0 : index
    %182 = vector.load %arg17[%c35, %c0_165] : memref<70x64xf32, #tpu.memory_space<vmem>>, vector<1x64xf32>
    %183 = arith.truncf %182 : vector<1x64xf32> to vector<1x64xbf16>
    %c0_166 = arith.constant 0 : index
    %c1664 = arith.constant 1664 : index
    %184 = vector.load %arg18[%c0_166, %c1664] : memref<1x3136xbf16, #tpu.memory_space<vmem>>, vector<1x64xbf16>
    tpu.vector_store %arg18[%c0_166, %c1664], %183 {strides = array<i32>} : memref<1x3136xbf16, #tpu.memory_space<vmem>>, vector<1x64xbf16>,
    %c36 = arith.constant 36 : index
    %c0_167 = arith.constant 0 : index
    %185 = vector.load %arg17[%c36, %c0_167] : memref<70x64xf32, #tpu.memory_space<vmem>>, vector<1x64xf32>
    %186 = arith.truncf %185 : vector<1x64xf32> to vector<1x64xbf16>
    %c0_168 = arith.constant 0 : index
    %c1728 = arith.constant 1728 : index
    %187 = vector.load %arg18[%c0_168, %c1728] : memref<1x3136xbf16, #tpu.memory_space<vmem>>, vector<1x64xbf16>
    tpu.vector_store %arg18[%c0_168, %c1728], %186 {strides = array<i32>} : memref<1x3136xbf16, #tpu.memory_space<vmem>>, vector<1x64xbf16>,
    %c40 = arith.constant 40 : index
    %c0_169 = arith.constant 0 : index
    %188 = vector.load %arg17[%c40, %c0_169] : memref<70x64xf32, #tpu.memory_space<vmem>>, vector<1x64xf32>
    %189 = arith.truncf %188 : vector<1x64xf32> to vector<1x64xbf16>
    %c0_170 = arith.constant 0 : index
    %c1792 = arith.constant 1792 : index
    %190 = vector.load %arg18[%c0_170, %c1792] : memref<1x3136xbf16, #tpu.memory_space<vmem>>, vector<1x64xbf16>
    tpu.vector_store %arg18[%c0_170, %c1792], %189 {strides = array<i32>} : memref<1x3136xbf16, #tpu.memory_space<vmem>>, vector<1x64xbf16>,
    %c41 = arith.constant 41 : index
    %c0_171 = arith.constant 0 : index
    %191 = vector.load %arg17[%c41, %c0_171] : memref<70x64xf32, #tpu.memory_space<vmem>>, vector<1x64xf32>
    %192 = arith.truncf %191 : vector<1x64xf32> to vector<1x64xbf16>
    %c0_172 = arith.constant 0 : index
    %c1856 = arith.constant 1856 : index
    %193 = vector.load %arg18[%c0_172, %c1856] : memref<1x3136xbf16, #tpu.memory_space<vmem>>, vector<1x64xbf16>
    tpu.vector_store %arg18[%c0_172, %c1856], %192 {strides = array<i32>} : memref<1x3136xbf16, #tpu.memory_space<vmem>>, vector<1x64xbf16>,
    %c42 = arith.constant 42 : index
    %c0_173 = arith.constant 0 : index
    %194 = vector.load %arg17[%c42, %c0_173] : memref<70x64xf32, #tpu.memory_space<vmem>>, vector<1x64xf32>
    %195 = arith.truncf %194 : vector<1x64xf32> to vector<1x64xbf16>
    %c0_174 = arith.constant 0 : index
    %c1920 = arith.constant 1920 : index
    %196 = vector.load %arg18[%c0_174, %c1920] : memref<1x3136xbf16, #tpu.memory_space<vmem>>, vector<1x64xbf16>
    tpu.vector_store %arg18[%c0_174, %c1920], %195 {strides = array<i32>} : memref<1x3136xbf16, #tpu.memory_space<vmem>>, vector<1x64xbf16>,
    %c43 = arith.constant 43 : index
    %c0_175 = arith.constant 0 : index
    %197 = vector.load %arg17[%c43, %c0_175] : memref<70x64xf32, #tpu.memory_space<vmem>>, vector<1x64xf32>
    %198 = arith.truncf %197 : vector<1x64xf32> to vector<1x64xbf16>
    %c0_176 = arith.constant 0 : index
    %c1984 = arith.constant 1984 : index
    %199 = vector.load %arg18[%c0_176, %c1984] : memref<1x3136xbf16, #tpu.memory_space<vmem>>, vector<1x64xbf16>
    tpu.vector_store %arg18[%c0_176, %c1984], %198 {strides = array<i32>} : memref<1x3136xbf16, #tpu.memory_space<vmem>>, vector<1x64xbf16>,
    %c44 = arith.constant 44 : index
    %c0_177 = arith.constant 0 : index
    %200 = vector.load %arg17[%c44, %c0_177] : memref<70x64xf32, #tpu.memory_space<vmem>>, vector<1x64xf32>
    %201 = arith.truncf %200 : vector<1x64xf32> to vector<1x64xbf16>
    %c0_178 = arith.constant 0 : index
    %c2048 = arith.constant 2048 : index
    %202 = vector.load %arg18[%c0_178, %c2048] : memref<1x3136xbf16, #tpu.memory_space<vmem>>, vector<1x64xbf16>
    tpu.vector_store %arg18[%c0_178, %c2048], %201 {strides = array<i32>} : memref<1x3136xbf16, #tpu.memory_space<vmem>>, vector<1x64xbf16>,
    %c45 = arith.constant 45 : index
    %c0_179 = arith.constant 0 : index
    %203 = vector.load %arg17[%c45, %c0_179] : memref<70x64xf32, #tpu.memory_space<vmem>>, vector<1x64xf32>
    %204 = arith.truncf %203 : vector<1x64xf32> to vector<1x64xbf16>
    %c0_180 = arith.constant 0 : index
    %c2112 = arith.constant 2112 : index
    %205 = vector.load %arg18[%c0_180, %c2112] : memref<1x3136xbf16, #tpu.memory_space<vmem>>, vector<1x64xbf16>
    tpu.vector_store %arg18[%c0_180, %c2112], %204 {strides = array<i32>} : memref<1x3136xbf16, #tpu.memory_space<vmem>>, vector<1x64xbf16>,
    %c46 = arith.constant 46 : index
    %c0_181 = arith.constant 0 : index
    %206 = vector.load %arg17[%c46, %c0_181] : memref<70x64xf32, #tpu.memory_space<vmem>>, vector<1x64xf32>
    %207 = arith.truncf %206 : vector<1x64xf32> to vector<1x64xbf16>
    %c0_182 = arith.constant 0 : index
    %c2176 = arith.constant 2176 : index
    %208 = vector.load %arg18[%c0_182, %c2176] : memref<1x3136xbf16, #tpu.memory_space<vmem>>, vector<1x64xbf16>
    tpu.vector_store %arg18[%c0_182, %c2176], %207 {strides = array<i32>} : memref<1x3136xbf16, #tpu.memory_space<vmem>>, vector<1x64xbf16>,
    %c50 = arith.constant 50 : index
    %c0_183 = arith.constant 0 : index
    %209 = vector.load %arg17[%c50, %c0_183] : memref<70x64xf32, #tpu.memory_space<vmem>>, vector<1x64xf32>
    %210 = arith.truncf %209 : vector<1x64xf32> to vector<1x64xbf16>
    %c0_184 = arith.constant 0 : index
    %c2240 = arith.constant 2240 : index
    %211 = vector.load %arg18[%c0_184, %c2240] : memref<1x3136xbf16, #tpu.memory_space<vmem>>, vector<1x64xbf16>
    tpu.vector_store %arg18[%c0_184, %c2240], %210 {strides = array<i32>} : memref<1x3136xbf16, #tpu.memory_space<vmem>>, vector<1x64xbf16>,
    %c51 = arith.constant 51 : index
    %c0_185 = arith.constant 0 : index
    %212 = vector.load %arg17[%c51, %c0_185] : memref<70x64xf32, #tpu.memory_space<vmem>>, vector<1x64xf32>
    %213 = arith.truncf %212 : vector<1x64xf32> to vector<1x64xbf16>
    %c0_186 = arith.constant 0 : index
    %c2304 = arith.constant 2304 : index
    %214 = vector.load %arg18[%c0_186, %c2304] : memref<1x3136xbf16, #tpu.memory_space<vmem>>, vector<1x64xbf16>
    tpu.vector_store %arg18[%c0_186, %c2304], %213 {strides = array<i32>} : memref<1x3136xbf16, #tpu.memory_space<vmem>>, vector<1x64xbf16>,
    %c52 = arith.constant 52 : index
    %c0_187 = arith.constant 0 : index
    %215 = vector.load %arg17[%c52, %c0_187] : memref<70x64xf32, #tpu.memory_space<vmem>>, vector<1x64xf32>
    %216 = arith.truncf %215 : vector<1x64xf32> to vector<1x64xbf16>
    %c0_188 = arith.constant 0 : index
    %c2368 = arith.constant 2368 : index
    %217 = vector.load %arg18[%c0_188, %c2368] : memref<1x3136xbf16, #tpu.memory_space<vmem>>, vector<1x64xbf16>
    tpu.vector_store %arg18[%c0_188, %c2368], %216 {strides = array<i32>} : memref<1x3136xbf16, #tpu.memory_space<vmem>>, vector<1x64xbf16>,
    %c53 = arith.constant 53 : index
    %c0_189 = arith.constant 0 : index
    %218 = vector.load %arg17[%c53, %c0_189] : memref<70x64xf32, #tpu.memory_space<vmem>>, vector<1x64xf32>
    %219 = arith.truncf %218 : vector<1x64xf32> to vector<1x64xbf16>
    %c0_190 = arith.constant 0 : index
    %c2432 = arith.constant 2432 : index
    %220 = vector.load %arg18[%c0_190, %c2432] : memref<1x3136xbf16, #tpu.memory_space<vmem>>, vector<1x64xbf16>
    tpu.vector_store %arg18[%c0_190, %c2432], %219 {strides = array<i32>} : memref<1x3136xbf16, #tpu.memory_space<vmem>>, vector<1x64xbf16>,
    %c54 = arith.constant 54 : index
    %c0_191 = arith.constant 0 : index
    %221 = vector.load %arg17[%c54, %c0_191] : memref<70x64xf32, #tpu.memory_space<vmem>>, vector<1x64xf32>
    %222 = arith.truncf %221 : vector<1x64xf32> to vector<1x64xbf16>
    %c0_192 = arith.constant 0 : index
    %c2496 = arith.constant 2496 : index
    %223 = vector.load %arg18[%c0_192, %c2496] : memref<1x3136xbf16, #tpu.memory_space<vmem>>, vector<1x64xbf16>
    tpu.vector_store %arg18[%c0_192, %c2496], %222 {strides = array<i32>} : memref<1x3136xbf16, #tpu.memory_space<vmem>>, vector<1x64xbf16>,
    %c55 = arith.constant 55 : index
    %c0_193 = arith.constant 0 : index
    %224 = vector.load %arg17[%c55, %c0_193] : memref<70x64xf32, #tpu.memory_space<vmem>>, vector<1x64xf32>
    %225 = arith.truncf %224 : vector<1x64xf32> to vector<1x64xbf16>
    %c0_194 = arith.constant 0 : index
    %c2560 = arith.constant 2560 : index
    %226 = vector.load %arg18[%c0_194, %c2560] : memref<1x3136xbf16, #tpu.memory_space<vmem>>, vector<1x64xbf16>
    tpu.vector_store %arg18[%c0_194, %c2560], %225 {strides = array<i32>} : memref<1x3136xbf16, #tpu.memory_space<vmem>>, vector<1x64xbf16>,
    %c56 = arith.constant 56 : index
    %c0_195 = arith.constant 0 : index
    %227 = vector.load %arg17[%c56, %c0_195] : memref<70x64xf32, #tpu.memory_space<vmem>>, vector<1x64xf32>
    %228 = arith.truncf %227 : vector<1x64xf32> to vector<1x64xbf16>
    %c0_196 = arith.constant 0 : index
    %c2624 = arith.constant 2624 : index
    %229 = vector.load %arg18[%c0_196, %c2624] : memref<1x3136xbf16, #tpu.memory_space<vmem>>, vector<1x64xbf16>
    tpu.vector_store %arg18[%c0_196, %c2624], %228 {strides = array<i32>} : memref<1x3136xbf16, #tpu.memory_space<vmem>>, vector<1x64xbf16>,
    %c60 = arith.constant 60 : index
    %c0_197 = arith.constant 0 : index
    %230 = vector.load %arg17[%c60, %c0_197] : memref<70x64xf32, #tpu.memory_space<vmem>>, vector<1x64xf32>
    %231 = arith.truncf %230 : vector<1x64xf32> to vector<1x64xbf16>
    %c0_198 = arith.constant 0 : index
    %c2688 = arith.constant 2688 : index
    %232 = vector.load %arg18[%c0_198, %c2688] : memref<1x3136xbf16, #tpu.memory_space<vmem>>, vector<1x64xbf16>
    tpu.vector_store %arg18[%c0_198, %c2688], %231 {strides = array<i32>} : memref<1x3136xbf16, #tpu.memory_space<vmem>>, vector<1x64xbf16>,
    %c61 = arith.constant 61 : index
    %c0_199 = arith.constant 0 : index
    %233 = vector.load %arg17[%c61, %c0_199] : memref<70x64xf32, #tpu.memory_space<vmem>>, vector<1x64xf32>
    %234 = arith.truncf %233 : vector<1x64xf32> to vector<1x64xbf16>
    %c0_200 = arith.constant 0 : index
    %c2752 = arith.constant 2752 : index
    %235 = vector.load %arg18[%c0_200, %c2752] : memref<1x3136xbf16, #tpu.memory_space<vmem>>, vector<1x64xbf16>
    tpu.vector_store %arg18[%c0_200, %c2752], %234 {strides = array<i32>} : memref<1x3136xbf16, #tpu.memory_space<vmem>>, vector<1x64xbf16>,
    %c62 = arith.constant 62 : index
    %c0_201 = arith.constant 0 : index
    %236 = vector.load %arg17[%c62, %c0_201] : memref<70x64xf32, #tpu.memory_space<vmem>>, vector<1x64xf32>
    %237 = arith.truncf %236 : vector<1x64xf32> to vector<1x64xbf16>
    %c0_202 = arith.constant 0 : index
    %c2816 = arith.constant 2816 : index
    %238 = vector.load %arg18[%c0_202, %c2816] : memref<1x3136xbf16, #tpu.memory_space<vmem>>, vector<1x64xbf16>
    tpu.vector_store %arg18[%c0_202, %c2816], %237 {strides = array<i32>} : memref<1x3136xbf16, #tpu.memory_space<vmem>>, vector<1x64xbf16>,
    %c63 = arith.constant 63 : index
    %c0_203 = arith.constant 0 : index
    %239 = vector.load %arg17[%c63, %c0_203] : memref<70x64xf32, #tpu.memory_space<vmem>>, vector<1x64xf32>
    %240 = arith.truncf %239 : vector<1x64xf32> to vector<1x64xbf16>
    %c0_204 = arith.constant 0 : index
    %c2880 = arith.constant 2880 : index
    %241 = vector.load %arg18[%c0_204, %c2880] : memref<1x3136xbf16, #tpu.memory_space<vmem>>, vector<1x64xbf16>
    tpu.vector_store %arg18[%c0_204, %c2880], %240 {strides = array<i32>} : memref<1x3136xbf16, #tpu.memory_space<vmem>>, vector<1x64xbf16>,
    %c64_205 = arith.constant 64 : index
    %c0_206 = arith.constant 0 : index
    %242 = vector.load %arg17[%c64_205, %c0_206] : memref<70x64xf32, #tpu.memory_space<vmem>>, vector<1x64xf32>
    %243 = arith.truncf %242 : vector<1x64xf32> to vector<1x64xbf16>
    %c0_207 = arith.constant 0 : index
    %c2944 = arith.constant 2944 : index
    %244 = vector.load %arg18[%c0_207, %c2944] : memref<1x3136xbf16, #tpu.memory_space<vmem>>, vector<1x64xbf16>
    tpu.vector_store %arg18[%c0_207, %c2944], %243 {strides = array<i32>} : memref<1x3136xbf16, #tpu.memory_space<vmem>>, vector<1x64xbf16>,
    %c65 = arith.constant 65 : index
    %c0_208 = arith.constant 0 : index
    %245 = vector.load %arg17[%c65, %c0_208] : memref<70x64xf32, #tpu.memory_space<vmem>>, vector<1x64xf32>
    %246 = arith.truncf %245 : vector<1x64xf32> to vector<1x64xbf16>
    %c0_209 = arith.constant 0 : index
    %c3008 = arith.constant 3008 : index
    %247 = vector.load %arg18[%c0_209, %c3008] : memref<1x3136xbf16, #tpu.memory_space<vmem>>, vector<1x64xbf16>
    tpu.vector_store %arg18[%c0_209, %c3008], %246 {strides = array<i32>} : memref<1x3136xbf16, #tpu.memory_space<vmem>>, vector<1x64xbf16>,
    %c66 = arith.constant 66 : index
    %c0_210 = arith.constant 0 : index
    %248 = vector.load %arg17[%c66, %c0_210] : memref<70x64xf32, #tpu.memory_space<vmem>>, vector<1x64xf32>
    %249 = arith.truncf %248 : vector<1x64xf32> to vector<1x64xbf16>
    %c0_211 = arith.constant 0 : index
    %c3072 = arith.constant 3072 : index
    %250 = vector.load %arg18[%c0_211, %c3072] : memref<1x3136xbf16, #tpu.memory_space<vmem>>, vector<1x64xbf16>
    tpu.vector_store %arg18[%c0_211, %c3072], %249 {strides = array<i32>} : memref<1x3136xbf16, #tpu.memory_space<vmem>>, vector<1x64xbf16>,
    %c0_212 = arith.constant 0 : index
    %c0_213 = arith.constant 0 : index
    %251 = vector.load %arg18[%c0_212, %c0_213] : memref<1x3136xbf16, #tpu.memory_space<vmem>>, vector<1x3136xbf16>
    %c0_214 = arith.constant 0 : index
    %c0_215 = arith.constant 0 : index
    %252 = vector.load %arg7[%c0_214, %c0_215] : memref<3136x512xbf16, #tpu.memory_space<vmem>>, vector<3136x512xbf16>
    %cst_216 = arith.constant dense<0.000000e+00> : vector<1x512xf32>
    %253 = tpu.matmul %251, %252, %cst_216 {dimension_numbers = #tpu.dot_dimension_numbers<[1], [0], [0], [1], [0, 0, 1, 1], [], []>} : vector<1x3136xbf16>, vector<3136x512xbf16>, vector<1x512xf32> -> vector<1x512xf32>
    %c0_217 = arith.constant 0 : index
    %c0_218 = arith.constant 0 : index
    %254 = vector.load %arg8[%c0_217, %c0_218] : memref<1x512xf32, #tpu.memory_space<vmem>>, vector<1x512xf32>
    %255 = arith.addf %253, %254 : vector<1x512xf32>
    %cst_219 = arith.constant 0.000000e+00 : f32
    %256 = vector.broadcast %cst_219 : f32 to vector<1x512xf32>
    %257 = arith.maximumf %255, %256 : vector<1x512xf32>
    %258 = arith.truncf %257 : vector<1x512xf32> to vector<1x512xbf16>
    %c0_220 = arith.constant 0 : index
    %c0_221 = arith.constant 0 : index
    %259 = vector.load %arg9[%c0_220, %c0_221] : memref<512x6xbf16, #tpu.memory_space<vmem>>, vector<512x6xbf16>
    %cst_222 = arith.constant dense<0.000000e+00> : vector<1x6xf32>
    %260 = tpu.matmul %258, %259, %cst_222 {dimension_numbers = #tpu.dot_dimension_numbers<[1], [0], [0], [1], [0, 0, 1, 1], [], []>} : vector<1x512xbf16>, vector<512x6xbf16>, vector<1x6xf32> -> vector<1x6xf32>
    %c0_223 = arith.constant 0 : index
    %c0_224 = arith.constant 0 : index
    %261 = vector.load %arg10[%c0_223, %c0_224] : memref<1x6xf32, #tpu.memory_space<vmem>>, vector<1x6xf32>
    %262 = arith.addf %260, %261 : vector<1x6xf32>
    %c0_225 = arith.constant 0 : index
    %c0_226 = arith.constant 0 : index
    %263 = vector.load %arg11[%c0_225, %c0_226] : memref<1x6xf32, #tpu.memory_space<vmem>>, vector<1x6xf32>
    tpu.vector_store %arg11[%c0_225, %c0_226], %262 {strides = array<i32>} : memref<1x6xf32, #tpu.memory_space<vmem>>, vector<1x6xf32>,
    %264 = tpu.iota {dimensions = array<i32: 1>} : vector<1x6xi32>
    %cst_227 = arith.constant dense<0xFF800000> : vector<1xf32>
    %265 = vector.multi_reduction <maximumf>, %262, %cst_227 [1] : vector<1x6xf32> to vector<1xf32>
    %266 = vector.shape_cast %265 : vector<1xf32> to vector<1x1xf32>
    %267 = vector.broadcast %266 : vector<1x1xf32> to vector<1x6xf32>
    %268 = arith.cmpf oge, %262, %267 : vector<1x6xf32>
    %c6_i32 = arith.constant 6 : i32
    %269 = vector.broadcast %c6_i32 : i32 to vector<1x6xi32>
    %270 = arith.select %268, %264, %269 : vector<1x6xi1>, vector<1x6xi32>
    %cst_228 = arith.constant dense<2147483647> : vector<1xi32>
    %271 = vector.multi_reduction <minsi>, %270, %cst_228 [1] : vector<1x6xi32> to vector<1xi32>
    %272 = vector.shape_cast %271 : vector<1xi32> to vector<1x1xi32>
    %c0_229 = arith.constant 0 : index
    %c0_230 = arith.constant 0 : index
    %273 = vector.load %arg12[%c0_229, %c0_230] : memref<1x1xi32, #tpu.memory_space<vmem>>, vector<1x1xi32>
    tpu.vector_store %arg12[%c0_229, %c0_230], %272 {strides = array<i32>} : memref<1x1xi32, #tpu.memory_space<vmem>>, vector<1x1xi32>,
    return
  }
}

</mosaic_0001>

<llo_original>
// kernel: agent_forward_greedy.1
$region0: #{agent_forward_greedy.1}
  #allocation0 [shape = 'u32[]', space=smem, size = 0x4, offset = 0x4, fixed_abs, tag = 'smem constant byte address 0x4 - core index']
  #allocation1 [shape = 'u32[144,128]{1,0:T(1,128)}', space=vmem, size = 0x12000, scoped, tag = 'internal scratch']
  #allocation2 [shape = 'f32[408,32]{1,0:T(8,128)}', space=vmem, size = 0x33000, scoped, tag = 'scratch operand']
  #allocation3 [shape = 'bf16[90,512]{1,0:T(8,128)(2,1)}', space=vmem, size = 0x18000, scoped, tag = 'scratch operand']
  #allocation4 [shape = 'f32[96,64]{1,0:T(8,128)}', space=vmem, size = 0xc000, scoped, tag = 'scratch operand']
  #allocation5 [shape = 'bf16[70,576]{1,0:T(8,128)(2,1)}', space=vmem, size = 0x16800, scoped, tag = 'scratch operand']
  #allocation6 [shape = 'f32[70,64]{1,0:T(8,128)}', space=vmem, size = 0x9000, scoped, tag = 'scratch operand']
  #allocation7 [shape = 'bf16[1,3136]{1,0:T(2,128)(2,1)}', space=vmem, size = 0x3200, scoped, tag = 'scratch operand']
  %s0 = inlined_call_operand.vmem [shape: bf16[408,256], index: 0, kind: input, shape index: {}]
  %s1 = inlined_call_operand.vmem [shape: bf16[256,32], index: 1, kind: input, shape index: {}]
  %s2 = inlined_call_operand.vmem [shape: f32[1,32], index: 2, kind: input, shape index: {}]
  %s3 = inlined_call_operand.vmem [shape: bf16[512,64], index: 3, kind: input, shape index: {}]
  %s4 = inlined_call_operand.vmem [shape: f32[1,64], index: 4, kind: input, shape index: {}]
  %s5 = inlined_call_operand.vmem [shape: bf16[576,64], index: 5, kind: input, shape index: {}]
  %s6 = inlined_call_operand.vmem [shape: f32[1,64], index: 6, kind: input, shape index: {}]
  %s7 = inlined_call_operand.vmem [shape: bf16[3136,512], index: 7, kind: input, shape index: {}]
  %s8 = inlined_call_operand.vmem [shape: f32[1,512], index: 8, kind: input, shape index: {}]
  %s9 = inlined_call_operand.vmem [shape: bf16[512,6], index: 9, kind: input, shape index: {}]
  %s10 = inlined_call_operand.vmem [shape: f32[1,6], index: 10, kind: input, shape index: {}]
  %s11 = inlined_call_operand.hbm [shape: f32[1,6], index: 11, kind: output, shape index: {0}]
  %s12 = inlined_call_operand.hbm [shape: s32[1,1], index: 12, kind: output, shape index: {1}]
  %13 = xla_tuple %s11, %s12
  %s14 = sld [smem:[#allocation0]]
  $region62: #{agent_forward_greedy.1} parent=0
    _
  %s16 = ssub.s32 1, %s14
  %s17 = scalar_select 0, %s16, %s14
  $region1: #{agent_forward_greedy.1} parent=0
    #allocation8 [shape = 'u8[512]{0}', space=vmem, size = 0x400, scoped, tag = 'output window, operand 0, single buffered']
    #allocation9 [shape = 's32[1]{0}', space=sflag, size = 0x4, scoped, tag = 'scoped memory for agent_forward_greedy.1']
    #allocation10 [shape = 'u8[512]{0}', space=vmem, size = 0x400, scoped, tag = 'output window, operand 1, single buffered']
    #allocation11 [shape = 's32[1]{0}', space=sflag, size = 0x4, scoped, tag = 'scoped memory for agent_forward_greedy.1']
    %18 = vsyncpa [#allocation9], 0
    %19 = vsyncpa [#allocation11], 0
    // Predicated region
    $region2: #{agent_forward_greedy.1} parent=1 // pred_check
      _
    $region3: #{agent_forward_greedy.1} parent=1 // pred_check_branch
      %21 = sbr.rel (0) target = $region5
    $region4: #{agent_forward_greedy.1} parent=1 // pred_region
      _
    $region5: #{agent_forward_greedy.1} parent=1 // pred_fallthru
      _
    // Predicated region
    $region6: #{agent_forward_greedy.1} parent=1 // pred_check
      _
    $region7: #{agent_forward_greedy.1} parent=1 // pred_check_branch
      %23 = sbr.rel (0) target = $region9
    $region8: #{agent_forward_greedy.1} parent=1 // pred_region
      _
    $region9: #{agent_forward_greedy.1} parent=1 // pred_fallthru
      _
    // Predicated region
    $region10: #{agent_forward_greedy.1} parent=1 // pred_check
      _
    $region11: #{agent_forward_greedy.1} parent=1 // pred_check_branch
      %25 = sbr.rel (0) target = $region13
    $region12: #{agent_forward_greedy.1} parent=1 // pred_region
      _
    $region13: #{agent_forward_greedy.1} parent=1 // pred_fallthru
      _
    // Predicated region
    $region14: #{agent_forward_greedy.1} parent=1 // pred_check
      _
    $region15: #{agent_forward_greedy.1} parent=1 // pred_check_branch
      %27 = sbr.rel (0) target = $region17
    $region16: #{agent_forward_greedy.1} parent=1 // pred_region
      _
    $region17: #{agent_forward_greedy.1} parent=1 // pred_fallthru
      _
    // Predicated region
    $region18: #{agent_forward_greedy.1} parent=1 // pred_check
      _
    $region19: #{agent_forward_greedy.1} parent=1 // pred_check_branch
      %29 = sbr.rel (0) target = $region21
    $region20: #{agent_forward_greedy.1} parent=1 // pred_region
      _
    $region21: #{agent_forward_greedy.1} parent=1 // pred_fallthru
      _
    // Predicated region
    $region22: #{agent_forward_greedy.1} parent=1 // pred_check
      _
    $region23: #{agent_forward_greedy.1} parent=1 // pred_check_branch
      %31 = sbr.rel (0) target = $region25
    $region24: #{agent_forward_greedy.1} parent=1 // pred_region
      _
    $region25: #{agent_forward_greedy.1} parent=1 // pred_fallthru
      _
    // Predicated region
    $region26: #{agent_forward_greedy.1} parent=1 // pred_check
      _
    $region27: #{agent_forward_greedy.1} parent=1 // pred_check_branch
      %33 = sbr.rel (0) target = $region29
    $region28: #{agent_forward_greedy.1} parent=1 // pred_region
      _
    $region29: #{agent_forward_greedy.1} parent=1 // pred_fallthru
      _
    // Predicated region
    $region30: #{agent_forward_greedy.1} parent=1 // pred_check
      _
    $region31: #{agent_forward_greedy.1} parent=1 // pred_check_branch
      %35 = sbr.rel (0) target = $region33
    $region32: #{agent_forward_greedy.1} parent=1 // pred_region
      _
    $region33: #{agent_forward_greedy.1} parent=1 // pred_fallthru
      _
    // Predicated region
    $region34: #{agent_forward_greedy.1} parent=1 // pred_check
      _
    $region35: #{agent_forward_greedy.1} parent=1 // pred_check_branch
      %37 = sbr.rel (0) target = $region37
    $region36: #{agent_forward_greedy.1} parent=1 // pred_region
      _
    $region37: #{agent_forward_greedy.1} parent=1 // pred_fallthru
      _
    // Predicated region
    $region38: #{agent_forward_greedy.1} parent=1 // pred_check
      _
    $region39: #{agent_forward_greedy.1} parent=1 // pred_check_branch
      %39 = sbr.rel (0) target = $region41
    $region40: #{agent_forward_greedy.1} parent=1 // pred_region
      _
    $region41: #{agent_forward_greedy.1} parent=1 // pred_fallthru
      _
    // Predicated region
    $region42: #{agent_forward_greedy.1} parent=1 // pred_check
      _
    $region43: #{agent_forward_greedy.1} parent=1 // pred_check_branch
      %41 = sbr.rel (0) target = $region45
    $region44: #{agent_forward_greedy.1} parent=1 // pred_region
      _
    $region45: #{agent_forward_greedy.1} parent=1 // pred_fallthru
      _
    %v43 = vld [vmem:[%s0] sm:$0xff]
    %v44 = vld [vmem:[%s0 + $0x8] sm:$0xff]
    %v45 = vld [vmem:[%s0 + $0x10] sm:$0xff]
    %v46 = vld [vmem:[%s0 + $0x18] sm:$0xff]
    %v47 = vld [vmem:[%s0 + $0x20] sm:$0xff]
    %v48 = vld [vmem:[%s0 + $0x28] sm:$0xff]
    %v49 = vld [vmem:[%s0 + $0x30] sm:$0xff]
    %v50 = vld [vmem:[%s0 + $0x38] sm:$0xff]
    %v51 = vld [vmem:[%s0 + $0x40] sm:$0xff]
    %v52 = vld [vmem:[%s0 + $0x48] sm:$0xff]
    %v53 = vld [vmem:[%s0 + $0x50] sm:$0xff]
    %v54 = vld [vmem:[%s0 + $0x58] sm:$0xff]
    %v55 = vld [vmem:[%s0 + $0x60] sm:$0xff]
    %v56 = vld [vmem:[%s0 + $0x68] sm:$0xff]
    %v57 = vld [vmem:[%s0 + $0x70] sm:$0xff]
    %v58 = vld [vmem:[%s0 + $0x78] sm:$0xff]
    %v59 = vld [vmem:[%s0 + $0x80] sm:$0xff]
    %v60 = vld [vmem:[%s0 + $0x88] sm:$0xff]
    %v61 = vld [vmem:[%s0 + $0x90] sm:$0xff]
    %v62 = vld [vmem:[%s0 + $0x98] sm:$0xff]
    %v63 = vld [vmem:[%s0 + $0xa0] sm:$0xff]
    %v64 = vld [vmem:[%s0 + $0xa8] sm:$0xff]
    %v65 = vld [vmem:[%s0 + $0xb0] sm:$0xff]
    %v66 = vld [vmem:[%s0 + $0xb8] sm:$0xff]
    %v67 = vld [vmem:[%s0 + $0xc0] sm:$0xff]
    %v68 = vld [vmem:[%s0 + $0xc8] sm:$0xff]
    %v69 = vld [vmem:[%s0 + $0xd0] sm:$0xff]
    %v70 = vld [vmem:[%s0 + $0xd8] sm:$0xff]
    %v71 = vld [vmem:[%s0 + $0xe0] sm:$0xff]
    %v72 = vld [vmem:[%s0 + $0xe8] sm:$0xff]
    %v73 = vld [vmem:[%s0 + $0xf0] sm:$0xff]
    %v74 = vld [vmem:[%s0 + $0xf8] sm:$0xff]
    %v75 = vld [vmem:[%s0 + $0x100] sm:$0xff]
    %v76 = vld [vmem:[%s0 + $0x108] sm:$0xff]
    %v77 = vld [vmem:[%s0 + $0x110] sm:$0xff]
    %v78 = vld [vmem:[%s0 + $0x118] sm:$0xff]
    %v79 = vld [vmem:[%s0 + $0x120] sm:$0xff]
    %v80 = vld [vmem:[%s0 + $0x128] sm:$0xff]
    %v81 = vld [vmem:[%s0 + $0x130] sm:$0xff]
    %v82 = vld [vmem:[%s0 + $0x138] sm:$0xff]
    %v83 = vld [vmem:[%s0 + $0x140] sm:$0xff]
    %v84 = vld [vmem:[%s0 + $0x148] sm:$0xff]
    %v85 = vld [vmem:[%s0 + $0x150] sm:$0xff]
    %v86 = vld [vmem:[%s0 + $0x158] sm:$0xff]
    %v87 = vld [vmem:[%s0 + $0x160] sm:$0xff]
    %v88 = vld [vmem:[%s0 + $0x168] sm:$0xff]
    %v89 = vld [vmem:[%s0 + $0x170] sm:$0xff]
    %v90 = vld [vmem:[%s0 + $0x178] sm:$0xff]
    %v91 = vld [vmem:[%s0 + $0x180] sm:$0xff]
    %v92 = vld [vmem:[%s0 + $0x188] sm:$0xff]
    %v93 = vld [vmem:[%s0 + $0x190] sm:$0xff]
    %v94 = vld [vmem:[%s1] sm:$0xf]
    %v95 = vld [vmem:[%s1 + $0x4] sm:$0xf]
    %v96 = vld [vmem:[%s1 + $0x8] sm:$0xf]
    %v97 = vld [vmem:[%s1 + $0xc] sm:$0xf]
    %v98 = vld [vmem:[%s1 + $0x10] sm:$0xf]
    %v99 = vld [vmem:[%s1 + $0x14] sm:$0xf]
    %v100 = vld [vmem:[%s1 + $0x18] sm:$0xf]
    %v101 = vld [vmem:[%s1 + $0x1c] sm:$0xf]
    %v102 = vld [vmem:[%s1 + $0x20] sm:$0xf]
    %v103 = vld [vmem:[%s1 + $0x24] sm:$0xf]
    %v104 = vld [vmem:[%s1 + $0x28] sm:$0xf]
    %v105 = vld [vmem:[%s1 + $0x2c] sm:$0xf]
    %v106 = vld [vmem:[%s1 + $0x30] sm:$0xf]
    %v107 = vld [vmem:[%s1 + $0x34] sm:$0xf]
    %v108 = vld [vmem:[%s1 + $0x38] sm:$0xf]
    %v109 = vld [vmem:[%s1 + $0x3c] sm:$0xf]
    %v110 = vld [vmem:[%s1 + $0x40] sm:$0xf]
    %v111 = vld [vmem:[%s1 + $0x44] sm:$0xf]
    %v112 = vld [vmem:[%s1 + $0x48] sm:$0xf]
    %v113 = vld [vmem:[%s1 + $0x4c] sm:$0xf]
    %v114 = vld [vmem:[%s1 + $0x50] sm:$0xf]
    %v115 = vld [vmem:[%s1 + $0x54] sm:$0xf]
    %v116 = vld [vmem:[%s1 + $0x58] sm:$0xf]
    %v117 = vld [vmem:[%s1 + $0x5c] sm:$0xf]
    %v118 = vld [vmem:[%s1 + $0x60] sm:$0xf]
    %v119 = vld [vmem:[%s1 + $0x64] sm:$0xf]
    %v120 = vld [vmem:[%s1 + $0x68] sm:$0xf]
    %v121 = vld [vmem:[%s1 + $0x6c] sm:$0xf]
    %v122 = vld [vmem:[%s1 + $0x70] sm:$0xf]
    %v123 = vld [vmem:[%s1 + $0x74] sm:$0xf]
    %v124 = vld [vmem:[%s1 + $0x78] sm:$0xf]
    %v125 = vld [vmem:[%s1 + $0x7c] sm:$0xf]
    %v126 = vld [vmem:[%s2] sm:$0x1]
    %v128 = vlaneseq
    %v129 = vshrl.u32 %v128, 7
    %v130 = vsub.s32 0, %v129
    %v131 = vrot.slane %v126, %v130
    %v184 = vunpack.c.l.b16 %v43
    %v185 = vunpack.c.h.b16 %v43
    %v186 = vunpack.c.l.b16 %v44
    %v187 = vunpack.c.h.b16 %v44
    %v188 = vunpack.c.l.b16 %v45
    %v189 = vunpack.c.h.b16 %v45
    %v190 = vunpack.c.l.b16 %v46
    %v191 = vunpack.c.h.b16 %v46
    %v192 = vunpack.c.l.b16 %v47
    %v193 = vunpack.c.h.b16 %v47
    %v194 = vunpack.c.l.b16 %v48
    %v195 = vunpack.c.h.b16 %v48
    %v196 = vunpack.c.l.b16 %v49
    %v197 = vunpack.c.h.b16 %v49
    %v198 = vunpack.c.l.b16 %v50
    %v199 = vunpack.c.h.b16 %v50
    %v200 = vunpack.c.l.b16 %v51
    %v201 = vunpack.c.h.b16 %v51
    %v202 = vunpack.c.l.b16 %v52
    %v203 = vunpack.c.h.b16 %v52
    %v204 = vunpack.c.l.b16 %v53
    %v205 = vunpack.c.h.b16 %v53
    %v206 = vunpack.c.l.b16 %v54
    %v207 = vunpack.c.h.b16 %v54
    %v208 = vunpack.c.l.b16 %v55
    %v209 = vunpack.c.h.b16 %v55
    %v210 = vunpack.c.l.b16 %v56
    %v211 = vunpack.c.h.b16 %v56
    %v212 = vunpack.c.l.b16 %v57
    %v213 = vunpack.c.h.b16 %v57
    %v214 = vunpack.c.l.b16 %v58
    %v215 = vunpack.c.h.b16 %v58
    %v216 = vunpack.c.l.b16 %v59
    %v217 = vunpack.c.h.b16 %v59
    %v218 = vunpack.c.l.b16 %v60
    %v219 = vunpack.c.h.b16 %v60
    %v220 = vunpack.c.l.b16 %v61
    %v221 = vunpack.c.h.b16 %v61
    %v222 = vunpack.c.l.b16 %v62
    %v223 = vunpack.c.h.b16 %v62
    %v224 = vunpack.c.l.b16 %v63
    %v225 = vunpack.c.h.b16 %v63
    %v226 = vunpack.c.l.b16 %v64
    %v227 = vunpack.c.h.b16 %v64
    %v228 = vunpack.c.l.b16 %v65
    %v229 = vunpack.c.h.b16 %v65
    %v230 = vunpack.c.l.b16 %v66
    %v231 = vunpack.c.h.b16 %v66
    %v232 = vunpack.c.l.b16 %v67
    %v233 = vunpack.c.h.b16 %v67
    %v234 = vunpack.c.l.b16 %v68
    %v235 = vunpack.c.h.b16 %v68
    %v236 = vunpack.c.l.b16 %v69
    %v237 = vunpack.c.h.b16 %v69
    %v238 = vunpack.c.l.b16 %v70
    %v239 = vunpack.c.h.b16 %v70
    %v240 = vunpack.c.l.b16 %v71
    %v241 = vunpack.c.h.b16 %v71
    %v242 = vunpack.c.l.b16 %v72
    %v243 = vunpack.c.h.b16 %v72
    %v244 = vunpack.c.l.b16 %v73
    %v245 = vunpack.c.h.b16 %v73
    %v246 = vunpack.c.l.b16 %v74
    %v247 = vunpack.c.h.b16 %v74
    %v248 = vunpack.c.l.b16 %v75
    %v249 = vunpack.c.h.b16 %v75
    %v250 = vunpack.c.l.b16 %v76
    %v251 = vunpack.c.h.b16 %v76
    %v252 = vunpack.c.l.b16 %v77
    %v253 = vunpack.c.h.b16 %v77
    %v254 = vunpack.c.l.b16 %v78
    %v255 = vunpack.c.h.b16 %v78
    %v256 = vunpack.c.l.b16 %v79
    %v257 = vunpack.c.h.b16 %v79
    %v258 = vunpack.c.l.b16 %v80
    %v259 = vunpack.c.h.b16 %v80
    %v260 = vunpack.c.l.b16 %v81
    %v261 = vunpack.c.h.b16 %v81
    %v262 = vunpack.c.l.b16 %v82
    %v263 = vunpack.c.h.b16 %v82
    %v264 = vunpack.c.l.b16 %v83
    %v265 = vunpack.c.h.b16 %v83
    %v266 = vunpack.c.l.b16 %v84
    %v267 = vunpack.c.h.b16 %v84
    %v268 = vunpack.c.l.b16 %v85
    %v269 = vunpack.c.h.b16 %v85
    %v270 = vunpack.c.l.b16 %v86
    %v271 = vunpack.c.h.b16 %v86
    %v272 = vunpack.c.l.b16 %v87
    %v273 = vunpack.c.h.b16 %v87
    %v274 = vunpack.c.l.b16 %v88
    %v275 = vunpack.c.h.b16 %v88
    %v276 = vunpack.c.l.b16 %v89
    %v277 = vunpack.c.h.b16 %v89
    %v278 = vunpack.c.l.b16 %v90
    %v279 = vunpack.c.h.b16 %v90
    %v280 = vunpack.c.l.b16 %v91
    %v281 = vunpack.c.h.b16 %v91
    %v282 = vunpack.c.l.b16 %v92
    %v283 = vunpack.c.h.b16 %v92
    %v284 = vunpack.c.l.b16 %v93
    %v285 = vunpack.c.h.b16 %v93
    %v286 = vpack.c.b16 %v186, %v184
    %v287 = vpack.c.b16 %v187, %v185
    %v288 = vpack.c.b16 %v190, %v188
    %v289 = vpack.c.b16 %v191, %v189
    %v290 = vpack.c.b16 %v194, %v192
    %v291 = vpack.c.b16 %v195, %v193
    %v292 = vpack.c.b16 %v198, %v196
    %v293 = vpack.c.b16 %v199, %v197
    %v294 = vpack.c.b16 %v202, %v200
    %v295 = vpack.c.b16 %v203, %v201
    %v296 = vpack.c.b16 %v206, %v204
    %v297 = vpack.c.b16 %v207, %v205
    %v298 = vpack.c.b16 %v210, %v208
    %v299 = vpack.c.b16 %v211, %v209
    %v300 = vpack.c.b16 %v214, %v212
    %v301 = vpack.c.b16 %v215, %v213
    %v302 = vpack.c.b16 %v218, %v216
    %v303 = vpack.c.b16 %v219, %v217
    %v304 = vpack.c.b16 %v222, %v220
    %v305 = vpack.c.b16 %v223, %v221
    %v306 = vpack.c.b16 %v226, %v224
    %v307 = vpack.c.b16 %v227, %v225
    %v308 = vpack.c.b16 %v230, %v228
    %v309 = vpack.c.b16 %v231, %v229
    %v310 = vpack.c.b16 %v234, %v232
    %v311 = vpack.c.b16 %v235, %v233
    %v312 = vpack.c.b16 %v238, %v236
    %v313 = vpack.c.b16 %v239, %v237
    %v314 = vpack.c.b16 %v242, %v240
    %v315 = vpack.c.b16 %v243, %v241
    %v316 = vpack.c.b16 %v246, %v244
    %v317 = vpack.c.b16 %v247, %v245
    %v318 = vpack.c.b16 %v250, %v248
    %v319 = vpack.c.b16 %v251, %v249
    %v320 = vpack.c.b16 %v254, %v252
    %v321 = vpack.c.b16 %v255, %v253
    %v322 = vpack.c.b16 %v258, %v256
    %v323 = vpack.c.b16 %v259, %v257
    %v324 = vpack.c.b16 %v262, %v260
    %v325 = vpack.c.b16 %v263, %v261
    %v326 = vpack.c.b16 %v266, %v264
    %v327 = vpack.c.b16 %v267, %v265
    %v328 = vpack.c.b16 %v270, %v268
    %v329 = vpack.c.b16 %v271, %v269
    %v330 = vpack.c.b16 %v274, %v272
    %v331 = vpack.c.b16 %v275, %v273
    %v332 = vpack.c.b16 %v278, %v276
    %v333 = vpack.c.b16 %v279, %v277
    %v334 = vpack.c.b16 %v282, %v280
    %v335 = vpack.c.b16 %v283, %v281
    %v336 = vpack.c.b16 %v284, %v284
    %v337 = vpack.c.b16 %v285, %v285
    %v422 = vunpack.c.l.b16 %v94
    %v423 = vunpack.c.l.b16 %v95
    %v424 = vunpack.c.l.b16 %v96
    %v425 = vunpack.c.l.b16 %v97
    %v426 = vunpack.c.l.b16 %v98
    %v427 = vunpack.c.l.b16 %v99
    %v428 = vunpack.c.l.b16 %v100
    %v429 = vunpack.c.l.b16 %v101
    %v430 = vunpack.c.l.b16 %v102
    %v431 = vunpack.c.l.b16 %v103
    %v432 = vunpack.c.l.b16 %v104
    %v433 = vunpack.c.l.b16 %v105
    %v434 = vunpack.c.l.b16 %v106
    %v435 = vunpack.c.l.b16 %v107
    %v436 = vunpack.c.l.b16 %v108
    %v437 = vunpack.c.l.b16 %v109
    %v438 = vunpack.c.l.b16 %v110
    %v439 = vunpack.c.l.b16 %v111
    %v440 = vunpack.c.l.b16 %v112
    %v441 = vunpack.c.l.b16 %v113
    %v442 = vunpack.c.l.b16 %v114
    %v443 = vunpack.c.l.b16 %v115
    %v444 = vunpack.c.l.b16 %v116
    %v445 = vunpack.c.l.b16 %v117
    %v446 = vunpack.c.l.b16 %v118
    %v447 = vunpack.c.l.b16 %v119
    %v448 = vunpack.c.l.b16 %v120
    %v449 = vunpack.c.l.b16 %v121
    %v450 = vunpack.c.l.b16 %v122
    %v451 = vunpack.c.l.b16 %v123
    %v452 = vunpack.c.l.b16 %v124
    %v453 = vunpack.c.l.b16 %v125
    %v454 = vpack.c.b16 %v423, %v422
    %v455 = vpack.c.b16 %v425, %v424
    %v456 = vpack.c.b16 %v427, %v426
    %v457 = vpack.c.b16 %v429, %v428
    %v458 = vpack.c.b16 %v431, %v430
    %v459 = vpack.c.b16 %v433, %v432
    %v460 = vpack.c.b16 %v435, %v434
    %v461 = vpack.c.b16 %v437, %v436
    %v462 = vpack.c.b16 %v439, %v438
    %v463 = vpack.c.b16 %v441, %v440
    %v464 = vpack.c.b16 %v443, %v442
    %v465 = vpack.c.b16 %v445, %v444
    %v466 = vpack.c.b16 %v447, %v446
    %v467 = vpack.c.b16 %v449, %v448
    %v468 = vpack.c.b16 %v451, %v450
    %v469 = vpack.c.b16 %v453, %v452
    %486 = vmatprep.subr.bf16.mxu0 0
    %487 = vmatpush1.bf16.msra.mxu0 %v454
    %488 = vmatprep.subr.bf16.mxu0 0
    %489 = vmatpush1.bf16.msra.mxu0 %v455
    %490 = vmatprep.subr.bf16.mxu0 0
    %491 = vmatpush1.bf16.msra.mxu0 %v456
    %492 = vmatprep.subr.bf16.mxu0 0
    %493 = vmatpush1.bf16.msra.mxu0 %v457
    %494 = vmatprep.subr.bf16.mxu0 0
    %495 = vmatpush1.bf16.msra.mxu0 %v458
    %496 = vmatprep.subr.bf16.mxu0 0
    %497 = vmatpush1.bf16.msra.mxu0 %v459
    %498 = vmatprep.subr.bf16.mxu0 0
    %499 = vmatpush1.bf16.msra.mxu0 %v460
    %500 = vmatprep.subr.bf16.mxu0 0
    %501 = vmatpush1.bf16.msra.mxu0 %v461
    %502 = vmatprep.subr.bf16.mxu0 0
    %503 = vmatpush1.bf16.msra.mxu0 %v462
    %504 = vmatprep.subr.bf16.mxu0 0
    %505 = vmatpush1.bf16.msra.mxu0 %v463
    %506 = vmatprep.subr.bf16.mxu0 0
    %507 = vmatpush1.bf16.msra.mxu0 %v464
    %508 = vmatprep.subr.bf16.mxu0 0
    %509 = vmatpush1.bf16.msra.mxu0 %v465
    %510 = vmatprep.subr.bf16.mxu0 0
    %511 = vmatpush1.bf16.msra.mxu0 %v466
    %512 = vmatprep.subr.bf16.mxu0 0
    %513 = vmatpush1.bf16.msra.mxu0 %v467
    %514 = vmatprep.subr.bf16.mxu0 0
    %515 = vmatpush1.bf16.msra.mxu0 %v468
    %516 = vmatprep.subr.bf16.mxu0 0
    %517 = vmatpush1.bf16.msra.mxu0 %v469
    %518 = vmatprep.mubr.bf16.mxu0 %v287
    %519 = vmatmul.mubr.bf16.gmra.mrb[0].mxu0 %v286
    %v520 = vpop.f32.mrb[0].mxu0
    %v521 = vadd.f32 %v131, %v520
    %v522 = vpop.f32.mrb[0].mxu0
    %v523 = vpop.f32.mrb[0].mxu0
    %v524 = vadd.f32 %v131, %v523
    %v525 = vpop.f32.mrb[0].mxu0
    %526 = vmatprep.mubr.bf16.mxu0 %v289
    %527 = vmatmul.mubr.bf16.gmra.mrb[0].mxu0 %v288
    %v528 = vpop.f32.mrb[0].mxu0
    %v529 = vadd.f32 %v131, %v528
    %v530 = vpop.f32.mrb[0].mxu0
    %v531 = vpop.f32.mrb[0].mxu0
    %v532 = vadd.f32 %v131, %v531
    %v533 = vpop.f32.mrb[0].mxu0
    %534 = vmatprep.mubr.bf16.mxu0 %v291
    %535 = vmatmul.mubr.bf16.gmra.mrb[0].mxu0 %v290
    %v536 = vpop.f32.mrb[0].mxu0
    %v537 = vadd.f32 %v131, %v536
    %v538 = vpop.f32.mrb[0].mxu0
    %v539 = vpop.f32.mrb[0].mxu0
    %v540 = vadd.f32 %v131, %v539
    %v541 = vpop.f32.mrb[0].mxu0
    %542 = vmatprep.mubr.bf16.mxu0 %v293
    %543 = vmatmul.mubr.bf16.gmra.mrb[0].mxu0 %v292
    %v544 = vpop.f32.mrb[0].mxu0
    %v545 = vadd.f32 %v131, %v544
    %v546 = vpop.f32.mrb[0].mxu0
    %v547 = vpop.f32.mrb[0].mxu0
    %v548 = vadd.f32 %v131, %v547
    %v549 = vpop.f32.mrb[0].mxu0
    %550 = vmatprep.mubr.bf16.mxu0 %v295
    %551 = vmatmul.mubr.bf16.gmra.mrb[0].mxu0 %v294
    %v552 = vpop.f32.mrb[0].mxu0
    %v553 = vadd.f32 %v131, %v552
    %v554 = vpop.f32.mrb[0].mxu0
    %v555 = vpop.f32.mrb[0].mxu0
    %v556 = vadd.f32 %v131, %v555
    %v557 = vpop.f32.mrb[0].mxu0
    %558 = vmatprep.mubr.bf16.mxu0 %v297
    %559 = vmatmul.mubr.bf16.gmra.mrb[0].mxu0 %v296
    %v560 = vpop.f32.mrb[0].mxu0
    %v561 = vadd.f32 %v131, %v560
    %v562 = vpop.f32.mrb[0].mxu0
    %v563 = vpop.f32.mrb[0].mxu0
    %v564 = vadd.f32 %v131, %v563
    %v565 = vpop.f32.mrb[0].mxu0
    %566 = vmatprep.mubr.bf16.mxu0 %v299
    %567 = vmatmul.mubr.bf16.gmra.mrb[0].mxu0 %v298
    %v568 = vpop.f32.mrb[0].mxu0
    %v569 = vadd.f32 %v131, %v568
    %v570 = vpop.f32.mrb[0].mxu0
    %v571 = vpop.f32.mrb[0].mxu0
    %v572 = vadd.f32 %v131, %v571
    %v573 = vpop.f32.mrb[0].mxu0
    %574 = vmatprep.mubr.bf16.mxu0 %v301
    %575 = vmatmul.mubr.bf16.gmra.mrb[0].mxu0 %v300
    %v576 = vpop.f32.mrb[0].mxu0
    %v577 = vadd.f32 %v131, %v576
    %v578 = vpop.f32.mrb[0].mxu0
    %v579 = vpop.f32.mrb[0].mxu0
    %v580 = vadd.f32 %v131, %v579
    %v581 = vpop.f32.mrb[0].mxu0
    %582 = vmatprep.mubr.bf16.mxu0 %v303
    %583 = vmatmul.mubr.bf16.gmra.mrb[0].mxu0 %v302
    %v584 = vpop.f32.mrb[0].mxu0
    %v585 = vadd.f32 %v131, %v584
    %v586 = vpop.f32.mrb[0].mxu0
    %v587 = vpop.f32.mrb[0].mxu0
    %v588 = vadd.f32 %v131, %v587
    %v589 = vpop.f32.mrb[0].mxu0
    %590 = vmatprep.mubr.bf16.mxu0 %v305
    %591 = vmatmul.mubr.bf16.gmra.mrb[0].mxu0 %v304
    %v592 = vpop.f32.mrb[0].mxu0
    %v593 = vadd.f32 %v131, %v592
    %v594 = vpop.f32.mrb[0].mxu0
    %v595 = vpop.f32.mrb[0].mxu0
    %v596 = vadd.f32 %v131, %v595
    %v597 = vpop.f32.mrb[0].mxu0
    %598 = vmatprep.mubr.bf16.mxu0 %v307
    %599 = vmatmul.mubr.bf16.gmra.mrb[0].mxu0 %v306
    %v600 = vpop.f32.mrb[0].mxu0
    %v601 = vadd.f32 %v131, %v600
    %v602 = vpop.f32.mrb[0].mxu0
    %v603 = vpop.f32.mrb[0].mxu0
    %v604 = vadd.f32 %v131, %v603
    %v605 = vpop.f32.mrb[0].mxu0
    %606 = vmatprep.mubr.bf16.mxu0 %v309
    %607 = vmatmul.mubr.bf16.gmra.mrb[0].mxu0 %v308
    %v608 = vpop.f32.mrb[0].mxu0
    %v609 = vadd.f32 %v131, %v608
    %v610 = vpop.f32.mrb[0].mxu0
    %v611 = vpop.f32.mrb[0].mxu0
    %v612 = vadd.f32 %v131, %v611
    %v613 = vpop.f32.mrb[0].mxu0
    %614 = vmatprep.mubr.bf16.mxu0 %v311
    %615 = vmatmul.mubr.bf16.gmra.mrb[0].mxu0 %v310
    %v616 = vpop.f32.mrb[0].mxu0
    %v617 = vadd.f32 %v131, %v616
    %v618 = vpop.f32.mrb[0].mxu0
    %v619 = vpop.f32.mrb[0].mxu0
    %v620 = vadd.f32 %v131, %v619
    %v621 = vpop.f32.mrb[0].mxu0
    %622 = vmatprep.mubr.bf16.mxu0 %v313
    %623 = vmatmul.mubr.bf16.gmra.mrb[0].mxu0 %v312
    %v624 = vpop.f32.mrb[0].mxu0
    %v625 = vadd.f32 %v131, %v624
    %v626 = vpop.f32.mrb[0].mxu0
    %v627 = vpop.f32.mrb[0].mxu0
    %v628 = vadd.f32 %v131, %v627
    %v629 = vpop.f32.mrb[0].mxu0
    %630 = vmatprep.mubr.bf16.mxu0 %v315
    %631 = vmatmul.mubr.bf16.gmra.mrb[0].mxu0 %v314
    %v632 = vpop.f32.mrb[0].mxu0
    %v633 = vadd.f32 %v131, %v632
    %v634 = vpop.f32.mrb[0].mxu0
    %v635 = vpop.f32.mrb[0].mxu0
    %v636 = vadd.f32 %v131, %v635
    %v637 = vpop.f32.mrb[0].mxu0
    %638 = vmatprep.mubr.bf16.mxu0 %v317
    %639 = vmatmul.mubr.bf16.gmra.mrb[0].mxu0 %v316
    %v640 = vpop.f32.mrb[0].mxu0
    %v641 = vadd.f32 %v131, %v640
    %v642 = vpop.f32.mrb[0].mxu0
    %v643 = vpop.f32.mrb[0].mxu0
    %v644 = vadd.f32 %v131, %v643
    %v645 = vpop.f32.mrb[0].mxu0
    %646 = vmatprep.mubr.bf16.mxu0 %v319
    %647 = vmatmul.mubr.bf16.gmra.mrb[0].mxu0 %v318
    %v648 = vpop.f32.mrb[0].mxu0
    %v649 = vadd.f32 %v131, %v648
    %v650 = vpop.f32.mrb[0].mxu0
    %v651 = vpop.f32.mrb[0].mxu0
    %v652 = vadd.f32 %v131, %v651
    %v653 = vpop.f32.mrb[0].mxu0
    %654 = vmatprep.mubr.bf16.mxu0 %v321
    %655 = vmatmul.mubr.bf16.gmra.mrb[0].mxu0 %v320
    %v656 = vpop.f32.mrb[0].mxu0
    %v657 = vadd.f32 %v131, %v656
    %v658 = vpop.f32.mrb[0].mxu0
    %v659 = vpop.f32.mrb[0].mxu0
    %v660 = vadd.f32 %v131, %v659
    %v661 = vpop.f32.mrb[0].mxu0
    %662 = vmatprep.mubr.bf16.mxu0 %v323
    %663 = vmatmul.mubr.bf16.gmra.mrb[0].mxu0 %v322
    %v664 = vpop.f32.mrb[0].mxu0
    %v665 = vadd.f32 %v131, %v664
    %v666 = vpop.f32.mrb[0].mxu0
    %v667 = vpop.f32.mrb[0].mxu0
    %v668 = vadd.f32 %v131, %v667
    %v669 = vpop.f32.mrb[0].mxu0
    %670 = vmatprep.mubr.bf16.mxu0 %v325
    %671 = vmatmul.mubr.bf16.gmra.mrb[0].mxu0 %v324
    %v672 = vpop.f32.mrb[0].mxu0
    %v673 = vadd.f32 %v131, %v672
    %v674 = vpop.f32.mrb[0].mxu0
    %v675 = vpop.f32.mrb[0].mxu0
    %v676 = vadd.f32 %v131, %v675
    %v677 = vpop.f32.mrb[0].mxu0
    %678 = vmatprep.mubr.bf16.mxu0 %v327
    %679 = vmatmul.mubr.bf16.gmra.mrb[0].mxu0 %v326
    %v680 = vpop.f32.mrb[0].mxu0
    %v681 = vadd.f32 %v131, %v680
    %v682 = vpop.f32.mrb[0].mxu0
    %v683 = vpop.f32.mrb[0].mxu0
    %v684 = vadd.f32 %v131, %v683
    %v685 = vpop.f32.mrb[0].mxu0
    %686 = vmatprep.mubr.bf16.mxu0 %v329
    %687 = vmatmul.mubr.bf16.gmra.mrb[0].mxu0 %v328
    %v688 = vpop.f32.mrb[0].mxu0
    %v689 = vadd.f32 %v131, %v688
    %v690 = vpop.f32.mrb[0].mxu0
    %v691 = vpop.f32.mrb[0].mxu0
    %v692 = vadd.f32 %v131, %v691
    %v693 = vpop.f32.mrb[0].mxu0
    %694 = vmatprep.mubr.bf16.mxu0 %v331
    %695 = vmatmul.mubr.bf16.gmra.mrb[0].mxu0 %v330
    %v696 = vpop.f32.mrb[0].mxu0
    %v697 = vadd.f32 %v131, %v696
    %v698 = vpop.f32.mrb[0].mxu0
    %v699 = vpop.f32.mrb[0].mxu0
    %v700 = vadd.f32 %v131, %v699
    %v701 = vpop.f32.mrb[0].mxu0
    %702 = vmatprep.mubr.bf16.mxu0 %v333
    %703 = vmatmul.mubr.bf16.gmra.mrb[0].mxu0 %v332
    %v704 = vpop.f32.mrb[0].mxu0
    %v705 = vadd.f32 %v131, %v704
    %v706 = vpop.f32.mrb[0].mxu0
    %v707 = vpop.f32.mrb[0].mxu0
    %v708 = vadd.f32 %v131, %v707
    %v709 = vpop.f32.mrb[0].mxu0
    %710 = vmatprep.mubr.bf16.mxu0 %v335
    %711 = vmatmul.mubr.bf16.gmra.mrb[0].mxu0 %v334
    %v712 = vpop.f32.mrb[0].mxu0
    %v713 = vadd.f32 %v131, %v712
    %v714 = vpop.f32.mrb[0].mxu0
    %v715 = vpop.f32.mrb[0].mxu0
    %v716 = vadd.f32 %v131, %v715
    %v717 = vpop.f32.mrb[0].mxu0
    %718 = vmatprep.mubr.bf16.mxu0 %v337
    %719 = vmatmul.mubr.bf16.gmra.mrb[0].mxu0 %v336
    %v720 = vpop.f32.mrb[0].mxu0
    %v721 = vadd.f32 %v131, %v720
    %v722 = vpop.f32.mrb[0].mxu0
    %v723 = vpop.f32.mrb[0].mxu0
    %v724 = vpop.f32.mrb[0].mxu0
    %725 = vdwg.mxu0
    %v726 = vmax.f32 %v521, 0.0
    %v727 = vmax.f32 %v524, 0.0
    %v728 = vmax.f32 %v529, 0.0
    %v729 = vmax.f32 %v532, 0.0
    %v730 = vmax.f32 %v537, 0.0
    %v731 = vmax.f32 %v540, 0.0
    %v732 = vmax.f32 %v545, 0.0
    %v733 = vmax.f32 %v548, 0.0
    %v734 = vmax.f32 %v553, 0.0
    %v735 = vmax.f32 %v556, 0.0
    %v736 = vmax.f32 %v561, 0.0
    %v737 = vmax.f32 %v564, 0.0
    %v738 = vmax.f32 %v569, 0.0
    %v739 = vmax.f32 %v572, 0.0
    %v740 = vmax.f32 %v577, 0.0
    %v741 = vmax.f32 %v580, 0.0
    %v742 = vmax.f32 %v585, 0.0
    %v743 = vmax.f32 %v588, 0.0
    %v744 = vmax.f32 %v593, 0.0
    %v745 = vmax.f32 %v596, 0.0
    %v746 = vmax.f32 %v601, 0.0
    %v747 = vmax.f32 %v604, 0.0
    %v748 = vmax.f32 %v609, 0.0
    %v749 = vmax.f32 %v612, 0.0
    %v750 = vmax.f32 %v617, 0.0
    %v751 = vmax.f32 %v620, 0.0
    %v752 = vmax.f32 %v625, 0.0
    %v753 = vmax.f32 %v628, 0.0
    %v754 = vmax.f32 %v633, 0.0
    %v755 = vmax.f32 %v636, 0.0
    %v756 = vmax.f32 %v641, 0.0
    %v757 = vmax.f32 %v644, 0.0
    %v758 = vmax.f32 %v649, 0.0
    %v759 = vmax.f32 %v652, 0.0
    %v760 = vmax.f32 %v657, 0.0
    %v761 = vmax.f32 %v660, 0.0
    %v762 = vmax.f32 %v665, 0.0
    %v763 = vmax.f32 %v668, 0.0
    %v764 = vmax.f32 %v673, 0.0
    %v765 = vmax.f32 %v676, 0.0
    %v766 = vmax.f32 %v681, 0.0
    %v767 = vmax.f32 %v684, 0.0
    %v768 = vmax.f32 %v689, 0.0
    %v769 = vmax.f32 %v692, 0.0
    %v770 = vmax.f32 %v697, 0.0
    %v771 = vmax.f32 %v700, 0.0
    %v772 = vmax.f32 %v705, 0.0
    %v773 = vmax.f32 %v708, 0.0
    %v774 = vmax.f32 %v713, 0.0
    %v775 = vmax.f32 %v716, 0.0
    %v776 = vmax.f32 %v721, 0.0
    %vm777 = vcmask 261120
    %778 = vst.msk [vmem:[#allocation2] sm:$0xff] %vm777, %v726
    %779 = vst.msk [vmem:[#allocation2 + $0x8] sm:$0xff] %vm777, %v727
    %780 = vst.msk [vmem:[#allocation2 + $0x10] sm:$0xff] %vm777, %v728
    %781 = vst.msk [vmem:[#allocation2 + $0x18] sm:$0xff] %vm777, %v729
    %782 = vst.msk [vmem:[#allocation2 + $0x20] sm:$0xff] %vm777, %v730
    %783 = vst.msk [vmem:[#allocation2 + $0x28] sm:$0xff] %vm777, %v731
    %784 = vst.msk [vmem:[#allocation2 + $0x30] sm:$0xff] %vm777, %v732
    %785 = vst.msk [vmem:[#allocation2 + $0x38] sm:$0xff] %vm777, %v733
    %786 = vst.msk [vmem:[#allocation2 + $0x40] sm:$0xff] %vm777, %v734
    %787 = vst.msk [vmem:[#allocation2 + $0x48] sm:$0xff] %vm777, %v735
    %788 = vst.msk [vmem:[#allocation2 + $0x50] sm:$0xff] %vm777, %v736
    %789 = vst.msk [vmem:[#allocation2 + $0x58] sm:$0xff] %vm777, %v737
    %790 = vst.msk [vmem:[#allocation2 + $0x60] sm:$0xff] %vm777, %v738
    %791 = vst.msk [vmem:[#allocation2 + $0x68] sm:$0xff] %vm777, %v739
    %792 = vst.msk [vmem:[#allocation2 + $0x70] sm:$0xff] %vm777, %v740
    %793 = vst.msk [vmem:[#allocation2 + $0x78] sm:$0xff] %vm777, %v741
    %794 = vst.msk [vmem:[#allocation2 + $0x80] sm:$0xff] %vm777, %v742
    %795 = vst.msk [vmem:[#allocation2 + $0x88] sm:$0xff] %vm777, %v743
    %796 = vst.msk [vmem:[#allocation2 + $0x90] sm:$0xff] %vm777, %v744
    %797 = vst.msk [vmem:[#allocation2 + $0x98] sm:$0xff] %vm777, %v745
    %798 = vst.msk [vmem:[#allocation2 + $0xa0] sm:$0xff] %vm777, %v746
    %799 = vst.msk [vmem:[#allocation2 + $0xa8] sm:$0xff] %vm777, %v747
    %800 = vst.msk [vmem:[#allocation2 + $0xb0] sm:$0xff] %vm777, %v748
    %801 = vst.msk [vmem:[#allocation2 + $0xb8] sm:$0xff] %vm777, %v749
    %802 = vst.msk [vmem:[#allocation2 + $0xc0] sm:$0xff] %vm777, %v750
    %803 = vst.msk [vmem:[#allocation2 + $0xc8] sm:$0xff] %vm777, %v751
    %804 = vst.msk [vmem:[#allocation2 + $0xd0] sm:$0xff] %vm777, %v752
    %805 = vst.msk [vmem:[#allocation2 + $0xd8] sm:$0xff] %vm777, %v753
    %806 = vst.msk [vmem:[#allocation2 + $0xe0] sm:$0xff] %vm777, %v754
    %807 = vst.msk [vmem:[#allocation2 + $0xe8] sm:$0xff] %vm777, %v755
    %808 = vst.msk [vmem:[#allocation2 + $0xf0] sm:$0xff] %vm777, %v756
    %809 = vst.msk [vmem:[#allocation2 + $0xf8] sm:$0xff] %vm777, %v757
    %810 = vst.msk [vmem:[#allocation2 + $0x100] sm:$0xff] %vm777, %v758
    %811 = vst.msk [vmem:[#allocation2 + $0x108] sm:$0xff] %vm777, %v759
    %812 = vst.msk [vmem:[#allocation2 + $0x110] sm:$0xff] %vm777, %v760
    %813 = vst.msk [vmem:[#allocation2 + $0x118] sm:$0xff] %vm777, %v761
    %814 = vst.msk [vmem:[#allocation2 + $0x120] sm:$0xff] %vm777, %v762
    %815 = vst.msk [vmem:[#allocation2 + $0x128] sm:$0xff] %vm777, %v763
    %816 = vst.msk [vmem:[#allocation2 + $0x130] sm:$0xff] %vm777, %v764
    %817 = vst.msk [vmem:[#allocation2 + $0x138] sm:$0xff] %vm777, %v765
    %818 = vst.msk [vmem:[#allocation2 + $0x140] sm:$0xff] %vm777, %v766
    %819 = vst.msk [vmem:[#allocation2 + $0x148] sm:$0xff] %vm777, %v767
    %820 = vst.msk [vmem:[#allocation2 + $0x150] sm:$0xff] %vm777, %v768
    %821 = vst.msk [vmem:[#allocation2 + $0x158] sm:$0xff] %vm777, %v769
    %822 = vst.msk [vmem:[#allocation2 + $0x160] sm:$0xff] %vm777, %v770
    %823 = vst.msk [vmem:[#allocation2 + $0x168] sm:$0xff] %vm777, %v771
    %824 = vst.msk [vmem:[#allocation2 + $0x170] sm:$0xff] %vm777, %v772
    %825 = vst.msk [vmem:[#allocation2 + $0x178] sm:$0xff] %vm777, %v773
    %826 = vst.msk [vmem:[#allocation2 + $0x180] sm:$0xff] %vm777, %v774
    %827 = vst.msk [vmem:[#allocation2 + $0x188] sm:$0xff] %vm777, %v775
    %828 = vst.msk [vmem:[#allocation2 + $0x190] sm:$0xff] %vm777, %v776
    %v829 = vld [vmem:[#allocation2] sm:$0xff]
    %v830 = vld [vmem:[#allocation2 + $0x8] sm:$0xff]
    %v831 = vld [vmem:[#allocation2 + $0x10] sm:$0xff]
    %v832 = vld [vmem:[#allocation2 + $0x18] sm:$0xff]
    %v833 = vld [vmem:[#allocation2 + $0x20] sm:$0xff]
    %v834 = vld [vmem:[#allocation2 + $0x28] sm:$0xff]
    %v835 = vld [vmem:[#allocation2 + $0x30] sm:$0xff]
    %v836 = vld [vmem:[#allocation2 + $0x38] sm:$0xff]
    %v837 = vld [vmem:[#allocation2 + $0x40] sm:$0xff]
    %v838 = vld [vmem:[#allocation2 + $0x48] sm:$0xff]
    %v839 = vld [vmem:[#allocation2 + $0x50] sm:$0xff]
    %v840 = vld [vmem:[#allocation2 + $0x58] sm:$0x3]
    %v841 = vpack.c.bf16 %v830, %v829
    %v842 = vpack.c.bf16 %v832, %v831
    %v843 = vpack.c.bf16 %v834, %v833
    %v844 = vpack.c.bf16 %v836, %v835
    %v845 = vpack.c.bf16 %v838, %v837
    %v846 = vpack.c.bf16 %v840, %v839
    %v853 = vunpack.c.l.b16 %v841
    %v854 = vunpack.c.h.b16 %v841
    %v855 = vunpack.c.l.b16 %v842
    %v856 = vunpack.c.h.b16 %v842
    %v857 = vunpack.c.l.b16 %v843
    %v858 = vunpack.c.h.b16 %v843
    %v859 = vunpack.c.l.b16 %v844
    %v860 = vunpack.c.h.b16 %v844
    %v861 = vunpack.c.l.b16 %v845
    %v862 = vunpack.c.h.b16 %v845
    %v863 = vunpack.c.l.b16 %v846
    %v864 = vunpack.c.h.b16 %v846
    %v865 = vpack.c.b16 %v853, %v853
    %v866 = vpack.c.b16 %v854, %v854
    %v867 = vpack.c.b16 %v855, %v855
    %v868 = vpack.c.b16 %v856, %v856
    %v869 = vpack.c.b16 %v857, %v857
    %v870 = vpack.c.b16 %v858, %v858
    %v871 = vpack.c.b16 %v859, %v859
    %v872 = vpack.c.b16 %v860, %v860
    %v873 = vpack.c.b16 %v861, %v861
    %v874 = vpack.c.b16 %v862, %v862
    %v875 = vpack.c.b16 %v863, %v863
    %v876 = vpack.c.b16 %v864, %v864
    %vm889 = vcmask 257024
    %890 = vst.msk [vmem:[#allocation3] sm:$0xf] %vm889, %v865
    %891 = vst.msk [vmem:[#allocation3 + $0x10] sm:$0xf] %vm889, %v866
    %892 = vst.msk [vmem:[#allocation3 + $0x20] sm:$0xf] %vm889, %v867
    %893 = vst.msk [vmem:[#allocation3 + $0x30] sm:$0xf] %vm889, %v868
    %894 = vst.msk [vmem:[#allocation3 + $0x40] sm:$0xf] %vm889, %v869
    %895 = vst.msk [vmem:[#allocation3 + $0x50] sm:$0xf] %vm889, %v870
    %896 = vst.msk [vmem:[#allocation3 + $0x60] sm:$0xf] %vm889, %v871
    %897 = vst.msk [vmem:[#allocation3 + $0x70] sm:$0xf] %vm889, %v872
    %898 = vst.msk [vmem:[#allocation3 + $0x80] sm:$0xf] %vm889, %v873
    %899 = vst.msk [vmem:[#allocation3 + $0x90] sm:$0xf] %vm889, %v874
    %900 = vst.msk [vmem:[#allocation3 + $0xa0] sm:$0xf] %vm889, %v875
    %vm901 = vcmask 253952
    %902 = vst.msk [vmem:[#allocation3 + $0xb0] sm:$0x1] %vm901, %v876
    %v903 = vld [vmem:[#allocation2 + $0x64] sm:$0xff]
    %v904 = vld [vmem:[#allocation2 + $0x6c] sm:$0xff]
    %v905 = vld [vmem:[#allocation2 + $0x74] sm:$0xff]
    %v906 = vld [vmem:[#allocation2 + $0x7c] sm:$0xff]
    %v907 = vld [vmem:[#allocation2 + $0x84] sm:$0xff]
    %v908 = vld [vmem:[#allocation2 + $0x8c] sm:$0xff]
    %v909 = vld [vmem:[#allocation2 + $0x94] sm:$0xff]
    %v910 = vld [vmem:[#allocation2 + $0x9c] sm:$0xff]
    %v911 = vld [vmem:[#allocation2 + $0xa4] sm:$0xff]
    %v912 = vld [vmem:[#allocation2 + $0xac] sm:$0xff]
    %v913 = vld [vmem:[#allocation2 + $0xb4] sm:$0xff]
    %v914 = vld [vmem:[#allocation2 + $0xbc] sm:$0x3]
    %v915 = vpack.c.bf16 %v904, %v903
    %v916 = vpack.c.bf16 %v906, %v905
    %v917 = vpack.c.bf16 %v908, %v907
    %v918 = vpack.c.bf16 %v910, %v909
    %v919 = vpack.c.bf16 %v912, %v911
    %v920 = vpack.c.bf16 %v914, %v913
    %v927 = vunpack.c.l.b16 %v915
    %v928 = vunpack.c.h.b16 %v915
    %v929 = vunpack.c.l.b16 %v916
    %v930 = vunpack.c.h.b16 %v916
    %v931 = vunpack.c.l.b16 %v917
    %v932 = vunpack.c.h.b16 %v917
    %v933 = vunpack.c.l.b16 %v918
    %v934 = vunpack.c.h.b16 %v918
    %v935 = vunpack.c.l.b16 %v919
    %v936 = vunpack.c.h.b16 %v919
    %v937 = vunpack.c.l.b16 %v920
    %v938 = vunpack.c.h.b16 %v920
    %v939 = vpack.c.b16 %v927, %v927
    %v940 = vpack.c.b16 %v928, %v928
    %v941 = vpack.c.b16 %v929, %v929
    %v942 = vpack.c.b16 %v930, %v930
    %v943 = vpack.c.b16 %v931, %v931
    %v944 = vpack.c.b16 %v932, %v932
    %v945 = vpack.c.b16 %v933, %v933
    %v946 = vpack.c.b16 %v934, %v934
    %v947 = vpack.c.b16 %v935, %v935
    %v948 = vpack.c.b16 %v936, %v936
    %v949 = vpack.c.b16 %v937, %v937
    %v950 = vpack.c.b16 %v938, %v938
    %951 = vrot.lane.b32.xlu0 %v939, 32
    %v952 = vpop.permute.xlu0 %951
    %953 = vrot.lane.b32.xlu0 %v940, 32
    %v954 = vpop.permute.xlu0 %953
    %955 = vrot.lane.b32.xlu0 %v941, 32
    %v956 = vpop.permute.xlu0 %955
    %957 = vrot.lane.b32.xlu0 %v942, 32
    %v958 = vpop.permute.xlu0 %957
    %959 = vrot.lane.b32.xlu0 %v943, 32
    %v960 = vpop.permute.xlu0 %959
    %961 = vrot.lane.b32.xlu0 %v944, 32
    %v962 = vpop.permute.xlu0 %961
    %963 = vrot.lane.b32.xlu0 %v945, 32
    %v964 = vpop.permute.xlu0 %963
    %965 = vrot.lane.b32.xlu0 %v946, 32
    %v966 = vpop.permute.xlu0 %965
    %967 = vrot.lane.b32.xlu0 %v947, 32
    %v968 = vpop.permute.xlu0 %967
    %969 = vrot.lane.b32.xlu0 %v948, 32
    %v970 = vpop.permute.xlu0 %969
    %971 = vrot.lane.b32.xlu0 %v949, 32
    %v972 = vpop.permute.xlu0 %971
    %973 = vrot.lane.b32.xlu0 %v950, 32
    %v974 = vpop.permute.xlu0 %973
    %vm987 = vcmask 519424
    %988 = vst.msk [vmem:[#allocation3] sm:$0xf] %vm987, %v952
    %989 = vst.msk [vmem:[#allocation3 + $0x10] sm:$0xf] %vm987, %v954
    %990 = vst.msk [vmem:[#allocation3 + $0x20] sm:$0xf] %vm987, %v956
    %991 = vst.msk [vmem:[#allocation3 + $0x30] sm:$0xf] %vm987, %v958
    %992 = vst.msk [vmem:[#allocation3 + $0x40] sm:$0xf] %vm987, %v960
    %993 = vst.msk [vmem:[#allocation3 + $0x50] sm:$0xf] %vm987, %v962
    %994 = vst.msk [vmem:[#allocation3 + $0x60] sm:$0xf] %vm987, %v964
    %995 = vst.msk [vmem:[#allocation3 + $0x70] sm:$0xf] %vm987, %v966
    %996 = vst.msk [vmem:[#allocation3 + $0x80] sm:$0xf] %vm987, %v968
    %997 = vst.msk [vmem:[#allocation3 + $0x90] sm:$0xf] %vm987, %v970
    %998 = vst.msk [vmem:[#allocation3 + $0xa0] sm:$0xf] %vm987, %v972
    %vm999 = vcmask 516352
    %1000 = vst.msk [vmem:[#allocation3 + $0xb0] sm:$0x1] %vm999, %v974
    %v1001 = vld [vmem:[#allocation2 + $0x1] sm:$0xff]
    %v1002 = vld [vmem:[#allocation2 + $0x9] sm:$0xff]
    %v1003 = vld [vmem:[#allocation2 + $0x11] sm:$0xff]
    %v1004 = vld [vmem:[#allocation2 + $0x19] sm:$0xff]
    %v1005 = vld [vmem:[#allocation2 + $0x21] sm:$0xff]
    %v1006 = vld [vmem:[#allocation2 + $0x29] sm:$0xff]
    %v1007 = vld [vmem:[#allocation2 + $0x31] sm:$0xff]
    %v1008 = vld [vmem:[#allocation2 + $0x39] sm:$0xff]
    %v1009 = vld [vmem:[#allocation2 + $0x41] sm:$0xff]
    %v1010 = vld [vmem:[#allocation2 + $0x49] sm:$0xff]
    %v1011 = vld [vmem:[#allocation2 + $0x51] sm:$0xff]
    %v1012 = vld [vmem:[#allocation2 + $0x59] sm:$0x3]
    %v1013 = vpack.c.bf16 %v1002, %v1001
    %v1014 = vpack.c.bf16 %v1004, %v1003
    %v1015 = vpack.c.bf16 %v1006, %v1005
    %v1016 = vpack.c.bf16 %v1008, %v1007
    %v1017 = vpack.c.bf16 %v1010, %v1009
    %v1018 = vpack.c.bf16 %v1012, %v1011
    %v1025 = vunpack.c.l.b16 %v1013
    %v1026 = vunpack.c.h.b16 %v1013
    %v1027 = vunpack.c.l.b16 %v1014
    %v1028 = vunpack.c.h.b16 %v1014
    %v1029 = vunpack.c.l.b16 %v1015
    %v1030 = vunpack.c.h.b16 %v1015
    %v1031 = vunpack.c.l.b16 %v1016
    %v1032 = vunpack.c.h.b16 %v1016
    %v1033 = vunpack.c.l.b16 %v1017
    %v1034 = vunpack.c.h.b16 %v1017
    %v1035 = vunpack.c.l.b16 %v1018
    %v1036 = vunpack.c.h.b16 %v1018
    %v1037 = vpack.c.b16 %v1025, %v1025
    %v1038 = vpack.c.b16 %v1026, %v1026
    %v1039 = vpack.c.b16 %v1027, %v1027
    %v1040 = vpack.c.b16 %v1028, %v1028
    %v1041 = vpack.c.b16 %v1029, %v1029
    %v1042 = vpack.c.b16 %v1030, %v1030
    %v1043 = vpack.c.b16 %v1031, %v1031
    %v1044 = vpack.c.b16 %v1032, %v1032
    %v1045 = vpack.c.b16 %v1033, %v1033
    %v1046 = vpack.c.b16 %v1034, %v1034
    %v1047 = vpack.c.b16 %v1035, %v1035
    %v1048 = vpack.c.b16 %v1036, %v1036
    %1049 = vrot.lane.b32.xlu0 %v1037, 64
    %v1050 = vpop.permute.xlu0 %1049
    %1051 = vrot.lane.b32.xlu0 %v1038, 64
    %v1052 = vpop.permute.xlu0 %1051
    %1053 = vrot.lane.b32.xlu0 %v1039, 64
    %v1054 = vpop.permute.xlu0 %1053
    %1055 = vrot.lane.b32.xlu0 %v1040, 64
    %v1056 = vpop.permute.xlu0 %1055
    %1057 = vrot.lane.b32.xlu0 %v1041, 64
    %v1058 = vpop.permute.xlu0 %1057
    %1059 = vrot.lane.b32.xlu0 %v1042, 64
    %v1060 = vpop.permute.xlu0 %1059
    %1061 = vrot.lane.b32.xlu0 %v1043, 64
    %v1062 = vpop.permute.xlu0 %1061
    %1063 = vrot.lane.b32.xlu0 %v1044, 64
    %v1064 = vpop.permute.xlu0 %1063
    %1065 = vrot.lane.b32.xlu0 %v1045, 64
    %v1066 = vpop.permute.xlu0 %1065
    %1067 = vrot.lane.b32.xlu0 %v1046, 64
    %v1068 = vpop.permute.xlu0 %1067
    %1069 = vrot.lane.b32.xlu0 %v1047, 64
    %v1070 = vpop.permute.xlu0 %1069
    %1071 = vrot.lane.b32.xlu0 %v1048, 64
    %v1072 = vpop.permute.xlu0 %1071
    %vm1085 = vcmask 781824
    %1086 = vst.msk [vmem:[#allocation3] sm:$0xf] %vm1085, %v1050
    %1087 = vst.msk [vmem:[#allocation3 + $0x10] sm:$0xf] %vm1085, %v1052
    %1088 = vst.msk [vmem:[#allocation3 + $0x20] sm:$0xf] %vm1085, %v1054
    %1089 = vst.msk [vmem:[#allocation3 + $0x30] sm:$0xf] %vm1085, %v1056
    %1090 = vst.msk [vmem:[#allocation3 + $0x40] sm:$0xf] %vm1085, %v1058
    %1091 = vst.msk [vmem:[#allocation3 + $0x50] sm:$0xf] %vm1085, %v1060
    %1092 = vst.msk [vmem:[#allocation3 + $0x60] sm:$0xf] %vm1085, %v1062
    %1093 = vst.msk [vmem:[#allocation3 + $0x70] sm:$0xf] %vm1085, %v1064
    %1094 = vst.msk [vmem:[#allocation3 + $0x80] sm:$0xf] %vm1085, %v1066
    %1095 = vst.msk [vmem:[#allocation3 + $0x90] sm:$0xf] %vm1085, %v1068
    %1096 = vst.msk [vmem:[#allocation3 + $0xa0] sm:$0xf] %vm1085, %v1070
    %vm1097 = vcmask 778752
    %1098 = vst.msk [vmem:[#allocation3 + $0xb0] sm:$0x1] %vm1097, %v1072
    %v1099 = vld [vmem:[#allocation2 + $0x65] sm:$0xff]
    %v1100 = vld [vmem:[#allocation2 + $0x6d] sm:$0xff]
    %v1101 = vld [vmem:[#allocation2 + $0x75] sm:$0xff]
    %v1102 = vld [vmem:[#allocation2 + $0x7d] sm:$0xff]
    %v1103 = vld [vmem:[#allocation2 + $0x85] sm:$0xff]
    %v1104 = vld [vmem:[#allocation2 + $0x8d] sm:$0xff]
    %v1105 = vld [vmem:[#allocation2 + $0x95] sm:$0xff]
    %v1106 = vld [vmem:[#allocation2 + $0x9d] sm:$0xff]
    %v1107 = vld [vmem:[#allocation2 + $0xa5] sm:$0xff]
    %v1108 = vld [vmem:[#allocation2 + $0xad] sm:$0xff]
    %v1109 = vld [vmem:[#allocation2 + $0xb5] sm:$0xff]
    %v1110 = vld [vmem:[#allocation2 + $0xbd] sm:$0x3]
    %v1111 = vpack.c.bf16 %v1100, %v1099
    %v1112 = vpack.c.bf16 %v1102, %v1101
    %v1113 = vpack.c.bf16 %v1104, %v1103
    %v1114 = vpack.c.bf16 %v1106, %v1105
    %v1115 = vpack.c.bf16 %v1108, %v1107
    %v1116 = vpack.c.bf16 %v1110, %v1109
    %v1123 = vunpack.c.l.b16 %v1111
    %v1124 = vunpack.c.h.b16 %v1111
    %v1125 = vunpack.c.l.b16 %v1112
    %v1126 = vunpack.c.h.b16 %v1112
    %v1127 = vunpack.c.l.b16 %v1113
    %v1128 = vunpack.c.h.b16 %v1113
    %v1129 = vunpack.c.l.b16 %v1114
    %v1130 = vunpack.c.h.b16 %v1114
    %v1131 = vunpack.c.l.b16 %v1115
    %v1132 = vunpack.c.h.b16 %v1115
    %v1133 = vunpack.c.l.b16 %v1116
    %v1134 = vunpack.c.h.b16 %v1116
    %v1135 = vpack.c.b16 %v1123, %v1123
    %v1136 = vpack.c.b16 %v1124, %v1124
    %v1137 = vpack.c.b16 %v1125, %v1125
    %v1138 = vpack.c.b16 %v1126, %v1126
    %v1139 = vpack.c.b16 %v1127, %v1127
    %v1140 = vpack.c.b16 %v1128, %v1128
    %v1141 = vpack.c.b16 %v1129, %v1129
    %v1142 = vpack.c.b16 %v1130, %v1130
    %v1143 = vpack.c.b16 %v1131, %v1131
    %v1144 = vpack.c.b16 %v1132, %v1132
    %v1145 = vpack.c.b16 %v1133, %v1133
    %v1146 = vpack.c.b16 %v1134, %v1134
    %1147 = vrot.lane.b32.xlu0 %v1135, 96
    %v1148 = vpop.permute.xlu0 %1147
    %1149 = vrot.lane.b32.xlu0 %v1136, 96
    %v1150 = vpop.permute.xlu0 %1149
    %1151 = vrot.lane.b32.xlu0 %v1137, 96
    %v1152 = vpop.permute.xlu0 %1151
    %1153 = vrot.lane.b32.xlu0 %v1138, 96
    %v1154 = vpop.permute.xlu0 %1153
    %1155 = vrot.lane.b32.xlu0 %v1139, 96
    %v1156 = vpop.permute.xlu0 %1155
    %1157 = vrot.lane.b32.xlu0 %v1140, 96
    %v1158 = vpop.permute.xlu0 %1157
    %1159 = vrot.lane.b32.xlu0 %v1141, 96
    %v1160 = vpop.permute.xlu0 %1159
    %1161 = vrot.lane.b32.xlu0 %v1142, 96
    %v1162 = vpop.permute.xlu0 %1161
    %1163 = vrot.lane.b32.xlu0 %v1143, 96
    %v1164 = vpop.permute.xlu0 %1163
    %1165 = vrot.lane.b32.xlu0 %v1144, 96
    %v1166 = vpop.permute.xlu0 %1165
    %1167 = vrot.lane.b32.xlu0 %v1145, 96
    %v1168 = vpop.permute.xlu0 %1167
    %1169 = vrot.lane.b32.xlu0 %v1146, 96
    %v1170 = vpop.permute.xlu0 %1169
    %vm1183 = vcmask 1044224
    %1184 = vst.msk [vmem:[#allocation3] sm:$0xf] %vm1183, %v1148
    %1185 = vst.msk [vmem:[#allocation3 + $0x10] sm:$0xf] %vm1183, %v1150
    %1186 = vst.msk [vmem:[#allocation3 + $0x20] sm:$0xf] %vm1183, %v1152
    %1187 = vst.msk [vmem:[#allocation3 + $0x30] sm:$0xf] %vm1183, %v1154
    %1188 = vst.msk [vmem:[#allocation3 + $0x40] sm:$0xf] %vm1183, %v1156
    %1189 = vst.msk [vmem:[#allocation3 + $0x50] sm:$0xf] %vm1183, %v1158
    %1190 = vst.msk [vmem:[#allocation3 + $0x60] sm:$0xf] %vm1183, %v1160
    %1191 = vst.msk [vmem:[#allocation3 + $0x70] sm:$0xf] %vm1183, %v1162
    %1192 = vst.msk [vmem:[#allocation3 + $0x80] sm:$0xf] %vm1183, %v1164
    %1193 = vst.msk [vmem:[#allocation3 + $0x90] sm:$0xf] %vm1183, %v1166
    %1194 = vst.msk [vmem:[#allocation3 + $0xa0] sm:$0xf] %vm1183, %v1168
    %vm1195 = vcmask 1041152
    %1196 = vst.msk [vmem:[#allocation3 + $0xb0] sm:$0x1] %vm1195, %v1170
    %v1197 = vld [vmem:[#allocation2 + $0xc8] sm:$0xff]
    %v1198 = vld [vmem:[#allocation2 + $0xd0] sm:$0xff]
    %v1199 = vld [vmem:[#allocation2 + $0xd8] sm:$0xff]
    %v1200 = vld [vmem:[#allocation2 + $0xe0] sm:$0xff]
    %v1201 = vld [vmem:[#allocation2 + $0xe8] sm:$0xff]
    %v1202 = vld [vmem:[#allocation2 + $0xf0] sm:$0xff]
    %v1203 = vld [vmem:[#allocation2 + $0xf8] sm:$0xff]
    %v1204 = vld [vmem:[#allocation2 + $0x100] sm:$0xff]
    %v1205 = vld [vmem:[#allocation2 + $0x108] sm:$0xff]
    %v1206 = vld [vmem:[#allocation2 + $0x110] sm:$0xff]
    %v1207 = vld [vmem:[#allocation2 + $0x118] sm:$0xff]
    %v1208 = vld [vmem:[#allocation2 + $0x120] sm:$0x3]
    %v1209 = vpack.c.bf16 %v1198, %v1197
    %v1210 = vpack.c.bf16 %v1200, %v1199
    %v1211 = vpack.c.bf16 %v1202, %v1201
    %v1212 = vpack.c.bf16 %v1204, %v1203
    %v1213 = vpack.c.bf16 %v1206, %v1205
    %v1214 = vpack.c.bf16 %v1208, %v1207
    %v1221 = vunpack.c.l.b16 %v1209
    %v1222 = vunpack.c.h.b16 %v1209
    %v1223 = vunpack.c.l.b16 %v1210
    %v1224 = vunpack.c.h.b16 %v1210
    %v1225 = vunpack.c.l.b16 %v1211
    %v1226 = vunpack.c.h.b16 %v1211
    %v1227 = vunpack.c.l.b16 %v1212
    %v1228 = vunpack.c.h.b16 %v1212
    %v1229 = vunpack.c.l.b16 %v1213
    %v1230 = vunpack.c.h.b16 %v1213
    %v1231 = vunpack.c.l.b16 %v1214
    %v1232 = vunpack.c.h.b16 %v1214
    %v1233 = vpack.c.b16 %v1221, %v1221
    %v1234 = vpack.c.b16 %v1222, %v1222
    %v1235 = vpack.c.b16 %v1223, %v1223
    %v1236 = vpack.c.b16 %v1224, %v1224
    %v1237 = vpack.c.b16 %v1225, %v1225
    %v1238 = vpack.c.b16 %v1226, %v1226
    %v1239 = vpack.c.b16 %v1227, %v1227
    %v1240 = vpack.c.b16 %v1228, %v1228
    %v1241 = vpack.c.b16 %v1229, %v1229
    %v1242 = vpack.c.b16 %v1230, %v1230
    %v1243 = vpack.c.b16 %v1231, %v1231
    %v1244 = vpack.c.b16 %v1232, %v1232
    %1257 = vst.msk [vmem:[#allocation3 + $0x4] sm:$0xf] %vm889, %v1233
    %1258 = vst.msk [vmem:[#allocation3 + $0x14] sm:$0xf] %vm889, %v1234
    %1259 = vst.msk [vmem:[#allocation3 + $0x24] sm:$0xf] %vm889, %v1235
    %1260 = vst.msk [vmem:[#allocation3 + $0x34] sm:$0xf] %vm889, %v1236
    %1261 = vst.msk [vmem:[#allocation3 + $0x44] sm:$0xf] %vm889, %v1237
    %1262 = vst.msk [vmem:[#allocation3 + $0x54] sm:$0xf] %vm889, %v1238
    %1263 = vst.msk [vmem:[#allocation3 + $0x64] sm:$0xf] %vm889, %v1239
    %1264 = vst.msk [vmem:[#allocation3 + $0x74] sm:$0xf] %vm889, %v1240
    %1265 = vst.msk [vmem:[#allocation3 + $0x84] sm:$0xf] %vm889, %v1241
    %1266 = vst.msk [vmem:[#allocation3 + $0x94] sm:$0xf] %vm889, %v1242
    %1267 = vst.msk [vmem:[#allocation3 + $0xa4] sm:$0xf] %vm889, %v1243
    %1268 = vst.msk [vmem:[#allocation3 + $0xb4] sm:$0x1] %vm901, %v1244
    %v1269 = vld [vmem:[#allocation2 + $0x12c] sm:$0xff]
    %v1270 = vld [vmem:[#allocation2 + $0x134] sm:$0xff]
    %v1271 = vld [vmem:[#allocation2 + $0x13c] sm:$0xff]
    %v1272 = vld [vmem:[#allocation2 + $0x144] sm:$0xff]
    %v1273 = vld [vmem:[#allocation2 + $0x14c] sm:$0xff]
    %v1274 = vld [vmem:[#allocation2 + $0x154] sm:$0xff]
    %v1275 = vld [vmem:[#allocation2 + $0x15c] sm:$0xff]
    %v1276 = vld [vmem:[#allocation2 + $0x164] sm:$0xff]
    %v1277 = vld [vmem:[#allocation2 + $0x16c] sm:$0xff]
    %v1278 = vld [vmem:[#allocation2 + $0x174] sm:$0xff]
    %v1279 = vld [vmem:[#allocation2 + $0x17c] sm:$0xff]
    %v1280 = vld [vmem:[#allocation2 + $0x184] sm:$0x3]
    %v1281 = vpack.c.bf16 %v1270, %v1269
    %v1282 = vpack.c.bf16 %v1272, %v1271
    %v1283 = vpack.c.bf16 %v1274, %v1273
    %v1284 = vpack.c.bf16 %v1276, %v1275
    %v1285 = vpack.c.bf16 %v1278, %v1277
    %v1286 = vpack.c.bf16 %v1280, %v1279
    %v1293 = vunpack.c.l.b16 %v1281
    %v1294 = vunpack.c.h.b16 %v1281
    %v1295 = vunpack.c.l.b16 %v1282
    %v1296 = vunpack.c.h.b16 %v1282
    %v1297 = vunpack.c.l.b16 %v1283
    %v1298 = vunpack.c.h.b16 %v1283
    %v1299 = vunpack.c.l.b16 %v1284
    %v1300 = vunpack.c.h.b16 %v1284
    %v1301 = vunpack.c.l.b16 %v1285
    %v1302 = vunpack.c.h.b16 %v1285
    %v1303 = vunpack.c.l.b16 %v1286
    %v1304 = vunpack.c.h.b16 %v1286
    %v1305 = vpack.c.b16 %v1293, %v1293
    %v1306 = vpack.c.b16 %v1294, %v1294
    %v1307 = vpack.c.b16 %v1295, %v1295
    %v1308 = vpack.c.b16 %v1296, %v1296
    %v1309 = vpack.c.b16 %v1297, %v1297
    %v1310 = vpack.c.b16 %v1298, %v1298
    %v1311 = vpack.c.b16 %v1299, %v1299
    %v1312 = vpack.c.b16 %v1300, %v1300
    %v1313 = vpack.c.b16 %v1301, %v1301
    %v1314 = vpack.c.b16 %v1302, %v1302
    %v1315 = vpack.c.b16 %v1303, %v1303
    %v1316 = vpack.c.b16 %v1304, %v1304
    %1317 = vrot.lane.b32.xlu0 %v1305, 32
    %v1318 = vpop.permute.xlu0 %1317
    %1319 = vrot.lane.b32.xlu0 %v1306, 32
    %v1320 = vpop.permute.xlu0 %1319
    %1321 = vrot.lane.b32.xlu0 %v1307, 32
    %v1322 = vpop.permute.xlu0 %1321
    %1323 = vrot.lane.b32.xlu0 %v1308, 32
    %v1324 = vpop.permute.xlu0 %1323
    %1325 = vrot.lane.b32.xlu0 %v1309, 32
    %v1326 = vpop.permute.xlu0 %1325
    %1327 = vrot.lane.b32.xlu0 %v1310, 32
    %v1328 = vpop.permute.xlu0 %1327
    %1329 = vrot.lane.b32.xlu0 %v1311, 32
    %v1330 = vpop.permute.xlu0 %1329
    %1331 = vrot.lane.b32.xlu0 %v1312, 32
    %v1332 = vpop.permute.xlu0 %1331
    %1333 = vrot.lane.b32.xlu0 %v1313, 32
    %v1334 = vpop.permute.xlu0 %1333
    %1335 = vrot.lane.b32.xlu0 %v1314, 32
    %v1336 = vpop.permute.xlu0 %1335
    %1337 = vrot.lane.b32.xlu0 %v1315, 32
    %v1338 = vpop.permute.xlu0 %1337
    %1339 = vrot.lane.b32.xlu0 %v1316, 32
    %v1340 = vpop.permute.xlu0 %1339
    %1353 = vst.msk [vmem:[#allocation3 + $0x4] sm:$0xf] %vm987, %v1318
    %1354 = vst.msk [vmem:[#allocation3 + $0x14] sm:$0xf] %vm987, %v1320
    %1355 = vst.msk [vmem:[#allocation3 + $0x24] sm:$0xf] %vm987, %v1322
    %1356 = vst.msk [vmem:[#allocation3 + $0x34] sm:$0xf] %vm987, %v1324
    %1357 = vst.msk [vmem:[#allocation3 + $0x44] sm:$0xf] %vm987, %v1326
    %1358 = vst.msk [vmem:[#allocation3 + $0x54] sm:$0xf] %vm987, %v1328
    %1359 = vst.msk [vmem:[#allocation3 + $0x64] sm:$0xf] %vm987, %v1330
    %1360 = vst.msk [vmem:[#allocation3 + $0x74] sm:$0xf] %vm987, %v1332
    %1361 = vst.msk [vmem:[#allocation3 + $0x84] sm:$0xf] %vm987, %v1334
    %1362 = vst.msk [vmem:[#allocation3 + $0x94] sm:$0xf] %vm987, %v1336
    %1363 = vst.msk [vmem:[#allocation3 + $0xa4] sm:$0xf] %vm987, %v1338
    %1364 = vst.msk [vmem:[#allocation3 + $0xb4] sm:$0x1] %vm999, %v1340
    %v1365 = vld [vmem:[#allocation2 + $0xc9] sm:$0xff]
    %v1366 = vld [vmem:[#allocation2 + $0xd1] sm:$0xff]
    %v1367 = vld [vmem:[#allocation2 + $0xd9] sm:$0xff]
    %v1368 = vld [vmem:[#allocation2 + $0xe1] sm:$0xff]
    %v1369 = vld [vmem:[#allocation2 + $0xe9] sm:$0xff]
    %v1370 = vld [vmem:[#allocation2 + $0xf1] sm:$0xff]
    %v1371 = vld [vmem:[#allocation2 + $0xf9] sm:$0xff]
    %v1372 = vld [vmem:[#allocation2 + $0x101] sm:$0xff]
    %v1373 = vld [vmem:[#allocation2 + $0x109] sm:$0xff]
    %v1374 = vld [vmem:[#allocation2 + $0x111] sm:$0xff]
    %v1375 = vld [vmem:[#allocation2 + $0x119] sm:$0xff]
    %v1376 = vld [vmem:[#allocation2 + $0x121] sm:$0x3]
    %v1377 = vpack.c.bf16 %v1366, %v1365
    %v1378 = vpack.c.bf16 %v1368, %v1367
    %v1379 = vpack.c.bf16 %v1370, %v1369
    %v1380 = vpack.c.bf16 %v1372, %v1371
    %v1381 = vpack.c.bf16 %v1374, %v1373
    %v1382 = vpack.c.bf16 %v1376, %v1375
    %v1389 = vunpack.c.l.b16 %v1377
    %v1390 = vunpack.c.h.b16 %v1377
    %v1391 = vunpack.c.l.b16 %v1378
    %v1392 = vunpack.c.h.b16 %v1378
    %v1393 = vunpack.c.l.b16 %v1379
    %v1394 = vunpack.c.h.b16 %v1379
    %v1395 = vunpack.c.l.b16 %v1380
    %v1396 = vunpack.c.h.b16 %v1380
    %v1397 = vunpack.c.l.b16 %v1381
    %v1398 = vunpack.c.h.b16 %v1381
    %v1399 = vunpack.c.l.b16 %v1382
    %v1400 = vunpack.c.h.b16 %v1382
    %v1401 = vpack.c.b16 %v1389, %v1389
    %v1402 = vpack.c.b16 %v1390, %v1390
    %v1403 = vpack.c.b16 %v1391, %v1391
    %v1404 = vpack.c.b16 %v1392, %v1392
    %v1405 = vpack.c.b16 %v1393, %v1393
    %v1406 = vpack.c.b16 %v1394, %v1394
    %v1407 = vpack.c.b16 %v1395, %v1395
    %v1408 = vpack.c.b16 %v1396, %v1396
    %v1409 = vpack.c.b16 %v1397, %v1397
    %v1410 = vpack.c.b16 %v1398, %v1398
    %v1411 = vpack.c.b16 %v1399, %v1399
    %v1412 = vpack.c.b16 %v1400, %v1400
    %1413 = vrot.lane.b32.xlu0 %v1401, 64
    %v1414 = vpop.permute.xlu0 %1413
    %1415 = vrot.lane.b32.xlu0 %v1402, 64
    %v1416 = vpop.permute.xlu0 %1415
    %1417 = vrot.lane.b32.xlu0 %v1403, 64
    %v1418 = vpop.permute.xlu0 %1417
    %1419 = vrot.lane.b32.xlu0 %v1404, 64
    %v1420 = vpop.permute.xlu0 %1419
    %1421 = vrot.lane.b32.xlu0 %v1405, 64
    %v1422 = vpop.permute.xlu0 %1421
    %1423 = vrot.lane.b32.xlu0 %v1406, 64
    %v1424 = vpop.permute.xlu0 %1423
    %1425 = vrot.lane.b32.xlu0 %v1407, 64
    %v1426 = vpop.permute.xlu0 %1425
    %1427 = vrot.lane.b32.xlu0 %v1408, 64
    %v1428 = vpop.permute.xlu0 %1427
    %1429 = vrot.lane.b32.xlu0 %v1409, 64
    %v1430 = vpop.permute.xlu0 %1429
    %1431 = vrot.lane.b32.xlu0 %v1410, 64
    %v1432 = vpop.permute.xlu0 %1431
    %1433 = vrot.lane.b32.xlu0 %v1411, 64
    %v1434 = vpop.permute.xlu0 %1433
    %1435 = vrot.lane.b32.xlu0 %v1412, 64
    %v1436 = vpop.permute.xlu0 %1435
    %1449 = vst.msk [vmem:[#allocation3 + $0x4] sm:$0xf] %vm1085, %v1414
    %1450 = vst.msk [vmem:[#allocation3 + $0x14] sm:$0xf] %vm1085, %v1416
    %1451 = vst.msk [vmem:[#allocation3 + $0x24] sm:$0xf] %vm1085, %v1418
    %1452 = vst.msk [vmem:[#allocation3 + $0x34] sm:$0xf] %vm1085, %v1420
    %1453 = vst.msk [vmem:[#allocation3 + $0x44] sm:$0xf] %vm1085, %v1422
    %1454 = vst.msk [vmem:[#allocation3 + $0x54] sm:$0xf] %vm1085, %v1424
    %1455 = vst.msk [vmem:[#allocation3 + $0x64] sm:$0xf] %vm1085, %v1426
    %1456 = vst.msk [vmem:[#allocation3 + $0x74] sm:$0xf] %vm1085, %v1428
    %1457 = vst.msk [vmem:[#allocation3 + $0x84] sm:$0xf] %vm1085, %v1430
    %1458 = vst.msk [vmem:[#allocation3 + $0x94] sm:$0xf] %vm1085, %v1432
    %1459 = vst.msk [vmem:[#allocation3 + $0xa4] sm:$0xf] %vm1085, %v1434
    %1460 = vst.msk [vmem:[#allocation3 + $0xb4] sm:$0x1] %vm1097, %v1436
    %v1461 = vld [vmem:[#allocation2 + $0x12d] sm:$0xff]
    %v1462 = vld [vmem:[#allocation2 + $0x135] sm:$0xff]
    %v1463 = vld [vmem:[#allocation2 + $0x13d] sm:$0xff]
    %v1464 = vld [vmem:[#allocation2 + $0x145] sm:$0xff]
    %v1465 = vld [vmem:[#allocation2 + $0x14d] sm:$0xff]
    %v1466 = vld [vmem:[#allocation2 + $0x155] sm:$0xff]
    %v1467 = vld [vmem:[#allocation2 + $0x15d] sm:$0xff]
    %v1468 = vld [vmem:[#allocation2 + $0x165] sm:$0xff]
    %v1469 = vld [vmem:[#allocation2 + $0x16d] sm:$0xff]
    %v1470 = vld [vmem:[#allocation2 + $0x175] sm:$0xff]
    %v1471 = vld [vmem:[#allocation2 + $0x17d] sm:$0xff]
    %v1472 = vld [vmem:[#allocation2 + $0x185] sm:$0x3]
    %v1473 = vpack.c.bf16 %v1462, %v1461
    %v1474 = vpack.c.bf16 %v1464, %v1463
    %v1475 = vpack.c.bf16 %v1466, %v1465
    %v1476 = vpack.c.bf16 %v1468, %v1467
    %v1477 = vpack.c.bf16 %v1470, %v1469
    %v1478 = vpack.c.bf16 %v1472, %v1471
    %v1485 = vunpack.c.l.b16 %v1473
    %v1486 = vunpack.c.h.b16 %v1473
    %v1487 = vunpack.c.l.b16 %v1474
    %v1488 = vunpack.c.h.b16 %v1474
    %v1489 = vunpack.c.l.b16 %v1475
    %v1490 = vunpack.c.h.b16 %v1475
    %v1491 = vunpack.c.l.b16 %v1476
    %v1492 = vunpack.c.h.b16 %v1476
    %v1493 = vunpack.c.l.b16 %v1477
    %v1494 = vunpack.c.h.b16 %v1477
    %v1495 = vunpack.c.l.b16 %v1478
    %v1496 = vunpack.c.h.b16 %v1478
    %v1497 = vpack.c.b16 %v1485, %v1485
    %v1498 = vpack.c.b16 %v1486, %v1486
    %v1499 = vpack.c.b16 %v1487, %v1487
    %v1500 = vpack.c.b16 %v1488, %v1488
    %v1501 = vpack.c.b16 %v1489, %v1489
    %v1502 = vpack.c.b16 %v1490, %v1490
    %v1503 = vpack.c.b16 %v1491, %v1491
    %v1504 = vpack.c.b16 %v1492, %v1492
    %v1505 = vpack.c.b16 %v1493, %v1493
    %v1506 = vpack.c.b16 %v1494, %v1494
    %v1507 = vpack.c.b16 %v1495, %v1495
    %v1508 = vpack.c.b16 %v1496, %v1496
    %1509 = vrot.lane.b32.xlu0 %v1497, 96
    %v1510 = vpop.permute.xlu0 %1509
    %1511 = vrot.lane.b32.xlu0 %v1498, 96
    %v1512 = vpop.permute.xlu0 %1511
    %1513 = vrot.lane.b32.xlu0 %v1499, 96
    %v1514 = vpop.permute.xlu0 %1513
    %1515 = vrot.lane.b32.xlu0 %v1500, 96
    %v1516 = vpop.permute.xlu0 %1515
    %1517 = vrot.lane.b32.xlu0 %v1501, 96
    %v1518 = vpop.permute.xlu0 %1517
    %1519 = vrot.lane.b32.xlu0 %v1502, 96
    %v1520 = vpop.permute.xlu0 %1519
    %1521 = vrot.lane.b32.xlu0 %v1503, 96
    %v1522 = vpop.permute.xlu0 %1521
    %1523 = vrot.lane.b32.xlu0 %v1504, 96
    %v1524 = vpop.permute.xlu0 %1523
    %1525 = vrot.lane.b32.xlu0 %v1505, 96
    %v1526 = vpop.permute.xlu0 %1525
    %1527 = vrot.lane.b32.xlu0 %v1506, 96
    %v1528 = vpop.permute.xlu0 %1527
    %1529 = vrot.lane.b32.xlu0 %v1507, 96
    %v1530 = vpop.permute.xlu0 %1529
    %1531 = vrot.lane.b32.xlu0 %v1508, 96
    %v1532 = vpop.permute.xlu0 %1531
    %1545 = vst.msk [vmem:[#allocation3 + $0x4] sm:$0xf] %vm1183, %v1510
    %1546 = vst.msk [vmem:[#allocation3 + $0x14] sm:$0xf] %vm1183, %v1512
    %1547 = vst.msk [vmem:[#allocation3 + $0x24] sm:$0xf] %vm1183, %v1514
    %1548 = vst.msk [vmem:[#allocation3 + $0x34] sm:$0xf] %vm1183, %v1516
    %1549 = vst.msk [vmem:[#allocation3 + $0x44] sm:$0xf] %vm1183, %v1518
    %1550 = vst.msk [vmem:[#allocation3 + $0x54] sm:$0xf] %vm1183, %v1520
    %1551 = vst.msk [vmem:[#allocation3 + $0x64] sm:$0xf] %vm1183, %v1522
    %1552 = vst.msk [vmem:[#allocation3 + $0x74] sm:$0xf] %vm1183, %v1524
    %1553 = vst.msk [vmem:[#allocation3 + $0x84] sm:$0xf] %vm1183, %v1526
    %1554 = vst.msk [vmem:[#allocation3 + $0x94] sm:$0xf] %vm1183, %v1528
    %1555 = vst.msk [vmem:[#allocation3 + $0xa4] sm:$0xf] %vm1183, %v1530
    %1556 = vst.msk [vmem:[#allocation3 + $0xb4] sm:$0x1] %vm1195, %v1532
    %v1557 = vld [vmem:[#allocation2 + $0xa] sm:$0xff]
    %v1558 = vld [vmem:[#allocation2 + $0x12] sm:$0xff]
    %v1559 = vld [vmem:[#allocation2 + $0x1a] sm:$0xff]
    %v1560 = vld [vmem:[#allocation2 + $0x22] sm:$0xff]
    %v1561 = vld [vmem:[#allocation2 + $0x2a] sm:$0xff]
    %v1562 = vld [vmem:[#allocation2 + $0x32] sm:$0xff]
    %v1563 = vld [vmem:[#allocation2 + $0x3a] sm:$0xff]
    %v1564 = vld [vmem:[#allocation2 + $0x42] sm:$0xff]
    %v1565 = vld [vmem:[#allocation2 + $0x4a] sm:$0xff]
    %v1566 = vld [vmem:[#allocation2 + $0x52] sm:$0xff]
    %v1567 = vld [vmem:[#allocation2 + $0x5a] sm:$0xff]
    %v1568 = vld [vmem:[#allocation2 + $0x62] sm:$0x3]
    %v1569 = vpack.c.bf16 %v1558, %v1557
    %v1570 = vpack.c.bf16 %v1560, %v1559
    %v1571 = vpack.c.bf16 %v1562, %v1561
    %v1572 = vpack.c.bf16 %v1564, %v1563
    %v1573 = vpack.c.bf16 %v1566, %v1565
    %v1574 = vpack.c.bf16 %v1568, %v1567
    %v1581 = vunpack.c.l.b16 %v1569
    %v1582 = vunpack.c.h.b16 %v1569
    %v1583 = vunpack.c.l.b16 %v1570
    %v1584 = vunpack.c.h.b16 %v1570
    %v1585 = vunpack.c.l.b16 %v1571
    %v1586 = vunpack.c.h.b16 %v1571
    %v1587 = vunpack.c.l.b16 %v1572
    %v1588 = vunpack.c.h.b16 %v1572
    %v1589 = vunpack.c.l.b16 %v1573
    %v1590 = vunpack.c.h.b16 %v1573
    %v1591 = vunpack.c.l.b16 %v1574
    %v1592 = vunpack.c.h.b16 %v1574
    %v1593 = vpack.c.b16 %v1581, %v1581
    %v1594 = vpack.c.b16 %v1582, %v1582
    %v1595 = vpack.c.b16 %v1583, %v1583
    %v1596 = vpack.c.b16 %v1584, %v1584
    %v1597 = vpack.c.b16 %v1585, %v1585
    %v1598 = vpack.c.b16 %v1586, %v1586
    %v1599 = vpack.c.b16 %v1587, %v1587
    %v1600 = vpack.c.b16 %v1588, %v1588
    %v1601 = vpack.c.b16 %v1589, %v1589
    %v1602 = vpack.c.b16 %v1590, %v1590
    %v1603 = vpack.c.b16 %v1591, %v1591
    %v1604 = vpack.c.b16 %v1592, %v1592
    %1617 = vst.msk [vmem:[#allocation3 + $0x8] sm:$0xf] %vm889, %v1593
    %1618 = vst.msk [vmem:[#allocation3 + $0x18] sm:$0xf] %vm889, %v1594
    %1619 = vst.msk [vmem:[#allocation3 + $0x28] sm:$0xf] %vm889, %v1595
    %1620 = vst.msk [vmem:[#allocation3 + $0x38] sm:$0xf] %vm889, %v1596
    %1621 = vst.msk [vmem:[#allocation3 + $0x48] sm:$0xf] %vm889, %v1597
    %1622 = vst.msk [vmem:[#allocation3 + $0x58] sm:$0xf] %vm889, %v1598
    %1623 = vst.msk [vmem:[#allocation3 + $0x68] sm:$0xf] %vm889, %v1599
    %1624 = vst.msk [vmem:[#allocation3 + $0x78] sm:$0xf] %vm889, %v1600
    %1625 = vst.msk [vmem:[#allocation3 + $0x88] sm:$0xf] %vm889, %v1601
    %1626 = vst.msk [vmem:[#allocation3 + $0x98] sm:$0xf] %vm889, %v1602
    %1627 = vst.msk [vmem:[#allocation3 + $0xa8] sm:$0xf] %vm889, %v1603
    %1628 = vst.msk [vmem:[#allocation3 + $0xb8] sm:$0x1] %vm901, %v1604
    %v1629 = vld [vmem:[#allocation2 + $0x6e] sm:$0xff]
    %v1630 = vld [vmem:[#allocation2 + $0x76] sm:$0xff]
    %v1631 = vld [vmem:[#allocation2 + $0x7e] sm:$0xff]
    %v1632 = vld [vmem:[#allocation2 + $0x86] sm:$0xff]
    %v1633 = vld [vmem:[#allocation2 + $0x8e] sm:$0xff]
    %v1634 = vld [vmem:[#allocation2 + $0x96] sm:$0xff]
    %v1635 = vld [vmem:[#allocation2 + $0x9e] sm:$0xff]
    %v1636 = vld [vmem:[#allocation2 + $0xa6] sm:$0xff]
    %v1637 = vld [vmem:[#allocation2 + $0xae] sm:$0xff]
    %v1638 = vld [vmem:[#allocation2 + $0xb6] sm:$0xff]
    %v1639 = vld [vmem:[#allocation2 + $0xbe] sm:$0xff]
    %v1640 = vld [vmem:[#allocation2 + $0xc6] sm:$0x3]
    %v1641 = vpack.c.bf16 %v1630, %v1629
    %v1642 = vpack.c.bf16 %v1632, %v1631
    %v1643 = vpack.c.bf16 %v1634, %v1633
    %v1644 = vpack.c.bf16 %v1636, %v1635
    %v1645 = vpack.c.bf16 %v1638, %v1637
    %v1646 = vpack.c.bf16 %v1640, %v1639
    %v1653 = vunpack.c.l.b16 %v1641
    %v1654 = vunpack.c.h.b16 %v1641
    %v1655 = vunpack.c.l.b16 %v1642
    %v1656 = vunpack.c.h.b16 %v1642
    %v1657 = vunpack.c.l.b16 %v1643
    %v1658 = vunpack.c.h.b16 %v1643
    %v1659 = vunpack.c.l.b16 %v1644
    %v1660 = vunpack.c.h.b16 %v1644
    %v1661 = vunpack.c.l.b16 %v1645
    %v1662 = vunpack.c.h.b16 %v1645
    %v1663 = vunpack.c.l.b16 %v1646
    %v1664 = vunpack.c.h.b16 %v1646
    %v1665 = vpack.c.b16 %v1653, %v1653
    %v1666 = vpack.c.b16 %v1654, %v1654
    %v1667 = vpack.c.b16 %v1655, %v1655
    %v1668 = vpack.c.b16 %v1656, %v1656
    %v1669 = vpack.c.b16 %v1657, %v1657
    %v1670 = vpack.c.b16 %v1658, %v1658
    %v1671 = vpack.c.b16 %v1659, %v1659
    %v1672 = vpack.c.b16 %v1660, %v1660
    %v1673 = vpack.c.b16 %v1661, %v1661
    %v1674 = vpack.c.b16 %v1662, %v1662
    %v1675 = vpack.c.b16 %v1663, %v1663
    %v1676 = vpack.c.b16 %v1664, %v1664
    %1677 = vrot.lane.b32.xlu0 %v1665, 32
    %v1678 = vpop.permute.xlu0 %1677
    %1679 = vrot.lane.b32.xlu0 %v1666, 32
    %v1680 = vpop.permute.xlu0 %1679
    %1681 = vrot.lane.b32.xlu0 %v1667, 32
    %v1682 = vpop.permute.xlu0 %1681
    %1683 = vrot.lane.b32.xlu0 %v1668, 32
    %v1684 = vpop.permute.xlu0 %1683
    %1685 = vrot.lane.b32.xlu0 %v1669, 32
    %v1686 = vpop.permute.xlu0 %1685
    %1687 = vrot.lane.b32.xlu0 %v1670, 32
    %v1688 = vpop.permute.xlu0 %1687
    %1689 = vrot.lane.b32.xlu0 %v1671, 32
    %v1690 = vpop.permute.xlu0 %1689
    %1691 = vrot.lane.b32.xlu0 %v1672, 32
    %v1692 = vpop.permute.xlu0 %1691
    %1693 = vrot.lane.b32.xlu0 %v1673, 32
    %v1694 = vpop.permute.xlu0 %1693
    %1695 = vrot.lane.b32.xlu0 %v1674, 32
    %v1696 = vpop.permute.xlu0 %1695
    %1697 = vrot.lane.b32.xlu0 %v1675, 32
    %v1698 = vpop.permute.xlu0 %1697
    %1699 = vrot.lane.b32.xlu0 %v1676, 32
    %v1700 = vpop.permute.xlu0 %1699
    %1713 = vst.msk [vmem:[#allocation3 + $0x8] sm:$0xf] %vm987, %v1678
    %1714 = vst.msk [vmem:[#allocation3 + $0x18] sm:$0xf] %vm987, %v1680
    %1715 = vst.msk [vmem:[#allocation3 + $0x28] sm:$0xf] %vm987, %v1682
    %1716 = vst.msk [vmem:[#allocation3 + $0x38] sm:$0xf] %vm987, %v1684
    %1717 = vst.msk [vmem:[#allocation3 + $0x48] sm:$0xf] %vm987, %v1686
    %1718 = vst.msk [vmem:[#allocation3 + $0x58] sm:$0xf] %vm987, %v1688
    %1719 = vst.msk [vmem:[#allocation3 + $0x68] sm:$0xf] %vm987, %v1690
    %1720 = vst.msk [vmem:[#allocation3 + $0x78] sm:$0xf] %vm987, %v1692
    %1721 = vst.msk [vmem:[#allocation3 + $0x88] sm:$0xf] %vm987, %v1694
    %1722 = vst.msk [vmem:[#allocation3 + $0x98] sm:$0xf] %vm987, %v1696
    %1723 = vst.msk [vmem:[#allocation3 + $0xa8] sm:$0xf] %vm987, %v1698
    %1724 = vst.msk [vmem:[#allocation3 + $0xb8] sm:$0x1] %vm999, %v1700
    %v1725 = vld [vmem:[#allocation2 + $0xb] sm:$0xff]
    %v1726 = vld [vmem:[#allocation2 + $0x13] sm:$0xff]
    %v1727 = vld [vmem:[#allocation2 + $0x1b] sm:$0xff]
    %v1728 = vld [vmem:[#allocation2 + $0x23] sm:$0xff]
    %v1729 = vld [vmem:[#allocation2 + $0x2b] sm:$0xff]
    %v1730 = vld [vmem:[#allocation2 + $0x33] sm:$0xff]
    %v1731 = vld [vmem:[#allocation2 + $0x3b] sm:$0xff]
    %v1732 = vld [vmem:[#allocation2 + $0x43] sm:$0xff]
    %v1733 = vld [vmem:[#allocation2 + $0x4b] sm:$0xff]
    %v1734 = vld [vmem:[#allocation2 + $0x53] sm:$0xff]
    %v1735 = vld [vmem:[#allocation2 + $0x5b] sm:$0xff]
    %v1736 = vld [vmem:[#allocation2 + $0x63] sm:$0x3]
    %v1737 = vpack.c.bf16 %v1726, %v1725
    %v1738 = vpack.c.bf16 %v1728, %v1727
    %v1739 = vpack.c.bf16 %v1730, %v1729
    %v1740 = vpack.c.bf16 %v1732, %v1731
    %v1741 = vpack.c.bf16 %v1734, %v1733
    %v1742 = vpack.c.bf16 %v1736, %v1735
    %v1749 = vunpack.c.l.b16 %v1737
    %v1750 = vunpack.c.h.b16 %v1737
    %v1751 = vunpack.c.l.b16 %v1738
    %v1752 = vunpack.c.h.b16 %v1738
    %v1753 = vunpack.c.l.b16 %v1739
    %v1754 = vunpack.c.h.b16 %v1739
    %v1755 = vunpack.c.l.b16 %v1740
    %v1756 = vunpack.c.h.b16 %v1740
    %v1757 = vunpack.c.l.b16 %v1741
    %v1758 = vunpack.c.h.b16 %v1741
    %v1759 = vunpack.c.l.b16 %v1742
    %v1760 = vunpack.c.h.b16 %v1742
    %v1761 = vpack.c.b16 %v1749, %v1749
    %v1762 = vpack.c.b16 %v1750, %v1750
    %v1763 = vpack.c.b16 %v1751, %v1751
    %v1764 = vpack.c.b16 %v1752, %v1752
    %v1765 = vpack.c.b16 %v1753, %v1753
    %v1766 = vpack.c.b16 %v1754, %v1754
    %v1767 = vpack.c.b16 %v1755, %v1755
    %v1768 = vpack.c.b16 %v1756, %v1756
    %v1769 = vpack.c.b16 %v1757, %v1757
    %v1770 = vpack.c.b16 %v1758, %v1758
    %v1771 = vpack.c.b16 %v1759, %v1759
    %v1772 = vpack.c.b16 %v1760, %v1760
    %1773 = vrot.lane.b32.xlu0 %v1761, 64
    %v1774 = vpop.permute.xlu0 %1773
    %1775 = vrot.lane.b32.xlu0 %v1762, 64
    %v1776 = vpop.permute.xlu0 %1775
    %1777 = vrot.lane.b32.xlu0 %v1763, 64
    %v1778 = vpop.permute.xlu0 %1777
    %1779 = vrot.lane.b32.xlu0 %v1764, 64
    %v1780 = vpop.permute.xlu0 %1779
    %1781 = vrot.lane.b32.xlu0 %v1765, 64
    %v1782 = vpop.permute.xlu0 %1781
    %1783 = vrot.lane.b32.xlu0 %v1766, 64
    %v1784 = vpop.permute.xlu0 %1783
    %1785 = vrot.lane.b32.xlu0 %v1767, 64
    %v1786 = vpop.permute.xlu0 %1785
    %1787 = vrot.lane.b32.xlu0 %v1768, 64
    %v1788 = vpop.permute.xlu0 %1787
    %1789 = vrot.lane.b32.xlu0 %v1769, 64
    %v1790 = vpop.permute.xlu0 %1789
    %1791 = vrot.lane.b32.xlu0 %v1770, 64
    %v1792 = vpop.permute.xlu0 %1791
    %1793 = vrot.lane.b32.xlu0 %v1771, 64
    %v1794 = vpop.permute.xlu0 %1793
    %1795 = vrot.lane.b32.xlu0 %v1772, 64
    %v1796 = vpop.permute.xlu0 %1795
    %1809 = vst.msk [vmem:[#allocation3 + $0x8] sm:$0xf] %vm1085, %v1774
    %1810 = vst.msk [vmem:[#allocation3 + $0x18] sm:$0xf] %vm1085, %v1776
    %1811 = vst.msk [vmem:[#allocation3 + $0x28] sm:$0xf] %vm1085, %v1778
    %1812 = vst.msk [vmem:[#allocation3 + $0x38] sm:$0xf] %vm1085, %v1780
    %1813 = vst.msk [vmem:[#allocation3 + $0x48] sm:$0xf] %vm1085, %v1782
    %1814 = vst.msk [vmem:[#allocation3 + $0x58] sm:$0xf] %vm1085, %v1784
    %1815 = vst.msk [vmem:[#allocation3 + $0x68] sm:$0xf] %vm1085, %v1786
    %1816 = vst.msk [vmem:[#allocation3 + $0x78] sm:$0xf] %vm1085, %v1788
    %1817 = vst.msk [vmem:[#allocation3 + $0x88] sm:$0xf] %vm1085, %v1790
    %1818 = vst.msk [vmem:[#allocation3 + $0x98] sm:$0xf] %vm1085, %v1792
    %1819 = vst.msk [vmem:[#allocation3 + $0xa8] sm:$0xf] %vm1085, %v1794
    %1820 = vst.msk [vmem:[#allocation3 + $0xb8] sm:$0x1] %vm1097, %v1796
    %v1821 = vld [vmem:[#allocation2 + $0x6f] sm:$0xff]
    %v1822 = vld [vmem:[#allocation2 + $0x77] sm:$0xff]
    %v1823 = vld [vmem:[#allocation2 + $0x7f] sm:$0xff]
    %v1824 = vld [vmem:[#allocation2 + $0x87] sm:$0xff]
    %v1825 = vld [vmem:[#allocation2 + $0x8f] sm:$0xff]
    %v1826 = vld [vmem:[#allocation2 + $0x97] sm:$0xff]
    %v1827 = vld [vmem:[#allocation2 + $0x9f] sm:$0xff]
    %v1828 = vld [vmem:[#allocation2 + $0xa7] sm:$0xff]
    %v1829 = vld [vmem:[#allocation2 + $0xaf] sm:$0xff]
    %v1830 = vld [vmem:[#allocation2 + $0xb7] sm:$0xff]
    %v1831 = vld [vmem:[#allocation2 + $0xbf] sm:$0xff]
    %v1832 = vld [vmem:[#allocation2 + $0xc7] sm:$0x3]
    %v1833 = vpack.c.bf16 %v1822, %v1821
    %v1834 = vpack.c.bf16 %v1824, %v1823
    %v1835 = vpack.c.bf16 %v1826, %v1825
    %v1836 = vpack.c.bf16 %v1828, %v1827
    %v1837 = vpack.c.bf16 %v1830, %v1829
    %v1838 = vpack.c.bf16 %v1832, %v1831
    %v1845 = vunpack.c.l.b16 %v1833
    %v1846 = vunpack.c.h.b16 %v1833
    %v1847 = vunpack.c.l.b16 %v1834
    %v1848 = vunpack.c.h.b16 %v1834
    %v1849 = vunpack.c.l.b16 %v1835
    %v1850 = vunpack.c.h.b16 %v1835
    %v1851 = vunpack.c.l.b16 %v1836
    %v1852 = vunpack.c.h.b16 %v1836
    %v1853 = vunpack.c.l.b16 %v1837
    %v1854 = vunpack.c.h.b16 %v1837
    %v1855 = vunpack.c.l.b16 %v1838
    %v1856 = vunpack.c.h.b16 %v1838
    %v1857 = vpack.c.b16 %v1845, %v1845
    %v1858 = vpack.c.b16 %v1846, %v1846
    %v1859 = vpack.c.b16 %v1847, %v1847
    %v1860 = vpack.c.b16 %v1848, %v1848
    %v1861 = vpack.c.b16 %v1849, %v1849
    %v1862 = vpack.c.b16 %v1850, %v1850
    %v1863 = vpack.c.b16 %v1851, %v1851
    %v1864 = vpack.c.b16 %v1852, %v1852
    %v1865 = vpack.c.b16 %v1853, %v1853
    %v1866 = vpack.c.b16 %v1854, %v1854
    %v1867 = vpack.c.b16 %v1855, %v1855
    %v1868 = vpack.c.b16 %v1856, %v1856
    %1869 = vrot.lane.b32.xlu0 %v1857, 96
    %v1870 = vpop.permute.xlu0 %1869
    %1871 = vrot.lane.b32.xlu0 %v1858, 96
    %v1872 = vpop.permute.xlu0 %1871
    %1873 = vrot.lane.b32.xlu0 %v1859, 96
    %v1874 = vpop.permute.xlu0 %1873
    %1875 = vrot.lane.b32.xlu0 %v1860, 96
    %v1876 = vpop.permute.xlu0 %1875
    %1877 = vrot.lane.b32.xlu0 %v1861, 96
    %v1878 = vpop.permute.xlu0 %1877
    %1879 = vrot.lane.b32.xlu0 %v1862, 96
    %v1880 = vpop.permute.xlu0 %1879
    %1881 = vrot.lane.b32.xlu0 %v1863, 96
    %v1882 = vpop.permute.xlu0 %1881
    %1883 = vrot.lane.b32.xlu0 %v1864, 96
    %v1884 = vpop.permute.xlu0 %1883
    %1885 = vrot.lane.b32.xlu0 %v1865, 96
    %v1886 = vpop.permute.xlu0 %1885
    %1887 = vrot.lane.b32.xlu0 %v1866, 96
    %v1888 = vpop.permute.xlu0 %1887
    %1889 = vrot.lane.b32.xlu0 %v1867, 96
    %v1890 = vpop.permute.xlu0 %1889
    %1891 = vrot.lane.b32.xlu0 %v1868, 96
    %v1892 = vpop.permute.xlu0 %1891
    %1905 = vst.msk [vmem:[#allocation3 + $0x8] sm:$0xf] %vm1183, %v1870
    %1906 = vst.msk [vmem:[#allocation3 + $0x18] sm:$0xf] %vm1183, %v1872
    %1907 = vst.msk [vmem:[#allocation3 + $0x28] sm:$0xf] %vm1183, %v1874
    %1908 = vst.msk [vmem:[#allocation3 + $0x38] sm:$0xf] %vm1183, %v1876
    %1909 = vst.msk [vmem:[#allocation3 + $0x48] sm:$0xf] %vm1183, %v1878
    %1910 = vst.msk [vmem:[#allocation3 + $0x58] sm:$0xf] %vm1183, %v1880
    %1911 = vst.msk [vmem:[#allocation3 + $0x68] sm:$0xf] %vm1183, %v1882
    %1912 = vst.msk [vmem:[#allocation3 + $0x78] sm:$0xf] %vm1183, %v1884
    %1913 = vst.msk [vmem:[#allocation3 + $0x88] sm:$0xf] %vm1183, %v1886
    %1914 = vst.msk [vmem:[#allocation3 + $0x98] sm:$0xf] %vm1183, %v1888
    %1915 = vst.msk [vmem:[#allocation3 + $0xa8] sm:$0xf] %vm1183, %v1890
    %1916 = vst.msk [vmem:[#allocation3 + $0xb8] sm:$0x1] %vm1195, %v1892
    %v1917 = vld [vmem:[#allocation2 + $0xd2] sm:$0xff]
    %v1918 = vld [vmem:[#allocation2 + $0xda] sm:$0xff]
    %v1919 = vld [vmem:[#allocation2 + $0xe2] sm:$0xff]
    %v1920 = vld [vmem:[#allocation2 + $0xea] sm:$0xff]
    %v1921 = vld [vmem:[#allocation2 + $0xf2] sm:$0xff]
    %v1922 = vld [vmem:[#allocation2 + $0xfa] sm:$0xff]
    %v1923 = vld [vmem:[#allocation2 + $0x102] sm:$0xff]
    %v1924 = vld [vmem:[#allocation2 + $0x10a] sm:$0xff]
    %v1925 = vld [vmem:[#allocation2 + $0x112] sm:$0xff]
    %v1926 = vld [vmem:[#allocation2 + $0x11a] sm:$0xff]
    %v1927 = vld [vmem:[#allocation2 + $0x122] sm:$0xff]
    %v1928 = vld [vmem:[#allocation2 + $0x12a] sm:$0x3]
    %v1929 = vpack.c.bf16 %v1918, %v1917
    %v1930 = vpack.c.bf16 %v1920, %v1919
    %v1931 = vpack.c.bf16 %v1922, %v1921
    %v1932 = vpack.c.bf16 %v1924, %v1923
    %v1933 = vpack.c.bf16 %v1926, %v1925
    %v1934 = vpack.c.bf16 %v1928, %v1927
    %v1941 = vunpack.c.l.b16 %v1929
    %v1942 = vunpack.c.h.b16 %v1929
    %v1943 = vunpack.c.l.b16 %v1930
    %v1944 = vunpack.c.h.b16 %v1930
    %v1945 = vunpack.c.l.b16 %v1931
    %v1946 = vunpack.c.h.b16 %v1931
    %v1947 = vunpack.c.l.b16 %v1932
    %v1948 = vunpack.c.h.b16 %v1932
    %v1949 = vunpack.c.l.b16 %v1933
    %v1950 = vunpack.c.h.b16 %v1933
    %v1951 = vunpack.c.l.b16 %v1934
    %v1952 = vunpack.c.h.b16 %v1934
    %v1953 = vpack.c.b16 %v1941, %v1941
    %v1954 = vpack.c.b16 %v1942, %v1942
    %v1955 = vpack.c.b16 %v1943, %v1943
    %v1956 = vpack.c.b16 %v1944, %v1944
    %v1957 = vpack.c.b16 %v1945, %v1945
    %v1958 = vpack.c.b16 %v1946, %v1946
    %v1959 = vpack.c.b16 %v1947, %v1947
    %v1960 = vpack.c.b16 %v1948, %v1948
    %v1961 = vpack.c.b16 %v1949, %v1949
    %v1962 = vpack.c.b16 %v1950, %v1950
    %v1963 = vpack.c.b16 %v1951, %v1951
    %v1964 = vpack.c.b16 %v1952, %v1952
    %1977 = vst.msk [vmem:[#allocation3 + $0xc] sm:$0xf] %vm889, %v1953
    %1978 = vst.msk [vmem:[#allocation3 + $0x1c] sm:$0xf] %vm889, %v1954
    %1979 = vst.msk [vmem:[#allocation3 + $0x2c] sm:$0xf] %vm889, %v1955
    %1980 = vst.msk [vmem:[#allocation3 + $0x3c] sm:$0xf] %vm889, %v1956
    %1981 = vst.msk [vmem:[#allocation3 + $0x4c] sm:$0xf] %vm889, %v1957
    %1982 = vst.msk [vmem:[#allocation3 + $0x5c] sm:$0xf] %vm889, %v1958
    %1983 = vst.msk [vmem:[#allocation3 + $0x6c] sm:$0xf] %vm889, %v1959
    %1984 = vst.msk [vmem:[#allocation3 + $0x7c] sm:$0xf] %vm889, %v1960
    %1985 = vst.msk [vmem:[#allocation3 + $0x8c] sm:$0xf] %vm889, %v1961
    %1986 = vst.msk [vmem:[#allocation3 + $0x9c] sm:$0xf] %vm889, %v1962
    %1987 = vst.msk [vmem:[#allocation3 + $0xac] sm:$0xf] %vm889, %v1963
    %1988 = vst.msk [vmem:[#allocation3 + $0xbc] sm:$0x1] %vm901, %v1964
    %v1989 = vld [vmem:[#allocation2 + $0x136] sm:$0xff]
    %v1990 = vld [vmem:[#allocation2 + $0x13e] sm:$0xff]
    %v1991 = vld [vmem:[#allocation2 + $0x146] sm:$0xff]
    %v1992 = vld [vmem:[#allocation2 + $0x14e] sm:$0xff]
    %v1993 = vld [vmem:[#allocation2 + $0x156] sm:$0xff]
    %v1994 = vld [vmem:[#allocation2 + $0x15e] sm:$0xff]
    %v1995 = vld [vmem:[#allocation2 + $0x166] sm:$0xff]
    %v1996 = vld [vmem:[#allocation2 + $0x16e] sm:$0xff]
    %v1997 = vld [vmem:[#allocation2 + $0x176] sm:$0xff]
    %v1998 = vld [vmem:[#allocation2 + $0x17e] sm:$0xff]
    %v1999 = vld [vmem:[#allocation2 + $0x186] sm:$0xff]
    %v2000 = vld [vmem:[#allocation2 + $0x18e] sm:$0x3]
    %v2001 = vpack.c.bf16 %v1990, %v1989
    %v2002 = vpack.c.bf16 %v1992, %v1991
    %v2003 = vpack.c.bf16 %v1994, %v1993
    %v2004 = vpack.c.bf16 %v1996, %v1995
    %v2005 = vpack.c.bf16 %v1998, %v1997
    %v2006 = vpack.c.bf16 %v2000, %v1999
    %v2013 = vunpack.c.l.b16 %v2001
    %v2014 = vunpack.c.h.b16 %v2001
    %v2015 = vunpack.c.l.b16 %v2002
    %v2016 = vunpack.c.h.b16 %v2002
    %v2017 = vunpack.c.l.b16 %v2003
    %v2018 = vunpack.c.h.b16 %v2003
    %v2019 = vunpack.c.l.b16 %v2004
    %v2020 = vunpack.c.h.b16 %v2004
    %v2021 = vunpack.c.l.b16 %v2005
    %v2022 = vunpack.c.h.b16 %v2005
    %v2023 = vunpack.c.l.b16 %v2006
    %v2024 = vunpack.c.h.b16 %v2006
    %v2025 = vpack.c.b16 %v2013, %v2013
    %v2026 = vpack.c.b16 %v2014, %v2014
    %v2027 = vpack.c.b16 %v2015, %v2015
    %v2028 = vpack.c.b16 %v2016, %v2016
    %v2029 = vpack.c.b16 %v2017, %v2017
    %v2030 = vpack.c.b16 %v2018, %v2018
    %v2031 = vpack.c.b16 %v2019, %v2019
    %v2032 = vpack.c.b16 %v2020, %v2020
    %v2033 = vpack.c.b16 %v2021, %v2021
    %v2034 = vpack.c.b16 %v2022, %v2022
    %v2035 = vpack.c.b16 %v2023, %v2023
    %v2036 = vpack.c.b16 %v2024, %v2024
    %2037 = vrot.lane.b32.xlu0 %v2025, 32
    %v2038 = vpop.permute.xlu0 %2037
    %2039 = vrot.lane.b32.xlu0 %v2026, 32
    %v2040 = vpop.permute.xlu0 %2039
    %2041 = vrot.lane.b32.xlu0 %v2027, 32
    %v2042 = vpop.permute.xlu0 %2041
    %2043 = vrot.lane.b32.xlu0 %v2028, 32
    %v2044 = vpop.permute.xlu0 %2043
    %2045 = vrot.lane.b32.xlu0 %v2029, 32
    %v2046 = vpop.permute.xlu0 %2045
    %2047 = vrot.lane.b32.xlu0 %v2030, 32
    %v2048 = vpop.permute.xlu0 %2047
    %2049 = vrot.lane.b32.xlu0 %v2031, 32
    %v2050 = vpop.permute.xlu0 %2049
    %2051 = vrot.lane.b32.xlu0 %v2032, 32
    %v2052 = vpop.permute.xlu0 %2051
    %2053 = vrot.lane.b32.xlu0 %v2033, 32
    %v2054 = vpop.permute.xlu0 %2053
    %2055 = vrot.lane.b32.xlu0 %v2034, 32
    %v2056 = vpop.permute.xlu0 %2055
    %2057 = vrot.lane.b32.xlu0 %v2035, 32
    %v2058 = vpop.permute.xlu0 %2057
    %2059 = vrot.lane.b32.xlu0 %v2036, 32
    %v2060 = vpop.permute.xlu0 %2059
    %2073 = vst.msk [vmem:[#allocation3 + $0xc] sm:$0xf] %vm987, %v2038
    %2074 = vst.msk [vmem:[#allocation3 + $0x1c] sm:$0xf] %vm987, %v2040
    %2075 = vst.msk [vmem:[#allocation3 + $0x2c] sm:$0xf] %vm987, %v2042
    %2076 = vst.msk [vmem:[#allocation3 + $0x3c] sm:$0xf] %vm987, %v2044
    %2077 = vst.msk [vmem:[#allocation3 + $0x4c] sm:$0xf] %vm987, %v2046
    %2078 = vst.msk [vmem:[#allocation3 + $0x5c] sm:$0xf] %vm987, %v2048
    %2079 = vst.msk [vmem:[#allocation3 + $0x6c] sm:$0xf] %vm987, %v2050
    %2080 = vst.msk [vmem:[#allocation3 + $0x7c] sm:$0xf] %vm987, %v2052
    %2081 = vst.msk [vmem:[#allocation3 + $0x8c] sm:$0xf] %vm987, %v2054
    %2082 = vst.msk [vmem:[#allocation3 + $0x9c] sm:$0xf] %vm987, %v2056
    %2083 = vst.msk [vmem:[#allocation3 + $0xac] sm:$0xf] %vm987, %v2058
    %2084 = vst.msk [vmem:[#allocation3 + $0xbc] sm:$0x1] %vm999, %v2060
    %v2085 = vld [vmem:[#allocation2 + $0xd3] sm:$0xff]
    %v2086 = vld [vmem:[#allocation2 + $0xdb] sm:$0xff]
    %v2087 = vld [vmem:[#allocation2 + $0xe3] sm:$0xff]
    %v2088 = vld [vmem:[#allocation2 + $0xeb] sm:$0xff]
    %v2089 = vld [vmem:[#allocation2 + $0xf3] sm:$0xff]
    %v2090 = vld [vmem:[#allocation2 + $0xfb] sm:$0xff]
    %v2091 = vld [vmem:[#allocation2 + $0x103] sm:$0xff]
    %v2092 = vld [vmem:[#allocation2 + $0x10b] sm:$0xff]
    %v2093 = vld [vmem:[#allocation2 + $0x113] sm:$0xff]
    %v2094 = vld [vmem:[#allocation2 + $0x11b] sm:$0xff]
    %v2095 = vld [vmem:[#allocation2 + $0x123] sm:$0xff]
    %v2096 = vld [vmem:[#allocation2 + $0x12b] sm:$0x3]
    %v2097 = vpack.c.bf16 %v2086, %v2085
    %v2098 = vpack.c.bf16 %v2088, %v2087
    %v2099 = vpack.c.bf16 %v2090, %v2089
    %v2100 = vpack.c.bf16 %v2092, %v2091
    %v2101 = vpack.c.bf16 %v2094, %v2093
    %v2102 = vpack.c.bf16 %v2096, %v2095
    %v2109 = vunpack.c.l.b16 %v2097
    %v2110 = vunpack.c.h.b16 %v2097
    %v2111 = vunpack.c.l.b16 %v2098
    %v2112 = vunpack.c.h.b16 %v2098
    %v2113 = vunpack.c.l.b16 %v2099
    %v2114 = vunpack.c.h.b16 %v2099
    %v2115 = vunpack.c.l.b16 %v2100
    %v2116 = vunpack.c.h.b16 %v2100
    %v2117 = vunpack.c.l.b16 %v2101
    %v2118 = vunpack.c.h.b16 %v2101
    %v2119 = vunpack.c.l.b16 %v2102
    %v2120 = vunpack.c.h.b16 %v2102
    %v2121 = vpack.c.b16 %v2109, %v2109
    %v2122 = vpack.c.b16 %v2110, %v2110
    %v2123 = vpack.c.b16 %v2111, %v2111
    %v2124 = vpack.c.b16 %v2112, %v2112
    %v2125 = vpack.c.b16 %v2113, %v2113
    %v2126 = vpack.c.b16 %v2114, %v2114
    %v2127 = vpack.c.b16 %v2115, %v2115
    %v2128 = vpack.c.b16 %v2116, %v2116
    %v2129 = vpack.c.b16 %v2117, %v2117
    %v2130 = vpack.c.b16 %v2118, %v2118
    %v2131 = vpack.c.b16 %v2119, %v2119
    %v2132 = vpack.c.b16 %v2120, %v2120
    %2133 = vrot.lane.b32.xlu0 %v2121, 64
    %v2134 = vpop.permute.xlu0 %2133
    %2135 = vrot.lane.b32.xlu0 %v2122, 64
    %v2136 = vpop.permute.xlu0 %2135
    %2137 = vrot.lane.b32.xlu0 %v2123, 64
    %v2138 = vpop.permute.xlu0 %2137
    %2139 = vrot.lane.b32.xlu0 %v2124, 64
    %v2140 = vpop.permute.xlu0 %2139
    %2141 = vrot.lane.b32.xlu0 %v2125, 64
    %v2142 = vpop.permute.xlu0 %2141
    %2143 = vrot.lane.b32.xlu0 %v2126, 64
    %v2144 = vpop.permute.xlu0 %2143
    %2145 = vrot.lane.b32.xlu0 %v2127, 64
    %v2146 = vpop.permute.xlu0 %2145
    %2147 = vrot.lane.b32.xlu0 %v2128, 64
    %v2148 = vpop.permute.xlu0 %2147
    %2149 = vrot.lane.b32.xlu0 %v2129, 64
    %v2150 = vpop.permute.xlu0 %2149
    %2151 = vrot.lane.b32.xlu0 %v2130, 64
    %v2152 = vpop.permute.xlu0 %2151
    %2153 = vrot.lane.b32.xlu0 %v2131, 64
    %v2154 = vpop.permute.xlu0 %2153
    %2155 = vrot.lane.b32.xlu0 %v2132, 64
    %v2156 = vpop.permute.xlu0 %2155
    %2169 = vst.msk [vmem:[#allocation3 + $0xc] sm:$0xf] %vm1085, %v2134
    %2170 = vst.msk [vmem:[#allocation3 + $0x1c] sm:$0xf] %vm1085, %v2136
    %2171 = vst.msk [vmem:[#allocation3 + $0x2c] sm:$0xf] %vm1085, %v2138
    %2172 = vst.msk [vmem:[#allocation3 + $0x3c] sm:$0xf] %vm1085, %v2140
    %2173 = vst.msk [vmem:[#allocation3 + $0x4c] sm:$0xf] %vm1085, %v2142
    %2174 = vst.msk [vmem:[#allocation3 + $0x5c] sm:$0xf] %vm1085, %v2144
    %2175 = vst.msk [vmem:[#allocation3 + $0x6c] sm:$0xf] %vm1085, %v2146
    %2176 = vst.msk [vmem:[#allocation3 + $0x7c] sm:$0xf] %vm1085, %v2148
    %2177 = vst.msk [vmem:[#allocation3 + $0x8c] sm:$0xf] %vm1085, %v2150
    %2178 = vst.msk [vmem:[#allocation3 + $0x9c] sm:$0xf] %vm1085, %v2152
    %2179 = vst.msk [vmem:[#allocation3 + $0xac] sm:$0xf] %vm1085, %v2154
    %2180 = vst.msk [vmem:[#allocation3 + $0xbc] sm:$0x1] %vm1097, %v2156
    %v2181 = vld [vmem:[#allocation2 + $0x137] sm:$0xff]
    %v2182 = vld [vmem:[#allocation2 + $0x13f] sm:$0xff]
    %v2183 = vld [vmem:[#allocation2 + $0x147] sm:$0xff]
    %v2184 = vld [vmem:[#allocation2 + $0x14f] sm:$0xff]
    %v2185 = vld [vmem:[#allocation2 + $0x157] sm:$0xff]
    %v2186 = vld [vmem:[#allocation2 + $0x15f] sm:$0xff]
    %v2187 = vld [vmem:[#allocation2 + $0x167] sm:$0xff]
    %v2188 = vld [vmem:[#allocation2 + $0x16f] sm:$0xff]
    %v2189 = vld [vmem:[#allocation2 + $0x177] sm:$0xff]
    %v2190 = vld [vmem:[#allocation2 + $0x17f] sm:$0xff]
    %v2191 = vld [vmem:[#allocation2 + $0x187] sm:$0xff]
    %v2192 = vld [vmem:[#allocation2 + $0x18f] sm:$0x3]
    %v2193 = vpack.c.bf16 %v2182, %v2181
    %v2194 = vpack.c.bf16 %v2184, %v2183
    %v2195 = vpack.c.bf16 %v2186, %v2185
    %v2196 = vpack.c.bf16 %v2188, %v2187
    %v2197 = vpack.c.bf16 %v2190, %v2189
    %v2198 = vpack.c.bf16 %v2192, %v2191
    %v2205 = vunpack.c.l.b16 %v2193
    %v2206 = vunpack.c.h.b16 %v2193
    %v2207 = vunpack.c.l.b16 %v2194
    %v2208 = vunpack.c.h.b16 %v2194
    %v2209 = vunpack.c.l.b16 %v2195
    %v2210 = vunpack.c.h.b16 %v2195
    %v2211 = vunpack.c.l.b16 %v2196
    %v2212 = vunpack.c.h.b16 %v2196
    %v2213 = vunpack.c.l.b16 %v2197
    %v2214 = vunpack.c.h.b16 %v2197
    %v2215 = vunpack.c.l.b16 %v2198
    %v2216 = vunpack.c.h.b16 %v2198
    %v2217 = vpack.c.b16 %v2205, %v2205
    %v2218 = vpack.c.b16 %v2206, %v2206
    %v2219 = vpack.c.b16 %v2207, %v2207
    %v2220 = vpack.c.b16 %v2208, %v2208
    %v2221 = vpack.c.b16 %v2209, %v2209
    %v2222 = vpack.c.b16 %v2210, %v2210
    %v2223 = vpack.c.b16 %v2211, %v2211
    %v2224 = vpack.c.b16 %v2212, %v2212
    %v2225 = vpack.c.b16 %v2213, %v2213
    %v2226 = vpack.c.b16 %v2214, %v2214
    %v2227 = vpack.c.b16 %v2215, %v2215
    %v2228 = vpack.c.b16 %v2216, %v2216
    %2229 = vrot.lane.b32.xlu0 %v2217, 96
    %v2230 = vpop.permute.xlu0 %2229
    %2231 = vrot.lane.b32.xlu0 %v2218, 96
    %v2232 = vpop.permute.xlu0 %2231
    %2233 = vrot.lane.b32.xlu0 %v2219, 96
    %v2234 = vpop.permute.xlu0 %2233
    %2235 = vrot.lane.b32.xlu0 %v2220, 96
    %v2236 = vpop.permute.xlu0 %2235
    %2237 = vrot.lane.b32.xlu0 %v2221, 96
    %v2238 = vpop.permute.xlu0 %2237
    %2239 = vrot.lane.b32.xlu0 %v2222, 96
    %v2240 = vpop.permute.xlu0 %2239
    %2241 = vrot.lane.b32.xlu0 %v2223, 96
    %v2242 = vpop.permute.xlu0 %2241
    %2243 = vrot.lane.b32.xlu0 %v2224, 96
    %v2244 = vpop.permute.xlu0 %2243
    %2245 = vrot.lane.b32.xlu0 %v2225, 96
    %v2246 = vpop.permute.xlu0 %2245
    %2247 = vrot.lane.b32.xlu0 %v2226, 96
    %v2248 = vpop.permute.xlu0 %2247
    %2249 = vrot.lane.b32.xlu0 %v2227, 96
    %v2250 = vpop.permute.xlu0 %2249
    %2251 = vrot.lane.b32.xlu0 %v2228, 96
    %v2252 = vpop.permute.xlu0 %2251
    %2265 = vst.msk [vmem:[#allocation3 + $0xc] sm:$0xf] %vm1183, %v2230
    %2266 = vst.msk [vmem:[#allocation3 + $0x1c] sm:$0xf] %vm1183, %v2232
    %2267 = vst.msk [vmem:[#allocation3 + $0x2c] sm:$0xf] %vm1183, %v2234
    %2268 = vst.msk [vmem:[#allocation3 + $0x3c] sm:$0xf] %vm1183, %v2236
    %2269 = vst.msk [vmem:[#allocation3 + $0x4c] sm:$0xf] %vm1183, %v2238
    %2270 = vst.msk [vmem:[#allocation3 + $0x5c] sm:$0xf] %vm1183, %v2240
    %2271 = vst.msk [vmem:[#allocation3 + $0x6c] sm:$0xf] %vm1183, %v2242
    %2272 = vst.msk [vmem:[#allocation3 + $0x7c] sm:$0xf] %vm1183, %v2244
    %2273 = vst.msk [vmem:[#allocation3 + $0x8c] sm:$0xf] %vm1183, %v2246
    %2274 = vst.msk [vmem:[#allocation3 + $0x9c] sm:$0xf] %vm1183, %v2248
    %2275 = vst.msk [vmem:[#allocation3 + $0xac] sm:$0xf] %vm1183, %v2250
    %2276 = vst.msk [vmem:[#allocation3 + $0xbc] sm:$0x1] %vm1195, %v2252
    %v2277 = vld [vmem:[#allocation3] sm:$0xff]
    %v2278 = vld [vmem:[#allocation3 + $0x8] sm:$0xff]
    %v2279 = vld [vmem:[#allocation3 + $0x10] sm:$0xff]
    %v2280 = vld [vmem:[#allocation3 + $0x18] sm:$0xff]
    %v2281 = vld [vmem:[#allocation3 + $0x20] sm:$0xff]
    %v2282 = vld [vmem:[#allocation3 + $0x28] sm:$0xff]
    %v2283 = vld [vmem:[#allocation3 + $0x30] sm:$0xff]
    %v2284 = vld [vmem:[#allocation3 + $0x38] sm:$0xff]
    %v2285 = vld [vmem:[#allocation3 + $0x40] sm:$0xff]
    %v2286 = vld [vmem:[#allocation3 + $0x48] sm:$0xff]
    %v2287 = vld [vmem:[#allocation3 + $0x50] sm:$0xff]
    %v2288 = vld [vmem:[#allocation3 + $0x58] sm:$0xff]
    %v2289 = vld [vmem:[#allocation3 + $0x60] sm:$0xff]
    %v2290 = vld [vmem:[#allocation3 + $0x68] sm:$0xff]
    %v2291 = vld [vmem:[#allocation3 + $0x70] sm:$0xff]
    %v2292 = vld [vmem:[#allocation3 + $0x78] sm:$0xff]
    %v2293 = vld [vmem:[#allocation3 + $0x80] sm:$0xff]
    %v2294 = vld [vmem:[#allocation3 + $0x88] sm:$0xff]
    %v2295 = vld [vmem:[#allocation3 + $0x90] sm:$0xff]
    %v2296 = vld [vmem:[#allocation3 + $0x98] sm:$0xff]
    %v2297 = vld [vmem:[#allocation3 + $0xa0] sm:$0xff]
    %v2298 = vld [vmem:[#allocation3 + $0xa8] sm:$0xff]
    %v2299 = vld [vmem:[#allocation3 + $0xb0] sm:$0x11]
    %v2300 = vld [vmem:[#allocation3 + $0xb8] sm:$0x11]
    %v2301 = vld [vmem:[%s3] sm:$0xf]
    %v2302 = vld [vmem:[%s3 + $0x4] sm:$0xf]
    %v2303 = vld [vmem:[%s3 + $0x8] sm:$0xf]
    %v2304 = vld [vmem:[%s3 + $0xc] sm:$0xf]
    %v2305 = vld [vmem:[%s3 + $0x10] sm:$0xf]
    %v2306 = vld [vmem:[%s3 + $0x14] sm:$0xf]
    %v2307 = vld [vmem:[%s3 + $0x18] sm:$0xf]
    %v2308 = vld [vmem:[%s3 + $0x1c] sm:$0xf]
    %v2309 = vld [vmem:[%s3 + $0x20] sm:$0xf]
    %v2310 = vld [vmem:[%s3 + $0x24] sm:$0xf]
    %v2311 = vld [vmem:[%s3 + $0x28] sm:$0xf]
    %v2312 = vld [vmem:[%s3 + $0x2c] sm:$0xf]
    %v2313 = vld [vmem:[%s3 + $0x30] sm:$0xf]
    %v2314 = vld [vmem:[%s3 + $0x34] sm:$0xf]
    %v2315 = vld [vmem:[%s3 + $0x38] sm:$0xf]
    %v2316 = vld [vmem:[%s3 + $0x3c] sm:$0xf]
    %v2317 = vld [vmem:[%s3 + $0x40] sm:$0xf]
    %v2318 = vld [vmem:[%s3 + $0x44] sm:$0xf]
    %v2319 = vld [vmem:[%s3 + $0x48] sm:$0xf]
    %v2320 = vld [vmem:[%s3 + $0x4c] sm:$0xf]
    %v2321 = vld [vmem:[%s3 + $0x50] sm:$0xf]
    %v2322 = vld [vmem:[%s3 + $0x54] sm:$0xf]
    %v2323 = vld [vmem:[%s3 + $0x58] sm:$0xf]
    %v2324 = vld [vmem:[%s3 + $0x5c] sm:$0xf]
    %v2325 = vld [vmem:[%s3 + $0x60] sm:$0xf]
    %v2326 = vld [vmem:[%s3 + $0x64] sm:$0xf]
    %v2327 = vld [vmem:[%s3 + $0x68] sm:$0xf]
    %v2328 = vld [vmem:[%s3 + $0x6c] sm:$0xf]
    %v2329 = vld [vmem:[%s3 + $0x70] sm:$0xf]
    %v2330 = vld [vmem:[%s3 + $0x74] sm:$0xf]
    %v2331 = vld [vmem:[%s3 + $0x78] sm:$0xf]
    %v2332 = vld [vmem:[%s3 + $0x7c] sm:$0xf]
    %v2333 = vld [vmem:[%s3 + $0x80] sm:$0xf]
    %v2334 = vld [vmem:[%s3 + $0x84] sm:$0xf]
    %v2335 = vld [vmem:[%s3 + $0x88] sm:$0xf]
    %v2336 = vld [vmem:[%s3 + $0x8c] sm:$0xf]
    %v2337 = vld [vmem:[%s3 + $0x90] sm:$0xf]
    %v2338 = vld [vmem:[%s3 + $0x94] sm:$0xf]
    %v2339 = vld [vmem:[%s3 + $0x98] sm:$0xf]
    %v2340 = vld [vmem:[%s3 + $0x9c] sm:$0xf]
    %v2341 = vld [vmem:[%s3 + $0xa0] sm:$0xf]
    %v2342 = vld [vmem:[%s3 + $0xa4] sm:$0xf]
    %v2343 = vld [vmem:[%s3 + $0xa8] sm:$0xf]
    %v2344 = vld [vmem:[%s3 + $0xac] sm:$0xf]
    %v2345 = vld [vmem:[%s3 + $0xb0] sm:$0xf]
    %v2346 = vld [vmem:[%s3 + $0xb4] sm:$0xf]
    %v2347 = vld [vmem:[%s3 + $0xb8] sm:$0xf]
    %v2348 = vld [vmem:[%s3 + $0xbc] sm:$0xf]
    %v2349 = vld [vmem:[%s3 + $0xc0] sm:$0xf]
    %v2350 = vld [vmem:[%s3 + $0xc4] sm:$0xf]
    %v2351 = vld [vmem:[%s3 + $0xc8] sm:$0xf]
    %v2352 = vld [vmem:[%s3 + $0xcc] sm:$0xf]
    %v2353 = vld [vmem:[%s3 + $0xd0] sm:$0xf]
    %v2354 = vld [vmem:[%s3 + $0xd4] sm:$0xf]
    %v2355 = vld [vmem:[%s3 + $0xd8] sm:$0xf]
    %v2356 = vld [vmem:[%s3 + $0xdc] sm:$0xf]
    %v2357 = vld [vmem:[%s3 + $0xe0] sm:$0xf]
    %v2358 = vld [vmem:[%s3 + $0xe4] sm:$0xf]
    %v2359 = vld [vmem:[%s3 + $0xe8] sm:$0xf]
    %v2360 = vld [vmem:[%s3 + $0xec] sm:$0xf]
    %v2361 = vld [vmem:[%s3 + $0xf0] sm:$0xf]
    %v2362 = vld [vmem:[%s3 + $0xf4] sm:$0xf]
    %v2363 = vld [vmem:[%s3 + $0xf8] sm:$0xf]
    %v2364 = vld [vmem:[%s3 + $0xfc] sm:$0xf]
    %v2365 = vld [vmem:[%s4] sm:$0x1]
    %v2367 = vlaneseq
    %v2368 = vshrl.u32 %v2367, 7
    %v2369 = vsub.s32 0, %v2368
    %v2370 = vrot.slane %v2365, %v2369
    %v2396 = vunpack.c.l.b16 %v2277
    %v2397 = vunpack.c.h.b16 %v2277
    %v2398 = vunpack.c.l.b16 %v2278
    %v2399 = vunpack.c.h.b16 %v2278
    %v2400 = vunpack.c.l.b16 %v2279
    %v2401 = vunpack.c.h.b16 %v2279
    %v2402 = vunpack.c.l.b16 %v2280
    %v2403 = vunpack.c.h.b16 %v2280
    %v2404 = vunpack.c.l.b16 %v2281
    %v2405 = vunpack.c.h.b16 %v2281
    %v2406 = vunpack.c.l.b16 %v2282
    %v2407 = vunpack.c.h.b16 %v2282
    %v2408 = vunpack.c.l.b16 %v2283
    %v2409 = vunpack.c.h.b16 %v2283
    %v2410 = vunpack.c.l.b16 %v2284
    %v2411 = vunpack.c.h.b16 %v2284
    %v2412 = vunpack.c.l.b16 %v2285
    %v2413 = vunpack.c.h.b16 %v2285
    %v2414 = vunpack.c.l.b16 %v2286
    %v2415 = vunpack.c.h.b16 %v2286
    %v2416 = vunpack.c.l.b16 %v2287
    %v2417 = vunpack.c.h.b16 %v2287
    %v2418 = vunpack.c.l.b16 %v2288
    %v2419 = vunpack.c.h.b16 %v2288
    %v2420 = vunpack.c.l.b16 %v2289
    %v2421 = vunpack.c.h.b16 %v2289
    %v2422 = vunpack.c.l.b16 %v2290
    %v2423 = vunpack.c.h.b16 %v2290
    %v2424 = vunpack.c.l.b16 %v2291
    %v2425 = vunpack.c.h.b16 %v2291
    %v2426 = vunpack.c.l.b16 %v2292
    %v2427 = vunpack.c.h.b16 %v2292
    %v2428 = vunpack.c.l.b16 %v2293
    %v2429 = vunpack.c.h.b16 %v2293
    %v2430 = vunpack.c.l.b16 %v2294
    %v2431 = vunpack.c.h.b16 %v2294
    %v2432 = vunpack.c.l.b16 %v2295
    %v2433 = vunpack.c.h.b16 %v2295
    %v2434 = vunpack.c.l.b16 %v2296
    %v2435 = vunpack.c.h.b16 %v2296
    %v2436 = vunpack.c.l.b16 %v2297
    %v2437 = vunpack.c.h.b16 %v2297
    %v2438 = vunpack.c.l.b16 %v2298
    %v2439 = vunpack.c.h.b16 %v2298
    %v2440 = vunpack.c.l.b16 %v2299
    %v2441 = vunpack.c.h.b16 %v2299
    %v2442 = vunpack.c.l.b16 %v2300
    %v2443 = vunpack.c.h.b16 %v2300
    %v2444 = vpack.c.b16 %v2400, %v2396
    %v2445 = vpack.c.b16 %v2401, %v2397
    %v2446 = vpack.c.b16 %v2402, %v2398
    %v2447 = vpack.c.b16 %v2403, %v2399
    %v2448 = vpack.c.b16 %v2408, %v2404
    %v2449 = vpack.c.b16 %v2409, %v2405
    %v2450 = vpack.c.b16 %v2410, %v2406
    %v2451 = vpack.c.b16 %v2411, %v2407
    %v2452 = vpack.c.b16 %v2416, %v2412
    %v2453 = vpack.c.b16 %v2417, %v2413
    %v2454 = vpack.c.b16 %v2418, %v2414
    %v2455 = vpack.c.b16 %v2419, %v2415
    %v2456 = vpack.c.b16 %v2424, %v2420
    %v2457 = vpack.c.b16 %v2425, %v2421
    %v2458 = vpack.c.b16 %v2426, %v2422
    %v2459 = vpack.c.b16 %v2427, %v2423
    %v2460 = vpack.c.b16 %v2432, %v2428
    %v2461 = vpack.c.b16 %v2433, %v2429
    %v2462 = vpack.c.b16 %v2434, %v2430
    %v2463 = vpack.c.b16 %v2435, %v2431
    %v2464 = vpack.c.b16 %v2440, %v2436
    %v2465 = vpack.c.b16 %v2441, %v2437
    %v2466 = vpack.c.b16 %v2442, %v2438
    %v2467 = vpack.c.b16 %v2443, %v2439
    %v2556 = vunpack.c.l.b16 %v2301
    %v2557 = vunpack.c.l.b16 %v2302
    %v2558 = vunpack.c.l.b16 %v2303
    %v2559 = vunpack.c.l.b16 %v2304
    %v2560 = vunpack.c.l.b16 %v2305
    %v2561 = vunpack.c.l.b16 %v2306
    %v2562 = vunpack.c.l.b16 %v2307
    %v2563 = vunpack.c.l.b16 %v2308
    %v2564 = vunpack.c.l.b16 %v2309
    %v2565 = vunpack.c.l.b16 %v2310
    %v2566 = vunpack.c.l.b16 %v2311
    %v2567 = vunpack.c.l.b16 %v2312
    %v2568 = vunpack.c.l.b16 %v2313
    %v2569 = vunpack.c.l.b16 %v2314
    %v2570 = vunpack.c.l.b16 %v2315
    %v2571 = vunpack.c.l.b16 %v2316
    %v2572 = vunpack.c.l.b16 %v2317
    %v2573 = vunpack.c.l.b16 %v2318
    %v2574 = vunpack.c.l.b16 %v2319
    %v2575 = vunpack.c.l.b16 %v2320
    %v2576 = vunpack.c.l.b16 %v2321
    %v2577 = vunpack.c.l.b16 %v2322
    %v2578 = vunpack.c.l.b16 %v2323
    %v2579 = vunpack.c.l.b16 %v2324
    %v2580 = vunpack.c.l.b16 %v2325
    %v2581 = vunpack.c.l.b16 %v2326
    %v2582 = vunpack.c.l.b16 %v2327
    %v2583 = vunpack.c.l.b16 %v2328
    %v2584 = vunpack.c.l.b16 %v2329
    %v2585 = vunpack.c.l.b16 %v2330
    %v2586 = vunpack.c.l.b16 %v2331
    %v2587 = vunpack.c.l.b16 %v2332
    %v2588 = vunpack.c.l.b16 %v2333
    %v2589 = vunpack.c.l.b16 %v2334
    %v2590 = vunpack.c.l.b16 %v2335
    %v2591 = vunpack.c.l.b16 %v2336
    %v2592 = vunpack.c.l.b16 %v2337
    %v2593 = vunpack.c.l.b16 %v2338
    %v2594 = vunpack.c.l.b16 %v2339
    %v2595 = vunpack.c.l.b16 %v2340
    %v2596 = vunpack.c.l.b16 %v2341
    %v2597 = vunpack.c.l.b16 %v2342
    %v2598 = vunpack.c.l.b16 %v2343
    %v2599 = vunpack.c.l.b16 %v2344
    %v2600 = vunpack.c.l.b16 %v2345
    %v2601 = vunpack.c.l.b16 %v2346
    %v2602 = vunpack.c.l.b16 %v2347
    %v2603 = vunpack.c.l.b16 %v2348
    %v2604 = vunpack.c.l.b16 %v2349
    %v2605 = vunpack.c.l.b16 %v2350
    %v2606 = vunpack.c.l.b16 %v2351
    %v2607 = vunpack.c.l.b16 %v2352
    %v2608 = vunpack.c.l.b16 %v2353
    %v2609 = vunpack.c.l.b16 %v2354
    %v2610 = vunpack.c.l.b16 %v2355
    %v2611 = vunpack.c.l.b16 %v2356
    %v2612 = vunpack.c.l.b16 %v2357
    %v2613 = vunpack.c.l.b16 %v2358
    %v2614 = vunpack.c.l.b16 %v2359
    %v2615 = vunpack.c.l.b16 %v2360
    %v2616 = vunpack.c.l.b16 %v2361
    %v2617 = vunpack.c.l.b16 %v2362
    %v2618 = vunpack.c.l.b16 %v2363
    %v2619 = vunpack.c.l.b16 %v2364
    %v2620 = vpack.c.b16 %v2557, %v2556
    %v2621 = vpack.c.b16 %v2559, %v2558
    %v2622 = vpack.c.b16 %v2561, %v2560
    %v2623 = vpack.c.b16 %v2563, %v2562
    %v2624 = vpack.c.b16 %v2565, %v2564
    %v2625 = vpack.c.b16 %v2567, %v2566
    %v2626 = vpack.c.b16 %v2569, %v2568
    %v2627 = vpack.c.b16 %v2571, %v2570
    %v2628 = vpack.c.b16 %v2573, %v2572
    %v2629 = vpack.c.b16 %v2575, %v2574
    %v2630 = vpack.c.b16 %v2577, %v2576
    %v2631 = vpack.c.b16 %v2579, %v2578
    %v2632 = vpack.c.b16 %v2581, %v2580
    %v2633 = vpack.c.b16 %v2583, %v2582
    %v2634 = vpack.c.b16 %v2585, %v2584
    %v2635 = vpack.c.b16 %v2587, %v2586
    %v2636 = vpack.c.b16 %v2589, %v2588
    %v2637 = vpack.c.b16 %v2591, %v2590
    %v2638 = vpack.c.b16 %v2593, %v2592
    %v2639 = vpack.c.b16 %v2595, %v2594
    %v2640 = vpack.c.b16 %v2597, %v2596
    %v2641 = vpack.c.b16 %v2599, %v2598
    %v2642 = vpack.c.b16 %v2601, %v2600
    %v2643 = vpack.c.b16 %v2603, %v2602
    %v2644 = vpack.c.b16 %v2605, %v2604
    %v2645 = vpack.c.b16 %v2607, %v2606
    %v2646 = vpack.c.b16 %v2609, %v2608
    %v2647 = vpack.c.b16 %v2611, %v2610
    %v2648 = vpack.c.b16 %v2613, %v2612
    %v2649 = vpack.c.b16 %v2615, %v2614
    %v2650 = vpack.c.b16 %v2617, %v2616
    %v2651 = vpack.c.b16 %v2619, %v2618
    %2684 = vmatprep.subr.bf16.mxu0 0
    %2685 = vmatpush1.bf16.msra.mxu0 %v2620
    %2686 = vmatprep.subr.bf16.mxu0 0
    %2687 = vmatpush1.bf16.msra.mxu0 %v2621
    %2688 = vmatprep.subr.bf16.mxu0 0
    %2689 = vmatpush1.bf16.msra.mxu0 %v2622
    %2690 = vmatprep.subr.bf16.mxu0 0
    %2691 = vmatpush1.bf16.msra.mxu0 %v2623
    %2692 = vmatprep.subr.bf16.mxu0 0
    %2693 = vmatpush1.bf16.msra.mxu0 %v2624
    %2694 = vmatprep.subr.bf16.mxu0 0
    %2695 = vmatpush1.bf16.msra.mxu0 %v2625
    %2696 = vmatprep.subr.bf16.mxu0 0
    %2697 = vmatpush1.bf16.msra.mxu0 %v2626
    %2698 = vmatprep.subr.bf16.mxu0 0
    %2699 = vmatpush1.bf16.msra.mxu0 %v2627
    %2700 = vmatprep.subr.bf16.mxu0 0
    %2701 = vmatpush1.bf16.msra.mxu0 %v2628
    %2702 = vmatprep.subr.bf16.mxu0 0
    %2703 = vmatpush1.bf16.msra.mxu0 %v2629
    %2704 = vmatprep.subr.bf16.mxu0 0
    %2705 = vmatpush1.bf16.msra.mxu0 %v2630
    %2706 = vmatprep.subr.bf16.mxu0 0
    %2707 = vmatpush1.bf16.msra.mxu0 %v2631
    %2708 = vmatprep.subr.bf16.mxu0 0
    %2709 = vmatpush1.bf16.msra.mxu0 %v2632
    %2710 = vmatprep.subr.bf16.mxu0 0
    %2711 = vmatpush1.bf16.msra.mxu0 %v2633
    %2712 = vmatprep.subr.bf16.mxu0 0
    %2713 = vmatpush1.bf16.msra.mxu0 %v2634
    %2714 = vmatprep.subr.bf16.mxu0 0
    %2715 = vmatpush1.bf16.msra.mxu0 %v2635
    %2716 = vmatprep.mubr.bf16.mxu0 %v2445
    %2717 = vmatmul.mubr.bf16.gmra.mrb[0].mxu0 %v2444
    %v2718 = vpop.f32.mrb[0].mxu0
    %v2719 = vadd.f32 %v2370, %v2718
    %v2720 = vpop.f32.mrb[0].mxu0
    %v2721 = vpop.f32.mrb[0].mxu0
    %v2722 = vadd.f32 %v2370, %v2721
    %v2723 = vpop.f32.mrb[0].mxu0
    %2724 = vmatprep.mubr.bf16.mxu0 %v2449
    %2725 = vmatmul.mubr.bf16.gmra.mrb[0].mxu0 %v2448
    %v2726 = vpop.f32.mrb[0].mxu0
    %v2727 = vadd.f32 %v2370, %v2726
    %v2728 = vpop.f32.mrb[0].mxu0
    %v2729 = vpop.f32.mrb[0].mxu0
    %v2730 = vadd.f32 %v2370, %v2729
    %v2731 = vpop.f32.mrb[0].mxu0
    %2732 = vmatprep.mubr.bf16.mxu0 %v2453
    %2733 = vmatmul.mubr.bf16.gmra.mrb[0].mxu0 %v2452
    %v2734 = vpop.f32.mrb[0].mxu0
    %v2735 = vadd.f32 %v2370, %v2734
    %v2736 = vpop.f32.mrb[0].mxu0
    %v2737 = vpop.f32.mrb[0].mxu0
    %v2738 = vadd.f32 %v2370, %v2737
    %v2739 = vpop.f32.mrb[0].mxu0
    %2740 = vmatprep.mubr.bf16.mxu0 %v2457
    %2741 = vmatmul.mubr.bf16.gmra.mrb[0].mxu0 %v2456
    %v2742 = vpop.f32.mrb[0].mxu0
    %v2743 = vadd.f32 %v2370, %v2742
    %v2744 = vpop.f32.mrb[0].mxu0
    %v2745 = vpop.f32.mrb[0].mxu0
    %v2746 = vadd.f32 %v2370, %v2745
    %v2747 = vpop.f32.mrb[0].mxu0
    %2748 = vmatprep.mubr.bf16.mxu0 %v2461
    %2749 = vmatmul.mubr.bf16.gmra.mrb[0].mxu0 %v2460
    %v2750 = vpop.f32.mrb[0].mxu0
    %v2751 = vadd.f32 %v2370, %v2750
    %v2752 = vpop.f32.mrb[0].mxu0
    %v2753 = vpop.f32.mrb[0].mxu0
    %v2754 = vadd.f32 %v2370, %v2753
    %v2755 = vpop.f32.mrb[0].mxu0
    %2756 = vmatprep.mubr.bf16.mxu0 %v2465
    %2757 = vmatmul.mubr.bf16.gmra.mrb[0].mxu0 %v2464
    %v2758 = vpop.f32.mrb[0].mxu0
    %v2759 = vadd.f32 %v2370, %v2758
    %v2760 = vpop.f32.mrb[0].mxu0
    %v2761 = vpop.f32.mrb[0].mxu0
    %v2762 = vadd.f32 %v2370, %v2761
    %v2763 = vpop.f32.mrb[0].mxu0
    %2764 = vdwg.mxu0
    %2765 = vmatprep.subr.bf16.mxu0 0
    %2766 = vmatpush1.bf16.msra.mxu0 %v2636
    %2767 = vmatprep.subr.bf16.mxu0 0
    %2768 = vmatpush1.bf16.msra.mxu0 %v2637
    %2769 = vmatprep.subr.bf16.mxu0 0
    %2770 = vmatpush1.bf16.msra.mxu0 %v2638
    %2771 = vmatprep.subr.bf16.mxu0 0
    %2772 = vmatpush1.bf16.msra.mxu0 %v2639
    %2773 = vmatprep.subr.bf16.mxu0 0
    %2774 = vmatpush1.bf16.msra.mxu0 %v2640
    %2775 = vmatprep.subr.bf16.mxu0 0
    %2776 = vmatpush1.bf16.msra.mxu0 %v2641
    %2777 = vmatprep.subr.bf16.mxu0 0
    %2778 = vmatpush1.bf16.msra.mxu0 %v2642
    %2779 = vmatprep.subr.bf16.mxu0 0
    %2780 = vmatpush1.bf16.msra.mxu0 %v2643
    %2781 = vmatprep.subr.bf16.mxu0 0
    %2782 = vmatpush1.bf16.msra.mxu0 %v2644
    %2783 = vmatprep.subr.bf16.mxu0 0
    %2784 = vmatpush1.bf16.msra.mxu0 %v2645
    %2785 = vmatprep.subr.bf16.mxu0 0
    %2786 = vmatpush1.bf16.msra.mxu0 %v2646
    %2787 = vmatprep.subr.bf16.mxu0 0
    %2788 = vmatpush1.bf16.msra.mxu0 %v2647
    %2789 = vmatprep.subr.bf16.mxu0 0
    %2790 = vmatpush1.bf16.msra.mxu0 %v2648
    %2791 = vmatprep.subr.bf16.mxu0 0
    %2792 = vmatpush1.bf16.msra.mxu0 %v2649
    %2793 = vmatprep.subr.bf16.mxu0 0
    %2794 = vmatpush1.bf16.msra.mxu0 %v2650
    %2795 = vmatprep.subr.bf16.mxu0 0
    %2796 = vmatpush1.bf16.msra.mxu0 %v2651
    %2797 = vmatprep.mubr.bf16.mxu0 %v2447
    %2798 = vmatmul.mubr.bf16.gmra.mrb[0].mxu0 %v2446
    %v2799 = vpop.f32.mrb[0].mxu0
    %v2800 = vadd.f32 %v2719, %v2799
    %v2801 = vpop.f32.mrb[0].mxu0
    %v2802 = vpop.f32.mrb[0].mxu0
    %v2803 = vadd.f32 %v2722, %v2802
    %v2804 = vpop.f32.mrb[0].mxu0
    %2805 = vmatprep.mubr.bf16.mxu0 %v2451
    %2806 = vmatmul.mubr.bf16.gmra.mrb[0].mxu0 %v2450
    %v2807 = vpop.f32.mrb[0].mxu0
    %v2808 = vadd.f32 %v2727, %v2807
    %v2809 = vpop.f32.mrb[0].mxu0
    %v2810 = vpop.f32.mrb[0].mxu0
    %v2811 = vadd.f32 %v2730, %v2810
    %v2812 = vpop.f32.mrb[0].mxu0
    %2813 = vmatprep.mubr.bf16.mxu0 %v2455
    %2814 = vmatmul.mubr.bf16.gmra.mrb[0].mxu0 %v2454
    %v2815 = vpop.f32.mrb[0].mxu0
    %v2816 = vadd.f32 %v2735, %v2815
    %v2817 = vpop.f32.mrb[0].mxu0
    %v2818 = vpop.f32.mrb[0].mxu0
    %v2819 = vadd.f32 %v2738, %v2818
    %v2820 = vpop.f32.mrb[0].mxu0
    %2821 = vmatprep.mubr.bf16.mxu0 %v2459
    %2822 = vmatmul.mubr.bf16.gmra.mrb[0].mxu0 %v2458
    %v2823 = vpop.f32.mrb[0].mxu0
    %v2824 = vadd.f32 %v2743, %v2823
    %v2825 = vpop.f32.mrb[0].mxu0
    %v2826 = vpop.f32.mrb[0].mxu0
    %v2827 = vadd.f32 %v2746, %v2826
    %v2828 = vpop.f32.mrb[0].mxu0
    %2829 = vmatprep.mubr.bf16.mxu0 %v2463
    %2830 = vmatmul.mubr.bf16.gmra.mrb[0].mxu0 %v2462
    %v2831 = vpop.f32.mrb[0].mxu0
    %v2832 = vadd.f32 %v2751, %v2831
    %v2833 = vpop.f32.mrb[0].mxu0
    %v2834 = vpop.f32.mrb[0].mxu0
    %v2835 = vadd.f32 %v2754, %v2834
    %v2836 = vpop.f32.mrb[0].mxu0
    %2837 = vmatprep.mubr.bf16.mxu0 %v2467
    %2838 = vmatmul.mubr.bf16.gmra.mrb[0].mxu0 %v2466
    %v2839 = vpop.f32.mrb[0].mxu0
    %v2840 = vadd.f32 %v2759, %v2839
    %v2841 = vpop.f32.mrb[0].mxu0
    %v2842 = vpop.f32.mrb[0].mxu0
    %v2843 = vadd.f32 %v2762, %v2842
    %v2844 = vpop.f32.mrb[0].mxu0
    %2845 = vdwg.mxu0
    %v2846 = vmax.f32 %v2800, 0.0
    %v2847 = vmax.f32 %v2803, 0.0
    %v2848 = vmax.f32 %v2808, 0.0
    %v2849 = vmax.f32 %v2811, 0.0
    %v2850 = vmax.f32 %v2816, 0.0
    %v2851 = vmax.f32 %v2819, 0.0
    %v2852 = vmax.f32 %v2824, 0.0
    %v2853 = vmax.f32 %v2827, 0.0
    %v2854 = vmax.f32 %v2832, 0.0
    %v2855 = vmax.f32 %v2835, 0.0
    %v2856 = vmax.f32 %v2840, 0.0
    %v2857 = vmax.f32 %v2843, 0.0
    %vm2858 = vcmask 523264
    %2859 = vst.msk [vmem:[#allocation4] sm:$0xff] %vm2858, %v2846
    %2860 = vst.msk [vmem:[#allocation4 + $0x8] sm:$0xff] %vm2858, %v2847
    %2861 = vst.msk [vmem:[#allocation4 + $0x10] sm:$0xff] %vm2858, %v2848
    %2862 = vst.msk [vmem:[#allocation4 + $0x18] sm:$0xff] %vm2858, %v2849
    %2863 = vst.msk [vmem:[#allocation4 + $0x20] sm:$0xff] %vm2858, %v2850
    %2864 = vst.msk [vmem:[#allocation4 + $0x28] sm:$0xff] %vm2858, %v2851
    %2865 = vst.msk [vmem:[#allocation4 + $0x30] sm:$0xff] %vm2858, %v2852
    %2866 = vst.msk [vmem:[#allocation4 + $0x38] sm:$0xff] %vm2858, %v2853
    %2867 = vst.msk [vmem:[#allocation4 + $0x40] sm:$0xff] %vm2858, %v2854
    %2868 = vst.msk [vmem:[#allocation4 + $0x48] sm:$0xff] %vm2858, %v2855
    %2869 = vst.msk [vmem:[#allocation4 + $0x50] sm:$0xff] %vm2858, %v2856
    %vm2870 = vcmask 517120
    %2871 = vst.msk [vmem:[#allocation4 + $0x58] sm:$0x3] %vm2870, %v2857
    %vm2872 = vcmask 521216
    %2873 = vst.msk [vmem:[#allocation4 + $0x5a] sm:$0x3f] %vm2872, 0.0
    %v2874 = vld [vmem:[#allocation4] sm:$0xff]
    %v2875 = vld [vmem:[#allocation4 + $0x8] sm:$0xff]
    %v2876 = vld [vmem:[#allocation4 + $0x10] sm:$0xff]
    %v2877 = vld [vmem:[#allocation4 + $0x18] sm:$0xff]
    %v2878 = vld [vmem:[#allocation4 + $0x20] sm:$0xff]
    %v2879 = vld [vmem:[#allocation4 + $0x28] sm:$0xff]
    %v2880 = vld [vmem:[#allocation4 + $0x30] sm:$0xff]
    %v2881 = vld [vmem:[#allocation4 + $0x38] sm:$0xff]
    %v2882 = vld [vmem:[#allocation4 + $0x40] sm:$0x3f]
    %v2883 = vpack.c.bf16 %v2875, %v2874
    %v2884 = vpack.c.bf16 %v2877, %v2876
    %v2885 = vpack.c.bf16 %v2879, %v2878
    %v2886 = vpack.c.bf16 %v2881, %v2880
    %v2887 = vpack.c.bf16 %v2882, %v2882
    %v2893 = vunpack.c.l.b16 %v2883
    %v2894 = vunpack.c.h.b16 %v2883
    %v2895 = vunpack.c.l.b16 %v2884
    %v2896 = vunpack.c.h.b16 %v2884
    %v2897 = vunpack.c.l.b16 %v2885
    %v2898 = vunpack.c.h.b16 %v2885
    %v2899 = vunpack.c.l.b16 %v2886
    %v2900 = vunpack.c.h.b16 %v2886
    %v2901 = vunpack.c.l.b16 %v2887
    %v2902 = vpack.c.b16 %v2893, %v2893
    %v2903 = vpack.c.b16 %v2894, %v2894
    %v2904 = vpack.c.b16 %v2895, %v2895
    %v2905 = vpack.c.b16 %v2896, %v2896
    %v2906 = vpack.c.b16 %v2897, %v2897
    %v2907 = vpack.c.b16 %v2898, %v2898
    %v2908 = vpack.c.b16 %v2899, %v2899
    %v2909 = vpack.c.b16 %v2900, %v2900
    %v2910 = vpack.c.b16 %v2901, %v2901
    %vm2920 = vcmask 519168
    %2921 = vst.msk [vmem:[#allocation5] sm:$0xf] %vm2920, %v2902
    %2922 = vst.msk [vmem:[#allocation5 + $0x14] sm:$0xf] %vm2920, %v2903
    %2923 = vst.msk [vmem:[#allocation5 + $0x28] sm:$0xf] %vm2920, %v2904
    %2924 = vst.msk [vmem:[#allocation5 + $0x3c] sm:$0xf] %vm2920, %v2905
    %2925 = vst.msk [vmem:[#allocation5 + $0x50] sm:$0xf] %vm2920, %v2906
    %2926 = vst.msk [vmem:[#allocation5 + $0x64] sm:$0xf] %vm2920, %v2907
    %2927 = vst.msk [vmem:[#allocation5 + $0x78] sm:$0xf] %vm2920, %v2908
    %2928 = vst.msk [vmem:[#allocation5 + $0x8c] sm:$0xf] %vm2920, %v2909
    %vm2929 = vcmask 518144
    %2930 = vst.msk [vmem:[#allocation5 + $0xa0] sm:$0x7] %vm2929, %v2910
    %v2931 = vld [vmem:[#allocation4 + $0x1] sm:$0xff]
    %v2932 = vld [vmem:[#allocation4 + $0x9] sm:$0xff]
    %v2933 = vld [vmem:[#allocation4 + $0x11] sm:$0xff]
    %v2934 = vld [vmem:[#allocation4 + $0x19] sm:$0xff]
    %v2935 = vld [vmem:[#allocation4 + $0x21] sm:$0xff]
    %v2936 = vld [vmem:[#allocation4 + $0x29] sm:$0xff]
    %v2937 = vld [vmem:[#allocation4 + $0x31] sm:$0xff]
    %v2938 = vld [vmem:[#allocation4 + $0x39] sm:$0xff]
    %v2939 = vld [vmem:[#allocation4 + $0x41] sm:$0x3f]
    %v2940 = vpack.c.bf16 %v2932, %v2931
    %v2941 = vpack.c.bf16 %v2934, %v2933
    %v2942 = vpack.c.bf16 %v2936, %v2935
    %v2943 = vpack.c.bf16 %v2938, %v2937
    %v2944 = vpack.c.bf16 %v2939, %v2939
    %v2950 = vunpack.c.l.b16 %v2940
    %v2951 = vunpack.c.h.b16 %v2940
    %v2952 = vunpack.c.l.b16 %v2941
    %v2953 = vunpack.c.h.b16 %v2941
    %v2954 = vunpack.c.l.b16 %v2942
    %v2955 = vunpack.c.h.b16 %v2942
    %v2956 = vunpack.c.l.b16 %v2943
    %v2957 = vunpack.c.h.b16 %v2943
    %v2958 = vunpack.c.l.b16 %v2944
    %v2959 = vpack.c.b16 %v2950, %v2950
    %v2960 = vpack.c.b16 %v2951, %v2951
    %v2961 = vpack.c.b16 %v2952, %v2952
    %v2962 = vpack.c.b16 %v2953, %v2953
    %v2963 = vpack.c.b16 %v2954, %v2954
    %v2964 = vpack.c.b16 %v2955, %v2955
    %v2965 = vpack.c.b16 %v2956, %v2956
    %v2966 = vpack.c.b16 %v2957, %v2957
    %v2967 = vpack.c.b16 %v2958, %v2958
    %2968 = vrot.lane.b32.xlu0 %v2959, 64
    %v2969 = vpop.permute.xlu0 %2968
    %2970 = vrot.lane.b32.xlu0 %v2960, 64
    %v2971 = vpop.permute.xlu0 %2970
    %2972 = vrot.lane.b32.xlu0 %v2961, 64
    %v2973 = vpop.permute.xlu0 %2972
    %2974 = vrot.lane.b32.xlu0 %v2962, 64
    %v2975 = vpop.permute.xlu0 %2974
    %2976 = vrot.lane.b32.xlu0 %v2963, 64
    %v2977 = vpop.permute.xlu0 %2976
    %2978 = vrot.lane.b32.xlu0 %v2964, 64
    %v2979 = vpop.permute.xlu0 %2978
    %2980 = vrot.lane.b32.xlu0 %v2965, 64
    %v2981 = vpop.permute.xlu0 %2980
    %2982 = vrot.lane.b32.xlu0 %v2966, 64
    %v2983 = vpop.permute.xlu0 %2982
    %2984 = vrot.lane.b32.xlu0 %v2967, 64
    %v2985 = vpop.permute.xlu0 %2984
    %vm2995 = vcmask 1043968
    %2996 = vst.msk [vmem:[#allocation5] sm:$0xf] %vm2995, %v2969
    %2997 = vst.msk [vmem:[#allocation5 + $0x14] sm:$0xf] %vm2995, %v2971
    %2998 = vst.msk [vmem:[#allocation5 + $0x28] sm:$0xf] %vm2995, %v2973
    %2999 = vst.msk [vmem:[#allocation5 + $0x3c] sm:$0xf] %vm2995, %v2975
    %3000 = vst.msk [vmem:[#allocation5 + $0x50] sm:$0xf] %vm2995, %v2977
    %3001 = vst.msk [vmem:[#allocation5 + $0x64] sm:$0xf] %vm2995, %v2979
    %3002 = vst.msk [vmem:[#allocation5 + $0x78] sm:$0xf] %vm2995, %v2981
    %3003 = vst.msk [vmem:[#allocation5 + $0x8c] sm:$0xf] %vm2995, %v2983
    %vm3004 = vcmask 1042944
    %3005 = vst.msk [vmem:[#allocation5 + $0xa0] sm:$0x7] %vm3004, %v2985
    %v3006 = vld [vmem:[#allocation4 + $0x2] sm:$0xff]
    %v3007 = vld [vmem:[#allocation4 + $0xa] sm:$0xff]
    %v3008 = vld [vmem:[#allocation4 + $0x12] sm:$0xff]
    %v3009 = vld [vmem:[#allocation4 + $0x1a] sm:$0xff]
    %v3010 = vld [vmem:[#allocation4 + $0x22] sm:$0xff]
    %v3011 = vld [vmem:[#allocation4 + $0x2a] sm:$0xff]
    %v3012 = vld [vmem:[#allocation4 + $0x32] sm:$0xff]
    %v3013 = vld [vmem:[#allocation4 + $0x3a] sm:$0xff]
    %v3014 = vld [vmem:[#allocation4 + $0x42] sm:$0x3f]
    %v3015 = vpack.c.bf16 %v3007, %v3006
    %v3016 = vpack.c.bf16 %v3009, %v3008
    %v3017 = vpack.c.bf16 %v3011, %v3010
    %v3018 = vpack.c.bf16 %v3013, %v3012
    %v3019 = vpack.c.bf16 %v3014, %v3014
    %v3025 = vunpack.c.l.b16 %v3015
    %v3026 = vunpack.c.h.b16 %v3015
    %v3027 = vunpack.c.l.b16 %v3016
    %v3028 = vunpack.c.h.b16 %v3016
    %v3029 = vunpack.c.l.b16 %v3017
    %v3030 = vunpack.c.h.b16 %v3017
    %v3031 = vunpack.c.l.b16 %v3018
    %v3032 = vunpack.c.h.b16 %v3018
    %v3033 = vunpack.c.l.b16 %v3019
    %v3034 = vpack.c.b16 %v3025, %v3025
    %v3035 = vpack.c.b16 %v3026, %v3026
    %v3036 = vpack.c.b16 %v3027, %v3027
    %v3037 = vpack.c.b16 %v3028, %v3028
    %v3038 = vpack.c.b16 %v3029, %v3029
    %v3039 = vpack.c.b16 %v3030, %v3030
    %v3040 = vpack.c.b16 %v3031, %v3031
    %v3041 = vpack.c.b16 %v3032, %v3032
    %v3042 = vpack.c.b16 %v3033, %v3033
    %3052 = vst.msk [vmem:[#allocation5 + $0x4] sm:$0xf] %vm2920, %v3034
    %3053 = vst.msk [vmem:[#allocation5 + $0x18] sm:$0xf] %vm2920, %v3035
    %3054 = vst.msk [vmem:[#allocation5 + $0x2c] sm:$0xf] %vm2920, %v3036
    %3055 = vst.msk [vmem:[#allocation5 + $0x40] sm:$0xf] %vm2920, %v3037
    %3056 = vst.msk [vmem:[#allocation5 + $0x54] sm:$0xf] %vm2920, %v3038
    %3057 = vst.msk [vmem:[#allocation5 + $0x68] sm:$0xf] %vm2920, %v3039
    %3058 = vst.msk [vmem:[#allocation5 + $0x7c] sm:$0xf] %vm2920, %v3040
    %3059 = vst.msk [vmem:[#allocation5 + $0x90] sm:$0xf] %vm2920, %v3041
    %3060 = vst.msk [vmem:[#allocation5 + $0xa4] sm:$0x7] %vm2929, %v3042
    %v3061 = vld [vmem:[#allocation4 + $0xa] sm:$0xff]
    %v3062 = vld [vmem:[#allocation4 + $0x12] sm:$0xff]
    %v3063 = vld [vmem:[#allocation4 + $0x1a] sm:$0xff]
    %v3064 = vld [vmem:[#allocation4 + $0x22] sm:$0xff]
    %v3065 = vld [vmem:[#allocation4 + $0x2a] sm:$0xff]
    %v3066 = vld [vmem:[#allocation4 + $0x32] sm:$0xff]
    %v3067 = vld [vmem:[#allocation4 + $0x3a] sm:$0xff]
    %v3068 = vld [vmem:[#allocation4 + $0x42] sm:$0xff]
    %v3069 = vld [vmem:[#allocation4 + $0x4a] sm:$0x3f]
    %v3070 = vpack.c.bf16 %v3062, %v3061
    %v3071 = vpack.c.bf16 %v3064, %v3063
    %v3072 = vpack.c.bf16 %v3066, %v3065
    %v3073 = vpack.c.bf16 %v3068, %v3067
    %v3074 = vpack.c.bf16 %v3069, %v3069
    %v3080 = vunpack.c.l.b16 %v3070
    %v3081 = vunpack.c.h.b16 %v3070
    %v3082 = vunpack.c.l.b16 %v3071
    %v3083 = vunpack.c.h.b16 %v3071
    %v3084 = vunpack.c.l.b16 %v3072
    %v3085 = vunpack.c.h.b16 %v3072
    %v3086 = vunpack.c.l.b16 %v3073
    %v3087 = vunpack.c.h.b16 %v3073
    %v3088 = vunpack.c.l.b16 %v3074
    %v3089 = vpack.c.b16 %v3080, %v3080
    %v3090 = vpack.c.b16 %v3081, %v3081
    %v3091 = vpack.c.b16 %v3082, %v3082
    %v3092 = vpack.c.b16 %v3083, %v3083
    %v3093 = vpack.c.b16 %v3084, %v3084
    %v3094 = vpack.c.b16 %v3085, %v3085
    %v3095 = vpack.c.b16 %v3086, %v3086
    %v3096 = vpack.c.b16 %v3087, %v3087
    %v3097 = vpack.c.b16 %v3088, %v3088
    %3098 = vrot.lane.b32.xlu0 %v3089, 64
    %v3099 = vpop.permute.xlu0 %3098
    %3100 = vrot.lane.b32.xlu0 %v3090, 64
    %v3101 = vpop.permute.xlu0 %3100
    %3102 = vrot.lane.b32.xlu0 %v3091, 64
    %v3103 = vpop.permute.xlu0 %3102
    %3104 = vrot.lane.b32.xlu0 %v3092, 64
    %v3105 = vpop.permute.xlu0 %3104
    %3106 = vrot.lane.b32.xlu0 %v3093, 64
    %v3107 = vpop.permute.xlu0 %3106
    %3108 = vrot.lane.b32.xlu0 %v3094, 64
    %v3109 = vpop.permute.xlu0 %3108
    %3110 = vrot.lane.b32.xlu0 %v3095, 64
    %v3111 = vpop.permute.xlu0 %3110
    %3112 = vrot.lane.b32.xlu0 %v3096, 64
    %v3113 = vpop.permute.xlu0 %3112
    %3114 = vrot.lane.b32.xlu0 %v3097, 64
    %v3115 = vpop.permute.xlu0 %3114
    %3125 = vst.msk [vmem:[#allocation5 + $0x4] sm:$0xf] %vm2995, %v3099
    %3126 = vst.msk [vmem:[#allocation5 + $0x18] sm:$0xf] %vm2995, %v3101
    %3127 = vst.msk [vmem:[#allocation5 + $0x2c] sm:$0xf] %vm2995, %v3103
    %3128 = vst.msk [vmem:[#allocation5 + $0x40] sm:$0xf] %vm2995, %v3105
    %3129 = vst.msk [vmem:[#allocation5 + $0x54] sm:$0xf] %vm2995, %v3107
    %3130 = vst.msk [vmem:[#allocation5 + $0x68] sm:$0xf] %vm2995, %v3109
    %3131 = vst.msk [vmem:[#allocation5 + $0x7c] sm:$0xf] %vm2995, %v3111
    %3132 = vst.msk [vmem:[#allocation5 + $0x90] sm:$0xf] %vm2995, %v3113
    %3133 = vst.msk [vmem:[#allocation5 + $0xa4] sm:$0x7] %vm3004, %v3115
    %v3134 = vld [vmem:[#allocation4 + $0xb] sm:$0xff]
    %v3135 = vld [vmem:[#allocation4 + $0x13] sm:$0xff]
    %v3136 = vld [vmem:[#allocation4 + $0x1b] sm:$0xff]
    %v3137 = vld [vmem:[#allocation4 + $0x23] sm:$0xff]
    %v3138 = vld [vmem:[#allocation4 + $0x2b] sm:$0xff]
    %v3139 = vld [vmem:[#allocation4 + $0x33] sm:$0xff]
    %v3140 = vld [vmem:[#allocation4 + $0x3b] sm:$0xff]
    %v3141 = vld [vmem:[#allocation4 + $0x43] sm:$0xff]
    %v3142 = vld [vmem:[#allocation4 + $0x4b] sm:$0x3f]
    %v3143 = vpack.c.bf16 %v3135, %v3134
    %v3144 = vpack.c.bf16 %v3137, %v3136
    %v3145 = vpack.c.bf16 %v3139, %v3138
    %v3146 = vpack.c.bf16 %v3141, %v3140
    %v3147 = vpack.c.bf16 %v3142, %v3142
    %v3153 = vunpack.c.l.b16 %v3143
    %v3154 = vunpack.c.h.b16 %v3143
    %v3155 = vunpack.c.l.b16 %v3144
    %v3156 = vunpack.c.h.b16 %v3144
    %v3157 = vunpack.c.l.b16 %v3145
    %v3158 = vunpack.c.h.b16 %v3145
    %v3159 = vunpack.c.l.b16 %v3146
    %v3160 = vunpack.c.h.b16 %v3146
    %v3161 = vunpack.c.l.b16 %v3147
    %v3162 = vpack.c.b16 %v3153, %v3153
    %v3163 = vpack.c.b16 %v3154, %v3154
    %v3164 = vpack.c.b16 %v3155, %v3155
    %v3165 = vpack.c.b16 %v3156, %v3156
    %v3166 = vpack.c.b16 %v3157, %v3157
    %v3167 = vpack.c.b16 %v3158, %v3158
    %v3168 = vpack.c.b16 %v3159, %v3159
    %v3169 = vpack.c.b16 %v3160, %v3160
    %v3170 = vpack.c.b16 %v3161, %v3161
    %3180 = vst.msk [vmem:[#allocation5 + $0x8] sm:$0xf] %vm2920, %v3162
    %3181 = vst.msk [vmem:[#allocation5 + $0x1c] sm:$0xf] %vm2920, %v3163
    %3182 = vst.msk [vmem:[#allocation5 + $0x30] sm:$0xf] %vm2920, %v3164
    %3183 = vst.msk [vmem:[#allocation5 + $0x44] sm:$0xf] %vm2920, %v3165
    %3184 = vst.msk [vmem:[#allocation5 + $0x58] sm:$0xf] %vm2920, %v3166
    %3185 = vst.msk [vmem:[#allocation5 + $0x6c] sm:$0xf] %vm2920, %v3167
    %3186 = vst.msk [vmem:[#allocation5 + $0x80] sm:$0xf] %vm2920, %v3168
    %3187 = vst.msk [vmem:[#allocation5 + $0x94] sm:$0xf] %vm2920, %v3169
    %3188 = vst.msk [vmem:[#allocation5 + $0xa8] sm:$0x7] %vm2929, %v3170
    %v3189 = vld [vmem:[#allocation4 + $0xc] sm:$0xff]
    %v3190 = vld [vmem:[#allocation4 + $0x14] sm:$0xff]
    %v3191 = vld [vmem:[#allocation4 + $0x1c] sm:$0xff]
    %v3192 = vld [vmem:[#allocation4 + $0x24] sm:$0xff]
    %v3193 = vld [vmem:[#allocation4 + $0x2c] sm:$0xff]
    %v3194 = vld [vmem:[#allocation4 + $0x34] sm:$0xff]
    %v3195 = vld [vmem:[#allocation4 + $0x3c] sm:$0xff]
    %v3196 = vld [vmem:[#allocation4 + $0x44] sm:$0xff]
    %v3197 = vld [vmem:[#allocation4 + $0x4c] sm:$0x3f]
    %v3198 = vpack.c.bf16 %v3190, %v3189
    %v3199 = vpack.c.bf16 %v3192, %v3191
    %v3200 = vpack.c.bf16 %v3194, %v3193
    %v3201 = vpack.c.bf16 %v3196, %v3195
    %v3202 = vpack.c.bf16 %v3197, %v3197
    %v3208 = vunpack.c.l.b16 %v3198
    %v3209 = vunpack.c.h.b16 %v3198
    %v3210 = vunpack.c.l.b16 %v3199
    %v3211 = vunpack.c.h.b16 %v3199
    %v3212 = vunpack.c.l.b16 %v3200
    %v3213 = vunpack.c.h.b16 %v3200
    %v3214 = vunpack.c.l.b16 %v3201
    %v3215 = vunpack.c.h.b16 %v3201
    %v3216 = vunpack.c.l.b16 %v3202
    %v3217 = vpack.c.b16 %v3208, %v3208
    %v3218 = vpack.c.b16 %v3209, %v3209
    %v3219 = vpack.c.b16 %v3210, %v3210
    %v3220 = vpack.c.b16 %v3211, %v3211
    %v3221 = vpack.c.b16 %v3212, %v3212
    %v3222 = vpack.c.b16 %v3213, %v3213
    %v3223 = vpack.c.b16 %v3214, %v3214
    %v3224 = vpack.c.b16 %v3215, %v3215
    %v3225 = vpack.c.b16 %v3216, %v3216
    %3226 = vrot.lane.b32.xlu0 %v3217, 64
    %v3227 = vpop.permute.xlu0 %3226
    %3228 = vrot.lane.b32.xlu0 %v3218, 64
    %v3229 = vpop.permute.xlu0 %3228
    %3230 = vrot.lane.b32.xlu0 %v3219, 64
    %v3231 = vpop.permute.xlu0 %3230
    %3232 = vrot.lane.b32.xlu0 %v3220, 64
    %v3233 = vpop.permute.xlu0 %3232
    %3234 = vrot.lane.b32.xlu0 %v3221, 64
    %v3235 = vpop.permute.xlu0 %3234
    %3236 = vrot.lane.b32.xlu0 %v3222, 64
    %v3237 = vpop.permute.xlu0 %3236
    %3238 = vrot.lane.b32.xlu0 %v3223, 64
    %v3239 = vpop.permute.xlu0 %3238
    %3240 = vrot.lane.b32.xlu0 %v3224, 64
    %v3241 = vpop.permute.xlu0 %3240
    %3242 = vrot.lane.b32.xlu0 %v3225, 64
    %v3243 = vpop.permute.xlu0 %3242
    %3253 = vst.msk [vmem:[#allocation5 + $0x8] sm:$0xf] %vm2995, %v3227
    %3254 = vst.msk [vmem:[#allocation5 + $0x1c] sm:$0xf] %vm2995, %v3229
    %3255 = vst.msk [vmem:[#allocation5 + $0x30] sm:$0xf] %vm2995, %v3231
    %3256 = vst.msk [vmem:[#allocation5 + $0x44] sm:$0xf] %vm2995, %v3233
    %3257 = vst.msk [vmem:[#allocation5 + $0x58] sm:$0xf] %vm2995, %v3235
    %3258 = vst.msk [vmem:[#allocation5 + $0x6c] sm:$0xf] %vm2995, %v3237
    %3259 = vst.msk [vmem:[#allocation5 + $0x80] sm:$0xf] %vm2995, %v3239
    %3260 = vst.msk [vmem:[#allocation5 + $0x94] sm:$0xf] %vm2995, %v3241
    %3261 = vst.msk [vmem:[#allocation5 + $0xa8] sm:$0x7] %vm3004, %v3243
    %v3262 = vld [vmem:[#allocation4 + $0x14] sm:$0xff]
    %v3263 = vld [vmem:[#allocation4 + $0x1c] sm:$0xff]
    %v3264 = vld [vmem:[#allocation4 + $0x24] sm:$0xff]
    %v3265 = vld [vmem:[#allocation4 + $0x2c] sm:$0xff]
    %v3266 = vld [vmem:[#allocation4 + $0x34] sm:$0xff]
    %v3267 = vld [vmem:[#allocation4 + $0x3c] sm:$0xff]
    %v3268 = vld [vmem:[#allocation4 + $0x44] sm:$0xff]
    %v3269 = vld [vmem:[#allocation4 + $0x4c] sm:$0xff]
    %v3270 = vld [vmem:[#allocation4 + $0x54] sm:$0x3f]
    %v3271 = vpack.c.bf16 %v3263, %v3262
    %v3272 = vpack.c.bf16 %v3265, %v3264
    %v3273 = vpack.c.bf16 %v3267, %v3266
    %v3274 = vpack.c.bf16 %v3269, %v3268
    %v3275 = vpack.c.bf16 %v3270, %v3270
    %v3281 = vunpack.c.l.b16 %v3271
    %v3282 = vunpack.c.h.b16 %v3271
    %v3283 = vunpack.c.l.b16 %v3272
    %v3284 = vunpack.c.h.b16 %v3272
    %v3285 = vunpack.c.l.b16 %v3273
    %v3286 = vunpack.c.h.b16 %v3273
    %v3287 = vunpack.c.l.b16 %v3274
    %v3288 = vunpack.c.h.b16 %v3274
    %v3289 = vunpack.c.l.b16 %v3275
    %v3290 = vpack.c.b16 %v3281, %v3281
    %v3291 = vpack.c.b16 %v3282, %v3282
    %v3292 = vpack.c.b16 %v3283, %v3283
    %v3293 = vpack.c.b16 %v3284, %v3284
    %v3294 = vpack.c.b16 %v3285, %v3285
    %v3295 = vpack.c.b16 %v3286, %v3286
    %v3296 = vpack.c.b16 %v3287, %v3287
    %v3297 = vpack.c.b16 %v3288, %v3288
    %v3298 = vpack.c.b16 %v3289, %v3289
    %3308 = vst.msk [vmem:[#allocation5 + $0xc] sm:$0xf] %vm2920, %v3290
    %3309 = vst.msk [vmem:[#allocation5 + $0x20] sm:$0xf] %vm2920, %v3291
    %3310 = vst.msk [vmem:[#allocation5 + $0x34] sm:$0xf] %vm2920, %v3292
    %3311 = vst.msk [vmem:[#allocation5 + $0x48] sm:$0xf] %vm2920, %v3293
    %3312 = vst.msk [vmem:[#allocation5 + $0x5c] sm:$0xf] %vm2920, %v3294
    %3313 = vst.msk [vmem:[#allocation5 + $0x70] sm:$0xf] %vm2920, %v3295
    %3314 = vst.msk [vmem:[#allocation5 + $0x84] sm:$0xf] %vm2920, %v3296
    %3315 = vst.msk [vmem:[#allocation5 + $0x98] sm:$0xf] %vm2920, %v3297
    %3316 = vst.msk [vmem:[#allocation5 + $0xac] sm:$0x7] %vm2929, %v3298
    %v3317 = vld [vmem:[#allocation4 + $0x15] sm:$0xff]
    %v3318 = vld [vmem:[#allocation4 + $0x1d] sm:$0xff]
    %v3319 = vld [vmem:[#allocation4 + $0x25] sm:$0xff]
    %v3320 = vld [vmem:[#allocation4 + $0x2d] sm:$0xff]
    %v3321 = vld [vmem:[#allocation4 + $0x35] sm:$0xff]
    %v3322 = vld [vmem:[#allocation4 + $0x3d] sm:$0xff]
    %v3323 = vld [vmem:[#allocation4 + $0x45] sm:$0xff]
    %v3324 = vld [vmem:[#allocation4 + $0x4d] sm:$0xff]
    %v3325 = vld [vmem:[#allocation4 + $0x55] sm:$0x3f]
    %v3326 = vpack.c.bf16 %v3318, %v3317
    %v3327 = vpack.c.bf16 %v3320, %v3319
    %v3328 = vpack.c.bf16 %v3322, %v3321
    %v3329 = vpack.c.bf16 %v3324, %v3323
    %v3330 = vpack.c.bf16 %v3325, %v3325
    %v3336 = vunpack.c.l.b16 %v3326
    %v3337 = vunpack.c.h.b16 %v3326
    %v3338 = vunpack.c.l.b16 %v3327
    %v3339 = vunpack.c.h.b16 %v3327
    %v3340 = vunpack.c.l.b16 %v3328
    %v3341 = vunpack.c.h.b16 %v3328
    %v3342 = vunpack.c.l.b16 %v3329
    %v3343 = vunpack.c.h.b16 %v3329
    %v3344 = vunpack.c.l.b16 %v3330
    %v3345 = vpack.c.b16 %v3336, %v3336
    %v3346 = vpack.c.b16 %v3337, %v3337
    %v3347 = vpack.c.b16 %v3338, %v3338
    %v3348 = vpack.c.b16 %v3339, %v3339
    %v3349 = vpack.c.b16 %v3340, %v3340
    %v3350 = vpack.c.b16 %v3341, %v3341
    %v3351 = vpack.c.b16 %v3342, %v3342
    %v3352 = vpack.c.b16 %v3343, %v3343
    %v3353 = vpack.c.b16 %v3344, %v3344
    %3354 = vrot.lane.b32.xlu0 %v3345, 64
    %v3355 = vpop.permute.xlu0 %3354
    %3356 = vrot.lane.b32.xlu0 %v3346, 64
    %v3357 = vpop.permute.xlu0 %3356
    %3358 = vrot.lane.b32.xlu0 %v3347, 64
    %v3359 = vpop.permute.xlu0 %3358
    %3360 = vrot.lane.b32.xlu0 %v3348, 64
    %v3361 = vpop.permute.xlu0 %3360
    %3362 = vrot.lane.b32.xlu0 %v3349, 64
    %v3363 = vpop.permute.xlu0 %3362
    %3364 = vrot.lane.b32.xlu0 %v3350, 64
    %v3365 = vpop.permute.xlu0 %3364
    %3366 = vrot.lane.b32.xlu0 %v3351, 64
    %v3367 = vpop.permute.xlu0 %3366
    %3368 = vrot.lane.b32.xlu0 %v3352, 64
    %v3369 = vpop.permute.xlu0 %3368
    %3370 = vrot.lane.b32.xlu0 %v3353, 64
    %v3371 = vpop.permute.xlu0 %3370
    %3381 = vst.msk [vmem:[#allocation5 + $0xc] sm:$0xf] %vm2995, %v3355
    %3382 = vst.msk [vmem:[#allocation5 + $0x20] sm:$0xf] %vm2995, %v3357
    %3383 = vst.msk [vmem:[#allocation5 + $0x34] sm:$0xf] %vm2995, %v3359
    %3384 = vst.msk [vmem:[#allocation5 + $0x48] sm:$0xf] %vm2995, %v3361
    %3385 = vst.msk [vmem:[#allocation5 + $0x5c] sm:$0xf] %vm2995, %v3363
    %3386 = vst.msk [vmem:[#allocation5 + $0x70] sm:$0xf] %vm2995, %v3365
    %3387 = vst.msk [vmem:[#allocation5 + $0x84] sm:$0xf] %vm2995, %v3367
    %3388 = vst.msk [vmem:[#allocation5 + $0x98] sm:$0xf] %vm2995, %v3369
    %3389 = vst.msk [vmem:[#allocation5 + $0xac] sm:$0x7] %vm3004, %v3371
    %v3390 = vld [vmem:[#allocation4 + $0x16] sm:$0xff]
    %v3391 = vld [vmem:[#allocation4 + $0x1e] sm:$0xff]
    %v3392 = vld [vmem:[#allocation4 + $0x26] sm:$0xff]
    %v3393 = vld [vmem:[#allocation4 + $0x2e] sm:$0xff]
    %v3394 = vld [vmem:[#allocation4 + $0x36] sm:$0xff]
    %v3395 = vld [vmem:[#allocation4 + $0x3e] sm:$0xff]
    %v3396 = vld [vmem:[#allocation4 + $0x46] sm:$0xff]
    %v3397 = vld [vmem:[#allocation4 + $0x4e] sm:$0xff]
    %v3398 = vld [vmem:[#allocation4 + $0x56] sm:$0x3f]
    %v3399 = vpack.c.bf16 %v3391, %v3390
    %v3400 = vpack.c.bf16 %v3393, %v3392
    %v3401 = vpack.c.bf16 %v3395, %v3394
    %v3402 = vpack.c.bf16 %v3397, %v3396
    %v3403 = vpack.c.bf16 %v3398, %v3398
    %v3409 = vunpack.c.l.b16 %v3399
    %v3410 = vunpack.c.h.b16 %v3399
    %v3411 = vunpack.c.l.b16 %v3400
    %v3412 = vunpack.c.h.b16 %v3400
    %v3413 = vunpack.c.l.b16 %v3401
    %v3414 = vunpack.c.h.b16 %v3401
    %v3415 = vunpack.c.l.b16 %v3402
    %v3416 = vunpack.c.h.b16 %v3402
    %v3417 = vunpack.c.l.b16 %v3403
    %v3418 = vpack.c.b16 %v3409, %v3409
    %v3419 = vpack.c.b16 %v3410, %v3410
    %v3420 = vpack.c.b16 %v3411, %v3411
    %v3421 = vpack.c.b16 %v3412, %v3412
    %v3422 = vpack.c.b16 %v3413, %v3413
    %v3423 = vpack.c.b16 %v3414, %v3414
    %v3424 = vpack.c.b16 %v3415, %v3415
    %v3425 = vpack.c.b16 %v3416, %v3416
    %v3426 = vpack.c.b16 %v3417, %v3417
    %3436 = vst.msk [vmem:[#allocation5 + $0x10] sm:$0xf] %vm2920, %v3418
    %3437 = vst.msk [vmem:[#allocation5 + $0x24] sm:$0xf] %vm2920, %v3419
    %3438 = vst.msk [vmem:[#allocation5 + $0x38] sm:$0xf] %vm2920, %v3420
    %3439 = vst.msk [vmem:[#allocation5 + $0x4c] sm:$0xf] %vm2920, %v3421
    %3440 = vst.msk [vmem:[#allocation5 + $0x60] sm:$0xf] %vm2920, %v3422
    %3441 = vst.msk [vmem:[#allocation5 + $0x74] sm:$0xf] %vm2920, %v3423
    %3442 = vst.msk [vmem:[#allocation5 + $0x88] sm:$0xf] %vm2920, %v3424
    %3443 = vst.msk [vmem:[#allocation5 + $0x9c] sm:$0xf] %vm2920, %v3425
    %3444 = vst.msk [vmem:[#allocation5 + $0xb0] sm:$0x7] %vm2929, %v3426
    %v3445 = vld [vmem:[#allocation5] sm:$0xff]
    %v3446 = vld [vmem:[#allocation5 + $0x8] sm:$0xff]
    %v3447 = vld [vmem:[#allocation5 + $0x10] sm:$0xf]
    %v3448 = vld [vmem:[#allocation5 + $0x14] sm:$0xff]
    %v3449 = vld [vmem:[#allocation5 + $0x1c] sm:$0xff]
    %v3450 = vld [vmem:[#allocation5 + $0x24] sm:$0xf]
    %v3451 = vld [vmem:[#allocation5 + $0x28] sm:$0xff]
    %v3452 = vld [vmem:[#allocation5 + $0x30] sm:$0xff]
    %v3453 = vld [vmem:[#allocation5 + $0x38] sm:$0xf]
    %v3454 = vld [vmem:[#allocation5 + $0x3c] sm:$0xff]
    %v3455 = vld [vmem:[#allocation5 + $0x44] sm:$0xff]
    %v3456 = vld [vmem:[#allocation5 + $0x4c] sm:$0xf]
    %v3457 = vld [vmem:[#allocation5 + $0x50] sm:$0xff]
    %v3458 = vld [vmem:[#allocation5 + $0x58] sm:$0xff]
    %v3459 = vld [vmem:[#allocation5 + $0x60] sm:$0xf]
    %v3460 = vld [vmem:[#allocation5 + $0x64] sm:$0xff]
    %v3461 = vld [vmem:[#allocation5 + $0x6c] sm:$0xff]
    %v3462 = vld [vmem:[#allocation5 + $0x74] sm:$0xf]
    %v3463 = vld [vmem:[#allocation5 + $0x78] sm:$0xff]
    %v3464 = vld [vmem:[#allocation5 + $0x80] sm:$0xff]
    %v3465 = vld [vmem:[#allocation5 + $0x88] sm:$0xf]
    %v3466 = vld [vmem:[#allocation5 + $0x8c] sm:$0xff]
    %v3467 = vld [vmem:[#allocation5 + $0x94] sm:$0xff]
    %v3468 = vld [vmem:[#allocation5 + $0x9c] sm:$0xf]
    %v3469 = vld [vmem:[#allocation5 + $0xa0] sm:$0x77]
    %v3470 = vld [vmem:[#allocation5 + $0xa8] sm:$0x77]
    %v3471 = vld [vmem:[#allocation5 + $0xb0] sm:$0x7]
    %v3472 = vld [vmem:[%s5] sm:$0xf]
    %v3473 = vld [vmem:[%s5 + $0x4] sm:$0xf]
    %v3474 = vld [vmem:[%s5 + $0x8] sm:$0xf]
    %v3475 = vld [vmem:[%s5 + $0xc] sm:$0xf]
    %v3476 = vld [vmem:[%s5 + $0x10] sm:$0xf]
    %v3477 = vld [vmem:[%s5 + $0x14] sm:$0xf]
    %v3478 = vld [vmem:[%s5 + $0x18] sm:$0xf]
    %v3479 = vld [vmem:[%s5 + $0x1c] sm:$0xf]
    %v3480 = vld [vmem:[%s5 + $0x20] sm:$0xf]
    %v3481 = vld [vmem:[%s5 + $0x24] sm:$0xf]
    %v3482 = vld [vmem:[%s5 + $0x28] sm:$0xf]
    %v3483 = vld [vmem:[%s5 + $0x2c] sm:$0xf]
    %v3484 = vld [vmem:[%s5 + $0x30] sm:$0xf]
    %v3485 = vld [vmem:[%s5 + $0x34] sm:$0xf]
    %v3486 = vld [vmem:[%s5 + $0x38] sm:$0xf]
    %v3487 = vld [vmem:[%s5 + $0x3c] sm:$0xf]
    %v3488 = vld [vmem:[%s5 + $0x40] sm:$0xf]
    %v3489 = vld [vmem:[%s5 + $0x44] sm:$0xf]
    %v3490 = vld [vmem:[%s5 + $0x48] sm:$0xf]
    %v3491 = vld [vmem:[%s5 + $0x4c] sm:$0xf]
    %v3492 = vld [vmem:[%s5 + $0x50] sm:$0xf]
    %v3493 = vld [vmem:[%s5 + $0x54] sm:$0xf]
    %v3494 = vld [vmem:[%s5 + $0x58] sm:$0xf]
    %v3495 = vld [vmem:[%s5 + $0x5c] sm:$0xf]
    %v3496 = vld [vmem:[%s5 + $0x60] sm:$0xf]
    %v3497 = vld [vmem:[%s5 + $0x64] sm:$0xf]
    %v3498 = vld [vmem:[%s5 + $0x68] sm:$0xf]
    %v3499 = vld [vmem:[%s5 + $0x6c] sm:$0xf]
    %v3500 = vld [vmem:[%s5 + $0x70] sm:$0xf]
    %v3501 = vld [vmem:[%s5 + $0x74] sm:$0xf]
    %v3502 = vld [vmem:[%s5 + $0x78] sm:$0xf]
    %v3503 = vld [vmem:[%s5 + $0x7c] sm:$0xf]
    %v3504 = vld [vmem:[%s5 + $0x80] sm:$0xf]
    %v3505 = vld [vmem:[%s5 + $0x84] sm:$0xf]
    %v3506 = vld [vmem:[%s5 + $0x88] sm:$0xf]
    %v3507 = vld [vmem:[%s5 + $0x8c] sm:$0xf]
    %v3508 = vld [vmem:[%s5 + $0x90] sm:$0xf]
    %v3509 = vld [vmem:[%s5 + $0x94] sm:$0xf]
    %v3510 = vld [vmem:[%s5 + $0x98] sm:$0xf]
    %v3511 = vld [vmem:[%s5 + $0x9c] sm:$0xf]
    %v3512 = vld [vmem:[%s5 + $0xa0] sm:$0xf]
    %v3513 = vld [vmem:[%s5 + $0xa4] sm:$0xf]
    %v3514 = vld [vmem:[%s5 + $0xa8] sm:$0xf]
    %v3515 = vld [vmem:[%s5 + $0xac] sm:$0xf]
    %v3516 = vld [vmem:[%s5 + $0xb0] sm:$0xf]
    %v3517 = vld [vmem:[%s5 + $0xb4] sm:$0xf]
    %v3518 = vld [vmem:[%s5 + $0xb8] sm:$0xf]
    %v3519 = vld [vmem:[%s5 + $0xbc] sm:$0xf]
    %v3520 = vld [vmem:[%s5 + $0xc0] sm:$0xf]
    %v3521 = vld [vmem:[%s5 + $0xc4] sm:$0xf]
    %v3522 = vld [vmem:[%s5 + $0xc8] sm:$0xf]
    %v3523 = vld [vmem:[%s5 + $0xcc] sm:$0xf]
    %v3524 = vld [vmem:[%s5 + $0xd0] sm:$0xf]
    %v3525 = vld [vmem:[%s5 + $0xd4] sm:$0xf]
    %v3526 = vld [vmem:[%s5 + $0xd8] sm:$0xf]
    %v3527 = vld [vmem:[%s5 + $0xdc] sm:$0xf]
    %v3528 = vld [vmem:[%s5 + $0xe0] sm:$0xf]
    %v3529 = vld [vmem:[%s5 + $0xe4] sm:$0xf]
    %v3530 = vld [vmem:[%s5 + $0xe8] sm:$0xf]
    %v3531 = vld [vmem:[%s5 + $0xec] sm:$0xf]
    %v3532 = vld [vmem:[%s5 + $0xf0] sm:$0xf]
    %v3533 = vld [vmem:[%s5 + $0xf4] sm:$0xf]
    %v3534 = vld [vmem:[%s5 + $0xf8] sm:$0xf]
    %v3535 = vld [vmem:[%s5 + $0xfc] sm:$0xf]
    %v3536 = vld [vmem:[%s5 + $0x100] sm:$0xf]
    %v3537 = vld [vmem:[%s5 + $0x104] sm:$0xf]
    %v3538 = vld [vmem:[%s5 + $0x108] sm:$0xf]
    %v3539 = vld [vmem:[%s5 + $0x10c] sm:$0xf]
    %v3540 = vld [vmem:[%s5 + $0x110] sm:$0xf]
    %v3541 = vld [vmem:[%s5 + $0x114] sm:$0xf]
    %v3542 = vld [vmem:[%s5 + $0x118] sm:$0xf]
    %v3543 = vld [vmem:[%s5 + $0x11c] sm:$0xf]
    %v3544 = vld [vmem:[%s6] sm:$0x1]
    %v3546 = vlaneseq
    %v3547 = vshrl.u32 %v3546, 7
    %v3548 = vsub.s32 0, %v3547
    %v3549 = vrot.slane %v3544, %v3548
    %v3578 = vunpack.c.l.b16 %v3445
    %v3579 = vunpack.c.h.b16 %v3445
    %v3580 = vunpack.c.l.b16 %v3446
    %v3581 = vunpack.c.h.b16 %v3446
    %v3582 = vunpack.c.l.b16 %v3447
    %v3583 = vunpack.c.l.b16 %v3448
    %v3584 = vunpack.c.h.b16 %v3448
    %v3585 = vunpack.c.l.b16 %v3449
    %v3586 = vunpack.c.h.b16 %v3449
    %v3587 = vunpack.c.l.b16 %v3450
    %v3588 = vunpack.c.l.b16 %v3451
    %v3589 = vunpack.c.h.b16 %v3451
    %v3590 = vunpack.c.l.b16 %v3452
    %v3591 = vunpack.c.h.b16 %v3452
    %v3592 = vunpack.c.l.b16 %v3453
    %v3593 = vunpack.c.l.b16 %v3454
    %v3594 = vunpack.c.h.b16 %v3454
    %v3595 = vunpack.c.l.b16 %v3455
    %v3596 = vunpack.c.h.b16 %v3455
    %v3597 = vunpack.c.l.b16 %v3456
    %v3598 = vunpack.c.l.b16 %v3457
    %v3599 = vunpack.c.h.b16 %v3457
    %v3600 = vunpack.c.l.b16 %v3458
    %v3601 = vunpack.c.h.b16 %v3458
    %v3602 = vunpack.c.l.b16 %v3459
    %v3603 = vunpack.c.l.b16 %v3460
    %v3604 = vunpack.c.h.b16 %v3460
    %v3605 = vunpack.c.l.b16 %v3461
    %v3606 = vunpack.c.h.b16 %v3461
    %v3607 = vunpack.c.l.b16 %v3462
    %v3608 = vunpack.c.l.b16 %v3463
    %v3609 = vunpack.c.h.b16 %v3463
    %v3610 = vunpack.c.l.b16 %v3464
    %v3611 = vunpack.c.h.b16 %v3464
    %v3612 = vunpack.c.l.b16 %v3465
    %v3613 = vunpack.c.l.b16 %v3466
    %v3614 = vunpack.c.h.b16 %v3466
    %v3615 = vunpack.c.l.b16 %v3467
    %v3616 = vunpack.c.h.b16 %v3467
    %v3617 = vunpack.c.l.b16 %v3468
    %v3618 = vunpack.c.l.b16 %v3469
    %v3619 = vunpack.c.h.b16 %v3469
    %v3620 = vunpack.c.l.b16 %v3470
    %v3621 = vunpack.c.h.b16 %v3470
    %v3622 = vunpack.c.l.b16 %v3471
    %v3623 = vpack.c.b16 %v3583, %v3578
    %v3624 = vpack.c.b16 %v3584, %v3579
    %v3625 = vpack.c.b16 %v3585, %v3580
    %v3626 = vpack.c.b16 %v3586, %v3581
    %v3627 = vpack.c.b16 %v3587, %v3582
    %v3628 = vpack.c.b16 %v3593, %v3588
    %v3629 = vpack.c.b16 %v3594, %v3589
    %v3630 = vpack.c.b16 %v3595, %v3590
    %v3631 = vpack.c.b16 %v3596, %v3591
    %v3632 = vpack.c.b16 %v3597, %v3592
    %v3633 = vpack.c.b16 %v3603, %v3598
    %v3634 = vpack.c.b16 %v3604, %v3599
    %v3635 = vpack.c.b16 %v3605, %v3600
    %v3636 = vpack.c.b16 %v3606, %v3601
    %v3637 = vpack.c.b16 %v3607, %v3602
    %v3638 = vpack.c.b16 %v3613, %v3608
    %v3639 = vpack.c.b16 %v3614, %v3609
    %v3640 = vpack.c.b16 %v3615, %v3610
    %v3641 = vpack.c.b16 %v3616, %v3611
    %v3642 = vpack.c.b16 %v3617, %v3612
    %v3643 = vpack.c.b16 %v3618, %v3618
    %v3644 = vpack.c.b16 %v3619, %v3619
    %v3645 = vpack.c.b16 %v3620, %v3620
    %v3646 = vpack.c.b16 %v3621, %v3621
    %v3647 = vpack.c.b16 %v3622, %v3622
    %v3740 = vunpack.c.l.b16 %v3472
    %v3741 = vunpack.c.l.b16 %v3473
    %v3742 = vunpack.c.l.b16 %v3474
    %v3743 = vunpack.c.l.b16 %v3475
    %v3744 = vunpack.c.l.b16 %v3476
    %v3745 = vunpack.c.l.b16 %v3477
    %v3746 = vunpack.c.l.b16 %v3478
    %v3747 = vunpack.c.l.b16 %v3479
    %v3748 = vunpack.c.l.b16 %v3480
    %v3749 = vunpack.c.l.b16 %v3481
    %v3750 = vunpack.c.l.b16 %v3482
    %v3751 = vunpack.c.l.b16 %v3483
    %v3752 = vunpack.c.l.b16 %v3484
    %v3753 = vunpack.c.l.b16 %v3485
    %v3754 = vunpack.c.l.b16 %v3486
    %v3755 = vunpack.c.l.b16 %v3487
    %v3756 = vunpack.c.l.b16 %v3488
    %v3757 = vunpack.c.l.b16 %v3489
    %v3758 = vunpack.c.l.b16 %v3490
    %v3759 = vunpack.c.l.b16 %v3491
    %v3760 = vunpack.c.l.b16 %v3492
    %v3761 = vunpack.c.l.b16 %v3493
    %v3762 = vunpack.c.l.b16 %v3494
    %v3763 = vunpack.c.l.b16 %v3495
    %v3764 = vunpack.c.l.b16 %v3496
    %v3765 = vunpack.c.l.b16 %v3497
    %v3766 = vunpack.c.l.b16 %v3498
    %v3767 = vunpack.c.l.b16 %v3499
    %v3768 = vunpack.c.l.b16 %v3500
    %v3769 = vunpack.c.l.b16 %v3501
    %v3770 = vunpack.c.l.b16 %v3502
    %v3771 = vunpack.c.l.b16 %v3503
    %v3772 = vunpack.c.l.b16 %v3504
    %v3773 = vunpack.c.l.b16 %v3505
    %v3774 = vunpack.c.l.b16 %v3506
    %v3775 = vunpack.c.l.b16 %v3507
    %v3776 = vunpack.c.l.b16 %v3508
    %v3777 = vunpack.c.l.b16 %v3509
    %v3778 = vunpack.c.l.b16 %v3510
    %v3779 = vunpack.c.l.b16 %v3511
    %v3780 = vunpack.c.l.b16 %v3512
    %v3781 = vunpack.c.l.b16 %v3513
    %v3782 = vunpack.c.l.b16 %v3514
    %v3783 = vunpack.c.l.b16 %v3515
    %v3784 = vunpack.c.l.b16 %v3516
    %v3785 = vunpack.c.l.b16 %v3517
    %v3786 = vunpack.c.l.b16 %v3518
    %v3787 = vunpack.c.l.b16 %v3519
    %v3788 = vunpack.c.l.b16 %v3520
    %v3789 = vunpack.c.l.b16 %v3521
    %v3790 = vunpack.c.l.b16 %v3522
    %v3791 = vunpack.c.l.b16 %v3523
    %v3792 = vunpack.c.l.b16 %v3524
    %v3793 = vunpack.c.l.b16 %v3525
    %v3794 = vunpack.c.l.b16 %v3526
    %v3795 = vunpack.c.l.b16 %v3527
    %v3796 = vunpack.c.l.b16 %v3528
    %v3797 = vunpack.c.l.b16 %v3529
    %v3798 = vunpack.c.l.b16 %v3530
    %v3799 = vunpack.c.l.b16 %v3531
    %v3800 = vunpack.c.l.b16 %v3532
    %v3801 = vunpack.c.l.b16 %v3533
    %v3802 = vunpack.c.l.b16 %v3534
    %v3803 = vunpack.c.l.b16 %v3535
    %v3804 = vunpack.c.l.b16 %v3536
    %v3805 = vunpack.c.l.b16 %v3537
    %v3806 = vunpack.c.l.b16 %v3538
    %v3807 = vunpack.c.l.b16 %v3539
    %v3808 = vunpack.c.l.b16 %v3540
    %v3809 = vunpack.c.l.b16 %v3541
    %v3810 = vunpack.c.l.b16 %v3542
    %v3811 = vunpack.c.l.b16 %v3543
    %v3812 = vpack.c.b16 %v3741, %v3740
    %v3813 = vpack.c.b16 %v3743, %v3742
    %v3814 = vpack.c.b16 %v3745, %v3744
    %v3815 = vpack.c.b16 %v3747, %v3746
    %v3816 = vpack.c.b16 %v3749, %v3748
    %v3817 = vpack.c.b16 %v3751, %v3750
    %v3818 = vpack.c.b16 %v3753, %v3752
    %v3819 = vpack.c.b16 %v3755, %v3754
    %v3820 = vpack.c.b16 %v3757, %v3756
    %v3821 = vpack.c.b16 %v3759, %v3758
    %v3822 = vpack.c.b16 %v3761, %v3760
    %v3823 = vpack.c.b16 %v3763, %v3762
    %v3824 = vpack.c.b16 %v3765, %v3764
    %v3825 = vpack.c.b16 %v3767, %v3766
    %v3826 = vpack.c.b16 %v3769, %v3768
    %v3827 = vpack.c.b16 %v3771, %v3770
    %v3828 = vpack.c.b16 %v3773, %v3772
    %v3829 = vpack.c.b16 %v3775, %v3774
    %v3830 = vpack.c.b16 %v3777, %v3776
    %v3831 = vpack.c.b16 %v3779, %v3778
    %v3832 = vpack.c.b16 %v3781, %v3780
    %v3833 = vpack.c.b16 %v3783, %v3782
    %v3834 = vpack.c.b16 %v3785, %v3784
    %v3835 = vpack.c.b16 %v3787, %v3786
    %v3836 = vpack.c.b16 %v3789, %v3788
    %v3837 = vpack.c.b16 %v3791, %v3790
    %v3838 = vpack.c.b16 %v3793, %v3792
    %v3839 = vpack.c.b16 %v3795, %v3794
    %v3840 = vpack.c.b16 %v3797, %v3796
    %v3841 = vpack.c.b16 %v3799, %v3798
    %v3842 = vpack.c.b16 %v3801, %v3800
    %v3843 = vpack.c.b16 %v3803, %v3802
    %v3844 = vpack.c.b16 %v3805, %v3804
    %v3845 = vpack.c.b16 %v3807, %v3806
    %v3846 = vpack.c.b16 %v3809, %v3808
    %v3847 = vpack.c.b16 %v3811, %v3810
    %v3885 = vsel %vm2858, %v3627, 0
    %v3888 = vsel %vm2858, %v3632, 0
    %v3891 = vsel %vm2858, %v3637, 0
    %v3894 = vsel %vm2858, %v3642, 0
    %v3897 = vsel %vm2858, %v3647, 0
    %3899 = vmatprep.subr.bf16.mxu0 0
    %3900 = vmatpush1.bf16.msra.mxu0 %v3812
    %3901 = vmatprep.subr.bf16.mxu0 0
    %3902 = vmatpush1.bf16.msra.mxu0 %v3813
    %3903 = vmatprep.subr.bf16.mxu0 0
    %3904 = vmatpush1.bf16.msra.mxu0 %v3814
    %3905 = vmatprep.subr.bf16.mxu0 0
    %3906 = vmatpush1.bf16.msra.mxu0 %v3815
    %3907 = vmatprep.subr.bf16.mxu0 0
    %3908 = vmatpush1.bf16.msra.mxu0 %v3816
    %3909 = vmatprep.subr.bf16.mxu0 0
    %3910 = vmatpush1.bf16.msra.mxu0 %v3817
    %3911 = vmatprep.subr.bf16.mxu0 0
    %3912 = vmatpush1.bf16.msra.mxu0 %v3818
    %3913 = vmatprep.subr.bf16.mxu0 0
    %3914 = vmatpush1.bf16.msra.mxu0 %v3819
    %3915 = vmatprep.subr.bf16.mxu0 0
    %3916 = vmatpush1.bf16.msra.mxu0 %v3820
    %3917 = vmatprep.subr.bf16.mxu0 0
    %3918 = vmatpush1.bf16.msra.mxu0 %v3821
    %3919 = vmatprep.subr.bf16.mxu0 0
    %3920 = vmatpush1.bf16.msra.mxu0 %v3822
    %3921 = vmatprep.subr.bf16.mxu0 0
    %3922 = vmatpush1.bf16.msra.mxu0 %v3823
    %3923 = vmatprep.subr.bf16.mxu0 0
    %3924 = vmatpush1.bf16.msra.mxu0 %v3824
    %3925 = vmatprep.subr.bf16.mxu0 0
    %3926 = vmatpush1.bf16.msra.mxu0 %v3825
    %3927 = vmatprep.subr.bf16.mxu0 0
    %3928 = vmatpush1.bf16.msra.mxu0 %v3826
    %3929 = vmatprep.subr.bf16.mxu0 0
    %3930 = vmatpush1.bf16.msra.mxu0 %v3827
    %3931 = vmatprep.mubr.bf16.mxu0 %v3624
    %3932 = vmatmul.mubr.bf16.gmra.mrb[0].mxu0 %v3623
    %v3933 = vpop.f32.mrb[0].mxu0
    %v3934 = vadd.f32 %v3549, %v3933
    %v3935 = vpop.f32.mrb[0].mxu0
    %v3936 = vpop.f32.mrb[0].mxu0
    %v3937 = vadd.f32 %v3549, %v3936
    %v3938 = vpop.f32.mrb[0].mxu0
    %3939 = vmatprep.mubr.bf16.mxu0 %v3629
    %3940 = vmatmul.mubr.bf16.gmra.mrb[0].mxu0 %v3628
    %v3941 = vpop.f32.mrb[0].mxu0
    %v3942 = vadd.f32 %v3549, %v3941
    %v3943 = vpop.f32.mrb[0].mxu0
    %v3944 = vpop.f32.mrb[0].mxu0
    %v3945 = vadd.f32 %v3549, %v3944
    %v3946 = vpop.f32.mrb[0].mxu0
    %3947 = vmatprep.mubr.bf16.mxu0 %v3634
    %3948 = vmatmul.mubr.bf16.gmra.mrb[0].mxu0 %v3633
    %v3949 = vpop.f32.mrb[0].mxu0
    %v3950 = vadd.f32 %v3549, %v3949
    %v3951 = vpop.f32.mrb[0].mxu0
    %v3952 = vpop.f32.mrb[0].mxu0
    %v3953 = vadd.f32 %v3549, %v3952
    %v3954 = vpop.f32.mrb[0].mxu0
    %3955 = vmatprep.mubr.bf16.mxu0 %v3639
    %3956 = vmatmul.mubr.bf16.gmra.mrb[0].mxu0 %v3638
    %v3957 = vpop.f32.mrb[0].mxu0
    %v3958 = vadd.f32 %v3549, %v3957
    %v3959 = vpop.f32.mrb[0].mxu0
    %v3960 = vpop.f32.mrb[0].mxu0
    %v3961 = vadd.f32 %v3549, %v3960
    %v3962 = vpop.f32.mrb[0].mxu0
    %3963 = vmatprep.mubr.bf16.mxu0 %v3644
    %3964 = vmatmul.mubr.bf16.gmra.mrb[0].mxu0 %v3643
    %v3965 = vpop.f32.mrb[0].mxu0
    %v3966 = vadd.f32 %v3549, %v3965
    %v3967 = vpop.f32.mrb[0].mxu0
    %v3968 = vpop.f32.mrb[0].mxu0
    %v3969 = vpop.f32.mrb[0].mxu0
    %3970 = vdwg.mxu0
    %3971 = vmatprep.subr.bf16.mxu0 0
    %3972 = vmatpush1.bf16.msra.mxu0 %v3828
    %3973 = vmatprep.subr.bf16.mxu0 0
    %3974 = vmatpush1.bf16.msra.mxu0 %v3829
    %3975 = vmatprep.subr.bf16.mxu0 0
    %3976 = vmatpush1.bf16.msra.mxu0 %v3830
    %3977 = vmatprep.subr.bf16.mxu0 0
    %3978 = vmatpush1.bf16.msra.mxu0 %v3831
    %3979 = vmatprep.subr.bf16.mxu0 0
    %3980 = vmatpush1.bf16.msra.mxu0 %v3832
    %3981 = vmatprep.subr.bf16.mxu0 0
    %3982 = vmatpush1.bf16.msra.mxu0 %v3833
    %3983 = vmatprep.subr.bf16.mxu0 0
    %3984 = vmatpush1.bf16.msra.mxu0 %v3834
    %3985 = vmatprep.subr.bf16.mxu0 0
    %3986 = vmatpush1.bf16.msra.mxu0 %v3835
    %3987 = vmatprep.subr.bf16.mxu0 0
    %3988 = vmatpush1.bf16.msra.mxu0 %v3836
    %3989 = vmatprep.subr.bf16.mxu0 0
    %3990 = vmatpush1.bf16.msra.mxu0 %v3837
    %3991 = vmatprep.subr.bf16.mxu0 0
    %3992 = vmatpush1.bf16.msra.mxu0 %v3838
    %3993 = vmatprep.subr.bf16.mxu0 0
    %3994 = vmatpush1.bf16.msra.mxu0 %v3839
    %3995 = vmatprep.subr.bf16.mxu0 0
    %3996 = vmatpush1.bf16.msra.mxu0 %v3840
    %3997 = vmatprep.subr.bf16.mxu0 0
    %3998 = vmatpush1.bf16.msra.mxu0 %v3841
    %3999 = vmatprep.subr.bf16.mxu0 0
    %4000 = vmatpush1.bf16.msra.mxu0 %v3842
    %4001 = vmatprep.subr.bf16.mxu0 0
    %4002 = vmatpush1.bf16.msra.mxu0 %v3843
    %4003 = vmatprep.mubr.bf16.mxu0 %v3626
    %4004 = vmatmul.mubr.bf16.gmra.mrb[0].mxu0 %v3625
    %v4005 = vpop.f32.mrb[0].mxu0
    %v4006 = vadd.f32 %v3934, %v4005
    %v4007 = vpop.f32.mrb[0].mxu0
    %v4008 = vpop.f32.mrb[0].mxu0
    %v4009 = vadd.f32 %v3937, %v4008
    %v4010 = vpop.f32.mrb[0].mxu0
    %4011 = vmatprep.mubr.bf16.mxu0 %v3631
    %4012 = vmatmul.mubr.bf16.gmra.mrb[0].mxu0 %v3630
    %v4013 = vpop.f32.mrb[0].mxu0
    %v4014 = vadd.f32 %v3942, %v4013
    %v4015 = vpop.f32.mrb[0].mxu0
    %v4016 = vpop.f32.mrb[0].mxu0
    %v4017 = vadd.f32 %v3945, %v4016
    %v4018 = vpop.f32.mrb[0].mxu0
    %4019 = vmatprep.mubr.bf16.mxu0 %v3636
    %4020 = vmatmul.mubr.bf16.gmra.mrb[0].mxu0 %v3635
    %v4021 = vpop.f32.mrb[0].mxu0
    %v4022 = vadd.f32 %v3950, %v4021
    %v4023 = vpop.f32.mrb[0].mxu0
    %v4024 = vpop.f32.mrb[0].mxu0
    %v4025 = vadd.f32 %v3953, %v4024
    %v4026 = vpop.f32.mrb[0].mxu0
    %4027 = vmatprep.mubr.bf16.mxu0 %v3641
    %4028 = vmatmul.mubr.bf16.gmra.mrb[0].mxu0 %v3640
    %v4029 = vpop.f32.mrb[0].mxu0
    %v4030 = vadd.f32 %v3958, %v4029
    %v4031 = vpop.f32.mrb[0].mxu0
    %v4032 = vpop.f32.mrb[0].mxu0
    %v4033 = vadd.f32 %v3961, %v4032
    %v4034 = vpop.f32.mrb[0].mxu0
    %4035 = vmatprep.mubr.bf16.mxu0 %v3646
    %4036 = vmatmul.mubr.bf16.gmra.mrb[0].mxu0 %v3645
    %v4037 = vpop.f32.mrb[0].mxu0
    %v4038 = vadd.f32 %v3966, %v4037
    %v4039 = vpop.f32.mrb[0].mxu0
    %v4040 = vpop.f32.mrb[0].mxu0
    %v4041 = vpop.f32.mrb[0].mxu0
    %4042 = vdwg.mxu0
    %4043 = vmatprep.subr.bf16.mxu0 0
    %4044 = vmatpush1.bf16.msra.mxu0 %v3844
    %4045 = vmatprep.subr.bf16.mxu0 0
    %4046 = vmatpush1.bf16.msra.mxu0 %v3845
    %4047 = vmatprep.subr.bf16.mxu0 0
    %4048 = vmatpush1.bf16.msra.mxu0 %v3846
    %4049 = vmatprep.subr.bf16.mxu0 0
    %4050 = vmatpush1.bf16.msra.mxu0 %v3847
    %4051 = vmatprep.subr.bf16.mxu0 0
    %4052 = vmatpush1.bf16.msra.mxu0 0
    %4053 = vmatprep.subr.bf16.mxu0 0
    %4054 = vmatpush1.bf16.msra.mxu0 0
    %4055 = vmatprep.subr.bf16.mxu0 0
    %4056 = vmatpush1.bf16.msra.mxu0 0
    %4057 = vmatprep.subr.bf16.mxu0 0
    %4058 = vmatpush1.bf16.msra.mxu0 0
    %4059 = vmatprep.subr.bf16.mxu0 0
    %4060 = vmatpush1.bf16.msra.mxu0 0
    %4061 = vmatprep.subr.bf16.mxu0 0
    %4062 = vmatpush1.bf16.msra.mxu0 0
    %4063 = vmatprep.subr.bf16.mxu0 0
    %4064 = vmatpush1.bf16.msra.mxu0 0
    %4065 = vmatprep.subr.bf16.mxu0 0
    %4066 = vmatpush1.bf16.msra.mxu0 0
    %4067 = vmatprep.subr.bf16.mxu0 0
    %4068 = vmatpush1.bf16.msra.mxu0 0
    %4069 = vmatprep.subr.bf16.mxu0 0
    %4070 = vmatpush1.bf16.msra.mxu0 0
    %4071 = vmatprep.subr.bf16.mxu0 0
    %4072 = vmatpush1.bf16.msra.mxu0 0
    %4073 = vmatprep.subr.bf16.mxu0 0
    %4074 = vmatpush1.bf16.msra.mxu0 0
    %4075 = vmatprep.mubr.bf16.mxu0 0
    %4076 = vmatmul.mubr.bf16.gmra.mrb[0].mxu0 %v3885
    %v4077 = vpop.f32.mrb[0].mxu0
    %v4078 = vadd.f32 %v4006, %v4077
    %v4079 = vpop.f32.mrb[0].mxu0
    %v4080 = vpop.f32.mrb[0].mxu0
    %v4081 = vadd.f32 %v4009, %v4080
    %v4082 = vpop.f32.mrb[0].mxu0
    %4083 = vmatprep.mubr.bf16.mxu0 0
    %4084 = vmatmul.mubr.bf16.gmra.mrb[0].mxu0 %v3888
    %v4085 = vpop.f32.mrb[0].mxu0
    %v4086 = vadd.f32 %v4014, %v4085
    %v4087 = vpop.f32.mrb[0].mxu0
    %v4088 = vpop.f32.mrb[0].mxu0
    %v4089 = vadd.f32 %v4017, %v4088
    %v4090 = vpop.f32.mrb[0].mxu0
    %4091 = vmatprep.mubr.bf16.mxu0 0
    %4092 = vmatmul.mubr.bf16.gmra.mrb[0].mxu0 %v3891
    %v4093 = vpop.f32.mrb[0].mxu0
    %v4094 = vadd.f32 %v4022, %v4093
    %v4095 = vpop.f32.mrb[0].mxu0
    %v4096 = vpop.f32.mrb[0].mxu0
    %v4097 = vadd.f32 %v4025, %v4096
    %v4098 = vpop.f32.mrb[0].mxu0
    %4099 = vmatprep.mubr.bf16.mxu0 0
    %4100 = vmatmul.mubr.bf16.gmra.mrb[0].mxu0 %v3894
    %v4101 = vpop.f32.mrb[0].mxu0
    %v4102 = vadd.f32 %v4030, %v4101
    %v4103 = vpop.f32.mrb[0].mxu0
    %v4104 = vpop.f32.mrb[0].mxu0
    %v4105 = vadd.f32 %v4033, %v4104
    %v4106 = vpop.f32.mrb[0].mxu0
    %4107 = vmatprep.mubr.bf16.mxu0 0
    %4108 = vmatmul.mubr.bf16.gmra.mrb[0].mxu0 %v3897
    %v4109 = vpop.f32.mrb[0].mxu0
    %v4110 = vadd.f32 %v4038, %v4109
    %v4111 = vpop.f32.mrb[0].mxu0
    %v4112 = vpop.f32.mrb[0].mxu0
    %v4113 = vpop.f32.mrb[0].mxu0
    %4114 = vdwg.mxu0
    %v4115 = vmax.f32 %v4078, 0.0
    %v4116 = vmax.f32 %v4081, 0.0
    %v4117 = vmax.f32 %v4086, 0.0
    %v4118 = vmax.f32 %v4089, 0.0
    %v4119 = vmax.f32 %v4094, 0.0
    %v4120 = vmax.f32 %v4097, 0.0
    %v4121 = vmax.f32 %v4102, 0.0
    %v4122 = vmax.f32 %v4105, 0.0
    %v4123 = vmax.f32 %v4110, 0.0
    %4124 = vst.msk [vmem:[#allocation6] sm:$0xff] %vm2858, %v4115
    %4125 = vst.msk [vmem:[#allocation6 + $0x8] sm:$0xff] %vm2858, %v4116
    %4126 = vst.msk [vmem:[#allocation6 + $0x10] sm:$0xff] %vm2858, %v4117
    %4127 = vst.msk [vmem:[#allocation6 + $0x18] sm:$0xff] %vm2858, %v4118
    %4128 = vst.msk [vmem:[#allocation6 + $0x20] sm:$0xff] %vm2858, %v4119
    %4129 = vst.msk [vmem:[#allocation6 + $0x28] sm:$0xff] %vm2858, %v4120
    %4130 = vst.msk [vmem:[#allocation6 + $0x30] sm:$0xff] %vm2858, %v4121
    %4131 = vst.msk [vmem:[#allocation6 + $0x38] sm:$0xff] %vm2858, %v4122
    %4132 = vst.msk [vmem:[#allocation6 + $0x40] sm:$0x3f] %vm2872, %v4123
    %v4133 = vld [vmem:[#allocation6] sm:$0x1]
    %v4134 = vpack.c.bf16 %v4133, %v4133
    %vm4135 = vcmask 516096
    %vm4136 = vsmask.f32 256
    %vm4137 = vmand %vm4135, %vm4136
    %v4138 = vld [vmem:[#allocation7] sm:$0x1]
    %v4139 = vsel %vm4137, %v4134, %v4138
    %4140 = vst [vmem:[#allocation7] sm:$0x1] %v4139
    %v4141 = vld [vmem:[#allocation6 + $0x1] sm:$0x1]
    %v4142 = vpack.c.bf16 %v4141, %v4141
    %v4145 = vunpack.c.l.s4 1966171168
    %v4146 = vunpack.c.0.s8 %v4145
    %v4147 = vlaneseq
    %v4148 = vshrl.u32 %v4147, 7
    %v4149 = vsub.s32 %v4146, %v4148
    %v4150 = vrot.slane %v4142, %v4149
    %v4152 = vunpack.c.l.s4 1966171168
    %v4153 = vunpack.c.0.s8 %v4152
    %v4154 = vlaneseq
    %v4155 = vshrl.u32 %v4154, 7
    %v4156 = vsub.s32 %v4153, %v4155
    %v4157 = vrot.slane %v4150, %v4156
    %4158 = vrot.lane.b32.xlu0 %v4157, 64
    %v4159 = vpop.permute.xlu0 %4158
    %vm4161 = vcmask 1040896
    %vm4162 = vmand %vm4161, %vm4136
    %v4163 = vld [vmem:[#allocation7] sm:$0x1]
    %v4164 = vsel %vm4162, %v4159, %v4163
    %4165 = vst [vmem:[#allocation7] sm:$0x1] %v4164
    %v4166 = vld [vmem:[#allocation6 + $0x2] sm:$0x1]
    %v4167 = vpack.c.bf16 %v4166, %v4166
    %v4168 = vld [vmem:[#allocation7 + $0x1] sm:$0x1]
    %v4169 = vsel %vm4137, %v4167, %v4168
    %4170 = vst [vmem:[#allocation7 + $0x1] sm:$0x1] %v4169
    %v4171 = vld [vmem:[#allocation6 + $0x3] sm:$0x1]
    %v4172 = vpack.c.bf16 %v4171, %v4171
    %v4175 = vunpack.c.l.s4 1966171168
    %v4176 = vunpack.c.0.s8 %v4175
    %v4177 = vlaneseq
    %v4178 = vshrl.u32 %v4177, 7
    %v4179 = vsub.s32 %v4176, %v4178
    %v4180 = vrot.slane %v4172, %v4179
    %v4182 = vunpack.c.l.s4 1966171168
    %v4183 = vunpack.c.0.s8 %v4182
    %v4184 = vlaneseq
    %v4185 = vshrl.u32 %v4184, 7
    %v4186 = vsub.s32 %v4183, %v4185
    %v4187 = vrot.slane %v4180, %v4186
    %4188 = vrot.lane.b32.xlu0 %v4187, 64
    %v4189 = vpop.permute.xlu0 %4188
    %v4191 = vld [vmem:[#allocation7 + $0x1] sm:$0x1]
    %v4192 = vsel %vm4162, %v4189, %v4191
    %4193 = vst [vmem:[#allocation7 + $0x1] sm:$0x1] %v4192
    %v4194 = vld [vmem:[#allocation6 + $0x4] sm:$0x1]
    %v4195 = vpack.c.bf16 %v4194, %v4194
    %v4196 = vld [vmem:[#allocation7 + $0x2] sm:$0x1]
    %v4197 = vsel %vm4137, %v4195, %v4196
    %4198 = vst [vmem:[#allocation7 + $0x2] sm:$0x1] %v4197
    %v4199 = vld [vmem:[#allocation6 + $0x5] sm:$0x1]
    %v4200 = vpack.c.bf16 %v4199, %v4199
    %v4203 = vunpack.c.l.s4 1966171168
    %v4204 = vunpack.c.0.s8 %v4203
    %v4205 = vlaneseq
    %v4206 = vshrl.u32 %v4205, 7
    %v4207 = vsub.s32 %v4204, %v4206
    %v4208 = vrot.slane %v4200, %v4207
    %v4210 = vunpack.c.l.s4 1966171168
    %v4211 = vunpack.c.0.s8 %v4210
    %v4212 = vlaneseq
    %v4213 = vshrl.u32 %v4212, 7
    %v4214 = vsub.s32 %v4211, %v4213
    %v4215 = vrot.slane %v4208, %v4214
    %4216 = vrot.lane.b32.xlu0 %v4215, 64
    %v4217 = vpop.permute.xlu0 %4216
    %v4219 = vld [vmem:[#allocation7 + $0x2] sm:$0x1]
    %v4220 = vsel %vm4162, %v4217, %v4219
    %4221 = vst [vmem:[#allocation7 + $0x2] sm:$0x1] %v4220
    %v4222 = vld [vmem:[#allocation6 + $0x6] sm:$0x1]
    %v4223 = vpack.c.bf16 %v4222, %v4222
    %v4224 = vld [vmem:[#allocation7 + $0x3] sm:$0x1]
    %v4225 = vsel %vm4137, %v4223, %v4224
    %4226 = vst [vmem:[#allocation7 + $0x3] sm:$0x1] %v4225
    %v4227 = vld [vmem:[#allocation6 + $0xa] sm:$0x1]
    %v4228 = vpack.c.bf16 %v4227, %v4227
    %v4231 = vunpack.c.l.s4 1966171168
    %v4232 = vunpack.c.0.s8 %v4231
    %v4233 = vlaneseq
    %v4234 = vshrl.u32 %v4233, 7
    %v4235 = vsub.s32 %v4232, %v4234
    %v4236 = vrot.slane %v4228, %v4235
    %v4238 = vunpack.c.l.s4 1966171168
    %v4239 = vunpack.c.0.s8 %v4238
    %v4240 = vlaneseq
    %v4241 = vshrl.u32 %v4240, 7
    %v4242 = vsub.s32 %v4239, %v4241
    %v4243 = vrot.slane %v4236, %v4242
    %4244 = vrot.lane.b32.xlu0 %v4243, 64
    %v4245 = vpop.permute.xlu0 %4244
    %v4247 = vld [vmem:[#allocation7 + $0x3] sm:$0x1]
    %v4248 = vsel %vm4162, %v4245, %v4247
    %4249 = vst [vmem:[#allocation7 + $0x3] sm:$0x1] %v4248
    %v4250 = vld [vmem:[#allocation6 + $0xb] sm:$0x1]
    %v4251 = vpack.c.bf16 %v4250, %v4250
    %v4252 = vld [vmem:[#allocation7 + $0x4] sm:$0x1]
    %v4253 = vsel %vm4137, %v4251, %v4252
    %4254 = vst [vmem:[#allocation7 + $0x4] sm:$0x1] %v4253
    %v4255 = vld [vmem:[#allocation6 + $0xc] sm:$0x1]
    %v4256 = vpack.c.bf16 %v4255, %v4255
    %v4259 = vunpack.c.l.s4 1966171168
    %v4260 = vunpack.c.0.s8 %v4259
    %v4261 = vlaneseq
    %v4262 = vshrl.u32 %v4261, 7
    %v4263 = vsub.s32 %v4260, %v4262
    %v4264 = vrot.slane %v4256, %v4263
    %v4266 = vunpack.c.l.s4 1966171168
    %v4267 = vunpack.c.0.s8 %v4266
    %v4268 = vlaneseq
    %v4269 = vshrl.u32 %v4268, 7
    %v4270 = vsub.s32 %v4267, %v4269
    %v4271 = vrot.slane %v4264, %v4270
    %4272 = vrot.lane.b32.xlu0 %v4271, 64
    %v4273 = vpop.permute.xlu0 %4272
    %v4275 = vld [vmem:[#allocation7 + $0x4] sm:$0x1]
    %v4276 = vsel %vm4162, %v4273, %v4275
    %4277 = vst [vmem:[#allocation7 + $0x4] sm:$0x1] %v4276
    %v4278 = vld [vmem:[#allocation6 + $0xd] sm:$0x1]
    %v4279 = vpack.c.bf16 %v4278, %v4278
    %v4280 = vld [vmem:[#allocation7 + $0x5] sm:$0x1]
    %v4281 = vsel %vm4137, %v4279, %v4280
    %4282 = vst [vmem:[#allocation7 + $0x5] sm:$0x1] %v4281
    %v4283 = vld [vmem:[#allocation6 + $0xe] sm:$0x1]
    %v4284 = vpack.c.bf16 %v4283, %v4283
    %v4287 = vunpack.c.l.s4 1966171168
    %v4288 = vunpack.c.0.s8 %v4287
    %v4289 = vlaneseq
    %v4290 = vshrl.u32 %v4289, 7
    %v4291 = vsub.s32 %v4288, %v4290
    %v4292 = vrot.slane %v4284, %v4291
    %v4294 = vunpack.c.l.s4 1966171168
    %v4295 = vunpack.c.0.s8 %v4294
    %v4296 = vlaneseq
    %v4297 = vshrl.u32 %v4296, 7
    %v4298 = vsub.s32 %v4295, %v4297
    %v4299 = vrot.slane %v4292, %v4298
    %4300 = vrot.lane.b32.xlu0 %v4299, 64
    %v4301 = vpop.permute.xlu0 %4300
    %v4303 = vld [vmem:[#allocation7 + $0x5] sm:$0x1]
    %v4304 = vsel %vm4162, %v4301, %v4303
    %4305 = vst [vmem:[#allocation7 + $0x5] sm:$0x1] %v4304
    %v4306 = vld [vmem:[#allocation6 + $0xf] sm:$0x1]
    %v4307 = vpack.c.bf16 %v4306, %v4306
    %v4308 = vld [vmem:[#allocation7 + $0x6] sm:$0x1]
    %v4309 = vsel %vm4137, %v4307, %v4308
    %4310 = vst [vmem:[#allocation7 + $0x6] sm:$0x1] %v4309
    %v4311 = vld [vmem:[#allocation6 + $0x10] sm:$0x1]
    %v4312 = vpack.c.bf16 %v4311, %v4311
    %v4315 = vunpack.c.l.s4 1966171168
    %v4316 = vunpack.c.0.s8 %v4315
    %v4317 = vlaneseq
    %v4318 = vshrl.u32 %v4317, 7
    %v4319 = vsub.s32 %v4316, %v4318
    %v4320 = vrot.slane %v4312, %v4319
    %v4322 = vunpack.c.l.s4 1966171168
    %v4323 = vunpack.c.0.s8 %v4322
    %v4324 = vlaneseq
    %v4325 = vshrl.u32 %v4324, 7
    %v4326 = vsub.s32 %v4323, %v4325
    %v4327 = vrot.slane %v4320, %v4326
    %4328 = vrot.lane.b32.xlu0 %v4327, 64
    %v4329 = vpop.permute.xlu0 %4328
    %v4331 = vld [vmem:[#allocation7 + $0x6] sm:$0x1]
    %v4332 = vsel %vm4162, %v4329, %v4331
    %4333 = vst [vmem:[#allocation7 + $0x6] sm:$0x1] %v4332
    %v4334 = vld [vmem:[#allocation6 + $0x14] sm:$0x1]
    %v4335 = vpack.c.bf16 %v4334, %v4334
    %v4336 = vld [vmem:[#allocation7 + $0x7] sm:$0x1]
    %v4337 = vsel %vm4137, %v4335, %v4336
    %4338 = vst [vmem:[#allocation7 + $0x7] sm:$0x1] %v4337
    %v4339 = vld [vmem:[#allocation6 + $0x15] sm:$0x1]
    %v4340 = vpack.c.bf16 %v4339, %v4339
    %v4343 = vunpack.c.l.s4 1966171168
    %v4344 = vunpack.c.0.s8 %v4343
    %v4345 = vlaneseq
    %v4346 = vshrl.u32 %v4345, 7
    %v4347 = vsub.s32 %v4344, %v4346
    %v4348 = vrot.slane %v4340, %v4347
    %v4350 = vunpack.c.l.s4 1966171168
    %v4351 = vunpack.c.0.s8 %v4350
    %v4352 = vlaneseq
    %v4353 = vshrl.u32 %v4352, 7
    %v4354 = vsub.s32 %v4351, %v4353
    %v4355 = vrot.slane %v4348, %v4354
    %4356 = vrot.lane.b32.xlu0 %v4355, 64
    %v4357 = vpop.permute.xlu0 %4356
    %v4359 = vld [vmem:[#allocation7 + $0x7] sm:$0x1]
    %v4360 = vsel %vm4162, %v4357, %v4359
    %4361 = vst [vmem:[#allocation7 + $0x7] sm:$0x1] %v4360
    %v4362 = vld [vmem:[#allocation6 + $0x16] sm:$0x1]
    %v4363 = vpack.c.bf16 %v4362, %v4362
    %v4364 = vld [vmem:[#allocation7 + $0x8] sm:$0x1]
    %v4365 = vsel %vm4137, %v4363, %v4364
    %4366 = vst [vmem:[#allocation7 + $0x8] sm:$0x1] %v4365
    %v4367 = vld [vmem:[#allocation6 + $0x17] sm:$0x1]
    %v4368 = vpack.c.bf16 %v4367, %v4367
    %v4371 = vunpack.c.l.s4 1966171168
    %v4372 = vunpack.c.0.s8 %v4371
    %v4373 = vlaneseq
    %v4374 = vshrl.u32 %v4373, 7
    %v4375 = vsub.s32 %v4372, %v4374
    %v4376 = vrot.slane %v4368, %v4375
    %v4378 = vunpack.c.l.s4 1966171168
    %v4379 = vunpack.c.0.s8 %v4378
    %v4380 = vlaneseq
    %v4381 = vshrl.u32 %v4380, 7
    %v4382 = vsub.s32 %v4379, %v4381
    %v4383 = vrot.slane %v4376, %v4382
    %4384 = vrot.lane.b32.xlu0 %v4383, 64
    %v4385 = vpop.permute.xlu0 %4384
    %v4387 = vld [vmem:[#allocation7 + $0x8] sm:$0x1]
    %v4388 = vsel %vm4162, %v4385, %v4387
    %4389 = vst [vmem:[#allocation7 + $0x8] sm:$0x1] %v4388
    %v4390 = vld [vmem:[#allocation6 + $0x18] sm:$0x1]
    %v4391 = vpack.c.bf16 %v4390, %v4390
    %v4392 = vld [vmem:[#allocation7 + $0x9] sm:$0x1]
    %v4393 = vsel %vm4137, %v4391, %v4392
    %4394 = vst [vmem:[#allocation7 + $0x9] sm:$0x1] %v4393
    %v4395 = vld [vmem:[#allocation6 + $0x19] sm:$0x1]
    %v4396 = vpack.c.bf16 %v4395, %v4395
    %v4399 = vunpack.c.l.s4 1966171168
    %v4400 = vunpack.c.0.s8 %v4399
    %v4401 = vlaneseq
    %v4402 = vshrl.u32 %v4401, 7
    %v4403 = vsub.s32 %v4400, %v4402
    %v4404 = vrot.slane %v4396, %v4403
    %v4406 = vunpack.c.l.s4 1966171168
    %v4407 = vunpack.c.0.s8 %v4406
    %v4408 = vlaneseq
    %v4409 = vshrl.u32 %v4408, 7
    %v4410 = vsub.s32 %v4407, %v4409
    %v4411 = vrot.slane %v4404, %v4410
    %4412 = vrot.lane.b32.xlu0 %v4411, 64
    %v4413 = vpop.permute.xlu0 %4412
    %v4415 = vld [vmem:[#allocation7 + $0x9] sm:$0x1]
    %v4416 = vsel %vm4162, %v4413, %v4415
    %4417 = vst [vmem:[#allocation7 + $0x9] sm:$0x1] %v4416
    %v4418 = vld [vmem:[#allocation6 + $0x1a] sm:$0x1]
    %v4419 = vpack.c.bf16 %v4418, %v4418
    %v4420 = vld [vmem:[#allocation7 + $0xa] sm:$0x1]
    %v4421 = vsel %vm4137, %v4419, %v4420
    %4422 = vst [vmem:[#allocation7 + $0xa] sm:$0x1] %v4421
    %v4423 = vld [vmem:[#allocation6 + $0x1e] sm:$0x1]
    %v4424 = vpack.c.bf16 %v4423, %v4423
    %v4427 = vunpack.c.l.s4 1966171168
    %v4428 = vunpack.c.0.s8 %v4427
    %v4429 = vlaneseq
    %v4430 = vshrl.u32 %v4429, 7
    %v4431 = vsub.s32 %v4428, %v4430
    %v4432 = vrot.slane %v4424, %v4431
    %v4434 = vunpack.c.l.s4 1966171168
    %v4435 = vunpack.c.0.s8 %v4434
    %v4436 = vlaneseq
    %v4437 = vshrl.u32 %v4436, 7
    %v4438 = vsub.s32 %v4435, %v4437
    %v4439 = vrot.slane %v4432, %v4438
    %4440 = vrot.lane.b32.xlu0 %v4439, 64
    %v4441 = vpop.permute.xlu0 %4440
    %v4443 = vld [vmem:[#allocation7 + $0xa] sm:$0x1]
    %v4444 = vsel %vm4162, %v4441, %v4443
    %4445 = vst [vmem:[#allocation7 + $0xa] sm:$0x1] %v4444
    %v4446 = vld [vmem:[#allocation6 + $0x1f] sm:$0x1]
    %v4447 = vpack.c.bf16 %v4446, %v4446
    %v4448 = vld [vmem:[#allocation7 + $0xb] sm:$0x1]
    %v4449 = vsel %vm4137, %v4447, %v4448
    %4450 = vst [vmem:[#allocation7 + $0xb] sm:$0x1] %v4449
    %v4451 = vld [vmem:[#allocation6 + $0x20] sm:$0x1]
    %v4452 = vpack.c.bf16 %v4451, %v4451
    %v4455 = vunpack.c.l.s4 1966171168
    %v4456 = vunpack.c.0.s8 %v4455
    %v4457 = vlaneseq
    %v4458 = vshrl.u32 %v4457, 7
    %v4459 = vsub.s32 %v4456, %v4458
    %v4460 = vrot.slane %v4452, %v4459
    %v4462 = vunpack.c.l.s4 1966171168
    %v4463 = vunpack.c.0.s8 %v4462
    %v4464 = vlaneseq
    %v4465 = vshrl.u32 %v4464, 7
    %v4466 = vsub.s32 %v4463, %v4465
    %v4467 = vrot.slane %v4460, %v4466
    %4468 = vrot.lane.b32.xlu0 %v4467, 64
    %v4469 = vpop.permute.xlu0 %4468
    %v4471 = vld [vmem:[#allocation7 + $0xb] sm:$0x1]
    %v4472 = vsel %vm4162, %v4469, %v4471
    %4473 = vst [vmem:[#allocation7 + $0xb] sm:$0x1] %v4472
    %v4474 = vld [vmem:[#allocation6 + $0x21] sm:$0x1]
    %v4475 = vpack.c.bf16 %v4474, %v4474
    %v4476 = vld [vmem:[#allocation7 + $0xc] sm:$0x1]
    %v4477 = vsel %vm4137, %v4475, %v4476
    %4478 = vst [vmem:[#allocation7 + $0xc] sm:$0x1] %v4477
    %v4479 = vld [vmem:[#allocation6 + $0x22] sm:$0x1]
    %v4480 = vpack.c.bf16 %v4479, %v4479
    %v4483 = vunpack.c.l.s4 1966171168
    %v4484 = vunpack.c.0.s8 %v4483
    %v4485 = vlaneseq
    %v4486 = vshrl.u32 %v4485, 7
    %v4487 = vsub.s32 %v4484, %v4486
    %v4488 = vrot.slane %v4480, %v4487
    %v4490 = vunpack.c.l.s4 1966171168
    %v4491 = vunpack.c.0.s8 %v4490
    %v4492 = vlaneseq
    %v4493 = vshrl.u32 %v4492, 7
    %v4494 = vsub.s32 %v4491, %v4493
    %v4495 = vrot.slane %v4488, %v4494
    %4496 = vrot.lane.b32.xlu0 %v4495, 64
    %v4497 = vpop.permute.xlu0 %4496
    %v4499 = vld [vmem:[#allocation7 + $0xc] sm:$0x1]
    %v4500 = vsel %vm4162, %v4497, %v4499
    %4501 = vst [vmem:[#allocation7 + $0xc] sm:$0x1] %v4500
    %v4502 = vld [vmem:[#allocation6 + $0x23] sm:$0x1]
    %v4503 = vpack.c.bf16 %v4502, %v4502
    %v4504 = vld [vmem:[#allocation7 + $0xd] sm:$0x1]
    %v4505 = vsel %vm4137, %v4503, %v4504
    %4506 = vst [vmem:[#allocation7 + $0xd] sm:$0x1] %v4505
    %v4507 = vld [vmem:[#allocation6 + $0x24] sm:$0x1]
    %v4508 = vpack.c.bf16 %v4507, %v4507
    %v4511 = vunpack.c.l.s4 1966171168
    %v4512 = vunpack.c.0.s8 %v4511
    %v4513 = vlaneseq
    %v4514 = vshrl.u32 %v4513, 7
    %v4515 = vsub.s32 %v4512, %v4514
    %v4516 = vrot.slane %v4508, %v4515
    %v4518 = vunpack.c.l.s4 1966171168
    %v4519 = vunpack.c.0.s8 %v4518
    %v4520 = vlaneseq
    %v4521 = vshrl.u32 %v4520, 7
    %v4522 = vsub.s32 %v4519, %v4521
    %v4523 = vrot.slane %v4516, %v4522
    %4524 = vrot.lane.b32.xlu0 %v4523, 64
    %v4525 = vpop.permute.xlu0 %4524
    %v4527 = vld [vmem:[#allocation7 + $0xd] sm:$0x1]
    %v4528 = vsel %vm4162, %v4525, %v4527
    %4529 = vst [vmem:[#allocation7 + $0xd] sm:$0x1] %v4528
    %v4530 = vld [vmem:[#allocation6 + $0x28] sm:$0x1]
    %v4531 = vpack.c.bf16 %v4530, %v4530
    %v4532 = vld [vmem:[#allocation7 + $0xe] sm:$0x1]
    %v4533 = vsel %vm4137, %v4531, %v4532
    %4534 = vst [vmem:[#allocation7 + $0xe] sm:$0x1] %v4533
    %v4535 = vld [vmem:[#allocation6 + $0x29] sm:$0x1]
    %v4536 = vpack.c.bf16 %v4535, %v4535
    %v4539 = vunpack.c.l.s4 1966171168
    %v4540 = vunpack.c.0.s8 %v4539
    %v4541 = vlaneseq
    %v4542 = vshrl.u32 %v4541, 7
    %v4543 = vsub.s32 %v4540, %v4542
    %v4544 = vrot.slane %v4536, %v4543
    %v4546 = vunpack.c.l.s4 1966171168
    %v4547 = vunpack.c.0.s8 %v4546
    %v4548 = vlaneseq
    %v4549 = vshrl.u32 %v4548, 7
    %v4550 = vsub.s32 %v4547, %v4549
    %v4551 = vrot.slane %v4544, %v4550
    %4552 = vrot.lane.b32.xlu0 %v4551, 64
    %v4553 = vpop.permute.xlu0 %4552
    %v4555 = vld [vmem:[#allocation7 + $0xe] sm:$0x1]
    %v4556 = vsel %vm4162, %v4553, %v4555
    %4557 = vst [vmem:[#allocation7 + $0xe] sm:$0x1] %v4556
    %v4558 = vld [vmem:[#allocation6 + $0x2a] sm:$0x1]
    %v4559 = vpack.c.bf16 %v4558, %v4558
    %v4560 = vld [vmem:[#allocation7 + $0xf] sm:$0x1]
    %v4561 = vsel %vm4137, %v4559, %v4560
    %4562 = vst [vmem:[#allocation7 + $0xf] sm:$0x1] %v4561
    %v4563 = vld [vmem:[#allocation6 + $0x2b] sm:$0x1]
    %v4564 = vpack.c.bf16 %v4563, %v4563
    %v4567 = vunpack.c.l.s4 1966171168
    %v4568 = vunpack.c.0.s8 %v4567
    %v4569 = vlaneseq
    %v4570 = vshrl.u32 %v4569, 7
    %v4571 = vsub.s32 %v4568, %v4570
    %v4572 = vrot.slane %v4564, %v4571
    %v4574 = vunpack.c.l.s4 1966171168
    %v4575 = vunpack.c.0.s8 %v4574
    %v4576 = vlaneseq
    %v4577 = vshrl.u32 %v4576, 7
    %v4578 = vsub.s32 %v4575, %v4577
    %v4579 = vrot.slane %v4572, %v4578
    %4580 = vrot.lane.b32.xlu0 %v4579, 64
    %v4581 = vpop.permute.xlu0 %4580
    %v4583 = vld [vmem:[#allocation7 + $0xf] sm:$0x1]
    %v4584 = vsel %vm4162, %v4581, %v4583
    %4585 = vst [vmem:[#allocation7 + $0xf] sm:$0x1] %v4584
    %v4586 = vld [vmem:[#allocation6 + $0x2c] sm:$0x1]
    %v4587 = vpack.c.bf16 %v4586, %v4586
    %v4588 = vld [vmem:[#allocation7 + $0x10] sm:$0x1]
    %v4589 = vsel %vm4137, %v4587, %v4588
    %4590 = vst [vmem:[#allocation7 + $0x10] sm:$0x1] %v4589
    %v4591 = vld [vmem:[#allocation6 + $0x2d] sm:$0x1]
    %v4592 = vpack.c.bf16 %v4591, %v4591
    %v4595 = vunpack.c.l.s4 1966171168
    %v4596 = vunpack.c.0.s8 %v4595
    %v4597 = vlaneseq
    %v4598 = vshrl.u32 %v4597, 7
    %v4599 = vsub.s32 %v4596, %v4598
    %v4600 = vrot.slane %v4592, %v4599
    %v4602 = vunpack.c.l.s4 1966171168
    %v4603 = vunpack.c.0.s8 %v4602
    %v4604 = vlaneseq
    %v4605 = vshrl.u32 %v4604, 7
    %v4606 = vsub.s32 %v4603, %v4605
    %v4607 = vrot.slane %v4600, %v4606
    %4608 = vrot.lane.b32.xlu0 %v4607, 64
    %v4609 = vpop.permute.xlu0 %4608
    %v4611 = vld [vmem:[#allocation7 + $0x10] sm:$0x1]
    %v4612 = vsel %vm4162, %v4609, %v4611
    %4613 = vst [vmem:[#allocation7 + $0x10] sm:$0x1] %v4612
    %v4614 = vld [vmem:[#allocation6 + $0x2e] sm:$0x1]
    %v4615 = vpack.c.bf16 %v4614, %v4614
    %v4616 = vld [vmem:[#allocation7 + $0x11] sm:$0x1]
    %v4617 = vsel %vm4137, %v4615, %v4616
    %4618 = vst [vmem:[#allocation7 + $0x11] sm:$0x1] %v4617
    %v4619 = vld [vmem:[#allocation6 + $0x32] sm:$0x1]
    %v4620 = vpack.c.bf16 %v4619, %v4619
    %v4623 = vunpack.c.l.s4 1966171168
    %v4624 = vunpack.c.0.s8 %v4623
    %v4625 = vlaneseq
    %v4626 = vshrl.u32 %v4625, 7
    %v4627 = vsub.s32 %v4624, %v4626
    %v4628 = vrot.slane %v4620, %v4627
    %v4630 = vunpack.c.l.s4 1966171168
    %v4631 = vunpack.c.0.s8 %v4630
    %v4632 = vlaneseq
    %v4633 = vshrl.u32 %v4632, 7
    %v4634 = vsub.s32 %v4631, %v4633
    %v4635 = vrot.slane %v4628, %v4634
    %4636 = vrot.lane.b32.xlu0 %v4635, 64
    %v4637 = vpop.permute.xlu0 %4636
    %v4639 = vld [vmem:[#allocation7 + $0x11] sm:$0x1]
    %v4640 = vsel %vm4162, %v4637, %v4639
    %4641 = vst [vmem:[#allocation7 + $0x11] sm:$0x1] %v4640
    %v4642 = vld [vmem:[#allocation6 + $0x33] sm:$0x1]
    %v4643 = vpack.c.bf16 %v4642, %v4642
    %v4644 = vld [vmem:[#allocation7 + $0x12] sm:$0x1]
    %v4645 = vsel %vm4137, %v4643, %v4644
    %4646 = vst [vmem:[#allocation7 + $0x12] sm:$0x1] %v4645
    %v4647 = vld [vmem:[#allocation6 + $0x34] sm:$0x1]
    %v4648 = vpack.c.bf16 %v4647, %v4647
    %v4651 = vunpack.c.l.s4 1966171168
    %v4652 = vunpack.c.0.s8 %v4651
    %v4653 = vlaneseq
    %v4654 = vshrl.u32 %v4653, 7
    %v4655 = vsub.s32 %v4652, %v4654
    %v4656 = vrot.slane %v4648, %v4655
    %v4658 = vunpack.c.l.s4 1966171168
    %v4659 = vunpack.c.0.s8 %v4658
    %v4660 = vlaneseq
    %v4661 = vshrl.u32 %v4660, 7
    %v4662 = vsub.s32 %v4659, %v4661
    %v4663 = vrot.slane %v4656, %v4662
    %4664 = vrot.lane.b32.xlu0 %v4663, 64
    %v4665 = vpop.permute.xlu0 %4664
    %v4667 = vld [vmem:[#allocation7 + $0x12] sm:$0x1]
    %v4668 = vsel %vm4162, %v4665, %v4667
    %4669 = vst [vmem:[#allocation7 + $0x12] sm:$0x1] %v4668
    %v4670 = vld [vmem:[#allocation6 + $0x35] sm:$0x1]
    %v4671 = vpack.c.bf16 %v4670, %v4670
    %v4672 = vld [vmem:[#allocation7 + $0x13] sm:$0x1]
    %v4673 = vsel %vm4137, %v4671, %v4672
    %4674 = vst [vmem:[#allocation7 + $0x13] sm:$0x1] %v4673
    %v4675 = vld [vmem:[#allocation6 + $0x36] sm:$0x1]
    %v4676 = vpack.c.bf16 %v4675, %v4675
    %v4679 = vunpack.c.l.s4 1966171168
    %v4680 = vunpack.c.0.s8 %v4679
    %v4681 = vlaneseq
    %v4682 = vshrl.u32 %v4681, 7
    %v4683 = vsub.s32 %v4680, %v4682
    %v4684 = vrot.slane %v4676, %v4683
    %v4686 = vunpack.c.l.s4 1966171168
    %v4687 = vunpack.c.0.s8 %v4686
    %v4688 = vlaneseq
    %v4689 = vshrl.u32 %v4688, 7
    %v4690 = vsub.s32 %v4687, %v4689
    %v4691 = vrot.slane %v4684, %v4690
    %4692 = vrot.lane.b32.xlu0 %v4691, 64
    %v4693 = vpop.permute.xlu0 %4692
    %v4695 = vld [vmem:[#allocation7 + $0x13] sm:$0x1]
    %v4696 = vsel %vm4162, %v4693, %v4695
    %4697 = vst [vmem:[#allocation7 + $0x13] sm:$0x1] %v4696
    %v4698 = vld [vmem:[#allocation6 + $0x37] sm:$0x1]
    %v4699 = vpack.c.bf16 %v4698, %v4698
    %v4700 = vld [vmem:[#allocation7 + $0x14] sm:$0x1]
    %v4701 = vsel %vm4137, %v4699, %v4700
    %4702 = vst [vmem:[#allocation7 + $0x14] sm:$0x1] %v4701
    %v4703 = vld [vmem:[#allocation6 + $0x38] sm:$0x1]
    %v4704 = vpack.c.bf16 %v4703, %v4703
    %v4707 = vunpack.c.l.s4 1966171168
    %v4708 = vunpack.c.0.s8 %v4707
    %v4709 = vlaneseq
    %v4710 = vshrl.u32 %v4709, 7
    %v4711 = vsub.s32 %v4708, %v4710
    %v4712 = vrot.slane %v4704, %v4711
    %v4714 = vunpack.c.l.s4 1966171168
    %v4715 = vunpack.c.0.s8 %v4714
    %v4716 = vlaneseq
    %v4717 = vshrl.u32 %v4716, 7
    %v4718 = vsub.s32 %v4715, %v4717
    %v4719 = vrot.slane %v4712, %v4718
    %4720 = vrot.lane.b32.xlu0 %v4719, 64
    %v4721 = vpop.permute.xlu0 %4720
    %v4723 = vld [vmem:[#allocation7 + $0x14] sm:$0x1]
    %v4724 = vsel %vm4162, %v4721, %v4723
    %4725 = vst [vmem:[#allocation7 + $0x14] sm:$0x1] %v4724
    %v4726 = vld [vmem:[#allocation6 + $0x3c] sm:$0x1]
    %v4727 = vpack.c.bf16 %v4726, %v4726
    %v4728 = vld [vmem:[#allocation7 + $0x15] sm:$0x1]
    %v4729 = vsel %vm4137, %v4727, %v4728
    %4730 = vst [vmem:[#allocation7 + $0x15] sm:$0x1] %v4729
    %v4731 = vld [vmem:[#allocation6 + $0x3d] sm:$0x1]
    %v4732 = vpack.c.bf16 %v4731, %v4731
    %v4735 = vunpack.c.l.s4 1966171168
    %v4736 = vunpack.c.0.s8 %v4735
    %v4737 = vlaneseq
    %v4738 = vshrl.u32 %v4737, 7
    %v4739 = vsub.s32 %v4736, %v4738
    %v4740 = vrot.slane %v4732, %v4739
    %v4742 = vunpack.c.l.s4 1966171168
    %v4743 = vunpack.c.0.s8 %v4742
    %v4744 = vlaneseq
    %v4745 = vshrl.u32 %v4744, 7
    %v4746 = vsub.s32 %v4743, %v4745
    %v4747 = vrot.slane %v4740, %v4746
    %4748 = vrot.lane.b32.xlu0 %v4747, 64
    %v4749 = vpop.permute.xlu0 %4748
    %v4751 = vld [vmem:[#allocation7 + $0x15] sm:$0x1]
    %v4752 = vsel %vm4162, %v4749, %v4751
    %4753 = vst [vmem:[#allocation7 + $0x15] sm:$0x1] %v4752
    %v4754 = vld [vmem:[#allocation6 + $0x3e] sm:$0x1]
    %v4755 = vpack.c.bf16 %v4754, %v4754
    %v4756 = vld [vmem:[#allocation7 + $0x16] sm:$0x1]
    %v4757 = vsel %vm4137, %v4755, %v4756
    %4758 = vst [vmem:[#allocation7 + $0x16] sm:$0x1] %v4757
    %v4759 = vld [vmem:[#allocation6 + $0x3f] sm:$0x1]
    %v4760 = vpack.c.bf16 %v4759, %v4759
    %v4763 = vunpack.c.l.s4 1966171168
    %v4764 = vunpack.c.0.s8 %v4763
    %v4765 = vlaneseq
    %v4766 = vshrl.u32 %v4765, 7
    %v4767 = vsub.s32 %v4764, %v4766
    %v4768 = vrot.slane %v4760, %v4767
    %v4770 = vunpack.c.l.s4 1966171168
    %v4771 = vunpack.c.0.s8 %v4770
    %v4772 = vlaneseq
    %v4773 = vshrl.u32 %v4772, 7
    %v4774 = vsub.s32 %v4771, %v4773
    %v4775 = vrot.slane %v4768, %v4774
    %4776 = vrot.lane.b32.xlu0 %v4775, 64
    %v4777 = vpop.permute.xlu0 %4776
    %v4779 = vld [vmem:[#allocation7 + $0x16] sm:$0x1]
    %v4780 = vsel %vm4162, %v4777, %v4779
    %4781 = vst [vmem:[#allocation7 + $0x16] sm:$0x1] %v4780
    %v4782 = vld [vmem:[#allocation6 + $0x40] sm:$0x1]
    %v4783 = vpack.c.bf16 %v4782, %v4782
    %v4784 = vld [vmem:[#allocation7 + $0x17] sm:$0x1]
    %v4785 = vsel %vm4137, %v4783, %v4784
    %4786 = vst [vmem:[#allocation7 + $0x17] sm:$0x1] %v4785
    %v4787 = vld [vmem:[#allocation6 + $0x41] sm:$0x1]
    %v4788 = vpack.c.bf16 %v4787, %v4787
    %v4791 = vunpack.c.l.s4 1966171168
    %v4792 = vunpack.c.0.s8 %v4791
    %v4793 = vlaneseq
    %v4794 = vshrl.u32 %v4793, 7
    %v4795 = vsub.s32 %v4792, %v4794
    %v4796 = vrot.slane %v4788, %v4795
    %v4798 = vunpack.c.l.s4 1966171168
    %v4799 = vunpack.c.0.s8 %v4798
    %v4800 = vlaneseq
    %v4801 = vshrl.u32 %v4800, 7
    %v4802 = vsub.s32 %v4799, %v4801
    %v4803 = vrot.slane %v4796, %v4802
    %4804 = vrot.lane.b32.xlu0 %v4803, 64
    %v4805 = vpop.permute.xlu0 %4804
    %v4807 = vld [vmem:[#allocation7 + $0x17] sm:$0x1]
    %v4808 = vsel %vm4162, %v4805, %v4807
    %4809 = vst [vmem:[#allocation7 + $0x17] sm:$0x1] %v4808
    %v4810 = vld [vmem:[#allocation6 + $0x42] sm:$0x1]
    %v4811 = vpack.c.bf16 %v4810, %v4810
    %v4812 = vld [vmem:[#allocation7 + $0x18] sm:$0x1]
    %v4813 = vsel %vm4137, %v4811, %v4812
    %4814 = vst [vmem:[#allocation7 + $0x18] sm:$0x1] %v4813
    %v4815 = vld [vmem:[#allocation7] sm:$0xff]
    %v4816 = vld [vmem:[#allocation7 + $0x8] sm:$0xff]
    %v4817 = vld [vmem:[#allocation7 + $0x10] sm:$0xff]
    %v4818 = vld [vmem:[#allocation7 + $0x18] sm:$0x1]
    %v4819 = vld [vmem:[%s7] sm:$0xff]
    %v4820 = vld [vmem:[%s7 + $0x8] sm:$0xff]
    %v4821 = vld [vmem:[%s7 + $0x10] sm:$0xff]
    %v4822 = vld [vmem:[%s7 + $0x18] sm:$0xff]
    %v4823 = vld [vmem:[%s7 + $0x20] sm:$0xff]
    %v4824 = vld [vmem:[%s7 + $0x28] sm:$0xff]
    %v4825 = vld [vmem:[%s7 + $0x30] sm:$0xff]
    %v4826 = vld [vmem:[%s7 + $0x38] sm:$0xff]
    %v4827 = vld [vmem:[%s7 + $0x40] sm:$0xff]
    %v4828 = vld [vmem:[%s7 + $0x48] sm:$0xff]
    %v4829 = vld [vmem:[%s7 + $0x50] sm:$0xff]
    %v4830 = vld [vmem:[%s7 + $0x58] sm:$0xff]
    %v4831 = vld [vmem:[%s7 + $0x60] sm:$0xff]
    %v4832 = vld [vmem:[%s7 + $0x68] sm:$0xff]
    %v4833 = vld [vmem:[%s7 + $0x70] sm:$0xff]
    %v4834 = vld [vmem:[%s7 + $0x78] sm:$0xff]
    %v4835 = vld [vmem:[%s7 + $0x80] sm:$0xff]
    %v4836 = vld [vmem:[%s7 + $0x88] sm:$0xff]
    %v4837 = vld [vmem:[%s7 + $0x90] sm:$0xff]
    %v4838 = vld [vmem:[%s7 + $0x98] sm:$0xff]
    %v4839 = vld [vmem:[%s7 + $0xa0] sm:$0xff]
    %v4840 = vld [vmem:[%s7 + $0xa8] sm:$0xff]
    %v4841 = vld [vmem:[%s7 + $0xb0] sm:$0xff]
    %v4842 = vld [vmem:[%s7 + $0xb8] sm:$0xff]
    %v4843 = vld [vmem:[%s7 + $0xc0] sm:$0xff]
    %v4844 = vld [vmem:[%s7 + $0xc8] sm:$0xff]
    %v4845 = vld [vmem:[%s7 + $0xd0] sm:$0xff]
    %v4846 = vld [vmem:[%s7 + $0xd8] sm:$0xff]
    %v4847 = vld [vmem:[%s7 + $0xe0] sm:$0xff]
    %v4848 = vld [vmem:[%s7 + $0xe8] sm:$0xff]
    %v4849 = vld [vmem:[%s7 + $0xf0] sm:$0xff]
    %v4850 = vld [vmem:[%s7 + $0xf8] sm:$0xff]
    %v4851 = vld [vmem:[%s7 + $0x100] sm:$0xff]
    %v4852 = vld [vmem:[%s7 + $0x108] sm:$0xff]
    %v4853 = vld [vmem:[%s7 + $0x110] sm:$0xff]
    %v4854 = vld [vmem:[%s7 + $0x118] sm:$0xff]
    %v4855 = vld [vmem:[%s7 + $0x120] sm:$0xff]
    %v4856 = vld [vmem:[%s7 + $0x128] sm:$0xff]
    %v4857 = vld [vmem:[%s7 + $0x130] sm:$0xff]
    %v4858 = vld [vmem:[%s7 + $0x138] sm:$0xff]
    %v4859 = vld [vmem:[%s7 + $0x140] sm:$0xff]
    %v4860 = vld [vmem:[%s7 + $0x148] sm:$0xff]
    %v4861 = vld [vmem:[%s7 + $0x150] sm:$0xff]
    %v4862 = vld [vmem:[%s7 + $0x158] sm:$0xff]
    %v4863 = vld [vmem:[%s7 + $0x160] sm:$0xff]
    %v4864 = vld [vmem:[%s7 + $0x168] sm:$0xff]
    %v4865 = vld [vmem:[%s7 + $0x170] sm:$0xff]
    %v4866 = vld [vmem:[%s7 + $0x178] sm:$0xff]
    %v4867 = vld [vmem:[%s7 + $0x180] sm:$0xff]
    %v4868 = vld [vmem:[%s7 + $0x188] sm:$0xff]
    %v4869 = vld [vmem:[%s7 + $0x190] sm:$0xff]
    %v4870 = vld [vmem:[%s7 + $0x198] sm:$0xff]
    %v4871 = vld [vmem:[%s7 + $0x1a0] sm:$0xff]
    %v4872 = vld [vmem:[%s7 + $0x1a8] sm:$0xff]
    %v4873 = vld [vmem:[%s7 + $0x1b0] sm:$0xff]
    %v4874 = vld [vmem:[%s7 + $0x1b8] sm:$0xff]
    %v4875 = vld [vmem:[%s7 + $0x1c0] sm:$0xff]
    %v4876 = vld [vmem:[%s7 + $0x1c8] sm:$0xff]
    %v4877 = vld [vmem:[%s7 + $0x1d0] sm:$0xff]
    %v4878 = vld [vmem:[%s7 + $0x1d8] sm:$0xff]
    %v4879 = vld [vmem:[%s7 + $0x1e0] sm:$0xff]
    %v4880 = vld [vmem:[%s7 + $0x1e8] sm:$0xff]
    %v4881 = vld [vmem:[%s7 + $0x1f0] sm:$0xff]
    %v4882 = vld [vmem:[%s7 + $0x1f8] sm:$0xff]
    %v4883 = vld [vmem:[%s7 + $0x200] sm:$0xff]
    %v4884 = vld [vmem:[%s7 + $0x208] sm:$0xff]
    %v4885 = vld [vmem:[%s7 + $0x210] sm:$0xff]
    %v4886 = vld [vmem:[%s7 + $0x218] sm:$0xff]
    %v4887 = vld [vmem:[%s7 + $0x220] sm:$0xff]
    %v4888 = vld [vmem:[%s7 + $0x228] sm:$0xff]
    %v4889 = vld [vmem:[%s7 + $0x230] sm:$0xff]
    %v4890 = vld [vmem:[%s7 + $0x238] sm:$0xff]
    %v4891 = vld [vmem:[%s7 + $0x240] sm:$0xff]
    %v4892 = vld [vmem:[%s7 + $0x248] sm:$0xff]
    %v4893 = vld [vmem:[%s7 + $0x250] sm:$0xff]
    %v4894 = vld [vmem:[%s7 + $0x258] sm:$0xff]
    %v4895 = vld [vmem:[%s7 + $0x260] sm:$0xff]
    %v4896 = vld [vmem:[%s7 + $0x268] sm:$0xff]
    %v4897 = vld [vmem:[%s7 + $0x270] sm:$0xff]
    %v4898 = vld [vmem:[%s7 + $0x278] sm:$0xff]
    %v4899 = vld [vmem:[%s7 + $0x280] sm:$0xff]
    %v4900 = vld [vmem:[%s7 + $0x288] sm:$0xff]
    %v4901 = vld [vmem:[%s7 + $0x290] sm:$0xff]
    %v4902 = vld [vmem:[%s7 + $0x298] sm:$0xff]
    %v4903 = vld [vmem:[%s7 + $0x2a0] sm:$0xff]
    %v4904 = vld [vmem:[%s7 + $0x2a8] sm:$0xff]
    %v4905 = vld [vmem:[%s7 + $0x2b0] sm:$0xff]
    %v4906 = vld [vmem:[%s7 + $0x2b8] sm:$0xff]
    %v4907 = vld [vmem:[%s7 + $0x2c0] sm:$0xff]
    %v4908 = vld [vmem:[%s7 + $0x2c8] sm:$0xff]
    %v4909 = vld [vmem:[%s7 + $0x2d0] sm:$0xff]
    %v4910 = vld [vmem:[%s7 + $0x2d8] sm:$0xff]
    %v4911 = vld [vmem:[%s7 + $0x2e0] sm:$0xff]
    %v4912 = vld [vmem:[%s7 + $0x2e8] sm:$0xff]
    %v4913 = vld [vmem:[%s7 + $0x2f0] sm:$0xff]
    %v4914 = vld [vmem:[%s7 + $0x2f8] sm:$0xff]
    %v4915 = vld [vmem:[%s7 + $0x300] sm:$0xff]
    %v4916 = vld [vmem:[%s7 + $0x308] sm:$0xff]
    %v4917 = vld [vmem:[%s7 + $0x310] sm:$0xff]
    %v4918 = vld [vmem:[%s7 + $0x318] sm:$0xff]
    %v4919 = vld [vmem:[%s7 + $0x320] sm:$0xff]
    %v4920 = vld [vmem:[%s7 + $0x328] sm:$0xff]
    %v4921 = vld [vmem:[%s7 + $0x330] sm:$0xff]
    %v4922 = vld [vmem:[%s7 + $0x338] sm:$0xff]
    %v4923 = vld [vmem:[%s7 + $0x340] sm:$0xff]
    %v4924 = vld [vmem:[%s7 + $0x348] sm:$0xff]
    %v4925 = vld [vmem:[%s7 + $0x350] sm:$0xff]
    %v4926 = vld [vmem:[%s7 + $0x358] sm:$0xff]
    %v4927 = vld [vmem:[%s7 + $0x360] sm:$0xff]
    %v4928 = vld [vmem:[%s7 + $0x368] sm:$0xff]
    %v4929 = vld [vmem:[%s7 + $0x370] sm:$0xff]
    %v4930 = vld [vmem:[%s7 + $0x378] sm:$0xff]
    %v4931 = vld [vmem:[%s7 + $0x380] sm:$0xff]
    %v4932 = vld [vmem:[%s7 + $0x388] sm:$0xff]
    %v4933 = vld [vmem:[%s7 + $0x390] sm:$0xff]
    %v4934 = vld [vmem:[%s7 + $0x398] sm:$0xff]
    %v4935 = vld [vmem:[%s7 + $0x3a0] sm:$0xff]
    %v4936 = vld [vmem:[%s7 + $0x3a8] sm:$0xff]
    %v4937 = vld [vmem:[%s7 + $0x3b0] sm:$0xff]
    %v4938 = vld [vmem:[%s7 + $0x3b8] sm:$0xff]
    %v4939 = vld [vmem:[%s7 + $0x3c0] sm:$0xff]
    %v4940 = vld [vmem:[%s7 + $0x3c8] sm:$0xff]
    %v4941 = vld [vmem:[%s7 + $0x3d0] sm:$0xff]
    %v4942 = vld [vmem:[%s7 + $0x3d8] sm:$0xff]
    %v4943 = vld [vmem:[%s7 + $0x3e0] sm:$0xff]
    %v4944 = vld [vmem:[%s7 + $0x3e8] sm:$0xff]
    %v4945 = vld [vmem:[%s7 + $0x3f0] sm:$0xff]
    %v4946 = vld [vmem:[%s7 + $0x3f8] sm:$0xff]
    %v4947 = vld [vmem:[%s7 + $0x400] sm:$0xff]
    %v4948 = vld [vmem:[%s7 + $0x408] sm:$0xff]
    %v4949 = vld [vmem:[%s7 + $0x410] sm:$0xff]
    %v4950 = vld [vmem:[%s7 + $0x418] sm:$0xff]
    %v4951 = vld [vmem:[%s7 + $0x420] sm:$0xff]
    %v4952 = vld [vmem:[%s7 + $0x428] sm:$0xff]
    %v4953 = vld [vmem:[%s7 + $0x430] sm:$0xff]
    %v4954 = vld [vmem:[%s7 + $0x438] sm:$0xff]
    %v4955 = vld [vmem:[%s7 + $0x440] sm:$0xff]
    %v4956 = vld [vmem:[%s7 + $0x448] sm:$0xff]
    %v4957 = vld [vmem:[%s7 + $0x450] sm:$0xff]
    %v4958 = vld [vmem:[%s7 + $0x458] sm:$0xff]
    %v4959 = vld [vmem:[%s7 + $0x460] sm:$0xff]
    %v4960 = vld [vmem:[%s7 + $0x468] sm:$0xff]
    %v4961 = vld [vmem:[%s7 + $0x470] sm:$0xff]
    %v4962 = vld [vmem:[%s7 + $0x478] sm:$0xff]
    %v4963 = vld [vmem:[%s7 + $0x480] sm:$0xff]
    %v4964 = vld [vmem:[%s7 + $0x488] sm:$0xff]
    %v4965 = vld [vmem:[%s7 + $0x490] sm:$0xff]
    %v4966 = vld [vmem:[%s7 + $0x498] sm:$0xff]
    %v4967 = vld [vmem:[%s7 + $0x4a0] sm:$0xff]
    %v4968 = vld [vmem:[%s7 + $0x4a8] sm:$0xff]
    %v4969 = vld [vmem:[%s7 + $0x4b0] sm:$0xff]
    %v4970 = vld [vmem:[%s7 + $0x4b8] sm:$0xff]
    %v4971 = vld [vmem:[%s7 + $0x4c0] sm:$0xff]
    %v4972 = vld [vmem:[%s7 + $0x4c8] sm:$0xff]
    %v4973 = vld [vmem:[%s7 + $0x4d0] sm:$0xff]
    %v4974 = vld [vmem:[%s7 + $0x4d8] sm:$0xff]
    %v4975 = vld [vmem:[%s7 + $0x4e0] sm:$0xff]
    %v4976 = vld [vmem:[%s7 + $0x4e8] sm:$0xff]
    %v4977 = vld [vmem:[%s7 + $0x4f0] sm:$0xff]
    %v4978 = vld [vmem:[%s7 + $0x4f8] sm:$0xff]
    %v4979 = vld [vmem:[%s7 + $0x500] sm:$0xff]
    %v4980 = vld [vmem:[%s7 + $0x508] sm:$0xff]
    %v4981 = vld [vmem:[%s7 + $0x510] sm:$0xff]
    %v4982 = vld [vmem:[%s7 + $0x518] sm:$0xff]
    %v4983 = vld [vmem:[%s7 + $0x520] sm:$0xff]
    %v4984 = vld [vmem:[%s7 + $0x528] sm:$0xff]
    %v4985 = vld [vmem:[%s7 + $0x530] sm:$0xff]
    %v4986 = vld [vmem:[%s7 + $0x538] sm:$0xff]
    %v4987 = vld [vmem:[%s7 + $0x540] sm:$0xff]
    %v4988 = vld [vmem:[%s7 + $0x548] sm:$0xff]
    %v4989 = vld [vmem:[%s7 + $0x550] sm:$0xff]
    %v4990 = vld [vmem:[%s7 + $0x558] sm:$0xff]
    %v4991 = vld [vmem:[%s7 + $0x560] sm:$0xff]
    %v4992 = vld [vmem:[%s7 + $0x568] sm:$0xff]
    %v4993 = vld [vmem:[%s7 + $0x570] sm:$0xff]
    %v4994 = vld [vmem:[%s7 + $0x578] sm:$0xff]
    %v4995 = vld [vmem:[%s7 + $0x580] sm:$0xff]
    %v4996 = vld [vmem:[%s7 + $0x588] sm:$0xff]
    %v4997 = vld [vmem:[%s7 + $0x590] sm:$0xff]
    %v4998 = vld [vmem:[%s7 + $0x598] sm:$0xff]
    %v4999 = vld [vmem:[%s7 + $0x5a0] sm:$0xff]
    %v5000 = vld [vmem:[%s7 + $0x5a8] sm:$0xff]
    %v5001 = vld [vmem:[%s7 + $0x5b0] sm:$0xff]
    %v5002 = vld [vmem:[%s7 + $0x5b8] sm:$0xff]
    %v5003 = vld [vmem:[%s7 + $0x5c0] sm:$0xff]
    %v5004 = vld [vmem:[%s7 + $0x5c8] sm:$0xff]
    %v5005 = vld [vmem:[%s7 + $0x5d0] sm:$0xff]
    %v5006 = vld [vmem:[%s7 + $0x5d8] sm:$0xff]
    %v5007 = vld [vmem:[%s7 + $0x5e0] sm:$0xff]
    %v5008 = vld [vmem:[%s7 + $0x5e8] sm:$0xff]
    %v5009 = vld [vmem:[%s7 + $0x5f0] sm:$0xff]
    %v5010 = vld [vmem:[%s7 + $0x5f8] sm:$0xff]
    %v5011 = vld [vmem:[%s7 + $0x600] sm:$0xff]
    %v5012 = vld [vmem:[%s7 + $0x608] sm:$0xff]
    %v5013 = vld [vmem:[%s7 + $0x610] sm:$0xff]
    %v5014 = vld [vmem:[%s7 + $0x618] sm:$0xff]
    %v5015 = vld [vmem:[%s7 + $0x620] sm:$0xff]
    %v5016 = vld [vmem:[%s7 + $0x628] sm:$0xff]
    %v5017 = vld [vmem:[%s7 + $0x630] sm:$0xff]
    %v5018 = vld [vmem:[%s7 + $0x638] sm:$0xff]
    %v5019 = vld [vmem:[%s7 + $0x640] sm:$0xff]
    %v5020 = vld [vmem:[%s7 + $0x648] sm:$0xff]
    %v5021 = vld [vmem:[%s7 + $0x650] sm:$0xff]
    %v5022 = vld [vmem:[%s7 + $0x658] sm:$0xff]
    %v5023 = vld [vmem:[%s7 + $0x660] sm:$0xff]
    %v5024 = vld [vmem:[%s7 + $0x668] sm:$0xff]
    %v5025 = vld [vmem:[%s7 + $0x670] sm:$0xff]
    %v5026 = vld [vmem:[%s7 + $0x678] sm:$0xff]
    %v5027 = vld [vmem:[%s7 + $0x680] sm:$0xff]
    %v5028 = vld [vmem:[%s7 + $0x688] sm:$0xff]
    %v5029 = vld [vmem:[%s7 + $0x690] sm:$0xff]
    %v5030 = vld [vmem:[%s7 + $0x698] sm:$0xff]
    %v5031 = vld [vmem:[%s7 + $0x6a0] sm:$0xff]
    %v5032 = vld [vmem:[%s7 + $0x6a8] sm:$0xff]
    %v5033 = vld [vmem:[%s7 + $0x6b0] sm:$0xff]
    %v5034 = vld [vmem:[%s7 + $0x6b8] sm:$0xff]
    %v5035 = vld [vmem:[%s7 + $0x6c0] sm:$0xff]
    %v5036 = vld [vmem:[%s7 + $0x6c8] sm:$0xff]
    %v5037 = vld [vmem:[%s7 + $0x6d0] sm:$0xff]
    %v5038 = vld [vmem:[%s7 + $0x6d8] sm:$0xff]
    %v5039 = vld [vmem:[%s7 + $0x6e0] sm:$0xff]
    %v5040 = vld [vmem:[%s7 + $0x6e8] sm:$0xff]
    %v5041 = vld [vmem:[%s7 + $0x6f0] sm:$0xff]
    %v5042 = vld [vmem:[%s7 + $0x6f8] sm:$0xff]
    %v5043 = vld [vmem:[%s7 + $0x700] sm:$0xff]
    %v5044 = vld [vmem:[%s7 + $0x708] sm:$0xff]
    %v5045 = vld [vmem:[%s7 + $0x710] sm:$0xff]
    %v5046 = vld [vmem:[%s7 + $0x718] sm:$0xff]
    %v5047 = vld [vmem:[%s7 + $0x720] sm:$0xff]
    %v5048 = vld [vmem:[%s7 + $0x728] sm:$0xff]
    %v5049 = vld [vmem:[%s7 + $0x730] sm:$0xff]
    %v5050 = vld [vmem:[%s7 + $0x738] sm:$0xff]
    %v5051 = vld [vmem:[%s7 + $0x740] sm:$0xff]
    %v5052 = vld [vmem:[%s7 + $0x748] sm:$0xff]
    %v5053 = vld [vmem:[%s7 + $0x750] sm:$0xff]
    %v5054 = vld [vmem:[%s7 + $0x758] sm:$0xff]
    %v5055 = vld [vmem:[%s7 + $0x760] sm:$0xff]
    %v5056 = vld [vmem:[%s7 + $0x768] sm:$0xff]
    %v5057 = vld [vmem:[%s7 + $0x770] sm:$0xff]
    %v5058 = vld [vmem:[%s7 + $0x778] sm:$0xff]
    %v5059 = vld [vmem:[%s7 + $0x780] sm:$0xff]
    %v5060 = vld [vmem:[%s7 + $0x788] sm:$0xff]
    %v5061 = vld [vmem:[%s7 + $0x790] sm:$0xff]
    %v5062 = vld [vmem:[%s7 + $0x798] sm:$0xff]
    %v5063 = vld [vmem:[%s7 + $0x7a0] sm:$0xff]
    %v5064 = vld [vmem:[%s7 + $0x7a8] sm:$0xff]
    %v5065 = vld [vmem:[%s7 + $0x7b0] sm:$0xff]
    %v5066 = vld [vmem:[%s7 + $0x7b8] sm:$0xff]
    %v5067 = vld [vmem:[%s7 + $0x7c0] sm:$0xff]
    %v5068 = vld [vmem:[%s7 + $0x7c8] sm:$0xff]
    %v5069 = vld [vmem:[%s7 + $0x7d0] sm:$0xff]
    %v5070 = vld [vmem:[%s7 + $0x7d8] sm:$0xff]
    %v5071 = vld [vmem:[%s7 + $0x7e0] sm:$0xff]
    %v5072 = vld [vmem:[%s7 + $0x7e8] sm:$0xff]
    %v5073 = vld [vmem:[%s7 + $0x7f0] sm:$0xff]
    %v5074 = vld [vmem:[%s7 + $0x7f8] sm:$0xff]
    %v5075 = vld [vmem:[%s7 + $0x800] sm:$0xff]
    %v5076 = vld [vmem:[%s7 + $0x808] sm:$0xff]
    %v5077 = vld [vmem:[%s7 + $0x810] sm:$0xff]
    %v5078 = vld [vmem:[%s7 + $0x818] sm:$0xff]
    %v5079 = vld [vmem:[%s7 + $0x820] sm:$0xff]
    %v5080 = vld [vmem:[%s7 + $0x828] sm:$0xff]
    %v5081 = vld [vmem:[%s7 + $0x830] sm:$0xff]
    %v5082 = vld [vmem:[%s7 + $0x838] sm:$0xff]
    %v5083 = vld [vmem:[%s7 + $0x840] sm:$0xff]
    %v5084 = vld [vmem:[%s7 + $0x848] sm:$0xff]
    %v5085 = vld [vmem:[%s7 + $0x850] sm:$0xff]
    %v5086 = vld [vmem:[%s7 + $0x858] sm:$0xff]
    %v5087 = vld [vmem:[%s7 + $0x860] sm:$0xff]
    %v5088 = vld [vmem:[%s7 + $0x868] sm:$0xff]
    %v5089 = vld [vmem:[%s7 + $0x870] sm:$0xff]
    %v5090 = vld [vmem:[%s7 + $0x878] sm:$0xff]
    %v5091 = vld [vmem:[%s7 + $0x880] sm:$0xff]
    %v5092 = vld [vmem:[%s7 + $0x888] sm:$0xff]
    %v5093 = vld [vmem:[%s7 + $0x890] sm:$0xff]
    %v5094 = vld [vmem:[%s7 + $0x898] sm:$0xff]
    %v5095 = vld [vmem:[%s7 + $0x8a0] sm:$0xff]
    %v5096 = vld [vmem:[%s7 + $0x8a8] sm:$0xff]
    %v5097 = vld [vmem:[%s7 + $0x8b0] sm:$0xff]
    %v5098 = vld [vmem:[%s7 + $0x8b8] sm:$0xff]
    %v5099 = vld [vmem:[%s7 + $0x8c0] sm:$0xff]
    %v5100 = vld [vmem:[%s7 + $0x8c8] sm:$0xff]
    %v5101 = vld [vmem:[%s7 + $0x8d0] sm:$0xff]
    %v5102 = vld [vmem:[%s7 + $0x8d8] sm:$0xff]
    %v5103 = vld [vmem:[%s7 + $0x8e0] sm:$0xff]
    %v5104 = vld [vmem:[%s7 + $0x8e8] sm:$0xff]
    %v5105 = vld [vmem:[%s7 + $0x8f0] sm:$0xff]
    %v5106 = vld [vmem:[%s7 + $0x8f8] sm:$0xff]
    %v5107 = vld [vmem:[%s7 + $0x900] sm:$0xff]
    %v5108 = vld [vmem:[%s7 + $0x908] sm:$0xff]
    %v5109 = vld [vmem:[%s7 + $0x910] sm:$0xff]
    %v5110 = vld [vmem:[%s7 + $0x918] sm:$0xff]
    %v5111 = vld [vmem:[%s7 + $0x920] sm:$0xff]
    %v5112 = vld [vmem:[%s7 + $0x928] sm:$0xff]
    %v5113 = vld [vmem:[%s7 + $0x930] sm:$0xff]
    %v5114 = vld [vmem:[%s7 + $0x938] sm:$0xff]
    %v5115 = vld [vmem:[%s7 + $0x940] sm:$0xff]
    %v5116 = vld [vmem:[%s7 + $0x948] sm:$0xff]
    %v5117 = vld [vmem:[%s7 + $0x950] sm:$0xff]
    %v5118 = vld [vmem:[%s7 + $0x958] sm:$0xff]
    %v5119 = vld [vmem:[%s7 + $0x960] sm:$0xff]
    %v5120 = vld [vmem:[%s7 + $0x968] sm:$0xff]
    %v5121 = vld [vmem:[%s7 + $0x970] sm:$0xff]
    %v5122 = vld [vmem:[%s7 + $0x978] sm:$0xff]
    %v5123 = vld [vmem:[%s7 + $0x980] sm:$0xff]
    %v5124 = vld [vmem:[%s7 + $0x988] sm:$0xff]
    %v5125 = vld [vmem:[%s7 + $0x990] sm:$0xff]
    %v5126 = vld [vmem:[%s7 + $0x998] sm:$0xff]
    %v5127 = vld [vmem:[%s7 + $0x9a0] sm:$0xff]
    %v5128 = vld [vmem:[%s7 + $0x9a8] sm:$0xff]
    %v5129 = vld [vmem:[%s7 + $0x9b0] sm:$0xff]
    %v5130 = vld [vmem:[%s7 + $0x9b8] sm:$0xff]
    %v5131 = vld [vmem:[%s7 + $0x9c0] sm:$0xff]
    %v5132 = vld [vmem:[%s7 + $0x9c8] sm:$0xff]
    %v5133 = vld [vmem:[%s7 + $0x9d0] sm:$0xff]
    %v5134 = vld [vmem:[%s7 + $0x9d8] sm:$0xff]
    %v5135 = vld [vmem:[%s7 + $0x9e0] sm:$0xff]
    %v5136 = vld [vmem:[%s7 + $0x9e8] sm:$0xff]
    %v5137 = vld [vmem:[%s7 + $0x9f0] sm:$0xff]
    %v5138 = vld [vmem:[%s7 + $0x9f8] sm:$0xff]
    %v5139 = vld [vmem:[%s7 + $0xa00] sm:$0xff]
    %v5140 = vld [vmem:[%s7 + $0xa08] sm:$0xff]
    %v5141 = vld [vmem:[%s7 + $0xa10] sm:$0xff]
    %v5142 = vld [vmem:[%s7 + $0xa18] sm:$0xff]
    %v5143 = vld [vmem:[%s7 + $0xa20] sm:$0xff]
    %v5144 = vld [vmem:[%s7 + $0xa28] sm:$0xff]
    %v5145 = vld [vmem:[%s7 + $0xa30] sm:$0xff]
    %v5146 = vld [vmem:[%s7 + $0xa38] sm:$0xff]
    %v5147 = vld [vmem:[%s7 + $0xa40] sm:$0xff]
    %v5148 = vld [vmem:[%s7 + $0xa48] sm:$0xff]
    %v5149 = vld [vmem:[%s7 + $0xa50] sm:$0xff]
    %v5150 = vld [vmem:[%s7 + $0xa58] sm:$0xff]
    %v5151 = vld [vmem:[%s7 + $0xa60] sm:$0xff]
    %v5152 = vld [vmem:[%s7 + $0xa68] sm:$0xff]
    %v5153 = vld [vmem:[%s7 + $0xa70] sm:$0xff]
    %v5154 = vld [vmem:[%s7 + $0xa78] sm:$0xff]
    %v5155 = vld [vmem:[%s7 + $0xa80] sm:$0xff]
    %v5156 = vld [vmem:[%s7 + $0xa88] sm:$0xff]
    %v5157 = vld [vmem:[%s7 + $0xa90] sm:$0xff]
    %v5158 = vld [vmem:[%s7 + $0xa98] sm:$0xff]
    %v5159 = vld [vmem:[%s7 + $0xaa0] sm:$0xff]
    %v5160 = vld [vmem:[%s7 + $0xaa8] sm:$0xff]
    %v5161 = vld [vmem:[%s7 + $0xab0] sm:$0xff]
    %v5162 = vld [vmem:[%s7 + $0xab8] sm:$0xff]
    %v5163 = vld [vmem:[%s7 + $0xac0] sm:$0xff]
    %v5164 = vld [vmem:[%s7 + $0xac8] sm:$0xff]
    %v5165 = vld [vmem:[%s7 + $0xad0] sm:$0xff]
    %v5166 = vld [vmem:[%s7 + $0xad8] sm:$0xff]
    %v5167 = vld [vmem:[%s7 + $0xae0] sm:$0xff]
    %v5168 = vld [vmem:[%s7 + $0xae8] sm:$0xff]
    %v5169 = vld [vmem:[%s7 + $0xaf0] sm:$0xff]
    %v5170 = vld [vmem:[%s7 + $0xaf8] sm:$0xff]
    %v5171 = vld [vmem:[%s7 + $0xb00] sm:$0xff]
    %v5172 = vld [vmem:[%s7 + $0xb08] sm:$0xff]
    %v5173 = vld [vmem:[%s7 + $0xb10] sm:$0xff]
    %v5174 = vld [vmem:[%s7 + $0xb18] sm:$0xff]
    %v5175 = vld [vmem:[%s7 + $0xb20] sm:$0xff]
    %v5176 = vld [vmem:[%s7 + $0xb28] sm:$0xff]
    %v5177 = vld [vmem:[%s7 + $0xb30] sm:$0xff]
    %v5178 = vld [vmem:[%s7 + $0xb38] sm:$0xff]
    %v5179 = vld [vmem:[%s7 + $0xb40] sm:$0xff]
    %v5180 = vld [vmem:[%s7 + $0xb48] sm:$0xff]
    %v5181 = vld [vmem:[%s7 + $0xb50] sm:$0xff]
    %v5182 = vld [vmem:[%s7 + $0xb58] sm:$0xff]
    %v5183 = vld [vmem:[%s7 + $0xb60] sm:$0xff]
    %v5184 = vld [vmem:[%s7 + $0xb68] sm:$0xff]
    %v5185 = vld [vmem:[%s7 + $0xb70] sm:$0xff]
    %v5186 = vld [vmem:[%s7 + $0xb78] sm:$0xff]
    %v5187 = vld [vmem:[%s7 + $0xb80] sm:$0xff]
    %v5188 = vld [vmem:[%s7 + $0xb88] sm:$0xff]
    %v5189 = vld [vmem:[%s7 + $0xb90] sm:$0xff]
    %v5190 = vld [vmem:[%s7 + $0xb98] sm:$0xff]
    %v5191 = vld [vmem:[%s7 + $0xba0] sm:$0xff]
    %v5192 = vld [vmem:[%s7 + $0xba8] sm:$0xff]
    %v5193 = vld [vmem:[%s7 + $0xbb0] sm:$0xff]
    %v5194 = vld [vmem:[%s7 + $0xbb8] sm:$0xff]
    %v5195 = vld [vmem:[%s7 + $0xbc0] sm:$0xff]
    %v5196 = vld [vmem:[%s7 + $0xbc8] sm:$0xff]
    %v5197 = vld [vmem:[%s7 + $0xbd0] sm:$0xff]
    %v5198 = vld [vmem:[%s7 + $0xbd8] sm:$0xff]
    %v5199 = vld [vmem:[%s7 + $0xbe0] sm:$0xff]
    %v5200 = vld [vmem:[%s7 + $0xbe8] sm:$0xff]
    %v5201 = vld [vmem:[%s7 + $0xbf0] sm:$0xff]
    %v5202 = vld [vmem:[%s7 + $0xbf8] sm:$0xff]
    %v5203 = vld [vmem:[%s7 + $0xc00] sm:$0xff]
    %v5204 = vld [vmem:[%s7 + $0xc08] sm:$0xff]
    %v5205 = vld [vmem:[%s7 + $0xc10] sm:$0xff]
    %v5206 = vld [vmem:[%s7 + $0xc18] sm:$0xff]
    %v5207 = vld [vmem:[%s7 + $0xc20] sm:$0xff]
    %v5208 = vld [vmem:[%s7 + $0xc28] sm:$0xff]
    %v5209 = vld [vmem:[%s7 + $0xc30] sm:$0xff]
    %v5210 = vld [vmem:[%s7 + $0xc38] sm:$0xff]
    %v5211 = vld [vmem:[%s7 + $0xc40] sm:$0xff]
    %v5212 = vld [vmem:[%s7 + $0xc48] sm:$0xff]
    %v5213 = vld [vmem:[%s7 + $0xc50] sm:$0xff]
    %v5214 = vld [vmem:[%s7 + $0xc58] sm:$0xff]
    %v5215 = vld [vmem:[%s7 + $0xc60] sm:$0xff]
    %v5216 = vld [vmem:[%s7 + $0xc68] sm:$0xff]
    %v5217 = vld [vmem:[%s7 + $0xc70] sm:$0xff]
    %v5218 = vld [vmem:[%s7 + $0xc78] sm:$0xff]
    %v5219 = vld [vmem:[%s7 + $0xc80] sm:$0xff]
    %v5220 = vld [vmem:[%s7 + $0xc88] sm:$0xff]
    %v5221 = vld [vmem:[%s7 + $0xc90] sm:$0xff]
    %v5222 = vld [vmem:[%s7 + $0xc98] sm:$0xff]
    %v5223 = vld [vmem:[%s7 + $0xca0] sm:$0xff]
    %v5224 = vld [vmem:[%s7 + $0xca8] sm:$0xff]
    %v5225 = vld [vmem:[%s7 + $0xcb0] sm:$0xff]
    %v5226 = vld [vmem:[%s7 + $0xcb8] sm:$0xff]
    %v5227 = vld [vmem:[%s7 + $0xcc0] sm:$0xff]
    %v5228 = vld [vmem:[%s7 + $0xcc8] sm:$0xff]
    %v5229 = vld [vmem:[%s7 + $0xcd0] sm:$0xff]
    %v5230 = vld [vmem:[%s7 + $0xcd8] sm:$0xff]
    %v5231 = vld [vmem:[%s7 + $0xce0] sm:$0xff]
    %v5232 = vld [vmem:[%s7 + $0xce8] sm:$0xff]
    %v5233 = vld [vmem:[%s7 + $0xcf0] sm:$0xff]
    %v5234 = vld [vmem:[%s7 + $0xcf8] sm:$0xff]
    %v5235 = vld [vmem:[%s7 + $0xd00] sm:$0xff]
    %v5236 = vld [vmem:[%s7 + $0xd08] sm:$0xff]
    %v5237 = vld [vmem:[%s7 + $0xd10] sm:$0xff]
    %v5238 = vld [vmem:[%s7 + $0xd18] sm:$0xff]
    %v5239 = vld [vmem:[%s7 + $0xd20] sm:$0xff]
    %v5240 = vld [vmem:[%s7 + $0xd28] sm:$0xff]
    %v5241 = vld [vmem:[%s7 + $0xd30] sm:$0xff]
    %v5242 = vld [vmem:[%s7 + $0xd38] sm:$0xff]
    %v5243 = vld [vmem:[%s7 + $0xd40] sm:$0xff]
    %v5244 = vld [vmem:[%s7 + $0xd48] sm:$0xff]
    %v5245 = vld [vmem:[%s7 + $0xd50] sm:$0xff]
    %v5246 = vld [vmem:[%s7 + $0xd58] sm:$0xff]
    %v5247 = vld [vmem:[%s7 + $0xd60] sm:$0xff]
    %v5248 = vld [vmem:[%s7 + $0xd68] sm:$0xff]
    %v5249 = vld [vmem:[%s7 + $0xd70] sm:$0xff]
    %v5250 = vld [vmem:[%s7 + $0xd78] sm:$0xff]
    %v5251 = vld [vmem:[%s7 + $0xd80] sm:$0xff]
    %v5252 = vld [vmem:[%s7 + $0xd88] sm:$0xff]
    %v5253 = vld [vmem:[%s7 + $0xd90] sm:$0xff]
    %v5254 = vld [vmem:[%s7 + $0xd98] sm:$0xff]
    %v5255 = vld [vmem:[%s7 + $0xda0] sm:$0xff]
    %v5256 = vld [vmem:[%s7 + $0xda8] sm:$0xff]
    %v5257 = vld [vmem:[%s7 + $0xdb0] sm:$0xff]
    %v5258 = vld [vmem:[%s7 + $0xdb8] sm:$0xff]
    %v5259 = vld [vmem:[%s7 + $0xdc0] sm:$0xff]
    %v5260 = vld [vmem:[%s7 + $0xdc8] sm:$0xff]
    %v5261 = vld [vmem:[%s7 + $0xdd0] sm:$0xff]
    %v5262 = vld [vmem:[%s7 + $0xdd8] sm:$0xff]
    %v5263 = vld [vmem:[%s7 + $0xde0] sm:$0xff]
    %v5264 = vld [vmem:[%s7 + $0xde8] sm:$0xff]
    %v5265 = vld [vmem:[%s7 + $0xdf0] sm:$0xff]
    %v5266 = vld [vmem:[%s7 + $0xdf8] sm:$0xff]
    %v5267 = vld [vmem:[%s7 + $0xe00] sm:$0xff]
    %v5268 = vld [vmem:[%s7 + $0xe08] sm:$0xff]
    %v5269 = vld [vmem:[%s7 + $0xe10] sm:$0xff]
    %v5270 = vld [vmem:[%s7 + $0xe18] sm:$0xff]
    %v5271 = vld [vmem:[%s7 + $0xe20] sm:$0xff]
    %v5272 = vld [vmem:[%s7 + $0xe28] sm:$0xff]
    %v5273 = vld [vmem:[%s7 + $0xe30] sm:$0xff]
    %v5274 = vld [vmem:[%s7 + $0xe38] sm:$0xff]
    %v5275 = vld [vmem:[%s7 + $0xe40] sm:$0xff]
    %v5276 = vld [vmem:[%s7 + $0xe48] sm:$0xff]
    %v5277 = vld [vmem:[%s7 + $0xe50] sm:$0xff]
    %v5278 = vld [vmem:[%s7 + $0xe58] sm:$0xff]
    %v5279 = vld [vmem:[%s7 + $0xe60] sm:$0xff]
    %v5280 = vld [vmem:[%s7 + $0xe68] sm:$0xff]
    %v5281 = vld [vmem:[%s7 + $0xe70] sm:$0xff]
    %v5282 = vld [vmem:[%s7 + $0xe78] sm:$0xff]
    %v5283 = vld [vmem:[%s7 + $0xe80] sm:$0xff]
    %v5284 = vld [vmem:[%s7 + $0xe88] sm:$0xff]
    %v5285 = vld [vmem:[%s7 + $0xe90] sm:$0xff]
    %v5286 = vld [vmem:[%s7 + $0xe98] sm:$0xff]
    %v5287 = vld [vmem:[%s7 + $0xea0] sm:$0xff]
    %v5288 = vld [vmem:[%s7 + $0xea8] sm:$0xff]
    %v5289 = vld [vmem:[%s7 + $0xeb0] sm:$0xff]
    %v5290 = vld [vmem:[%s7 + $0xeb8] sm:$0xff]
    %v5291 = vld [vmem:[%s7 + $0xec0] sm:$0xff]
    %v5292 = vld [vmem:[%s7 + $0xec8] sm:$0xff]
    %v5293 = vld [vmem:[%s7 + $0xed0] sm:$0xff]
    %v5294 = vld [vmem:[%s7 + $0xed8] sm:$0xff]
    %v5295 = vld [vmem:[%s7 + $0xee0] sm:$0xff]
    %v5296 = vld [vmem:[%s7 + $0xee8] sm:$0xff]
    %v5297 = vld [vmem:[%s7 + $0xef0] sm:$0xff]
    %v5298 = vld [vmem:[%s7 + $0xef8] sm:$0xff]
    %v5299 = vld [vmem:[%s7 + $0xf00] sm:$0xff]
    %v5300 = vld [vmem:[%s7 + $0xf08] sm:$0xff]
    %v5301 = vld [vmem:[%s7 + $0xf10] sm:$0xff]
    %v5302 = vld [vmem:[%s7 + $0xf18] sm:$0xff]
    %v5303 = vld [vmem:[%s7 + $0xf20] sm:$0xff]
    %v5304 = vld [vmem:[%s7 + $0xf28] sm:$0xff]
    %v5305 = vld [vmem:[%s7 + $0xf30] sm:$0xff]
    %v5306 = vld [vmem:[%s7 + $0xf38] sm:$0xff]
    %v5307 = vld [vmem:[%s7 + $0xf40] sm:$0xff]
    %v5308 = vld [vmem:[%s7 + $0xf48] sm:$0xff]
    %v5309 = vld [vmem:[%s7 + $0xf50] sm:$0xff]
    %v5310 = vld [vmem:[%s7 + $0xf58] sm:$0xff]
    %v5311 = vld [vmem:[%s7 + $0xf60] sm:$0xff]
    %v5312 = vld [vmem:[%s7 + $0xf68] sm:$0xff]
    %v5313 = vld [vmem:[%s7 + $0xf70] sm:$0xff]
    %v5314 = vld [vmem:[%s7 + $0xf78] sm:$0xff]
    %v5315 = vld [vmem:[%s7 + $0xf80] sm:$0xff]
    %v5316 = vld [vmem:[%s7 + $0xf88] sm:$0xff]
    %v5317 = vld [vmem:[%s7 + $0xf90] sm:$0xff]
    %v5318 = vld [vmem:[%s7 + $0xf98] sm:$0xff]
    %v5319 = vld [vmem:[%s7 + $0xfa0] sm:$0xff]
    %v5320 = vld [vmem:[%s7 + $0xfa8] sm:$0xff]
    %v5321 = vld [vmem:[%s7 + $0xfb0] sm:$0xff]
    %v5322 = vld [vmem:[%s7 + $0xfb8] sm:$0xff]
    %v5323 = vld [vmem:[%s7 + $0xfc0] sm:$0xff]
    %v5324 = vld [vmem:[%s7 + $0xfc8] sm:$0xff]
    %v5325 = vld [vmem:[%s7 + $0xfd0] sm:$0xff]
    %v5326 = vld [vmem:[%s7 + $0xfd8] sm:$0xff]
    %v5327 = vld [vmem:[%s7 + $0xfe0] sm:$0xff]
    %v5328 = vld [vmem:[%s7 + $0xfe8] sm:$0xff]
    %v5329 = vld [vmem:[%s7 + $0xff0] sm:$0xff]
    %v5330 = vld [vmem:[%s7 + $0xff8] sm:$0xff]
    %v5331 = vld [vmem:[%s7 + $0x1000] sm:$0xff]
    %v5332 = vld [vmem:[%s7 + $0x1008] sm:$0xff]
    %v5333 = vld [vmem:[%s7 + $0x1010] sm:$0xff]
    %v5334 = vld [vmem:[%s7 + $0x1018] sm:$0xff]
    %v5335 = vld [vmem:[%s7 + $0x1020] sm:$0xff]
    %v5336 = vld [vmem:[%s7 + $0x1028] sm:$0xff]
    %v5337 = vld [vmem:[%s7 + $0x1030] sm:$0xff]
    %v5338 = vld [vmem:[%s7 + $0x1038] sm:$0xff]
    %v5339 = vld [vmem:[%s7 + $0x1040] sm:$0xff]
    %v5340 = vld [vmem:[%s7 + $0x1048] sm:$0xff]
    %v5341 = vld [vmem:[%s7 + $0x1050] sm:$0xff]
    %v5342 = vld [vmem:[%s7 + $0x1058] sm:$0xff]
    %v5343 = vld [vmem:[%s7 + $0x1060] sm:$0xff]
    %v5344 = vld [vmem:[%s7 + $0x1068] sm:$0xff]
    %v5345 = vld [vmem:[%s7 + $0x1070] sm:$0xff]
    %v5346 = vld [vmem:[%s7 + $0x1078] sm:$0xff]
    %v5347 = vld [vmem:[%s7 + $0x1080] sm:$0xff]
    %v5348 = vld [vmem:[%s7 + $0x1088] sm:$0xff]
    %v5349 = vld [vmem:[%s7 + $0x1090] sm:$0xff]
    %v5350 = vld [vmem:[%s7 + $0x1098] sm:$0xff]
    %v5351 = vld [vmem:[%s7 + $0x10a0] sm:$0xff]
    %v5352 = vld [vmem:[%s7 + $0x10a8] sm:$0xff]
    %v5353 = vld [vmem:[%s7 + $0x10b0] sm:$0xff]
    %v5354 = vld [vmem:[%s7 + $0x10b8] sm:$0xff]
    %v5355 = vld [vmem:[%s7 + $0x10c0] sm:$0xff]
    %v5356 = vld [vmem:[%s7 + $0x10c8] sm:$0xff]
    %v5357 = vld [vmem:[%s7 + $0x10d0] sm:$0xff]
    %v5358 = vld [vmem:[%s7 + $0x10d8] sm:$0xff]
    %v5359 = vld [vmem:[%s7 + $0x10e0] sm:$0xff]
    %v5360 = vld [vmem:[%s7 + $0x10e8] sm:$0xff]
    %v5361 = vld [vmem:[%s7 + $0x10f0] sm:$0xff]
    %v5362 = vld [vmem:[%s7 + $0x10f8] sm:$0xff]
    %v5363 = vld [vmem:[%s7 + $0x1100] sm:$0xff]
    %v5364 = vld [vmem:[%s7 + $0x1108] sm:$0xff]
    %v5365 = vld [vmem:[%s7 + $0x1110] sm:$0xff]
    %v5366 = vld [vmem:[%s7 + $0x1118] sm:$0xff]
    %v5367 = vld [vmem:[%s7 + $0x1120] sm:$0xff]
    %v5368 = vld [vmem:[%s7 + $0x1128] sm:$0xff]
    %v5369 = vld [vmem:[%s7 + $0x1130] sm:$0xff]
    %v5370 = vld [vmem:[%s7 + $0x1138] sm:$0xff]
    %v5371 = vld [vmem:[%s7 + $0x1140] sm:$0xff]
    %v5372 = vld [vmem:[%s7 + $0x1148] sm:$0xff]
    %v5373 = vld [vmem:[%s7 + $0x1150] sm:$0xff]
    %v5374 = vld [vmem:[%s7 + $0x1158] sm:$0xff]
    %v5375 = vld [vmem:[%s7 + $0x1160] sm:$0xff]
    %v5376 = vld [vmem:[%s7 + $0x1168] sm:$0xff]
    %v5377 = vld [vmem:[%s7 + $0x1170] sm:$0xff]
    %v5378 = vld [vmem:[%s7 + $0x1178] sm:$0xff]
    %v5379 = vld [vmem:[%s7 + $0x1180] sm:$0xff]
    %v5380 = vld [vmem:[%s7 + $0x1188] sm:$0xff]
    %v5381 = vld [vmem:[%s7 + $0x1190] sm:$0xff]
    %v5382 = vld [vmem:[%s7 + $0x1198] sm:$0xff]
    %v5383 = vld [vmem:[%s7 + $0x11a0] sm:$0xff]
    %v5384 = vld [vmem:[%s7 + $0x11a8] sm:$0xff]
    %v5385 = vld [vmem:[%s7 + $0x11b0] sm:$0xff]
    %v5386 = vld [vmem:[%s7 + $0x11b8] sm:$0xff]
    %v5387 = vld [vmem:[%s7 + $0x11c0] sm:$0xff]
    %v5388 = vld [vmem:[%s7 + $0x11c8] sm:$0xff]
    %v5389 = vld [vmem:[%s7 + $0x11d0] sm:$0xff]
    %v5390 = vld [vmem:[%s7 + $0x11d8] sm:$0xff]
    %v5391 = vld [vmem:[%s7 + $0x11e0] sm:$0xff]
    %v5392 = vld [vmem:[%s7 + $0x11e8] sm:$0xff]
    %v5393 = vld [vmem:[%s7 + $0x11f0] sm:$0xff]
    %v5394 = vld [vmem:[%s7 + $0x11f8] sm:$0xff]
    %v5395 = vld [vmem:[%s7 + $0x1200] sm:$0xff]
    %v5396 = vld [vmem:[%s7 + $0x1208] sm:$0xff]
    %v5397 = vld [vmem:[%s7 + $0x1210] sm:$0xff]
    %v5398 = vld [vmem:[%s7 + $0x1218] sm:$0xff]
    %v5399 = vld [vmem:[%s7 + $0x1220] sm:$0xff]
    %v5400 = vld [vmem:[%s7 + $0x1228] sm:$0xff]
    %v5401 = vld [vmem:[%s7 + $0x1230] sm:$0xff]
    %v5402 = vld [vmem:[%s7 + $0x1238] sm:$0xff]
    %v5403 = vld [vmem:[%s7 + $0x1240] sm:$0xff]
    %v5404 = vld [vmem:[%s7 + $0x1248] sm:$0xff]
    %v5405 = vld [vmem:[%s7 + $0x1250] sm:$0xff]
    %v5406 = vld [vmem:[%s7 + $0x1258] sm:$0xff]
    %v5407 = vld [vmem:[%s7 + $0x1260] sm:$0xff]
    %v5408 = vld [vmem:[%s7 + $0x1268] sm:$0xff]
    %v5409 = vld [vmem:[%s7 + $0x1270] sm:$0xff]
    %v5410 = vld [vmem:[%s7 + $0x1278] sm:$0xff]
    %v5411 = vld [vmem:[%s7 + $0x1280] sm:$0xff]
    %v5412 = vld [vmem:[%s7 + $0x1288] sm:$0xff]
    %v5413 = vld [vmem:[%s7 + $0x1290] sm:$0xff]
    %v5414 = vld [vmem:[%s7 + $0x1298] sm:$0xff]
    %v5415 = vld [vmem:[%s7 + $0x12a0] sm:$0xff]
    %v5416 = vld [vmem:[%s7 + $0x12a8] sm:$0xff]
    %v5417 = vld [vmem:[%s7 + $0x12b0] sm:$0xff]
    %v5418 = vld [vmem:[%s7 + $0x12b8] sm:$0xff]
    %v5419 = vld [vmem:[%s7 + $0x12c0] sm:$0xff]
    %v5420 = vld [vmem:[%s7 + $0x12c8] sm:$0xff]
    %v5421 = vld [vmem:[%s7 + $0x12d0] sm:$0xff]
    %v5422 = vld [vmem:[%s7 + $0x12d8] sm:$0xff]
    %v5423 = vld [vmem:[%s7 + $0x12e0] sm:$0xff]
    %v5424 = vld [vmem:[%s7 + $0x12e8] sm:$0xff]
    %v5425 = vld [vmem:[%s7 + $0x12f0] sm:$0xff]
    %v5426 = vld [vmem:[%s7 + $0x12f8] sm:$0xff]
    %v5427 = vld [vmem:[%s7 + $0x1300] sm:$0xff]
    %v5428 = vld [vmem:[%s7 + $0x1308] sm:$0xff]
    %v5429 = vld [vmem:[%s7 + $0x1310] sm:$0xff]
    %v5430 = vld [vmem:[%s7 + $0x1318] sm:$0xff]
    %v5431 = vld [vmem:[%s7 + $0x1320] sm:$0xff]
    %v5432 = vld [vmem:[%s7 + $0x1328] sm:$0xff]
    %v5433 = vld [vmem:[%s7 + $0x1330] sm:$0xff]
    %v5434 = vld [vmem:[%s7 + $0x1338] sm:$0xff]
    %v5435 = vld [vmem:[%s7 + $0x1340] sm:$0xff]
    %v5436 = vld [vmem:[%s7 + $0x1348] sm:$0xff]
    %v5437 = vld [vmem:[%s7 + $0x1350] sm:$0xff]
    %v5438 = vld [vmem:[%s7 + $0x1358] sm:$0xff]
    %v5439 = vld [vmem:[%s7 + $0x1360] sm:$0xff]
    %v5440 = vld [vmem:[%s7 + $0x1368] sm:$0xff]
    %v5441 = vld [vmem:[%s7 + $0x1370] sm:$0xff]
    %v5442 = vld [vmem:[%s7 + $0x1378] sm:$0xff]
    %v5443 = vld [vmem:[%s7 + $0x1380] sm:$0xff]
    %v5444 = vld [vmem:[%s7 + $0x1388] sm:$0xff]
    %v5445 = vld [vmem:[%s7 + $0x1390] sm:$0xff]
    %v5446 = vld [vmem:[%s7 + $0x1398] sm:$0xff]
    %v5447 = vld [vmem:[%s7 + $0x13a0] sm:$0xff]
    %v5448 = vld [vmem:[%s7 + $0x13a8] sm:$0xff]
    %v5449 = vld [vmem:[%s7 + $0x13b0] sm:$0xff]
    %v5450 = vld [vmem:[%s7 + $0x13b8] sm:$0xff]
    %v5451 = vld [vmem:[%s7 + $0x13c0] sm:$0xff]
    %v5452 = vld [vmem:[%s7 + $0x13c8] sm:$0xff]
    %v5453 = vld [vmem:[%s7 + $0x13d0] sm:$0xff]
    %v5454 = vld [vmem:[%s7 + $0x13d8] sm:$0xff]
    %v5455 = vld [vmem:[%s7 + $0x13e0] sm:$0xff]
    %v5456 = vld [vmem:[%s7 + $0x13e8] sm:$0xff]
    %v5457 = vld [vmem:[%s7 + $0x13f0] sm:$0xff]
    %v5458 = vld [vmem:[%s7 + $0x13f8] sm:$0xff]
    %v5459 = vld [vmem:[%s7 + $0x1400] sm:$0xff]
    %v5460 = vld [vmem:[%s7 + $0x1408] sm:$0xff]
    %v5461 = vld [vmem:[%s7 + $0x1410] sm:$0xff]
    %v5462 = vld [vmem:[%s7 + $0x1418] sm:$0xff]
    %v5463 = vld [vmem:[%s7 + $0x1420] sm:$0xff]
    %v5464 = vld [vmem:[%s7 + $0x1428] sm:$0xff]
    %v5465 = vld [vmem:[%s7 + $0x1430] sm:$0xff]
    %v5466 = vld [vmem:[%s7 + $0x1438] sm:$0xff]
    %v5467 = vld [vmem:[%s7 + $0x1440] sm:$0xff]
    %v5468 = vld [vmem:[%s7 + $0x1448] sm:$0xff]
    %v5469 = vld [vmem:[%s7 + $0x1450] sm:$0xff]
    %v5470 = vld [vmem:[%s7 + $0x1458] sm:$0xff]
    %v5471 = vld [vmem:[%s7 + $0x1460] sm:$0xff]
    %v5472 = vld [vmem:[%s7 + $0x1468] sm:$0xff]
    %v5473 = vld [vmem:[%s7 + $0x1470] sm:$0xff]
    %v5474 = vld [vmem:[%s7 + $0x1478] sm:$0xff]
    %v5475 = vld [vmem:[%s7 + $0x1480] sm:$0xff]
    %v5476 = vld [vmem:[%s7 + $0x1488] sm:$0xff]
    %v5477 = vld [vmem:[%s7 + $0x1490] sm:$0xff]
    %v5478 = vld [vmem:[%s7 + $0x1498] sm:$0xff]
    %v5479 = vld [vmem:[%s7 + $0x14a0] sm:$0xff]
    %v5480 = vld [vmem:[%s7 + $0x14a8] sm:$0xff]
    %v5481 = vld [vmem:[%s7 + $0x14b0] sm:$0xff]
    %v5482 = vld [vmem:[%s7 + $0x14b8] sm:$0xff]
    %v5483 = vld [vmem:[%s7 + $0x14c0] sm:$0xff]
    %v5484 = vld [vmem:[%s7 + $0x14c8] sm:$0xff]
    %v5485 = vld [vmem:[%s7 + $0x14d0] sm:$0xff]
    %v5486 = vld [vmem:[%s7 + $0x14d8] sm:$0xff]
    %v5487 = vld [vmem:[%s7 + $0x14e0] sm:$0xff]
    %v5488 = vld [vmem:[%s7 + $0x14e8] sm:$0xff]
    %v5489 = vld [vmem:[%s7 + $0x14f0] sm:$0xff]
    %v5490 = vld [vmem:[%s7 + $0x14f8] sm:$0xff]
    %v5491 = vld [vmem:[%s7 + $0x1500] sm:$0xff]
    %v5492 = vld [vmem:[%s7 + $0x1508] sm:$0xff]
    %v5493 = vld [vmem:[%s7 + $0x1510] sm:$0xff]
    %v5494 = vld [vmem:[%s7 + $0x1518] sm:$0xff]
    %v5495 = vld [vmem:[%s7 + $0x1520] sm:$0xff]
    %v5496 = vld [vmem:[%s7 + $0x1528] sm:$0xff]
    %v5497 = vld [vmem:[%s7 + $0x1530] sm:$0xff]
    %v5498 = vld [vmem:[%s7 + $0x1538] sm:$0xff]
    %v5499 = vld [vmem:[%s7 + $0x1540] sm:$0xff]
    %v5500 = vld [vmem:[%s7 + $0x1548] sm:$0xff]
    %v5501 = vld [vmem:[%s7 + $0x1550] sm:$0xff]
    %v5502 = vld [vmem:[%s7 + $0x1558] sm:$0xff]
    %v5503 = vld [vmem:[%s7 + $0x1560] sm:$0xff]
    %v5504 = vld [vmem:[%s7 + $0x1568] sm:$0xff]
    %v5505 = vld [vmem:[%s7 + $0x1570] sm:$0xff]
    %v5506 = vld [vmem:[%s7 + $0x1578] sm:$0xff]
    %v5507 = vld [vmem:[%s7 + $0x1580] sm:$0xff]
    %v5508 = vld [vmem:[%s7 + $0x1588] sm:$0xff]
    %v5509 = vld [vmem:[%s7 + $0x1590] sm:$0xff]
    %v5510 = vld [vmem:[%s7 + $0x1598] sm:$0xff]
    %v5511 = vld [vmem:[%s7 + $0x15a0] sm:$0xff]
    %v5512 = vld [vmem:[%s7 + $0x15a8] sm:$0xff]
    %v5513 = vld [vmem:[%s7 + $0x15b0] sm:$0xff]
    %v5514 = vld [vmem:[%s7 + $0x15b8] sm:$0xff]
    %v5515 = vld [vmem:[%s7 + $0x15c0] sm:$0xff]
    %v5516 = vld [vmem:[%s7 + $0x15c8] sm:$0xff]
    %v5517 = vld [vmem:[%s7 + $0x15d0] sm:$0xff]
    %v5518 = vld [vmem:[%s7 + $0x15d8] sm:$0xff]
    %v5519 = vld [vmem:[%s7 + $0x15e0] sm:$0xff]
    %v5520 = vld [vmem:[%s7 + $0x15e8] sm:$0xff]
    %v5521 = vld [vmem:[%s7 + $0x15f0] sm:$0xff]
    %v5522 = vld [vmem:[%s7 + $0x15f8] sm:$0xff]
    %v5523 = vld [vmem:[%s7 + $0x1600] sm:$0xff]
    %v5524 = vld [vmem:[%s7 + $0x1608] sm:$0xff]
    %v5525 = vld [vmem:[%s7 + $0x1610] sm:$0xff]
    %v5526 = vld [vmem:[%s7 + $0x1618] sm:$0xff]
    %v5527 = vld [vmem:[%s7 + $0x1620] sm:$0xff]
    %v5528 = vld [vmem:[%s7 + $0x1628] sm:$0xff]
    %v5529 = vld [vmem:[%s7 + $0x1630] sm:$0xff]
    %v5530 = vld [vmem:[%s7 + $0x1638] sm:$0xff]
    %v5531 = vld [vmem:[%s7 + $0x1640] sm:$0xff]
    %v5532 = vld [vmem:[%s7 + $0x1648] sm:$0xff]
    %v5533 = vld [vmem:[%s7 + $0x1650] sm:$0xff]
    %v5534 = vld [vmem:[%s7 + $0x1658] sm:$0xff]
    %v5535 = vld [vmem:[%s7 + $0x1660] sm:$0xff]
    %v5536 = vld [vmem:[%s7 + $0x1668] sm:$0xff]
    %v5537 = vld [vmem:[%s7 + $0x1670] sm:$0xff]
    %v5538 = vld [vmem:[%s7 + $0x1678] sm:$0xff]
    %v5539 = vld [vmem:[%s7 + $0x1680] sm:$0xff]
    %v5540 = vld [vmem:[%s7 + $0x1688] sm:$0xff]
    %v5541 = vld [vmem:[%s7 + $0x1690] sm:$0xff]
    %v5542 = vld [vmem:[%s7 + $0x1698] sm:$0xff]
    %v5543 = vld [vmem:[%s7 + $0x16a0] sm:$0xff]
    %v5544 = vld [vmem:[%s7 + $0x16a8] sm:$0xff]
    %v5545 = vld [vmem:[%s7 + $0x16b0] sm:$0xff]
    %v5546 = vld [vmem:[%s7 + $0x16b8] sm:$0xff]
    %v5547 = vld [vmem:[%s7 + $0x16c0] sm:$0xff]
    %v5548 = vld [vmem:[%s7 + $0x16c8] sm:$0xff]
    %v5549 = vld [vmem:[%s7 + $0x16d0] sm:$0xff]
    %v5550 = vld [vmem:[%s7 + $0x16d8] sm:$0xff]
    %v5551 = vld [vmem:[%s7 + $0x16e0] sm:$0xff]
    %v5552 = vld [vmem:[%s7 + $0x16e8] sm:$0xff]
    %v5553 = vld [vmem:[%s7 + $0x16f0] sm:$0xff]
    %v5554 = vld [vmem:[%s7 + $0x16f8] sm:$0xff]
    %v5555 = vld [vmem:[%s7 + $0x1700] sm:$0xff]
    %v5556 = vld [vmem:[%s7 + $0x1708] sm:$0xff]
    %v5557 = vld [vmem:[%s7 + $0x1710] sm:$0xff]
    %v5558 = vld [vmem:[%s7 + $0x1718] sm:$0xff]
    %v5559 = vld [vmem:[%s7 + $0x1720] sm:$0xff]
    %v5560 = vld [vmem:[%s7 + $0x1728] sm:$0xff]
    %v5561 = vld [vmem:[%s7 + $0x1730] sm:$0xff]
    %v5562 = vld [vmem:[%s7 + $0x1738] sm:$0xff]
    %v5563 = vld [vmem:[%s7 + $0x1740] sm:$0xff]
    %v5564 = vld [vmem:[%s7 + $0x1748] sm:$0xff]
    %v5565 = vld [vmem:[%s7 + $0x1750] sm:$0xff]
    %v5566 = vld [vmem:[%s7 + $0x1758] sm:$0xff]
    %v5567 = vld [vmem:[%s7 + $0x1760] sm:$0xff]
    %v5568 = vld [vmem:[%s7 + $0x1768] sm:$0xff]
    %v5569 = vld [vmem:[%s7 + $0x1770] sm:$0xff]
    %v5570 = vld [vmem:[%s7 + $0x1778] sm:$0xff]
    %v5571 = vld [vmem:[%s7 + $0x1780] sm:$0xff]
    %v5572 = vld [vmem:[%s7 + $0x1788] sm:$0xff]
    %v5573 = vld [vmem:[%s7 + $0x1790] sm:$0xff]
    %v5574 = vld [vmem:[%s7 + $0x1798] sm:$0xff]
    %v5575 = vld [vmem:[%s7 + $0x17a0] sm:$0xff]
    %v5576 = vld [vmem:[%s7 + $0x17a8] sm:$0xff]
    %v5577 = vld [vmem:[%s7 + $0x17b0] sm:$0xff]
    %v5578 = vld [vmem:[%s7 + $0x17b8] sm:$0xff]
    %v5579 = vld [vmem:[%s7 + $0x17c0] sm:$0xff]
    %v5580 = vld [vmem:[%s7 + $0x17c8] sm:$0xff]
    %v5581 = vld [vmem:[%s7 + $0x17d0] sm:$0xff]
    %v5582 = vld [vmem:[%s7 + $0x17d8] sm:$0xff]
    %v5583 = vld [vmem:[%s7 + $0x17e0] sm:$0xff]
    %v5584 = vld [vmem:[%s7 + $0x17e8] sm:$0xff]
    %v5585 = vld [vmem:[%s7 + $0x17f0] sm:$0xff]
    %v5586 = vld [vmem:[%s7 + $0x17f8] sm:$0xff]
    %v5587 = vld [vmem:[%s7 + $0x1800] sm:$0xff]
    %v5588 = vld [vmem:[%s7 + $0x1808] sm:$0xff]
    %v5589 = vld [vmem:[%s7 + $0x1810] sm:$0xff]
    %v5590 = vld [vmem:[%s7 + $0x1818] sm:$0xff]
    %v5591 = vld [vmem:[%s7 + $0x1820] sm:$0xff]
    %v5592 = vld [vmem:[%s7 + $0x1828] sm:$0xff]
    %v5593 = vld [vmem:[%s7 + $0x1830] sm:$0xff]
    %v5594 = vld [vmem:[%s7 + $0x1838] sm:$0xff]
    %v5595 = vld [vmem:[%s7 + $0x1840] sm:$0xff]
    %v5596 = vld [vmem:[%s7 + $0x1848] sm:$0xff]
    %v5597 = vld [vmem:[%s7 + $0x1850] sm:$0xff]
    %v5598 = vld [vmem:[%s7 + $0x1858] sm:$0xff]
    %v5599 = vld [vmem:[%s7 + $0x1860] sm:$0xff]
    %v5600 = vld [vmem:[%s7 + $0x1868] sm:$0xff]
    %v5601 = vld [vmem:[%s7 + $0x1870] sm:$0xff]
    %v5602 = vld [vmem:[%s7 + $0x1878] sm:$0xff]
    %v5603 = vld [vmem:[%s8] sm:$0xf]
    %v5608 = vcombine.high %v4815, %v4815
    %v5610 = vunpack.c.l.s4 1966171168
    %v5611 = vunpack.c.0.s8 %v5610
    %v5612 = vlaneseq
    %v5613 = vshrl.u32 %v5612, 7
    %v5614 = vsub.s32 %v5611, %v5613
    %v5615 = vrot.slane %v4815, %v5614
    %v5617 = vunpack.c.l.s4 1966171168
    %v5618 = vunpack.c.0.s8 %v5617
    %v5619 = vlaneseq
    %v5620 = vshrl.u32 %v5619, 7
    %v5621 = vsub.s32 %v5618, %v5620
    %v5622 = vrot.slane %v5608, %v5621
    %v5623 = vcombine.high %v5615, %v5615
    %v5624 = vcombine.high %v5622, %v5622
    %v5626 = vunpack.c.l.s4 1966171168
    %v5627 = vunpack.c.0.s8 %v5626
    %v5628 = vlaneseq
    %v5629 = vshrl.u32 %v5628, 7
    %v5630 = vsub.s32 %v5627, %v5629
    %v5631 = vrot.slane %v5615, %v5630
    %v5633 = vunpack.c.l.s4 1966171168
    %v5634 = vunpack.c.0.s8 %v5633
    %v5635 = vlaneseq
    %v5636 = vshrl.u32 %v5635, 7
    %v5637 = vsub.s32 %v5634, %v5636
    %v5638 = vrot.slane %v5622, %v5637
    %v5640 = vunpack.c.l.s4 1966171168
    %v5641 = vunpack.c.0.s8 %v5640
    %v5642 = vlaneseq
    %v5643 = vshrl.u32 %v5642, 7
    %v5644 = vsub.s32 %v5641, %v5643
    %v5645 = vrot.slane %v5623, %v5644
    %v5647 = vunpack.c.l.s4 1966171168
    %v5648 = vunpack.c.0.s8 %v5647
    %v5649 = vlaneseq
    %v5650 = vshrl.u32 %v5649, 7
    %v5651 = vsub.s32 %v5648, %v5650
    %v5652 = vrot.slane %v5624, %v5651
    %v5653 = vcombine.high %v5631, %v5631
    %v5654 = vcombine.high %v5638, %v5638
    %v5655 = vcombine.high %v5645, %v5645
    %v5656 = vcombine.high %v5652, %v5652
    %v5657 = vcombine.high %v4816, %v4816
    %v5659 = vunpack.c.l.s4 1966171168
    %v5660 = vunpack.c.0.s8 %v5659
    %v5661 = vlaneseq
    %v5662 = vshrl.u32 %v5661, 7
    %v5663 = vsub.s32 %v5660, %v5662
    %v5664 = vrot.slane %v4816, %v5663
    %v5666 = vunpack.c.l.s4 1966171168
    %v5667 = vunpack.c.0.s8 %v5666
    %v5668 = vlaneseq
    %v5669 = vshrl.u32 %v5668, 7
    %v5670 = vsub.s32 %v5667, %v5669
    %v5671 = vrot.slane %v5657, %v5670
    %v5672 = vcombine.high %v5664, %v5664
    %v5673 = vcombine.high %v5671, %v5671
    %v5675 = vunpack.c.l.s4 1966171168
    %v5676 = vunpack.c.0.s8 %v5675
    %v5677 = vlaneseq
    %v5678 = vshrl.u32 %v5677, 7
    %v5679 = vsub.s32 %v5676, %v5678
    %v5680 = vrot.slane %v5664, %v5679
    %v5682 = vunpack.c.l.s4 1966171168
    %v5683 = vunpack.c.0.s8 %v5682
    %v5684 = vlaneseq
    %v5685 = vshrl.u32 %v5684, 7
    %v5686 = vsub.s32 %v5683, %v5685
    %v5687 = vrot.slane %v5671, %v5686
    %v5689 = vunpack.c.l.s4 1966171168
    %v5690 = vunpack.c.0.s8 %v5689
    %v5691 = vlaneseq
    %v5692 = vshrl.u32 %v5691, 7
    %v5693 = vsub.s32 %v5690, %v5692
    %v5694 = vrot.slane %v5672, %v5693
    %v5696 = vunpack.c.l.s4 1966171168
    %v5697 = vunpack.c.0.s8 %v5696
    %v5698 = vlaneseq
    %v5699 = vshrl.u32 %v5698, 7
    %v5700 = vsub.s32 %v5697, %v5699
    %v5701 = vrot.slane %v5673, %v5700
    %v5702 = vcombine.high %v5680, %v5680
    %v5703 = vcombine.high %v5687, %v5687
    %v5704 = vcombine.high %v5694, %v5694
    %v5705 = vcombine.high %v5701, %v5701
    %v5706 = vcombine.high %v4817, %v4817
    %v5708 = vunpack.c.l.s4 1966171168
    %v5709 = vunpack.c.0.s8 %v5708
    %v5710 = vlaneseq
    %v5711 = vshrl.u32 %v5710, 7
    %v5712 = vsub.s32 %v5709, %v5711
    %v5713 = vrot.slane %v4817, %v5712
    %v5715 = vunpack.c.l.s4 1966171168
    %v5716 = vunpack.c.0.s8 %v5715
    %v5717 = vlaneseq
    %v5718 = vshrl.u32 %v5717, 7
    %v5719 = vsub.s32 %v5716, %v5718
    %v5720 = vrot.slane %v5706, %v5719
    %v5721 = vcombine.high %v5713, %v5713
    %v5722 = vcombine.high %v5720, %v5720
    %v5724 = vunpack.c.l.s4 1966171168
    %v5725 = vunpack.c.0.s8 %v5724
    %v5726 = vlaneseq
    %v5727 = vshrl.u32 %v5726, 7
    %v5728 = vsub.s32 %v5725, %v5727
    %v5729 = vrot.slane %v5713, %v5728
    %v5731 = vunpack.c.l.s4 1966171168
    %v5732 = vunpack.c.0.s8 %v5731
    %v5733 = vlaneseq
    %v5734 = vshrl.u32 %v5733, 7
    %v5735 = vsub.s32 %v5732, %v5734
    %v5736 = vrot.slane %v5720, %v5735
    %v5738 = vunpack.c.l.s4 1966171168
    %v5739 = vunpack.c.0.s8 %v5738
    %v5740 = vlaneseq
    %v5741 = vshrl.u32 %v5740, 7
    %v5742 = vsub.s32 %v5739, %v5741
    %v5743 = vrot.slane %v5721, %v5742
    %v5745 = vunpack.c.l.s4 1966171168
    %v5746 = vunpack.c.0.s8 %v5745
    %v5747 = vlaneseq
    %v5748 = vshrl.u32 %v5747, 7
    %v5749 = vsub.s32 %v5746, %v5748
    %v5750 = vrot.slane %v5722, %v5749
    %v5751 = vcombine.high %v5729, %v5729
    %v5752 = vcombine.high %v5736, %v5736
    %v5753 = vcombine.high %v5743, %v5743
    %v5754 = vcombine.high %v5750, %v5750
    %v5756 = vunpack.c.l.s4 1966171168
    %v5757 = vunpack.c.0.s8 %v5756
    %v5758 = vlaneseq
    %v5759 = vshrl.u32 %v5758, 7
    %v5760 = vsub.s32 %v5757, %v5759
    %v5761 = vrot.slane %v4818, %v5760
    %v5763 = vunpack.c.l.s4 1966171168
    %v5764 = vunpack.c.0.s8 %v5763
    %v5765 = vlaneseq
    %v5766 = vshrl.u32 %v5765, 7
    %v5767 = vsub.s32 %v5764, %v5766
    %v5768 = vrot.slane %v5761, %v5767
    %v6577 = vunpack.c.l.b16 %v4819
    %v6578 = vunpack.c.h.b16 %v4819
    %v6579 = vunpack.c.l.b16 %v4820
    %v6580 = vunpack.c.h.b16 %v4820
    %v6581 = vunpack.c.l.b16 %v4821
    %v6582 = vunpack.c.h.b16 %v4821
    %v6583 = vunpack.c.l.b16 %v4822
    %v6584 = vunpack.c.h.b16 %v4822
    %v6585 = vunpack.c.l.b16 %v4823
    %v6586 = vunpack.c.h.b16 %v4823
    %v6587 = vunpack.c.l.b16 %v4824
    %v6588 = vunpack.c.h.b16 %v4824
    %v6589 = vunpack.c.l.b16 %v4825
    %v6590 = vunpack.c.h.b16 %v4825
    %v6591 = vunpack.c.l.b16 %v4826
    %v6592 = vunpack.c.h.b16 %v4826
    %v6593 = vunpack.c.l.b16 %v4827
    %v6594 = vunpack.c.h.b16 %v4827
    %v6595 = vunpack.c.l.b16 %v4828
    %v6596 = vunpack.c.h.b16 %v4828
    %v6597 = vunpack.c.l.b16 %v4829
    %v6598 = vunpack.c.h.b16 %v4829
    %v6599 = vunpack.c.l.b16 %v4830
    %v6600 = vunpack.c.h.b16 %v4830
    %v6601 = vunpack.c.l.b16 %v4831
    %v6602 = vunpack.c.h.b16 %v4831
    %v6603 = vunpack.c.l.b16 %v4832
    %v6604 = vunpack.c.h.b16 %v4832
    %v6605 = vunpack.c.l.b16 %v4833
    %v6606 = vunpack.c.h.b16 %v4833
    %v6607 = vunpack.c.l.b16 %v4834
    %v6608 = vunpack.c.h.b16 %v4834
    %v6609 = vunpack.c.l.b16 %v4835
    %v6610 = vunpack.c.h.b16 %v4835
    %v6611 = vunpack.c.l.b16 %v4836
    %v6612 = vunpack.c.h.b16 %v4836
    %v6613 = vunpack.c.l.b16 %v4837
    %v6614 = vunpack.c.h.b16 %v4837
    %v6615 = vunpack.c.l.b16 %v4838
    %v6616 = vunpack.c.h.b16 %v4838
    %v6617 = vunpack.c.l.b16 %v4839
    %v6618 = vunpack.c.h.b16 %v4839
    %v6619 = vunpack.c.l.b16 %v4840
    %v6620 = vunpack.c.h.b16 %v4840
    %v6621 = vunpack.c.l.b16 %v4841
    %v6622 = vunpack.c.h.b16 %v4841
    %v6623 = vunpack.c.l.b16 %v4842
    %v6624 = vunpack.c.h.b16 %v4842
    %v6625 = vunpack.c.l.b16 %v4843
    %v6626 = vunpack.c.h.b16 %v4843
    %v6627 = vunpack.c.l.b16 %v4844
    %v6628 = vunpack.c.h.b16 %v4844
    %v6629 = vunpack.c.l.b16 %v4845
    %v6630 = vunpack.c.h.b16 %v4845
    %v6631 = vunpack.c.l.b16 %v4846
    %v6632 = vunpack.c.h.b16 %v4846
    %v6633 = vunpack.c.l.b16 %v4847
    %v6634 = vunpack.c.h.b16 %v4847
    %v6635 = vunpack.c.l.b16 %v4848
    %v6636 = vunpack.c.h.b16 %v4848
    %v6637 = vunpack.c.l.b16 %v4849
    %v6638 = vunpack.c.h.b16 %v4849
    %v6639 = vunpack.c.l.b16 %v4850
    %v6640 = vunpack.c.h.b16 %v4850
    %v6641 = vunpack.c.l.b16 %v4851
    %v6642 = vunpack.c.h.b16 %v4851
    %v6643 = vunpack.c.l.b16 %v4852
    %v6644 = vunpack.c.h.b16 %v4852
    %v6645 = vunpack.c.l.b16 %v4853
    %v6646 = vunpack.c.h.b16 %v4853
    %v6647 = vunpack.c.l.b16 %v4854
    %v6648 = vunpack.c.h.b16 %v4854
    %v6649 = vunpack.c.l.b16 %v4855
    %v6650 = vunpack.c.h.b16 %v4855
    %v6651 = vunpack.c.l.b16 %v4856
    %v6652 = vunpack.c.h.b16 %v4856
    %v6653 = vunpack.c.l.b16 %v4857
    %v6654 = vunpack.c.h.b16 %v4857
    %v6655 = vunpack.c.l.b16 %v4858
    %v6656 = vunpack.c.h.b16 %v4858
    %v6657 = vunpack.c.l.b16 %v4859
    %v6658 = vunpack.c.h.b16 %v4859
    %v6659 = vunpack.c.l.b16 %v4860
    %v6660 = vunpack.c.h.b16 %v4860
    %v6661 = vunpack.c.l.b16 %v4861
    %v6662 = vunpack.c.h.b16 %v4861
    %v6663 = vunpack.c.l.b16 %v4862
    %v6664 = vunpack.c.h.b16 %v4862
    %v6665 = vunpack.c.l.b16 %v4863
    %v6666 = vunpack.c.h.b16 %v4863
    %v6667 = vunpack.c.l.b16 %v4864
    %v6668 = vunpack.c.h.b16 %v4864
    %v6669 = vunpack.c.l.b16 %v4865
    %v6670 = vunpack.c.h.b16 %v4865
    %v6671 = vunpack.c.l.b16 %v4866
    %v6672 = vunpack.c.h.b16 %v4866
    %v6673 = vunpack.c.l.b16 %v4867
    %v6674 = vunpack.c.h.b16 %v4867
    %v6675 = vunpack.c.l.b16 %v4868
    %v6676 = vunpack.c.h.b16 %v4868
    %v6677 = vunpack.c.l.b16 %v4869
    %v6678 = vunpack.c.h.b16 %v4869
    %v6679 = vunpack.c.l.b16 %v4870
    %v6680 = vunpack.c.h.b16 %v4870
    %v6681 = vunpack.c.l.b16 %v4871
    %v6682 = vunpack.c.h.b16 %v4871
    %v6683 = vunpack.c.l.b16 %v4872
    %v6684 = vunpack.c.h.b16 %v4872
    %v6685 = vunpack.c.l.b16 %v4873
    %v6686 = vunpack.c.h.b16 %v4873
    %v6687 = vunpack.c.l.b16 %v4874
    %v6688 = vunpack.c.h.b16 %v4874
    %v6689 = vunpack.c.l.b16 %v4875
    %v6690 = vunpack.c.h.b16 %v4875
    %v6691 = vunpack.c.l.b16 %v4876
    %v6692 = vunpack.c.h.b16 %v4876
    %v6693 = vunpack.c.l.b16 %v4877
    %v6694 = vunpack.c.h.b16 %v4877
    %v6695 = vunpack.c.l.b16 %v4878
    %v6696 = vunpack.c.h.b16 %v4878
    %v6697 = vunpack.c.l.b16 %v4879
    %v6698 = vunpack.c.h.b16 %v4879
    %v6699 = vunpack.c.l.b16 %v4880
    %v6700 = vunpack.c.h.b16 %v4880
    %v6701 = vunpack.c.l.b16 %v4881
    %v6702 = vunpack.c.h.b16 %v4881
    %v6703 = vunpack.c.l.b16 %v4882
    %v6704 = vunpack.c.h.b16 %v4882
    %v6705 = vunpack.c.l.b16 %v4883
    %v6706 = vunpack.c.h.b16 %v4883
    %v6707 = vunpack.c.l.b16 %v4884
    %v6708 = vunpack.c.h.b16 %v4884
    %v6709 = vunpack.c.l.b16 %v4885
    %v6710 = vunpack.c.h.b16 %v4885
    %v6711 = vunpack.c.l.b16 %v4886
    %v6712 = vunpack.c.h.b16 %v4886
    %v6713 = vunpack.c.l.b16 %v4887
    %v6714 = vunpack.c.h.b16 %v4887
    %v6715 = vunpack.c.l.b16 %v4888
    %v6716 = vunpack.c.h.b16 %v4888
    %v6717 = vunpack.c.l.b16 %v4889
    %v6718 = vunpack.c.h.b16 %v4889
    %v6719 = vunpack.c.l.b16 %v4890
    %v6720 = vunpack.c.h.b16 %v4890
    %v6721 = vunpack.c.l.b16 %v4891
    %v6722 = vunpack.c.h.b16 %v4891
    %v6723 = vunpack.c.l.b16 %v4892
    %v6724 = vunpack.c.h.b16 %v4892
    %v6725 = vunpack.c.l.b16 %v4893
    %v6726 = vunpack.c.h.b16 %v4893
    %v6727 = vunpack.c.l.b16 %v4894
    %v6728 = vunpack.c.h.b16 %v4894
    %v6729 = vunpack.c.l.b16 %v4895
    %v6730 = vunpack.c.h.b16 %v4895
    %v6731 = vunpack.c.l.b16 %v4896
    %v6732 = vunpack.c.h.b16 %v4896
    %v6733 = vunpack.c.l.b16 %v4897
    %v6734 = vunpack.c.h.b16 %v4897
    %v6735 = vunpack.c.l.b16 %v4898
    %v6736 = vunpack.c.h.b16 %v4898
    %v6737 = vunpack.c.l.b16 %v4899
    %v6738 = vunpack.c.h.b16 %v4899
    %v6739 = vunpack.c.l.b16 %v4900
    %v6740 = vunpack.c.h.b16 %v4900
    %v6741 = vunpack.c.l.b16 %v4901
    %v6742 = vunpack.c.h.b16 %v4901
    %v6743 = vunpack.c.l.b16 %v4902
    %v6744 = vunpack.c.h.b16 %v4902
    %v6745 = vunpack.c.l.b16 %v4903
    %v6746 = vunpack.c.h.b16 %v4903
    %v6747 = vunpack.c.l.b16 %v4904
    %v6748 = vunpack.c.h.b16 %v4904
    %v6749 = vunpack.c.l.b16 %v4905
    %v6750 = vunpack.c.h.b16 %v4905
    %v6751 = vunpack.c.l.b16 %v4906
    %v6752 = vunpack.c.h.b16 %v4906
    %v6753 = vunpack.c.l.b16 %v4907
    %v6754 = vunpack.c.h.b16 %v4907
    %v6755 = vunpack.c.l.b16 %v4908
    %v6756 = vunpack.c.h.b16 %v4908
    %v6757 = vunpack.c.l.b16 %v4909
    %v6758 = vunpack.c.h.b16 %v4909
    %v6759 = vunpack.c.l.b16 %v4910
    %v6760 = vunpack.c.h.b16 %v4910
    %v6761 = vunpack.c.l.b16 %v4911
    %v6762 = vunpack.c.h.b16 %v4911
    %v6763 = vunpack.c.l.b16 %v4912
    %v6764 = vunpack.c.h.b16 %v4912
    %v6765 = vunpack.c.l.b16 %v4913
    %v6766 = vunpack.c.h.b16 %v4913
    %v6767 = vunpack.c.l.b16 %v4914
    %v6768 = vunpack.c.h.b16 %v4914
    %v6769 = vunpack.c.l.b16 %v4915
    %v6770 = vunpack.c.h.b16 %v4915
    %v6771 = vunpack.c.l.b16 %v4916
    %v6772 = vunpack.c.h.b16 %v4916
    %v6773 = vunpack.c.l.b16 %v4917
    %v6774 = vunpack.c.h.b16 %v4917
    %v6775 = vunpack.c.l.b16 %v4918
    %v6776 = vunpack.c.h.b16 %v4918
    %v6777 = vunpack.c.l.b16 %v4919
    %v6778 = vunpack.c.h.b16 %v4919
    %v6779 = vunpack.c.l.b16 %v4920
    %v6780 = vunpack.c.h.b16 %v4920
    %v6781 = vunpack.c.l.b16 %v4921
    %v6782 = vunpack.c.h.b16 %v4921
    %v6783 = vunpack.c.l.b16 %v4922
    %v6784 = vunpack.c.h.b16 %v4922
    %v6785 = vunpack.c.l.b16 %v4923
    %v6786 = vunpack.c.h.b16 %v4923
    %v6787 = vunpack.c.l.b16 %v4924
    %v6788 = vunpack.c.h.b16 %v4924
    %v6789 = vunpack.c.l.b16 %v4925
    %v6790 = vunpack.c.h.b16 %v4925
    %v6791 = vunpack.c.l.b16 %v4926
    %v6792 = vunpack.c.h.b16 %v4926
    %v6793 = vunpack.c.l.b16 %v4927
    %v6794 = vunpack.c.h.b16 %v4927
    %v6795 = vunpack.c.l.b16 %v4928
    %v6796 = vunpack.c.h.b16 %v4928
    %v6797 = vunpack.c.l.b16 %v4929
    %v6798 = vunpack.c.h.b16 %v4929
    %v6799 = vunpack.c.l.b16 %v4930
    %v6800 = vunpack.c.h.b16 %v4930
    %v6801 = vunpack.c.l.b16 %v4931
    %v6802 = vunpack.c.h.b16 %v4931
    %v6803 = vunpack.c.l.b16 %v4932
    %v6804 = vunpack.c.h.b16 %v4932
    %v6805 = vunpack.c.l.b16 %v4933
    %v6806 = vunpack.c.h.b16 %v4933
    %v6807 = vunpack.c.l.b16 %v4934
    %v6808 = vunpack.c.h.b16 %v4934
    %v6809 = vunpack.c.l.b16 %v4935
    %v6810 = vunpack.c.h.b16 %v4935
    %v6811 = vunpack.c.l.b16 %v4936
    %v6812 = vunpack.c.h.b16 %v4936
    %v6813 = vunpack.c.l.b16 %v4937
    %v6814 = vunpack.c.h.b16 %v4937
    %v6815 = vunpack.c.l.b16 %v4938
    %v6816 = vunpack.c.h.b16 %v4938
    %v6817 = vunpack.c.l.b16 %v4939
    %v6818 = vunpack.c.h.b16 %v4939
    %v6819 = vunpack.c.l.b16 %v4940
    %v6820 = vunpack.c.h.b16 %v4940
    %v6821 = vunpack.c.l.b16 %v4941
    %v6822 = vunpack.c.h.b16 %v4941
    %v6823 = vunpack.c.l.b16 %v4942
    %v6824 = vunpack.c.h.b16 %v4942
    %v6825 = vunpack.c.l.b16 %v4943
    %v6826 = vunpack.c.h.b16 %v4943
    %v6827 = vunpack.c.l.b16 %v4944
    %v6828 = vunpack.c.h.b16 %v4944
    %v6829 = vunpack.c.l.b16 %v4945
    %v6830 = vunpack.c.h.b16 %v4945
    %v6831 = vunpack.c.l.b16 %v4946
    %v6832 = vunpack.c.h.b16 %v4946
    %v6833 = vunpack.c.l.b16 %v4947
    %v6834 = vunpack.c.h.b16 %v4947
    %v6835 = vunpack.c.l.b16 %v4948
    %v6836 = vunpack.c.h.b16 %v4948
    %v6837 = vunpack.c.l.b16 %v4949
    %v6838 = vunpack.c.h.b16 %v4949
    %v6839 = vunpack.c.l.b16 %v4950
    %v6840 = vunpack.c.h.b16 %v4950
    %v6841 = vunpack.c.l.b16 %v4951
    %v6842 = vunpack.c.h.b16 %v4951
    %v6843 = vunpack.c.l.b16 %v4952
    %v6844 = vunpack.c.h.b16 %v4952
    %v6845 = vunpack.c.l.b16 %v4953
    %v6846 = vunpack.c.h.b16 %v4953
    %v6847 = vunpack.c.l.b16 %v4954
    %v6848 = vunpack.c.h.b16 %v4954
    %v6849 = vunpack.c.l.b16 %v4955
    %v6850 = vunpack.c.h.b16 %v4955
    %v6851 = vunpack.c.l.b16 %v4956
    %v6852 = vunpack.c.h.b16 %v4956
    %v6853 = vunpack.c.l.b16 %v4957
    %v6854 = vunpack.c.h.b16 %v4957
    %v6855 = vunpack.c.l.b16 %v4958
    %v6856 = vunpack.c.h.b16 %v4958
    %v6857 = vunpack.c.l.b16 %v4959
    %v6858 = vunpack.c.h.b16 %v4959
    %v6859 = vunpack.c.l.b16 %v4960
    %v6860 = vunpack.c.h.b16 %v4960
    %v6861 = vunpack.c.l.b16 %v4961
    %v6862 = vunpack.c.h.b16 %v4961
    %v6863 = vunpack.c.l.b16 %v4962
    %v6864 = vunpack.c.h.b16 %v4962
    %v6865 = vunpack.c.l.b16 %v4963
    %v6866 = vunpack.c.h.b16 %v4963
    %v6867 = vunpack.c.l.b16 %v4964
    %v6868 = vunpack.c.h.b16 %v4964
    %v6869 = vunpack.c.l.b16 %v4965
    %v6870 = vunpack.c.h.b16 %v4965
    %v6871 = vunpack.c.l.b16 %v4966
    %v6872 = vunpack.c.h.b16 %v4966
    %v6873 = vunpack.c.l.b16 %v4967
    %v6874 = vunpack.c.h.b16 %v4967
    %v6875 = vunpack.c.l.b16 %v4968
    %v6876 = vunpack.c.h.b16 %v4968
    %v6877 = vunpack.c.l.b16 %v4969
    %v6878 = vunpack.c.h.b16 %v4969
    %v6879 = vunpack.c.l.b16 %v4970
    %v6880 = vunpack.c.h.b16 %v4970
    %v6881 = vunpack.c.l.b16 %v4971
    %v6882 = vunpack.c.h.b16 %v4971
    %v6883 = vunpack.c.l.b16 %v4972
    %v6884 = vunpack.c.h.b16 %v4972
    %v6885 = vunpack.c.l.b16 %v4973
    %v6886 = vunpack.c.h.b16 %v4973
    %v6887 = vunpack.c.l.b16 %v4974
    %v6888 = vunpack.c.h.b16 %v4974
    %v6889 = vunpack.c.l.b16 %v4975
    %v6890 = vunpack.c.h.b16 %v4975
    %v6891 = vunpack.c.l.b16 %v4976
    %v6892 = vunpack.c.h.b16 %v4976
    %v6893 = vunpack.c.l.b16 %v4977
    %v6894 = vunpack.c.h.b16 %v4977
    %v6895 = vunpack.c.l.b16 %v4978
    %v6896 = vunpack.c.h.b16 %v4978
    %v6897 = vunpack.c.l.b16 %v4979
    %v6898 = vunpack.c.h.b16 %v4979
    %v6899 = vunpack.c.l.b16 %v4980
    %v6900 = vunpack.c.h.b16 %v4980
    %v6901 = vunpack.c.l.b16 %v4981
    %v6902 = vunpack.c.h.b16 %v4981
    %v6903 = vunpack.c.l.b16 %v4982
    %v6904 = vunpack.c.h.b16 %v4982
    %v6905 = vunpack.c.l.b16 %v4983
    %v6906 = vunpack.c.h.b16 %v4983
    %v6907 = vunpack.c.l.b16 %v4984
    %v6908 = vunpack.c.h.b16 %v4984
    %v6909 = vunpack.c.l.b16 %v4985
    %v6910 = vunpack.c.h.b16 %v4985
    %v6911 = vunpack.c.l.b16 %v4986
    %v6912 = vunpack.c.h.b16 %v4986
    %v6913 = vunpack.c.l.b16 %v4987
    %v6914 = vunpack.c.h.b16 %v4987
    %v6915 = vunpack.c.l.b16 %v4988
    %v6916 = vunpack.c.h.b16 %v4988
    %v6917 = vunpack.c.l.b16 %v4989
    %v6918 = vunpack.c.h.b16 %v4989
    %v6919 = vunpack.c.l.b16 %v4990
    %v6920 = vunpack.c.h.b16 %v4990
    %v6921 = vunpack.c.l.b16 %v4991
    %v6922 = vunpack.c.h.b16 %v4991
    %v6923 = vunpack.c.l.b16 %v4992
    %v6924 = vunpack.c.h.b16 %v4992
    %v6925 = vunpack.c.l.b16 %v4993
    %v6926 = vunpack.c.h.b16 %v4993
    %v6927 = vunpack.c.l.b16 %v4994
    %v6928 = vunpack.c.h.b16 %v4994
    %v6929 = vunpack.c.l.b16 %v4995
    %v6930 = vunpack.c.h.b16 %v4995
    %v6931 = vunpack.c.l.b16 %v4996
    %v6932 = vunpack.c.h.b16 %v4996
    %v6933 = vunpack.c.l.b16 %v4997
    %v6934 = vunpack.c.h.b16 %v4997
    %v6935 = vunpack.c.l.b16 %v4998
    %v6936 = vunpack.c.h.b16 %v4998
    %v6937 = vunpack.c.l.b16 %v4999
    %v6938 = vunpack.c.h.b16 %v4999
    %v6939 = vunpack.c.l.b16 %v5000
    %v6940 = vunpack.c.h.b16 %v5000
    %v6941 = vunpack.c.l.b16 %v5001
    %v6942 = vunpack.c.h.b16 %v5001
    %v6943 = vunpack.c.l.b16 %v5002
    %v6944 = vunpack.c.h.b16 %v5002
    %v6945 = vunpack.c.l.b16 %v5003
    %v6946 = vunpack.c.h.b16 %v5003
    %v6947 = vunpack.c.l.b16 %v5004
    %v6948 = vunpack.c.h.b16 %v5004
    %v6949 = vunpack.c.l.b16 %v5005
    %v6950 = vunpack.c.h.b16 %v5005
    %v6951 = vunpack.c.l.b16 %v5006
    %v6952 = vunpack.c.h.b16 %v5006
    %v6953 = vunpack.c.l.b16 %v5007
    %v6954 = vunpack.c.h.b16 %v5007
    %v6955 = vunpack.c.l.b16 %v5008
    %v6956 = vunpack.c.h.b16 %v5008
    %v6957 = vunpack.c.l.b16 %v5009
    %v6958 = vunpack.c.h.b16 %v5009
    %v6959 = vunpack.c.l.b16 %v5010
    %v6960 = vunpack.c.h.b16 %v5010
    %v6961 = vunpack.c.l.b16 %v5011
    %v6962 = vunpack.c.h.b16 %v5011
    %v6963 = vunpack.c.l.b16 %v5012
    %v6964 = vunpack.c.h.b16 %v5012
    %v6965 = vunpack.c.l.b16 %v5013
    %v6966 = vunpack.c.h.b16 %v5013
    %v6967 = vunpack.c.l.b16 %v5014
    %v6968 = vunpack.c.h.b16 %v5014
    %v6969 = vunpack.c.l.b16 %v5015
    %v6970 = vunpack.c.h.b16 %v5015
    %v6971 = vunpack.c.l.b16 %v5016
    %v6972 = vunpack.c.h.b16 %v5016
    %v6973 = vunpack.c.l.b16 %v5017
    %v6974 = vunpack.c.h.b16 %v5017
    %v6975 = vunpack.c.l.b16 %v5018
    %v6976 = vunpack.c.h.b16 %v5018
    %v6977 = vunpack.c.l.b16 %v5019
    %v6978 = vunpack.c.h.b16 %v5019
    %v6979 = vunpack.c.l.b16 %v5020
    %v6980 = vunpack.c.h.b16 %v5020
    %v6981 = vunpack.c.l.b16 %v5021
    %v6982 = vunpack.c.h.b16 %v5021
    %v6983 = vunpack.c.l.b16 %v5022
    %v6984 = vunpack.c.h.b16 %v5022
    %v6985 = vunpack.c.l.b16 %v5023
    %v6986 = vunpack.c.h.b16 %v5023
    %v6987 = vunpack.c.l.b16 %v5024
    %v6988 = vunpack.c.h.b16 %v5024
    %v6989 = vunpack.c.l.b16 %v5025
    %v6990 = vunpack.c.h.b16 %v5025
    %v6991 = vunpack.c.l.b16 %v5026
    %v6992 = vunpack.c.h.b16 %v5026
    %v6993 = vunpack.c.l.b16 %v5027
    %v6994 = vunpack.c.h.b16 %v5027
    %v6995 = vunpack.c.l.b16 %v5028
    %v6996 = vunpack.c.h.b16 %v5028
    %v6997 = vunpack.c.l.b16 %v5029
    %v6998 = vunpack.c.h.b16 %v5029
    %v6999 = vunpack.c.l.b16 %v5030
    %v7000 = vunpack.c.h.b16 %v5030
    %v7001 = vunpack.c.l.b16 %v5031
    %v7002 = vunpack.c.h.b16 %v5031
    %v7003 = vunpack.c.l.b16 %v5032
    %v7004 = vunpack.c.h.b16 %v5032
    %v7005 = vunpack.c.l.b16 %v5033
    %v7006 = vunpack.c.h.b16 %v5033
    %v7007 = vunpack.c.l.b16 %v5034
    %v7008 = vunpack.c.h.b16 %v5034
    %v7009 = vunpack.c.l.b16 %v5035
    %v7010 = vunpack.c.h.b16 %v5035
    %v7011 = vunpack.c.l.b16 %v5036
    %v7012 = vunpack.c.h.b16 %v5036
    %v7013 = vunpack.c.l.b16 %v5037
    %v7014 = vunpack.c.h.b16 %v5037
    %v7015 = vunpack.c.l.b16 %v5038
    %v7016 = vunpack.c.h.b16 %v5038
    %v7017 = vunpack.c.l.b16 %v5039
    %v7018 = vunpack.c.h.b16 %v5039
    %v7019 = vunpack.c.l.b16 %v5040
    %v7020 = vunpack.c.h.b16 %v5040
    %v7021 = vunpack.c.l.b16 %v5041
    %v7022 = vunpack.c.h.b16 %v5041
    %v7023 = vunpack.c.l.b16 %v5042
    %v7024 = vunpack.c.h.b16 %v5042
    %v7025 = vunpack.c.l.b16 %v5043
    %v7026 = vunpack.c.h.b16 %v5043
    %v7027 = vunpack.c.l.b16 %v5044
    %v7028 = vunpack.c.h.b16 %v5044
    %v7029 = vunpack.c.l.b16 %v5045
    %v7030 = vunpack.c.h.b16 %v5045
    %v7031 = vunpack.c.l.b16 %v5046
    %v7032 = vunpack.c.h.b16 %v5046
    %v7033 = vunpack.c.l.b16 %v5047
    %v7034 = vunpack.c.h.b16 %v5047
    %v7035 = vunpack.c.l.b16 %v5048
    %v7036 = vunpack.c.h.b16 %v5048
    %v7037 = vunpack.c.l.b16 %v5049
    %v7038 = vunpack.c.h.b16 %v5049
    %v7039 = vunpack.c.l.b16 %v5050
    %v7040 = vunpack.c.h.b16 %v5050
    %v7041 = vunpack.c.l.b16 %v5051
    %v7042 = vunpack.c.h.b16 %v5051
    %v7043 = vunpack.c.l.b16 %v5052
    %v7044 = vunpack.c.h.b16 %v5052
    %v7045 = vunpack.c.l.b16 %v5053
    %v7046 = vunpack.c.h.b16 %v5053
    %v7047 = vunpack.c.l.b16 %v5054
    %v7048 = vunpack.c.h.b16 %v5054
    %v7049 = vunpack.c.l.b16 %v5055
    %v7050 = vunpack.c.h.b16 %v5055
    %v7051 = vunpack.c.l.b16 %v5056
    %v7052 = vunpack.c.h.b16 %v5056
    %v7053 = vunpack.c.l.b16 %v5057
    %v7054 = vunpack.c.h.b16 %v5057
    %v7055 = vunpack.c.l.b16 %v5058
    %v7056 = vunpack.c.h.b16 %v5058
    %v7057 = vunpack.c.l.b16 %v5059
    %v7058 = vunpack.c.h.b16 %v5059
    %v7059 = vunpack.c.l.b16 %v5060
    %v7060 = vunpack.c.h.b16 %v5060
    %v7061 = vunpack.c.l.b16 %v5061
    %v7062 = vunpack.c.h.b16 %v5061
    %v7063 = vunpack.c.l.b16 %v5062
    %v7064 = vunpack.c.h.b16 %v5062
    %v7065 = vunpack.c.l.b16 %v5063
    %v7066 = vunpack.c.h.b16 %v5063
    %v7067 = vunpack.c.l.b16 %v5064
    %v7068 = vunpack.c.h.b16 %v5064
    %v7069 = vunpack.c.l.b16 %v5065
    %v7070 = vunpack.c.h.b16 %v5065
    %v7071 = vunpack.c.l.b16 %v5066
    %v7072 = vunpack.c.h.b16 %v5066
    %v7073 = vunpack.c.l.b16 %v5067
    %v7074 = vunpack.c.h.b16 %v5067
    %v7075 = vunpack.c.l.b16 %v5068
    %v7076 = vunpack.c.h.b16 %v5068
    %v7077 = vunpack.c.l.b16 %v5069
    %v7078 = vunpack.c.h.b16 %v5069
    %v7079 = vunpack.c.l.b16 %v5070
    %v7080 = vunpack.c.h.b16 %v5070
    %v7081 = vunpack.c.l.b16 %v5071
    %v7082 = vunpack.c.h.b16 %v5071
    %v7083 = vunpack.c.l.b16 %v5072
    %v7084 = vunpack.c.h.b16 %v5072
    %v7085 = vunpack.c.l.b16 %v5073
    %v7086 = vunpack.c.h.b16 %v5073
    %v7087 = vunpack.c.l.b16 %v5074
    %v7088 = vunpack.c.h.b16 %v5074
    %v7089 = vunpack.c.l.b16 %v5075
    %v7090 = vunpack.c.h.b16 %v5075
    %v7091 = vunpack.c.l.b16 %v5076
    %v7092 = vunpack.c.h.b16 %v5076
    %v7093 = vunpack.c.l.b16 %v5077
    %v7094 = vunpack.c.h.b16 %v5077
    %v7095 = vunpack.c.l.b16 %v5078
    %v7096 = vunpack.c.h.b16 %v5078
    %v7097 = vunpack.c.l.b16 %v5079
    %v7098 = vunpack.c.h.b16 %v5079
    %v7099 = vunpack.c.l.b16 %v5080
    %v7100 = vunpack.c.h.b16 %v5080
    %v7101 = vunpack.c.l.b16 %v5081
    %v7102 = vunpack.c.h.b16 %v5081
    %v7103 = vunpack.c.l.b16 %v5082
    %v7104 = vunpack.c.h.b16 %v5082
    %v7105 = vunpack.c.l.b16 %v5083
    %v7106 = vunpack.c.h.b16 %v5083
    %v7107 = vunpack.c.l.b16 %v5084
    %v7108 = vunpack.c.h.b16 %v5084
    %v7109 = vunpack.c.l.b16 %v5085
    %v7110 = vunpack.c.h.b16 %v5085
    %v7111 = vunpack.c.l.b16 %v5086
    %v7112 = vunpack.c.h.b16 %v5086
    %v7113 = vunpack.c.l.b16 %v5087
    %v7114 = vunpack.c.h.b16 %v5087
    %v7115 = vunpack.c.l.b16 %v5088
    %v7116 = vunpack.c.h.b16 %v5088
    %v7117 = vunpack.c.l.b16 %v5089
    %v7118 = vunpack.c.h.b16 %v5089
    %v7119 = vunpack.c.l.b16 %v5090
    %v7120 = vunpack.c.h.b16 %v5090
    %v7121 = vunpack.c.l.b16 %v5091
    %v7122 = vunpack.c.h.b16 %v5091
    %v7123 = vunpack.c.l.b16 %v5092
    %v7124 = vunpack.c.h.b16 %v5092
    %v7125 = vunpack.c.l.b16 %v5093
    %v7126 = vunpack.c.h.b16 %v5093
    %v7127 = vunpack.c.l.b16 %v5094
    %v7128 = vunpack.c.h.b16 %v5094
    %v7129 = vunpack.c.l.b16 %v5095
    %v7130 = vunpack.c.h.b16 %v5095
    %v7131 = vunpack.c.l.b16 %v5096
    %v7132 = vunpack.c.h.b16 %v5096
    %v7133 = vunpack.c.l.b16 %v5097
    %v7134 = vunpack.c.h.b16 %v5097
    %v7135 = vunpack.c.l.b16 %v5098
    %v7136 = vunpack.c.h.b16 %v5098
    %v7137 = vunpack.c.l.b16 %v5099
    %v7138 = vunpack.c.h.b16 %v5099
    %v7139 = vunpack.c.l.b16 %v5100
    %v7140 = vunpack.c.h.b16 %v5100
    %v7141 = vunpack.c.l.b16 %v5101
    %v7142 = vunpack.c.h.b16 %v5101
    %v7143 = vunpack.c.l.b16 %v5102
    %v7144 = vunpack.c.h.b16 %v5102
    %v7145 = vunpack.c.l.b16 %v5103
    %v7146 = vunpack.c.h.b16 %v5103
    %v7147 = vunpack.c.l.b16 %v5104
    %v7148 = vunpack.c.h.b16 %v5104
    %v7149 = vunpack.c.l.b16 %v5105
    %v7150 = vunpack.c.h.b16 %v5105
    %v7151 = vunpack.c.l.b16 %v5106
    %v7152 = vunpack.c.h.b16 %v5106
    %v7153 = vunpack.c.l.b16 %v5107
    %v7154 = vunpack.c.h.b16 %v5107
    %v7155 = vunpack.c.l.b16 %v5108
    %v7156 = vunpack.c.h.b16 %v5108
    %v7157 = vunpack.c.l.b16 %v5109
    %v7158 = vunpack.c.h.b16 %v5109
    %v7159 = vunpack.c.l.b16 %v5110
    %v7160 = vunpack.c.h.b16 %v5110
    %v7161 = vunpack.c.l.b16 %v5111
    %v7162 = vunpack.c.h.b16 %v5111
    %v7163 = vunpack.c.l.b16 %v5112
    %v7164 = vunpack.c.h.b16 %v5112
    %v7165 = vunpack.c.l.b16 %v5113
    %v7166 = vunpack.c.h.b16 %v5113
    %v7167 = vunpack.c.l.b16 %v5114
    %v7168 = vunpack.c.h.b16 %v5114
    %v7169 = vunpack.c.l.b16 %v5115
    %v7170 = vunpack.c.h.b16 %v5115
    %v7171 = vunpack.c.l.b16 %v5116
    %v7172 = vunpack.c.h.b16 %v5116
    %v7173 = vunpack.c.l.b16 %v5117
    %v7174 = vunpack.c.h.b16 %v5117
    %v7175 = vunpack.c.l.b16 %v5118
    %v7176 = vunpack.c.h.b16 %v5118
    %v7177 = vunpack.c.l.b16 %v5119
    %v7178 = vunpack.c.h.b16 %v5119
    %v7179 = vunpack.c.l.b16 %v5120
    %v7180 = vunpack.c.h.b16 %v5120
    %v7181 = vunpack.c.l.b16 %v5121
    %v7182 = vunpack.c.h.b16 %v5121
    %v7183 = vunpack.c.l.b16 %v5122
    %v7184 = vunpack.c.h.b16 %v5122
    %v7185 = vunpack.c.l.b16 %v5123
    %v7186 = vunpack.c.h.b16 %v5123
    %v7187 = vunpack.c.l.b16 %v5124
    %v7188 = vunpack.c.h.b16 %v5124
    %v7189 = vunpack.c.l.b16 %v5125
    %v7190 = vunpack.c.h.b16 %v5125
    %v7191 = vunpack.c.l.b16 %v5126
    %v7192 = vunpack.c.h.b16 %v5126
    %v7193 = vunpack.c.l.b16 %v5127
    %v7194 = vunpack.c.h.b16 %v5127
    %v7195 = vunpack.c.l.b16 %v5128
    %v7196 = vunpack.c.h.b16 %v5128
    %v7197 = vunpack.c.l.b16 %v5129
    %v7198 = vunpack.c.h.b16 %v5129
    %v7199 = vunpack.c.l.b16 %v5130
    %v7200 = vunpack.c.h.b16 %v5130
    %v7201 = vunpack.c.l.b16 %v5131
    %v7202 = vunpack.c.h.b16 %v5131
    %v7203 = vunpack.c.l.b16 %v5132
    %v7204 = vunpack.c.h.b16 %v5132
    %v7205 = vunpack.c.l.b16 %v5133
    %v7206 = vunpack.c.h.b16 %v5133
    %v7207 = vunpack.c.l.b16 %v5134
    %v7208 = vunpack.c.h.b16 %v5134
    %v7209 = vunpack.c.l.b16 %v5135
    %v7210 = vunpack.c.h.b16 %v5135
    %v7211 = vunpack.c.l.b16 %v5136
    %v7212 = vunpack.c.h.b16 %v5136
    %v7213 = vunpack.c.l.b16 %v5137
    %v7214 = vunpack.c.h.b16 %v5137
    %v7215 = vunpack.c.l.b16 %v5138
    %v7216 = vunpack.c.h.b16 %v5138
    %v7217 = vunpack.c.l.b16 %v5139
    %v7218 = vunpack.c.h.b16 %v5139
    %v7219 = vunpack.c.l.b16 %v5140
    %v7220 = vunpack.c.h.b16 %v5140
    %v7221 = vunpack.c.l.b16 %v5141
    %v7222 = vunpack.c.h.b16 %v5141
    %v7223 = vunpack.c.l.b16 %v5142
    %v7224 = vunpack.c.h.b16 %v5142
    %v7225 = vunpack.c.l.b16 %v5143
    %v7226 = vunpack.c.h.b16 %v5143
    %v7227 = vunpack.c.l.b16 %v5144
    %v7228 = vunpack.c.h.b16 %v5144
    %v7229 = vunpack.c.l.b16 %v5145
    %v7230 = vunpack.c.h.b16 %v5145
    %v7231 = vunpack.c.l.b16 %v5146
    %v7232 = vunpack.c.h.b16 %v5146
    %v7233 = vunpack.c.l.b16 %v5147
    %v7234 = vunpack.c.h.b16 %v5147
    %v7235 = vunpack.c.l.b16 %v5148
    %v7236 = vunpack.c.h.b16 %v5148
    %v7237 = vunpack.c.l.b16 %v5149
    %v7238 = vunpack.c.h.b16 %v5149
    %v7239 = vunpack.c.l.b16 %v5150
    %v7240 = vunpack.c.h.b16 %v5150
    %v7241 = vunpack.c.l.b16 %v5151
    %v7242 = vunpack.c.h.b16 %v5151
    %v7243 = vunpack.c.l.b16 %v5152
    %v7244 = vunpack.c.h.b16 %v5152
    %v7245 = vunpack.c.l.b16 %v5153
    %v7246 = vunpack.c.h.b16 %v5153
    %v7247 = vunpack.c.l.b16 %v5154
    %v7248 = vunpack.c.h.b16 %v5154
    %v7249 = vunpack.c.l.b16 %v5155
    %v7250 = vunpack.c.h.b16 %v5155
    %v7251 = vunpack.c.l.b16 %v5156
    %v7252 = vunpack.c.h.b16 %v5156
    %v7253 = vunpack.c.l.b16 %v5157
    %v7254 = vunpack.c.h.b16 %v5157
    %v7255 = vunpack.c.l.b16 %v5158
    %v7256 = vunpack.c.h.b16 %v5158
    %v7257 = vunpack.c.l.b16 %v5159
    %v7258 = vunpack.c.h.b16 %v5159
    %v7259 = vunpack.c.l.b16 %v5160
    %v7260 = vunpack.c.h.b16 %v5160
    %v7261 = vunpack.c.l.b16 %v5161
    %v7262 = vunpack.c.h.b16 %v5161
    %v7263 = vunpack.c.l.b16 %v5162
    %v7264 = vunpack.c.h.b16 %v5162
    %v7265 = vunpack.c.l.b16 %v5163
    %v7266 = vunpack.c.h.b16 %v5163
    %v7267 = vunpack.c.l.b16 %v5164
    %v7268 = vunpack.c.h.b16 %v5164
    %v7269 = vunpack.c.l.b16 %v5165
    %v7270 = vunpack.c.h.b16 %v5165
    %v7271 = vunpack.c.l.b16 %v5166
    %v7272 = vunpack.c.h.b16 %v5166
    %v7273 = vunpack.c.l.b16 %v5167
    %v7274 = vunpack.c.h.b16 %v5167
    %v7275 = vunpack.c.l.b16 %v5168
    %v7276 = vunpack.c.h.b16 %v5168
    %v7277 = vunpack.c.l.b16 %v5169
    %v7278 = vunpack.c.h.b16 %v5169
    %v7279 = vunpack.c.l.b16 %v5170
    %v7280 = vunpack.c.h.b16 %v5170
    %v7281 = vunpack.c.l.b16 %v5171
    %v7282 = vunpack.c.h.b16 %v5171
    %v7283 = vunpack.c.l.b16 %v5172
    %v7284 = vunpack.c.h.b16 %v5172
    %v7285 = vunpack.c.l.b16 %v5173
    %v7286 = vunpack.c.h.b16 %v5173
    %v7287 = vunpack.c.l.b16 %v5174
    %v7288 = vunpack.c.h.b16 %v5174
    %v7289 = vunpack.c.l.b16 %v5175
    %v7290 = vunpack.c.h.b16 %v5175
    %v7291 = vunpack.c.l.b16 %v5176
    %v7292 = vunpack.c.h.b16 %v5176
    %v7293 = vunpack.c.l.b16 %v5177
    %v7294 = vunpack.c.h.b16 %v5177
    %v7295 = vunpack.c.l.b16 %v5178
    %v7296 = vunpack.c.h.b16 %v5178
    %v7297 = vunpack.c.l.b16 %v5179
    %v7298 = vunpack.c.h.b16 %v5179
    %v7299 = vunpack.c.l.b16 %v5180
    %v7300 = vunpack.c.h.b16 %v5180
    %v7301 = vunpack.c.l.b16 %v5181
    %v7302 = vunpack.c.h.b16 %v5181
    %v7303 = vunpack.c.l.b16 %v5182
    %v7304 = vunpack.c.h.b16 %v5182
    %v7305 = vunpack.c.l.b16 %v5183
    %v7306 = vunpack.c.h.b16 %v5183
    %v7307 = vunpack.c.l.b16 %v5184
    %v7308 = vunpack.c.h.b16 %v5184
    %v7309 = vunpack.c.l.b16 %v5185
    %v7310 = vunpack.c.h.b16 %v5185
    %v7311 = vunpack.c.l.b16 %v5186
    %v7312 = vunpack.c.h.b16 %v5186
    %v7313 = vunpack.c.l.b16 %v5187
    %v7314 = vunpack.c.h.b16 %v5187
    %v7315 = vunpack.c.l.b16 %v5188
    %v7316 = vunpack.c.h.b16 %v5188
    %v7317 = vunpack.c.l.b16 %v5189
    %v7318 = vunpack.c.h.b16 %v5189
    %v7319 = vunpack.c.l.b16 %v5190
    %v7320 = vunpack.c.h.b16 %v5190
    %v7321 = vunpack.c.l.b16 %v5191
    %v7322 = vunpack.c.h.b16 %v5191
    %v7323 = vunpack.c.l.b16 %v5192
    %v7324 = vunpack.c.h.b16 %v5192
    %v7325 = vunpack.c.l.b16 %v5193
    %v7326 = vunpack.c.h.b16 %v5193
    %v7327 = vunpack.c.l.b16 %v5194
    %v7328 = vunpack.c.h.b16 %v5194
    %v7329 = vunpack.c.l.b16 %v5195
    %v7330 = vunpack.c.h.b16 %v5195
    %v7331 = vunpack.c.l.b16 %v5196
    %v7332 = vunpack.c.h.b16 %v5196
    %v7333 = vunpack.c.l.b16 %v5197
    %v7334 = vunpack.c.h.b16 %v5197
    %v7335 = vunpack.c.l.b16 %v5198
    %v7336 = vunpack.c.h.b16 %v5198
    %v7337 = vunpack.c.l.b16 %v5199
    %v7338 = vunpack.c.h.b16 %v5199
    %v7339 = vunpack.c.l.b16 %v5200
    %v7340 = vunpack.c.h.b16 %v5200
    %v7341 = vunpack.c.l.b16 %v5201
    %v7342 = vunpack.c.h.b16 %v5201
    %v7343 = vunpack.c.l.b16 %v5202
    %v7344 = vunpack.c.h.b16 %v5202
    %v7345 = vunpack.c.l.b16 %v5203
    %v7346 = vunpack.c.h.b16 %v5203
    %v7347 = vunpack.c.l.b16 %v5204
    %v7348 = vunpack.c.h.b16 %v5204
    %v7349 = vunpack.c.l.b16 %v5205
    %v7350 = vunpack.c.h.b16 %v5205
    %v7351 = vunpack.c.l.b16 %v5206
    %v7352 = vunpack.c.h.b16 %v5206
    %v7353 = vunpack.c.l.b16 %v5207
    %v7354 = vunpack.c.h.b16 %v5207
    %v7355 = vunpack.c.l.b16 %v5208
    %v7356 = vunpack.c.h.b16 %v5208
    %v7357 = vunpack.c.l.b16 %v5209
    %v7358 = vunpack.c.h.b16 %v5209
    %v7359 = vunpack.c.l.b16 %v5210
    %v7360 = vunpack.c.h.b16 %v5210
    %v7361 = vunpack.c.l.b16 %v5211
    %v7362 = vunpack.c.h.b16 %v5211
    %v7363 = vunpack.c.l.b16 %v5212
    %v7364 = vunpack.c.h.b16 %v5212
    %v7365 = vunpack.c.l.b16 %v5213
    %v7366 = vunpack.c.h.b16 %v5213
    %v7367 = vunpack.c.l.b16 %v5214
    %v7368 = vunpack.c.h.b16 %v5214
    %v7369 = vunpack.c.l.b16 %v5215
    %v7370 = vunpack.c.h.b16 %v5215
    %v7371 = vunpack.c.l.b16 %v5216
    %v7372 = vunpack.c.h.b16 %v5216
    %v7373 = vunpack.c.l.b16 %v5217
    %v7374 = vunpack.c.h.b16 %v5217
    %v7375 = vunpack.c.l.b16 %v5218
    %v7376 = vunpack.c.h.b16 %v5218
    %v7377 = vunpack.c.l.b16 %v5219
    %v7378 = vunpack.c.h.b16 %v5219
    %v7379 = vunpack.c.l.b16 %v5220
    %v7380 = vunpack.c.h.b16 %v5220
    %v7381 = vunpack.c.l.b16 %v5221
    %v7382 = vunpack.c.h.b16 %v5221
    %v7383 = vunpack.c.l.b16 %v5222
    %v7384 = vunpack.c.h.b16 %v5222
    %v7385 = vunpack.c.l.b16 %v5223
    %v7386 = vunpack.c.h.b16 %v5223
    %v7387 = vunpack.c.l.b16 %v5224
    %v7388 = vunpack.c.h.b16 %v5224
    %v7389 = vunpack.c.l.b16 %v5225
    %v7390 = vunpack.c.h.b16 %v5225
    %v7391 = vunpack.c.l.b16 %v5226
    %v7392 = vunpack.c.h.b16 %v5226
    %v7393 = vunpack.c.l.b16 %v5227
    %v7394 = vunpack.c.h.b16 %v5227
    %v7395 = vunpack.c.l.b16 %v5228
    %v7396 = vunpack.c.h.b16 %v5228
    %v7397 = vunpack.c.l.b16 %v5229
    %v7398 = vunpack.c.h.b16 %v5229
    %v7399 = vunpack.c.l.b16 %v5230
    %v7400 = vunpack.c.h.b16 %v5230
    %v7401 = vunpack.c.l.b16 %v5231
    %v7402 = vunpack.c.h.b16 %v5231
    %v7403 = vunpack.c.l.b16 %v5232
    %v7404 = vunpack.c.h.b16 %v5232
    %v7405 = vunpack.c.l.b16 %v5233
    %v7406 = vunpack.c.h.b16 %v5233
    %v7407 = vunpack.c.l.b16 %v5234
    %v7408 = vunpack.c.h.b16 %v5234
    %v7409 = vunpack.c.l.b16 %v5235
    %v7410 = vunpack.c.h.b16 %v5235
    %v7411 = vunpack.c.l.b16 %v5236
    %v7412 = vunpack.c.h.b16 %v5236
    %v7413 = vunpack.c.l.b16 %v5237
    %v7414 = vunpack.c.h.b16 %v5237
    %v7415 = vunpack.c.l.b16 %v5238
    %v7416 = vunpack.c.h.b16 %v5238
    %v7417 = vunpack.c.l.b16 %v5239
    %v7418 = vunpack.c.h.b16 %v5239
    %v7419 = vunpack.c.l.b16 %v5240
    %v7420 = vunpack.c.h.b16 %v5240
    %v7421 = vunpack.c.l.b16 %v5241
    %v7422 = vunpack.c.h.b16 %v5241
    %v7423 = vunpack.c.l.b16 %v5242
    %v7424 = vunpack.c.h.b16 %v5242
    %v7425 = vunpack.c.l.b16 %v5243
    %v7426 = vunpack.c.h.b16 %v5243
    %v7427 = vunpack.c.l.b16 %v5244
    %v7428 = vunpack.c.h.b16 %v5244
    %v7429 = vunpack.c.l.b16 %v5245
    %v7430 = vunpack.c.h.b16 %v5245
    %v7431 = vunpack.c.l.b16 %v5246
    %v7432 = vunpack.c.h.b16 %v5246
    %v7433 = vunpack.c.l.b16 %v5247
    %v7434 = vunpack.c.h.b16 %v5247
    %v7435 = vunpack.c.l.b16 %v5248
    %v7436 = vunpack.c.h.b16 %v5248
    %v7437 = vunpack.c.l.b16 %v5249
    %v7438 = vunpack.c.h.b16 %v5249
    %v7439 = vunpack.c.l.b16 %v5250
    %v7440 = vunpack.c.h.b16 %v5250
    %v7441 = vunpack.c.l.b16 %v5251
    %v7442 = vunpack.c.h.b16 %v5251
    %v7443 = vunpack.c.l.b16 %v5252
    %v7444 = vunpack.c.h.b16 %v5252
    %v7445 = vunpack.c.l.b16 %v5253
    %v7446 = vunpack.c.h.b16 %v5253
    %v7447 = vunpack.c.l.b16 %v5254
    %v7448 = vunpack.c.h.b16 %v5254
    %v7449 = vunpack.c.l.b16 %v5255
    %v7450 = vunpack.c.h.b16 %v5255
    %v7451 = vunpack.c.l.b16 %v5256
    %v7452 = vunpack.c.h.b16 %v5256
    %v7453 = vunpack.c.l.b16 %v5257
    %v7454 = vunpack.c.h.b16 %v5257
    %v7455 = vunpack.c.l.b16 %v5258
    %v7456 = vunpack.c.h.b16 %v5258
    %v7457 = vunpack.c.l.b16 %v5259
    %v7458 = vunpack.c.h.b16 %v5259
    %v7459 = vunpack.c.l.b16 %v5260
    %v7460 = vunpack.c.h.b16 %v5260
    %v7461 = vunpack.c.l.b16 %v5261
    %v7462 = vunpack.c.h.b16 %v5261
    %v7463 = vunpack.c.l.b16 %v5262
    %v7464 = vunpack.c.h.b16 %v5262
    %v7465 = vunpack.c.l.b16 %v5263
    %v7466 = vunpack.c.h.b16 %v5263
    %v7467 = vunpack.c.l.b16 %v5264
    %v7468 = vunpack.c.h.b16 %v5264
    %v7469 = vunpack.c.l.b16 %v5265
    %v7470 = vunpack.c.h.b16 %v5265
    %v7471 = vunpack.c.l.b16 %v5266
    %v7472 = vunpack.c.h.b16 %v5266
    %v7473 = vunpack.c.l.b16 %v5267
    %v7474 = vunpack.c.h.b16 %v5267
    %v7475 = vunpack.c.l.b16 %v5268
    %v7476 = vunpack.c.h.b16 %v5268
    %v7477 = vunpack.c.l.b16 %v5269
    %v7478 = vunpack.c.h.b16 %v5269
    %v7479 = vunpack.c.l.b16 %v5270
    %v7480 = vunpack.c.h.b16 %v5270
    %v7481 = vunpack.c.l.b16 %v5271
    %v7482 = vunpack.c.h.b16 %v5271
    %v7483 = vunpack.c.l.b16 %v5272
    %v7484 = vunpack.c.h.b16 %v5272
    %v7485 = vunpack.c.l.b16 %v5273
    %v7486 = vunpack.c.h.b16 %v5273
    %v7487 = vunpack.c.l.b16 %v5274
    %v7488 = vunpack.c.h.b16 %v5274
    %v7489 = vunpack.c.l.b16 %v5275
    %v7490 = vunpack.c.h.b16 %v5275
    %v7491 = vunpack.c.l.b16 %v5276
    %v7492 = vunpack.c.h.b16 %v5276
    %v7493 = vunpack.c.l.b16 %v5277
    %v7494 = vunpack.c.h.b16 %v5277
    %v7495 = vunpack.c.l.b16 %v5278
    %v7496 = vunpack.c.h.b16 %v5278
    %v7497 = vunpack.c.l.b16 %v5279
    %v7498 = vunpack.c.h.b16 %v5279
    %v7499 = vunpack.c.l.b16 %v5280
    %v7500 = vunpack.c.h.b16 %v5280
    %v7501 = vunpack.c.l.b16 %v5281
    %v7502 = vunpack.c.h.b16 %v5281
    %v7503 = vunpack.c.l.b16 %v5282
    %v7504 = vunpack.c.h.b16 %v5282
    %v7505 = vunpack.c.l.b16 %v5283
    %v7506 = vunpack.c.h.b16 %v5283
    %v7507 = vunpack.c.l.b16 %v5284
    %v7508 = vunpack.c.h.b16 %v5284
    %v7509 = vunpack.c.l.b16 %v5285
    %v7510 = vunpack.c.h.b16 %v5285
    %v7511 = vunpack.c.l.b16 %v5286
    %v7512 = vunpack.c.h.b16 %v5286
    %v7513 = vunpack.c.l.b16 %v5287
    %v7514 = vunpack.c.h.b16 %v5287
    %v7515 = vunpack.c.l.b16 %v5288
    %v7516 = vunpack.c.h.b16 %v5288
    %v7517 = vunpack.c.l.b16 %v5289
    %v7518 = vunpack.c.h.b16 %v5289
    %v7519 = vunpack.c.l.b16 %v5290
    %v7520 = vunpack.c.h.b16 %v5290
    %v7521 = vunpack.c.l.b16 %v5291
    %v7522 = vunpack.c.h.b16 %v5291
    %v7523 = vunpack.c.l.b16 %v5292
    %v7524 = vunpack.c.h.b16 %v5292
    %v7525 = vunpack.c.l.b16 %v5293
    %v7526 = vunpack.c.h.b16 %v5293
    %v7527 = vunpack.c.l.b16 %v5294
    %v7528 = vunpack.c.h.b16 %v5294
    %v7529 = vunpack.c.l.b16 %v5295
    %v7530 = vunpack.c.h.b16 %v5295
    %v7531 = vunpack.c.l.b16 %v5296
    %v7532 = vunpack.c.h.b16 %v5296
    %v7533 = vunpack.c.l.b16 %v5297
    %v7534 = vunpack.c.h.b16 %v5297
    %v7535 = vunpack.c.l.b16 %v5298
    %v7536 = vunpack.c.h.b16 %v5298
    %v7537 = vunpack.c.l.b16 %v5299
    %v7538 = vunpack.c.h.b16 %v5299
    %v7539 = vunpack.c.l.b16 %v5300
    %v7540 = vunpack.c.h.b16 %v5300
    %v7541 = vunpack.c.l.b16 %v5301
    %v7542 = vunpack.c.h.b16 %v5301
    %v7543 = vunpack.c.l.b16 %v5302
    %v7544 = vunpack.c.h.b16 %v5302
    %v7545 = vunpack.c.l.b16 %v5303
    %v7546 = vunpack.c.h.b16 %v5303
    %v7547 = vunpack.c.l.b16 %v5304
    %v7548 = vunpack.c.h.b16 %v5304
    %v7549 = vunpack.c.l.b16 %v5305
    %v7550 = vunpack.c.h.b16 %v5305
    %v7551 = vunpack.c.l.b16 %v5306
    %v7552 = vunpack.c.h.b16 %v5306
    %v7553 = vunpack.c.l.b16 %v5307
    %v7554 = vunpack.c.h.b16 %v5307
    %v7555 = vunpack.c.l.b16 %v5308
    %v7556 = vunpack.c.h.b16 %v5308
    %v7557 = vunpack.c.l.b16 %v5309
    %v7558 = vunpack.c.h.b16 %v5309
    %v7559 = vunpack.c.l.b16 %v5310
    %v7560 = vunpack.c.h.b16 %v5310
    %v7561 = vunpack.c.l.b16 %v5311
    %v7562 = vunpack.c.h.b16 %v5311
    %v7563 = vunpack.c.l.b16 %v5312
    %v7564 = vunpack.c.h.b16 %v5312
    %v7565 = vunpack.c.l.b16 %v5313
    %v7566 = vunpack.c.h.b16 %v5313
    %v7567 = vunpack.c.l.b16 %v5314
    %v7568 = vunpack.c.h.b16 %v5314
    %v7569 = vunpack.c.l.b16 %v5315
    %v7570 = vunpack.c.h.b16 %v5315
    %v7571 = vunpack.c.l.b16 %v5316
    %v7572 = vunpack.c.h.b16 %v5316
    %v7573 = vunpack.c.l.b16 %v5317
    %v7574 = vunpack.c.h.b16 %v5317
    %v7575 = vunpack.c.l.b16 %v5318
    %v7576 = vunpack.c.h.b16 %v5318
    %v7577 = vunpack.c.l.b16 %v5319
    %v7578 = vunpack.c.h.b16 %v5319
    %v7579 = vunpack.c.l.b16 %v5320
    %v7580 = vunpack.c.h.b16 %v5320
    %v7581 = vunpack.c.l.b16 %v5321
    %v7582 = vunpack.c.h.b16 %v5321
    %v7583 = vunpack.c.l.b16 %v5322
    %v7584 = vunpack.c.h.b16 %v5322
    %v7585 = vunpack.c.l.b16 %v5323
    %v7586 = vunpack.c.h.b16 %v5323
    %v7587 = vunpack.c.l.b16 %v5324
    %v7588 = vunpack.c.h.b16 %v5324
    %v7589 = vunpack.c.l.b16 %v5325
    %v7590 = vunpack.c.h.b16 %v5325
    %v7591 = vunpack.c.l.b16 %v5326
    %v7592 = vunpack.c.h.b16 %v5326
    %v7593 = vunpack.c.l.b16 %v5327
    %v7594 = vunpack.c.h.b16 %v5327
    %v7595 = vunpack.c.l.b16 %v5328
    %v7596 = vunpack.c.h.b16 %v5328
    %v7597 = vunpack.c.l.b16 %v5329
    %v7598 = vunpack.c.h.b16 %v5329
    %v7599 = vunpack.c.l.b16 %v5330
    %v7600 = vunpack.c.h.b16 %v5330
    %v7601 = vunpack.c.l.b16 %v5331
    %v7602 = vunpack.c.h.b16 %v5331
    %v7603 = vunpack.c.l.b16 %v5332
    %v7604 = vunpack.c.h.b16 %v5332
    %v7605 = vunpack.c.l.b16 %v5333
    %v7606 = vunpack.c.h.b16 %v5333
    %v7607 = vunpack.c.l.b16 %v5334
    %v7608 = vunpack.c.h.b16 %v5334
    %v7609 = vunpack.c.l.b16 %v5335
    %v7610 = vunpack.c.h.b16 %v5335
    %v7611 = vunpack.c.l.b16 %v5336
    %v7612 = vunpack.c.h.b16 %v5336
    %v7613 = vunpack.c.l.b16 %v5337
    %v7614 = vunpack.c.h.b16 %v5337
    %v7615 = vunpack.c.l.b16 %v5338
    %v7616 = vunpack.c.h.b16 %v5338
    %v7617 = vunpack.c.l.b16 %v5339
    %v7618 = vunpack.c.h.b16 %v5339
    %v7619 = vunpack.c.l.b16 %v5340
    %v7620 = vunpack.c.h.b16 %v5340
    %v7621 = vunpack.c.l.b16 %v5341
    %v7622 = vunpack.c.h.b16 %v5341
    %v7623 = vunpack.c.l.b16 %v5342
    %v7624 = vunpack.c.h.b16 %v5342
    %v7625 = vunpack.c.l.b16 %v5343
    %v7626 = vunpack.c.h.b16 %v5343
    %v7627 = vunpack.c.l.b16 %v5344
    %v7628 = vunpack.c.h.b16 %v5344
    %v7629 = vunpack.c.l.b16 %v5345
    %v7630 = vunpack.c.h.b16 %v5345
    %v7631 = vunpack.c.l.b16 %v5346
    %v7632 = vunpack.c.h.b16 %v5346
    %v7633 = vunpack.c.l.b16 %v5347
    %v7634 = vunpack.c.h.b16 %v5347
    %v7635 = vunpack.c.l.b16 %v5348
    %v7636 = vunpack.c.h.b16 %v5348
    %v7637 = vunpack.c.l.b16 %v5349
    %v7638 = vunpack.c.h.b16 %v5349
    %v7639 = vunpack.c.l.b16 %v5350
    %v7640 = vunpack.c.h.b16 %v5350
    %v7641 = vunpack.c.l.b16 %v5351
    %v7642 = vunpack.c.h.b16 %v5351
    %v7643 = vunpack.c.l.b16 %v5352
    %v7644 = vunpack.c.h.b16 %v5352
    %v7645 = vunpack.c.l.b16 %v5353
    %v7646 = vunpack.c.h.b16 %v5353
    %v7647 = vunpack.c.l.b16 %v5354
    %v7648 = vunpack.c.h.b16 %v5354
    %v7649 = vunpack.c.l.b16 %v5355
    %v7650 = vunpack.c.h.b16 %v5355
    %v7651 = vunpack.c.l.b16 %v5356
    %v7652 = vunpack.c.h.b16 %v5356
    %v7653 = vunpack.c.l.b16 %v5357
    %v7654 = vunpack.c.h.b16 %v5357
    %v7655 = vunpack.c.l.b16 %v5358
    %v7656 = vunpack.c.h.b16 %v5358
    %v7657 = vunpack.c.l.b16 %v5359
    %v7658 = vunpack.c.h.b16 %v5359
    %v7659 = vunpack.c.l.b16 %v5360
    %v7660 = vunpack.c.h.b16 %v5360
    %v7661 = vunpack.c.l.b16 %v5361
    %v7662 = vunpack.c.h.b16 %v5361
    %v7663 = vunpack.c.l.b16 %v5362
    %v7664 = vunpack.c.h.b16 %v5362
    %v7665 = vunpack.c.l.b16 %v5363
    %v7666 = vunpack.c.h.b16 %v5363
    %v7667 = vunpack.c.l.b16 %v5364
    %v7668 = vunpack.c.h.b16 %v5364
    %v7669 = vunpack.c.l.b16 %v5365
    %v7670 = vunpack.c.h.b16 %v5365
    %v7671 = vunpack.c.l.b16 %v5366
    %v7672 = vunpack.c.h.b16 %v5366
    %v7673 = vunpack.c.l.b16 %v5367
    %v7674 = vunpack.c.h.b16 %v5367
    %v7675 = vunpack.c.l.b16 %v5368
    %v7676 = vunpack.c.h.b16 %v5368
    %v7677 = vunpack.c.l.b16 %v5369
    %v7678 = vunpack.c.h.b16 %v5369
    %v7679 = vunpack.c.l.b16 %v5370
    %v7680 = vunpack.c.h.b16 %v5370
    %v7681 = vunpack.c.l.b16 %v5371
    %v7682 = vunpack.c.h.b16 %v5371
    %v7683 = vunpack.c.l.b16 %v5372
    %v7684 = vunpack.c.h.b16 %v5372
    %v7685 = vunpack.c.l.b16 %v5373
    %v7686 = vunpack.c.h.b16 %v5373
    %v7687 = vunpack.c.l.b16 %v5374
    %v7688 = vunpack.c.h.b16 %v5374
    %v7689 = vunpack.c.l.b16 %v5375
    %v7690 = vunpack.c.h.b16 %v5375
    %v7691 = vunpack.c.l.b16 %v5376
    %v7692 = vunpack.c.h.b16 %v5376
    %v7693 = vunpack.c.l.b16 %v5377
    %v7694 = vunpack.c.h.b16 %v5377
    %v7695 = vunpack.c.l.b16 %v5378
    %v7696 = vunpack.c.h.b16 %v5378
    %v7697 = vunpack.c.l.b16 %v5379
    %v7698 = vunpack.c.h.b16 %v5379
    %v7699 = vunpack.c.l.b16 %v5380
    %v7700 = vunpack.c.h.b16 %v5380
    %v7701 = vunpack.c.l.b16 %v5381
    %v7702 = vunpack.c.h.b16 %v5381
    %v7703 = vunpack.c.l.b16 %v5382
    %v7704 = vunpack.c.h.b16 %v5382
    %v7705 = vunpack.c.l.b16 %v5383
    %v7706 = vunpack.c.h.b16 %v5383
    %v7707 = vunpack.c.l.b16 %v5384
    %v7708 = vunpack.c.h.b16 %v5384
    %v7709 = vunpack.c.l.b16 %v5385
    %v7710 = vunpack.c.h.b16 %v5385
    %v7711 = vunpack.c.l.b16 %v5386
    %v7712 = vunpack.c.h.b16 %v5386
    %v7713 = vunpack.c.l.b16 %v5387
    %v7714 = vunpack.c.h.b16 %v5387
    %v7715 = vunpack.c.l.b16 %v5388
    %v7716 = vunpack.c.h.b16 %v5388
    %v7717 = vunpack.c.l.b16 %v5389
    %v7718 = vunpack.c.h.b16 %v5389
    %v7719 = vunpack.c.l.b16 %v5390
    %v7720 = vunpack.c.h.b16 %v5390
    %v7721 = vunpack.c.l.b16 %v5391
    %v7722 = vunpack.c.h.b16 %v5391
    %v7723 = vunpack.c.l.b16 %v5392
    %v7724 = vunpack.c.h.b16 %v5392
    %v7725 = vunpack.c.l.b16 %v5393
    %v7726 = vunpack.c.h.b16 %v5393
    %v7727 = vunpack.c.l.b16 %v5394
    %v7728 = vunpack.c.h.b16 %v5394
    %v7729 = vunpack.c.l.b16 %v5395
    %v7730 = vunpack.c.h.b16 %v5395
    %v7731 = vunpack.c.l.b16 %v5396
    %v7732 = vunpack.c.h.b16 %v5396
    %v7733 = vunpack.c.l.b16 %v5397
    %v7734 = vunpack.c.h.b16 %v5397
    %v7735 = vunpack.c.l.b16 %v5398
    %v7736 = vunpack.c.h.b16 %v5398
    %v7737 = vunpack.c.l.b16 %v5399
    %v7738 = vunpack.c.h.b16 %v5399
    %v7739 = vunpack.c.l.b16 %v5400
    %v7740 = vunpack.c.h.b16 %v5400
    %v7741 = vunpack.c.l.b16 %v5401
    %v7742 = vunpack.c.h.b16 %v5401
    %v7743 = vunpack.c.l.b16 %v5402
    %v7744 = vunpack.c.h.b16 %v5402
    %v7745 = vunpack.c.l.b16 %v5403
    %v7746 = vunpack.c.h.b16 %v5403
    %v7747 = vunpack.c.l.b16 %v5404
    %v7748 = vunpack.c.h.b16 %v5404
    %v7749 = vunpack.c.l.b16 %v5405
    %v7750 = vunpack.c.h.b16 %v5405
    %v7751 = vunpack.c.l.b16 %v5406
    %v7752 = vunpack.c.h.b16 %v5406
    %v7753 = vunpack.c.l.b16 %v5407
    %v7754 = vunpack.c.h.b16 %v5407
    %v7755 = vunpack.c.l.b16 %v5408
    %v7756 = vunpack.c.h.b16 %v5408
    %v7757 = vunpack.c.l.b16 %v5409
    %v7758 = vunpack.c.h.b16 %v5409
    %v7759 = vunpack.c.l.b16 %v5410
    %v7760 = vunpack.c.h.b16 %v5410
    %v7761 = vunpack.c.l.b16 %v5411
    %v7762 = vunpack.c.h.b16 %v5411
    %v7763 = vunpack.c.l.b16 %v5412
    %v7764 = vunpack.c.h.b16 %v5412
    %v7765 = vunpack.c.l.b16 %v5413
    %v7766 = vunpack.c.h.b16 %v5413
    %v7767 = vunpack.c.l.b16 %v5414
    %v7768 = vunpack.c.h.b16 %v5414
    %v7769 = vunpack.c.l.b16 %v5415
    %v7770 = vunpack.c.h.b16 %v5415
    %v7771 = vunpack.c.l.b16 %v5416
    %v7772 = vunpack.c.h.b16 %v5416
    %v7773 = vunpack.c.l.b16 %v5417
    %v7774 = vunpack.c.h.b16 %v5417
    %v7775 = vunpack.c.l.b16 %v5418
    %v7776 = vunpack.c.h.b16 %v5418
    %v7777 = vunpack.c.l.b16 %v5419
    %v7778 = vunpack.c.h.b16 %v5419
    %v7779 = vunpack.c.l.b16 %v5420
    %v7780 = vunpack.c.h.b16 %v5420
    %v7781 = vunpack.c.l.b16 %v5421
    %v7782 = vunpack.c.h.b16 %v5421
    %v7783 = vunpack.c.l.b16 %v5422
    %v7784 = vunpack.c.h.b16 %v5422
    %v7785 = vunpack.c.l.b16 %v5423
    %v7786 = vunpack.c.h.b16 %v5423
    %v7787 = vunpack.c.l.b16 %v5424
    %v7788 = vunpack.c.h.b16 %v5424
    %v7789 = vunpack.c.l.b16 %v5425
    %v7790 = vunpack.c.h.b16 %v5425
    %v7791 = vunpack.c.l.b16 %v5426
    %v7792 = vunpack.c.h.b16 %v5426
    %v7793 = vunpack.c.l.b16 %v5427
    %v7794 = vunpack.c.h.b16 %v5427
    %v7795 = vunpack.c.l.b16 %v5428
    %v7796 = vunpack.c.h.b16 %v5428
    %v7797 = vunpack.c.l.b16 %v5429
    %v7798 = vunpack.c.h.b16 %v5429
    %v7799 = vunpack.c.l.b16 %v5430
    %v7800 = vunpack.c.h.b16 %v5430
    %v7801 = vunpack.c.l.b16 %v5431
    %v7802 = vunpack.c.h.b16 %v5431
    %v7803 = vunpack.c.l.b16 %v5432
    %v7804 = vunpack.c.h.b16 %v5432
    %v7805 = vunpack.c.l.b16 %v5433
    %v7806 = vunpack.c.h.b16 %v5433
    %v7807 = vunpack.c.l.b16 %v5434
    %v7808 = vunpack.c.h.b16 %v5434
    %v7809 = vunpack.c.l.b16 %v5435
    %v7810 = vunpack.c.h.b16 %v5435
    %v7811 = vunpack.c.l.b16 %v5436
    %v7812 = vunpack.c.h.b16 %v5436
    %v7813 = vunpack.c.l.b16 %v5437
    %v7814 = vunpack.c.h.b16 %v5437
    %v7815 = vunpack.c.l.b16 %v5438
    %v7816 = vunpack.c.h.b16 %v5438
    %v7817 = vunpack.c.l.b16 %v5439
    %v7818 = vunpack.c.h.b16 %v5439
    %v7819 = vunpack.c.l.b16 %v5440
    %v7820 = vunpack.c.h.b16 %v5440
    %v7821 = vunpack.c.l.b16 %v5441
    %v7822 = vunpack.c.h.b16 %v5441
    %v7823 = vunpack.c.l.b16 %v5442
    %v7824 = vunpack.c.h.b16 %v5442
    %v7825 = vunpack.c.l.b16 %v5443
    %v7826 = vunpack.c.h.b16 %v5443
    %v7827 = vunpack.c.l.b16 %v5444
    %v7828 = vunpack.c.h.b16 %v5444
    %v7829 = vunpack.c.l.b16 %v5445
    %v7830 = vunpack.c.h.b16 %v5445
    %v7831 = vunpack.c.l.b16 %v5446
    %v7832 = vunpack.c.h.b16 %v5446
    %v7833 = vunpack.c.l.b16 %v5447
    %v7834 = vunpack.c.h.b16 %v5447
    %v7835 = vunpack.c.l.b16 %v5448
    %v7836 = vunpack.c.h.b16 %v5448
    %v7837 = vunpack.c.l.b16 %v5449
    %v7838 = vunpack.c.h.b16 %v5449
    %v7839 = vunpack.c.l.b16 %v5450
    %v7840 = vunpack.c.h.b16 %v5450
    %v7841 = vunpack.c.l.b16 %v5451
    %v7842 = vunpack.c.h.b16 %v5451
    %v7843 = vunpack.c.l.b16 %v5452
    %v7844 = vunpack.c.h.b16 %v5452
    %v7845 = vunpack.c.l.b16 %v5453
    %v7846 = vunpack.c.h.b16 %v5453
    %v7847 = vunpack.c.l.b16 %v5454
    %v7848 = vunpack.c.h.b16 %v5454
    %v7849 = vunpack.c.l.b16 %v5455
    %v7850 = vunpack.c.h.b16 %v5455
    %v7851 = vunpack.c.l.b16 %v5456
    %v7852 = vunpack.c.h.b16 %v5456
    %v7853 = vunpack.c.l.b16 %v5457
    %v7854 = vunpack.c.h.b16 %v5457
    %v7855 = vunpack.c.l.b16 %v5458
    %v7856 = vunpack.c.h.b16 %v5458
    %v7857 = vunpack.c.l.b16 %v5459
    %v7858 = vunpack.c.h.b16 %v5459
    %v7859 = vunpack.c.l.b16 %v5460
    %v7860 = vunpack.c.h.b16 %v5460
    %v7861 = vunpack.c.l.b16 %v5461
    %v7862 = vunpack.c.h.b16 %v5461
    %v7863 = vunpack.c.l.b16 %v5462
    %v7864 = vunpack.c.h.b16 %v5462
    %v7865 = vunpack.c.l.b16 %v5463
    %v7866 = vunpack.c.h.b16 %v5463
    %v7867 = vunpack.c.l.b16 %v5464
    %v7868 = vunpack.c.h.b16 %v5464
    %v7869 = vunpack.c.l.b16 %v5465
    %v7870 = vunpack.c.h.b16 %v5465
    %v7871 = vunpack.c.l.b16 %v5466
    %v7872 = vunpack.c.h.b16 %v5466
    %v7873 = vunpack.c.l.b16 %v5467
    %v7874 = vunpack.c.h.b16 %v5467
    %v7875 = vunpack.c.l.b16 %v5468
    %v7876 = vunpack.c.h.b16 %v5468
    %v7877 = vunpack.c.l.b16 %v5469
    %v7878 = vunpack.c.h.b16 %v5469
    %v7879 = vunpack.c.l.b16 %v5470
    %v7880 = vunpack.c.h.b16 %v5470
    %v7881 = vunpack.c.l.b16 %v5471
    %v7882 = vunpack.c.h.b16 %v5471
    %v7883 = vunpack.c.l.b16 %v5472
    %v7884 = vunpack.c.h.b16 %v5472
    %v7885 = vunpack.c.l.b16 %v5473
    %v7886 = vunpack.c.h.b16 %v5473
    %v7887 = vunpack.c.l.b16 %v5474
    %v7888 = vunpack.c.h.b16 %v5474
    %v7889 = vunpack.c.l.b16 %v5475
    %v7890 = vunpack.c.h.b16 %v5475
    %v7891 = vunpack.c.l.b16 %v5476
    %v7892 = vunpack.c.h.b16 %v5476
    %v7893 = vunpack.c.l.b16 %v5477
    %v7894 = vunpack.c.h.b16 %v5477
    %v7895 = vunpack.c.l.b16 %v5478
    %v7896 = vunpack.c.h.b16 %v5478
    %v7897 = vunpack.c.l.b16 %v5479
    %v7898 = vunpack.c.h.b16 %v5479
    %v7899 = vunpack.c.l.b16 %v5480
    %v7900 = vunpack.c.h.b16 %v5480
    %v7901 = vunpack.c.l.b16 %v5481
    %v7902 = vunpack.c.h.b16 %v5481
    %v7903 = vunpack.c.l.b16 %v5482
    %v7904 = vunpack.c.h.b16 %v5482
    %v7905 = vunpack.c.l.b16 %v5483
    %v7906 = vunpack.c.h.b16 %v5483
    %v7907 = vunpack.c.l.b16 %v5484
    %v7908 = vunpack.c.h.b16 %v5484
    %v7909 = vunpack.c.l.b16 %v5485
    %v7910 = vunpack.c.h.b16 %v5485
    %v7911 = vunpack.c.l.b16 %v5486
    %v7912 = vunpack.c.h.b16 %v5486
    %v7913 = vunpack.c.l.b16 %v5487
    %v7914 = vunpack.c.h.b16 %v5487
    %v7915 = vunpack.c.l.b16 %v5488
    %v7916 = vunpack.c.h.b16 %v5488
    %v7917 = vunpack.c.l.b16 %v5489
    %v7918 = vunpack.c.h.b16 %v5489
    %v7919 = vunpack.c.l.b16 %v5490
    %v7920 = vunpack.c.h.b16 %v5490
    %v7921 = vunpack.c.l.b16 %v5491
    %v7922 = vunpack.c.h.b16 %v5491
    %v7923 = vunpack.c.l.b16 %v5492
    %v7924 = vunpack.c.h.b16 %v5492
    %v7925 = vunpack.c.l.b16 %v5493
    %v7926 = vunpack.c.h.b16 %v5493
    %v7927 = vunpack.c.l.b16 %v5494
    %v7928 = vunpack.c.h.b16 %v5494
    %v7929 = vunpack.c.l.b16 %v5495
    %v7930 = vunpack.c.h.b16 %v5495
    %v7931 = vunpack.c.l.b16 %v5496
    %v7932 = vunpack.c.h.b16 %v5496
    %v7933 = vunpack.c.l.b16 %v5497
    %v7934 = vunpack.c.h.b16 %v5497
    %v7935 = vunpack.c.l.b16 %v5498
    %v7936 = vunpack.c.h.b16 %v5498
    %v7937 = vunpack.c.l.b16 %v5499
    %v7938 = vunpack.c.h.b16 %v5499
    %v7939 = vunpack.c.l.b16 %v5500
    %v7940 = vunpack.c.h.b16 %v5500
    %v7941 = vunpack.c.l.b16 %v5501
    %v7942 = vunpack.c.h.b16 %v5501
    %v7943 = vunpack.c.l.b16 %v5502
    %v7944 = vunpack.c.h.b16 %v5502
    %v7945 = vunpack.c.l.b16 %v5503
    %v7946 = vunpack.c.h.b16 %v5503
    %v7947 = vunpack.c.l.b16 %v5504
    %v7948 = vunpack.c.h.b16 %v5504
    %v7949 = vunpack.c.l.b16 %v5505
    %v7950 = vunpack.c.h.b16 %v5505
    %v7951 = vunpack.c.l.b16 %v5506
    %v7952 = vunpack.c.h.b16 %v5506
    %v7953 = vunpack.c.l.b16 %v5507
    %v7954 = vunpack.c.h.b16 %v5507
    %v7955 = vunpack.c.l.b16 %v5508
    %v7956 = vunpack.c.h.b16 %v5508
    %v7957 = vunpack.c.l.b16 %v5509
    %v7958 = vunpack.c.h.b16 %v5509
    %v7959 = vunpack.c.l.b16 %v5510
    %v7960 = vunpack.c.h.b16 %v5510
    %v7961 = vunpack.c.l.b16 %v5511
    %v7962 = vunpack.c.h.b16 %v5511
    %v7963 = vunpack.c.l.b16 %v5512
    %v7964 = vunpack.c.h.b16 %v5512
    %v7965 = vunpack.c.l.b16 %v5513
    %v7966 = vunpack.c.h.b16 %v5513
    %v7967 = vunpack.c.l.b16 %v5514
    %v7968 = vunpack.c.h.b16 %v5514
    %v7969 = vunpack.c.l.b16 %v5515
    %v7970 = vunpack.c.h.b16 %v5515
    %v7971 = vunpack.c.l.b16 %v5516
    %v7972 = vunpack.c.h.b16 %v5516
    %v7973 = vunpack.c.l.b16 %v5517
    %v7974 = vunpack.c.h.b16 %v5517
    %v7975 = vunpack.c.l.b16 %v5518
    %v7976 = vunpack.c.h.b16 %v5518
    %v7977 = vunpack.c.l.b16 %v5519
    %v7978 = vunpack.c.h.b16 %v5519
    %v7979 = vunpack.c.l.b16 %v5520
    %v7980 = vunpack.c.h.b16 %v5520
    %v7981 = vunpack.c.l.b16 %v5521
    %v7982 = vunpack.c.h.b16 %v5521
    %v7983 = vunpack.c.l.b16 %v5522
    %v7984 = vunpack.c.h.b16 %v5522
    %v7985 = vunpack.c.l.b16 %v5523
    %v7986 = vunpack.c.h.b16 %v5523
    %v7987 = vunpack.c.l.b16 %v5524
    %v7988 = vunpack.c.h.b16 %v5524
    %v7989 = vunpack.c.l.b16 %v5525
    %v7990 = vunpack.c.h.b16 %v5525
    %v7991 = vunpack.c.l.b16 %v5526
    %v7992 = vunpack.c.h.b16 %v5526
    %v7993 = vunpack.c.l.b16 %v5527
    %v7994 = vunpack.c.h.b16 %v5527
    %v7995 = vunpack.c.l.b16 %v5528
    %v7996 = vunpack.c.h.b16 %v5528
    %v7997 = vunpack.c.l.b16 %v5529
    %v7998 = vunpack.c.h.b16 %v5529
    %v7999 = vunpack.c.l.b16 %v5530
    %v8000 = vunpack.c.h.b16 %v5530
    %v8001 = vunpack.c.l.b16 %v5531
    %v8002 = vunpack.c.h.b16 %v5531
    %v8003 = vunpack.c.l.b16 %v5532
    %v8004 = vunpack.c.h.b16 %v5532
    %v8005 = vunpack.c.l.b16 %v5533
    %v8006 = vunpack.c.h.b16 %v5533
    %v8007 = vunpack.c.l.b16 %v5534
    %v8008 = vunpack.c.h.b16 %v5534
    %v8009 = vunpack.c.l.b16 %v5535
    %v8010 = vunpack.c.h.b16 %v5535
    %v8011 = vunpack.c.l.b16 %v5536
    %v8012 = vunpack.c.h.b16 %v5536
    %v8013 = vunpack.c.l.b16 %v5537
    %v8014 = vunpack.c.h.b16 %v5537
    %v8015 = vunpack.c.l.b16 %v5538
    %v8016 = vunpack.c.h.b16 %v5538
    %v8017 = vunpack.c.l.b16 %v5539
    %v8018 = vunpack.c.h.b16 %v5539
    %v8019 = vunpack.c.l.b16 %v5540
    %v8020 = vunpack.c.h.b16 %v5540
    %v8021 = vunpack.c.l.b16 %v5541
    %v8022 = vunpack.c.h.b16 %v5541
    %v8023 = vunpack.c.l.b16 %v5542
    %v8024 = vunpack.c.h.b16 %v5542
    %v8025 = vunpack.c.l.b16 %v5543
    %v8026 = vunpack.c.h.b16 %v5543
    %v8027 = vunpack.c.l.b16 %v5544
    %v8028 = vunpack.c.h.b16 %v5544
    %v8029 = vunpack.c.l.b16 %v5545
    %v8030 = vunpack.c.h.b16 %v5545
    %v8031 = vunpack.c.l.b16 %v5546
    %v8032 = vunpack.c.h.b16 %v5546
    %v8033 = vunpack.c.l.b16 %v5547
    %v8034 = vunpack.c.h.b16 %v5547
    %v8035 = vunpack.c.l.b16 %v5548
    %v8036 = vunpack.c.h.b16 %v5548
    %v8037 = vunpack.c.l.b16 %v5549
    %v8038 = vunpack.c.h.b16 %v5549
    %v8039 = vunpack.c.l.b16 %v5550
    %v8040 = vunpack.c.h.b16 %v5550
    %v8041 = vunpack.c.l.b16 %v5551
    %v8042 = vunpack.c.h.b16 %v5551
    %v8043 = vunpack.c.l.b16 %v5552
    %v8044 = vunpack.c.h.b16 %v5552
    %v8045 = vunpack.c.l.b16 %v5553
    %v8046 = vunpack.c.h.b16 %v5553
    %v8047 = vunpack.c.l.b16 %v5554
    %v8048 = vunpack.c.h.b16 %v5554
    %v8049 = vunpack.c.l.b16 %v5555
    %v8050 = vunpack.c.h.b16 %v5555
    %v8051 = vunpack.c.l.b16 %v5556
    %v8052 = vunpack.c.h.b16 %v5556
    %v8053 = vunpack.c.l.b16 %v5557
    %v8054 = vunpack.c.h.b16 %v5557
    %v8055 = vunpack.c.l.b16 %v5558
    %v8056 = vunpack.c.h.b16 %v5558
    %v8057 = vunpack.c.l.b16 %v5559
    %v8058 = vunpack.c.h.b16 %v5559
    %v8059 = vunpack.c.l.b16 %v5560
    %v8060 = vunpack.c.h.b16 %v5560
    %v8061 = vunpack.c.l.b16 %v5561
    %v8062 = vunpack.c.h.b16 %v5561
    %v8063 = vunpack.c.l.b16 %v5562
    %v8064 = vunpack.c.h.b16 %v5562
    %v8065 = vunpack.c.l.b16 %v5563
    %v8066 = vunpack.c.h.b16 %v5563
    %v8067 = vunpack.c.l.b16 %v5564
    %v8068 = vunpack.c.h.b16 %v5564
    %v8069 = vunpack.c.l.b16 %v5565
    %v8070 = vunpack.c.h.b16 %v5565
    %v8071 = vunpack.c.l.b16 %v5566
    %v8072 = vunpack.c.h.b16 %v5566
    %v8073 = vunpack.c.l.b16 %v5567
    %v8074 = vunpack.c.h.b16 %v5567
    %v8075 = vunpack.c.l.b16 %v5568
    %v8076 = vunpack.c.h.b16 %v5568
    %v8077 = vunpack.c.l.b16 %v5569
    %v8078 = vunpack.c.h.b16 %v5569
    %v8079 = vunpack.c.l.b16 %v5570
    %v8080 = vunpack.c.h.b16 %v5570
    %v8081 = vunpack.c.l.b16 %v5571
    %v8082 = vunpack.c.h.b16 %v5571
    %v8083 = vunpack.c.l.b16 %v5572
    %v8084 = vunpack.c.h.b16 %v5572
    %v8085 = vunpack.c.l.b16 %v5573
    %v8086 = vunpack.c.h.b16 %v5573
    %v8087 = vunpack.c.l.b16 %v5574
    %v8088 = vunpack.c.h.b16 %v5574
    %v8089 = vunpack.c.l.b16 %v5575
    %v8090 = vunpack.c.h.b16 %v5575
    %v8091 = vunpack.c.l.b16 %v5576
    %v8092 = vunpack.c.h.b16 %v5576
    %v8093 = vunpack.c.l.b16 %v5577
    %v8094 = vunpack.c.h.b16 %v5577
    %v8095 = vunpack.c.l.b16 %v5578
    %v8096 = vunpack.c.h.b16 %v5578
    %v8097 = vunpack.c.l.b16 %v5579
    %v8098 = vunpack.c.h.b16 %v5579
    %v8099 = vunpack.c.l.b16 %v5580
    %v8100 = vunpack.c.h.b16 %v5580
    %v8101 = vunpack.c.l.b16 %v5581
    %v8102 = vunpack.c.h.b16 %v5581
    %v8103 = vunpack.c.l.b16 %v5582
    %v8104 = vunpack.c.h.b16 %v5582
    %v8105 = vunpack.c.l.b16 %v5583
    %v8106 = vunpack.c.h.b16 %v5583
    %v8107 = vunpack.c.l.b16 %v5584
    %v8108 = vunpack.c.h.b16 %v5584
    %v8109 = vunpack.c.l.b16 %v5585
    %v8110 = vunpack.c.h.b16 %v5585
    %v8111 = vunpack.c.l.b16 %v5586
    %v8112 = vunpack.c.h.b16 %v5586
    %v8113 = vunpack.c.l.b16 %v5587
    %v8114 = vunpack.c.h.b16 %v5587
    %v8115 = vunpack.c.l.b16 %v5588
    %v8116 = vunpack.c.h.b16 %v5588
    %v8117 = vunpack.c.l.b16 %v5589
    %v8118 = vunpack.c.h.b16 %v5589
    %v8119 = vunpack.c.l.b16 %v5590
    %v8120 = vunpack.c.h.b16 %v5590
    %v8121 = vunpack.c.l.b16 %v5591
    %v8122 = vunpack.c.h.b16 %v5591
    %v8123 = vunpack.c.l.b16 %v5592
    %v8124 = vunpack.c.h.b16 %v5592
    %v8125 = vunpack.c.l.b16 %v5593
    %v8126 = vunpack.c.h.b16 %v5593
    %v8127 = vunpack.c.l.b16 %v5594
    %v8128 = vunpack.c.h.b16 %v5594
    %v8129 = vunpack.c.l.b16 %v5595
    %v8130 = vunpack.c.h.b16 %v5595
    %v8131 = vunpack.c.l.b16 %v5596
    %v8132 = vunpack.c.h.b16 %v5596
    %v8133 = vunpack.c.l.b16 %v5597
    %v8134 = vunpack.c.h.b16 %v5597
    %v8135 = vunpack.c.l.b16 %v5598
    %v8136 = vunpack.c.h.b16 %v5598
    %v8137 = vunpack.c.l.b16 %v5599
    %v8138 = vunpack.c.h.b16 %v5599
    %v8139 = vunpack.c.l.b16 %v5600
    %v8140 = vunpack.c.h.b16 %v5600
    %v8141 = vunpack.c.l.b16 %v5601
    %v8142 = vunpack.c.h.b16 %v5601
    %v8143 = vunpack.c.l.b16 %v5602
    %v8144 = vunpack.c.h.b16 %v5602
    %v8145 = vpack.c.b16 %v6581, %v6577
    %v8146 = vpack.c.b16 %v6582, %v6578
    %v8147 = vpack.c.b16 %v6583, %v6579
    %v8148 = vpack.c.b16 %v6584, %v6580
    %v8149 = vpack.c.b16 %v6589, %v6585
    %v8150 = vpack.c.b16 %v6590, %v6586
    %v8151 = vpack.c.b16 %v6591, %v6587
    %v8152 = vpack.c.b16 %v6592, %v6588
    %v8153 = vpack.c.b16 %v6597, %v6593
    %v8154 = vpack.c.b16 %v6598, %v6594
    %v8155 = vpack.c.b16 %v6599, %v6595
    %v8156 = vpack.c.b16 %v6600, %v6596
    %v8157 = vpack.c.b16 %v6605, %v6601
    %v8158 = vpack.c.b16 %v6606, %v6602
    %v8159 = vpack.c.b16 %v6607, %v6603
    %v8160 = vpack.c.b16 %v6608, %v6604
    %v8161 = vpack.c.b16 %v6613, %v6609
    %v8162 = vpack.c.b16 %v6614, %v6610
    %v8163 = vpack.c.b16 %v6615, %v6611
    %v8164 = vpack.c.b16 %v6616, %v6612
    %v8165 = vpack.c.b16 %v6621, %v6617
    %v8166 = vpack.c.b16 %v6622, %v6618
    %v8167 = vpack.c.b16 %v6623, %v6619
    %v8168 = vpack.c.b16 %v6624, %v6620
    %v8169 = vpack.c.b16 %v6629, %v6625
    %v8170 = vpack.c.b16 %v6630, %v6626
    %v8171 = vpack.c.b16 %v6631, %v6627
    %v8172 = vpack.c.b16 %v6632, %v6628
    %v8173 = vpack.c.b16 %v6637, %v6633
    %v8174 = vpack.c.b16 %v6638, %v6634
    %v8175 = vpack.c.b16 %v6639, %v6635
    %v8176 = vpack.c.b16 %v6640, %v6636
    %v8177 = vpack.c.b16 %v6645, %v6641
    %v8178 = vpack.c.b16 %v6646, %v6642
    %v8179 = vpack.c.b16 %v6647, %v6643
    %v8180 = vpack.c.b16 %v6648, %v6644
    %v8181 = vpack.c.b16 %v6653, %v6649
    %v8182 = vpack.c.b16 %v6654, %v6650
    %v8183 = vpack.c.b16 %v6655, %v6651
    %v8184 = vpack.c.b16 %v6656, %v6652
    %v8185 = vpack.c.b16 %v6661, %v6657
    %v8186 = vpack.c.b16 %v6662, %v6658
    %v8187 = vpack.c.b16 %v6663, %v6659
    %v8188 = vpack.c.b16 %v6664, %v6660
    %v8189 = vpack.c.b16 %v6669, %v6665
    %v8190 = vpack.c.b16 %v6670, %v6666
    %v8191 = vpack.c.b16 %v6671, %v6667
    %v8192 = vpack.c.b16 %v6672, %v6668
    %v8193 = vpack.c.b16 %v6677, %v6673
    %v8194 = vpack.c.b16 %v6678, %v6674
    %v8195 = vpack.c.b16 %v6679, %v6675
    %v8196 = vpack.c.b16 %v6680, %v6676
    %v8197 = vpack.c.b16 %v6685, %v6681
    %v8198 = vpack.c.b16 %v6686, %v6682
    %v8199 = vpack.c.b16 %v6687, %v6683
    %v8200 = vpack.c.b16 %v6688, %v6684
    %v8201 = vpack.c.b16 %v6693, %v6689
    %v8202 = vpack.c.b16 %v6694, %v6690
    %v8203 = vpack.c.b16 %v6695, %v6691
    %v8204 = vpack.c.b16 %v6696, %v6692
    %v8205 = vpack.c.b16 %v6701, %v6697
    %v8206 = vpack.c.b16 %v6702, %v6698
    %v8207 = vpack.c.b16 %v6703, %v6699
    %v8208 = vpack.c.b16 %v6704, %v6700
    %v8209 = vpack.c.b16 %v6709, %v6705
    %v8210 = vpack.c.b16 %v6710, %v6706
    %v8211 = vpack.c.b16 %v6711, %v6707
    %v8212 = vpack.c.b16 %v6712, %v6708
    %v8213 = vpack.c.b16 %v6717, %v6713
    %v8214 = vpack.c.b16 %v6718, %v6714
    %v8215 = vpack.c.b16 %v6719, %v6715
    %v8216 = vpack.c.b16 %v6720, %v6716
    %v8217 = vpack.c.b16 %v6725, %v6721
    %v8218 = vpack.c.b16 %v6726, %v6722
    %v8219 = vpack.c.b16 %v6727, %v6723
    %v8220 = vpack.c.b16 %v6728, %v6724
    %v8221 = vpack.c.b16 %v6733, %v6729
    %v8222 = vpack.c.b16 %v6734, %v6730
    %v8223 = vpack.c.b16 %v6735, %v6731
    %v8224 = vpack.c.b16 %v6736, %v6732
    %v8225 = vpack.c.b16 %v6741, %v6737
    %v8226 = vpack.c.b16 %v6742, %v6738
    %v8227 = vpack.c.b16 %v6743, %v6739
    %v8228 = vpack.c.b16 %v6744, %v6740
    %v8229 = vpack.c.b16 %v6749, %v6745
    %v8230 = vpack.c.b16 %v6750, %v6746
    %v8231 = vpack.c.b16 %v6751, %v6747
    %v8232 = vpack.c.b16 %v6752, %v6748
    %v8233 = vpack.c.b16 %v6757, %v6753
    %v8234 = vpack.c.b16 %v6758, %v6754
    %v8235 = vpack.c.b16 %v6759, %v6755
    %v8236 = vpack.c.b16 %v6760, %v6756
    %v8237 = vpack.c.b16 %v6765, %v6761
    %v8238 = vpack.c.b16 %v6766, %v6762
    %v8239 = vpack.c.b16 %v6767, %v6763
    %v8240 = vpack.c.b16 %v6768, %v6764
    %v8241 = vpack.c.b16 %v6773, %v6769
    %v8242 = vpack.c.b16 %v6774, %v6770
    %v8243 = vpack.c.b16 %v6775, %v6771
    %v8244 = vpack.c.b16 %v6776, %v6772
    %v8245 = vpack.c.b16 %v6781, %v6777
    %v8246 = vpack.c.b16 %v6782, %v6778
    %v8247 = vpack.c.b16 %v6783, %v6779
    %v8248 = vpack.c.b16 %v6784, %v6780
    %v8249 = vpack.c.b16 %v6789, %v6785
    %v8250 = vpack.c.b16 %v6790, %v6786
    %v8251 = vpack.c.b16 %v6791, %v6787
    %v8252 = vpack.c.b16 %v6792, %v6788
    %v8253 = vpack.c.b16 %v6797, %v6793
    %v8254 = vpack.c.b16 %v6798, %v6794
    %v8255 = vpack.c.b16 %v6799, %v6795
    %v8256 = vpack.c.b16 %v6800, %v6796
    %v8257 = vpack.c.b16 %v6805, %v6801
    %v8258 = vpack.c.b16 %v6806, %v6802
    %v8259 = vpack.c.b16 %v6807, %v6803
    %v8260 = vpack.c.b16 %v6808, %v6804
    %v8261 = vpack.c.b16 %v6813, %v6809
    %v8262 = vpack.c.b16 %v6814, %v6810
    %v8263 = vpack.c.b16 %v6815, %v6811
    %v8264 = vpack.c.b16 %v6816, %v6812
    %v8265 = vpack.c.b16 %v6821, %v6817
    %v8266 = vpack.c.b16 %v6822, %v6818
    %v8267 = vpack.c.b16 %v6823, %v6819
    %v8268 = vpack.c.b16 %v6824, %v6820
    %v8269 = vpack.c.b16 %v6829, %v6825
    %v8270 = vpack.c.b16 %v6830, %v6826
    %v8271 = vpack.c.b16 %v6831, %v6827
    %v8272 = vpack.c.b16 %v6832, %v6828
    %v8273 = vpack.c.b16 %v6837, %v6833
    %v8274 = vpack.c.b16 %v6838, %v6834
    %v8275 = vpack.c.b16 %v6839, %v6835
    %v8276 = vpack.c.b16 %v6840, %v6836
    %v8277 = vpack.c.b16 %v6845, %v6841
    %v8278 = vpack.c.b16 %v6846, %v6842
    %v8279 = vpack.c.b16 %v6847, %v6843
    %v8280 = vpack.c.b16 %v6848, %v6844
    %v8281 = vpack.c.b16 %v6853, %v6849
    %v8282 = vpack.c.b16 %v6854, %v6850
    %v8283 = vpack.c.b16 %v6855, %v6851
    %v8284 = vpack.c.b16 %v6856, %v6852
    %v8285 = vpack.c.b16 %v6861, %v6857
    %v8286 = vpack.c.b16 %v6862, %v6858
    %v8287 = vpack.c.b16 %v6863, %v6859
    %v8288 = vpack.c.b16 %v6864, %v6860
    %v8289 = vpack.c.b16 %v6869, %v6865
    %v8290 = vpack.c.b16 %v6870, %v6866
    %v8291 = vpack.c.b16 %v6871, %v6867
    %v8292 = vpack.c.b16 %v6872, %v6868
    %v8293 = vpack.c.b16 %v6877, %v6873
    %v8294 = vpack.c.b16 %v6878, %v6874
    %v8295 = vpack.c.b16 %v6879, %v6875
    %v8296 = vpack.c.b16 %v6880, %v6876
    %v8297 = vpack.c.b16 %v6885, %v6881
    %v8298 = vpack.c.b16 %v6886, %v6882
    %v8299 = vpack.c.b16 %v6887, %v6883
    %v8300 = vpack.c.b16 %v6888, %v6884
    %v8301 = vpack.c.b16 %v6893, %v6889
    %v8302 = vpack.c.b16 %v6894, %v6890
    %v8303 = vpack.c.b16 %v6895, %v6891
    %v8304 = vpack.c.b16 %v6896, %v6892
    %v8305 = vpack.c.b16 %v6901, %v6897
    %v8306 = vpack.c.b16 %v6902, %v6898
    %v8307 = vpack.c.b16 %v6903, %v6899
    %v8308 = vpack.c.b16 %v6904, %v6900
    %v8309 = vpack.c.b16 %v6909, %v6905
    %v8310 = vpack.c.b16 %v6910, %v6906
    %v8311 = vpack.c.b16 %v6911, %v6907
    %v8312 = vpack.c.b16 %v6912, %v6908
    %v8313 = vpack.c.b16 %v6917, %v6913
    %v8314 = vpack.c.b16 %v6918, %v6914
    %v8315 = vpack.c.b16 %v6919, %v6915
    %v8316 = vpack.c.b16 %v6920, %v6916
    %v8317 = vpack.c.b16 %v6925, %v6921
    %v8318 = vpack.c.b16 %v6926, %v6922
    %v8319 = vpack.c.b16 %v6927, %v6923
    %v8320 = vpack.c.b16 %v6928, %v6924
    %v8321 = vpack.c.b16 %v6933, %v6929
    %v8322 = vpack.c.b16 %v6934, %v6930
    %v8323 = vpack.c.b16 %v6935, %v6931
    %v8324 = vpack.c.b16 %v6936, %v6932
    %v8325 = vpack.c.b16 %v6941, %v6937
    %v8326 = vpack.c.b16 %v6942, %v6938
    %v8327 = vpack.c.b16 %v6943, %v6939
    %v8328 = vpack.c.b16 %v6944, %v6940
    %v8329 = vpack.c.b16 %v6949, %v6945
    %v8330 = vpack.c.b16 %v6950, %v6946
    %v8331 = vpack.c.b16 %v6951, %v6947
    %v8332 = vpack.c.b16 %v6952, %v6948
    %v8333 = vpack.c.b16 %v6957, %v6953
    %v8334 = vpack.c.b16 %v6958, %v6954
    %v8335 = vpack.c.b16 %v6959, %v6955
    %v8336 = vpack.c.b16 %v6960, %v6956
    %v8337 = vpack.c.b16 %v6965, %v6961
    %v8338 = vpack.c.b16 %v6966, %v6962
    %v8339 = vpack.c.b16 %v6967, %v6963
    %v8340 = vpack.c.b16 %v6968, %v6964
    %v8341 = vpack.c.b16 %v6973, %v6969
    %v8342 = vpack.c.b16 %v6974, %v6970
    %v8343 = vpack.c.b16 %v6975, %v6971
    %v8344 = vpack.c.b16 %v6976, %v6972
    %v8345 = vpack.c.b16 %v6981, %v6977
    %v8346 = vpack.c.b16 %v6982, %v6978
    %v8347 = vpack.c.b16 %v6983, %v6979
    %v8348 = vpack.c.b16 %v6984, %v6980
    %v8349 = vpack.c.b16 %v6989, %v6985
    %v8350 = vpack.c.b16 %v6990, %v6986
    %v8351 = vpack.c.b16 %v6991, %v6987
    %v8352 = vpack.c.b16 %v6992, %v6988
    %v8353 = vpack.c.b16 %v6997, %v6993
    %v8354 = vpack.c.b16 %v6998, %v6994
    %v8355 = vpack.c.b16 %v6999, %v6995
    %v8356 = vpack.c.b16 %v7000, %v6996
    %v8357 = vpack.c.b16 %v7005, %v7001
    %v8358 = vpack.c.b16 %v7006, %v7002
    %v8359 = vpack.c.b16 %v7007, %v7003
    %v8360 = vpack.c.b16 %v7008, %v7004
    %v8361 = vpack.c.b16 %v7013, %v7009
    %v8362 = vpack.c.b16 %v7014, %v7010
    %v8363 = vpack.c.b16 %v7015, %v7011
    %v8364 = vpack.c.b16 %v7016, %v7012
    %v8365 = vpack.c.b16 %v7021, %v7017
    %v8366 = vpack.c.b16 %v7022, %v7018
    %v8367 = vpack.c.b16 %v7023, %v7019
    %v8368 = vpack.c.b16 %v7024, %v7020
    %v8369 = vpack.c.b16 %v7029, %v7025
    %v8370 = vpack.c.b16 %v7030, %v7026
    %v8371 = vpack.c.b16 %v7031, %v7027
    %v8372 = vpack.c.b16 %v7032, %v7028
    %v8373 = vpack.c.b16 %v7037, %v7033
    %v8374 = vpack.c.b16 %v7038, %v7034
    %v8375 = vpack.c.b16 %v7039, %v7035
    %v8376 = vpack.c.b16 %v7040, %v7036
    %v8377 = vpack.c.b16 %v7045, %v7041
    %v8378 = vpack.c.b16 %v7046, %v7042
    %v8379 = vpack.c.b16 %v7047, %v7043
    %v8380 = vpack.c.b16 %v7048, %v7044
    %v8381 = vpack.c.b16 %v7053, %v7049
    %v8382 = vpack.c.b16 %v7054, %v7050
    %v8383 = vpack.c.b16 %v7055, %v7051
    %v8384 = vpack.c.b16 %v7056, %v7052
    %v8385 = vpack.c.b16 %v7061, %v7057
    %v8386 = vpack.c.b16 %v7062, %v7058
    %v8387 = vpack.c.b16 %v7063, %v7059
    %v8388 = vpack.c.b16 %v7064, %v7060
    %v8389 = vpack.c.b16 %v7069, %v7065
    %v8390 = vpack.c.b16 %v7070, %v7066
    %v8391 = vpack.c.b16 %v7071, %v7067
    %v8392 = vpack.c.b16 %v7072, %v7068
    %v8393 = vpack.c.b16 %v7077, %v7073
    %v8394 = vpack.c.b16 %v7078, %v7074
    %v8395 = vpack.c.b16 %v7079, %v7075
    %v8396 = vpack.c.b16 %v7080, %v7076
    %v8397 = vpack.c.b16 %v7085, %v7081
    %v8398 = vpack.c.b16 %v7086, %v7082
    %v8399 = vpack.c.b16 %v7087, %v7083
    %v8400 = vpack.c.b16 %v7088, %v7084
    %v8401 = vpack.c.b16 %v7093, %v7089
    %v8402 = vpack.c.b16 %v7094, %v7090
    %v8403 = vpack.c.b16 %v7095, %v7091
    %v8404 = vpack.c.b16 %v7096, %v7092
    %v8405 = vpack.c.b16 %v7101, %v7097
    %v8406 = vpack.c.b16 %v7102, %v7098
    %v8407 = vpack.c.b16 %v7103, %v7099
    %v8408 = vpack.c.b16 %v7104, %v7100
    %v8409 = vpack.c.b16 %v7109, %v7105
    %v8410 = vpack.c.b16 %v7110, %v7106
    %v8411 = vpack.c.b16 %v7111, %v7107
    %v8412 = vpack.c.b16 %v7112, %v7108
    %v8413 = vpack.c.b16 %v7117, %v7113
    %v8414 = vpack.c.b16 %v7118, %v7114
    %v8415 = vpack.c.b16 %v7119, %v7115
    %v8416 = vpack.c.b16 %v7120, %v7116
    %v8417 = vpack.c.b16 %v7125, %v7121
    %v8418 = vpack.c.b16 %v7126, %v7122
    %v8419 = vpack.c.b16 %v7127, %v7123
    %v8420 = vpack.c.b16 %v7128, %v7124
    %v8421 = vpack.c.b16 %v7133, %v7129
    %v8422 = vpack.c.b16 %v7134, %v7130
    %v8423 = vpack.c.b16 %v7135, %v7131
    %v8424 = vpack.c.b16 %v7136, %v7132
    %v8425 = vpack.c.b16 %v7141, %v7137
    %v8426 = vpack.c.b16 %v7142, %v7138
    %v8427 = vpack.c.b16 %v7143, %v7139
    %v8428 = vpack.c.b16 %v7144, %v7140
    %v8429 = vpack.c.b16 %v7149, %v7145
    %v8430 = vpack.c.b16 %v7150, %v7146
    %v8431 = vpack.c.b16 %v7151, %v7147
    %v8432 = vpack.c.b16 %v7152, %v7148
    %v8433 = vpack.c.b16 %v7157, %v7153
    %v8434 = vpack.c.b16 %v7158, %v7154
    %v8435 = vpack.c.b16 %v7159, %v7155
    %v8436 = vpack.c.b16 %v7160, %v7156
    %v8437 = vpack.c.b16 %v7165, %v7161
    %v8438 = vpack.c.b16 %v7166, %v7162
    %v8439 = vpack.c.b16 %v7167, %v7163
    %v8440 = vpack.c.b16 %v7168, %v7164
    %v8441 = vpack.c.b16 %v7173, %v7169
    %v8442 = vpack.c.b16 %v7174, %v7170
    %v8443 = vpack.c.b16 %v7175, %v7171
    %v8444 = vpack.c.b16 %v7176, %v7172
    %v8445 = vpack.c.b16 %v7181, %v7177
    %v8446 = vpack.c.b16 %v7182, %v7178
    %v8447 = vpack.c.b16 %v7183, %v7179
    %v8448 = vpack.c.b16 %v7184, %v7180
    %v8449 = vpack.c.b16 %v7189, %v7185
    %v8450 = vpack.c.b16 %v7190, %v7186
    %v8451 = vpack.c.b16 %v7191, %v7187
    %v8452 = vpack.c.b16 %v7192, %v7188
    %v8453 = vpack.c.b16 %v7197, %v7193
    %v8454 = vpack.c.b16 %v7198, %v7194
    %v8455 = vpack.c.b16 %v7199, %v7195
    %v8456 = vpack.c.b16 %v7200, %v7196
    %v8457 = vpack.c.b16 %v7205, %v7201
    %v8458 = vpack.c.b16 %v7206, %v7202
    %v8459 = vpack.c.b16 %v7207, %v7203
    %v8460 = vpack.c.b16 %v7208, %v7204
    %v8461 = vpack.c.b16 %v7213, %v7209
    %v8462 = vpack.c.b16 %v7214, %v7210
    %v8463 = vpack.c.b16 %v7215, %v7211
    %v8464 = vpack.c.b16 %v7216, %v7212
    %v8465 = vpack.c.b16 %v7221, %v7217
    %v8466 = vpack.c.b16 %v7222, %v7218
    %v8467 = vpack.c.b16 %v7223, %v7219
    %v8468 = vpack.c.b16 %v7224, %v7220
    %v8469 = vpack.c.b16 %v7229, %v7225
    %v8470 = vpack.c.b16 %v7230, %v7226
    %v8471 = vpack.c.b16 %v7231, %v7227
    %v8472 = vpack.c.b16 %v7232, %v7228
    %v8473 = vpack.c.b16 %v7237, %v7233
    %v8474 = vpack.c.b16 %v7238, %v7234
    %v8475 = vpack.c.b16 %v7239, %v7235
    %v8476 = vpack.c.b16 %v7240, %v7236
    %v8477 = vpack.c.b16 %v7245, %v7241
    %v8478 = vpack.c.b16 %v7246, %v7242
    %v8479 = vpack.c.b16 %v7247, %v7243
    %v8480 = vpack.c.b16 %v7248, %v7244
    %v8481 = vpack.c.b16 %v7253, %v7249
    %v8482 = vpack.c.b16 %v7254, %v7250
    %v8483 = vpack.c.b16 %v7255, %v7251
    %v8484 = vpack.c.b16 %v7256, %v7252
    %v8485 = vpack.c.b16 %v7261, %v7257
    %v8486 = vpack.c.b16 %v7262, %v7258
    %v8487 = vpack.c.b16 %v7263, %v7259
    %v8488 = vpack.c.b16 %v7264, %v7260
    %v8489 = vpack.c.b16 %v7269, %v7265
    %v8490 = vpack.c.b16 %v7270, %v7266
    %v8491 = vpack.c.b16 %v7271, %v7267
    %v8492 = vpack.c.b16 %v7272, %v7268
    %v8493 = vpack.c.b16 %v7277, %v7273
    %v8494 = vpack.c.b16 %v7278, %v7274
    %v8495 = vpack.c.b16 %v7279, %v7275
    %v8496 = vpack.c.b16 %v7280, %v7276
    %v8497 = vpack.c.b16 %v7285, %v7281
    %v8498 = vpack.c.b16 %v7286, %v7282
    %v8499 = vpack.c.b16 %v7287, %v7283
    %v8500 = vpack.c.b16 %v7288, %v7284
    %v8501 = vpack.c.b16 %v7293, %v7289
    %v8502 = vpack.c.b16 %v7294, %v7290
    %v8503 = vpack.c.b16 %v7295, %v7291
    %v8504 = vpack.c.b16 %v7296, %v7292
    %v8505 = vpack.c.b16 %v7301, %v7297
    %v8506 = vpack.c.b16 %v7302, %v7298
    %v8507 = vpack.c.b16 %v7303, %v7299
    %v8508 = vpack.c.b16 %v7304, %v7300
    %v8509 = vpack.c.b16 %v7309, %v7305
    %v8510 = vpack.c.b16 %v7310, %v7306
    %v8511 = vpack.c.b16 %v7311, %v7307
    %v8512 = vpack.c.b16 %v7312, %v7308
    %v8513 = vpack.c.b16 %v7317, %v7313
    %v8514 = vpack.c.b16 %v7318, %v7314
    %v8515 = vpack.c.b16 %v7319, %v7315
    %v8516 = vpack.c.b16 %v7320, %v7316
    %v8517 = vpack.c.b16 %v7325, %v7321
    %v8518 = vpack.c.b16 %v7326, %v7322
    %v8519 = vpack.c.b16 %v7327, %v7323
    %v8520 = vpack.c.b16 %v7328, %v7324
    %v8521 = vpack.c.b16 %v7333, %v7329
    %v8522 = vpack.c.b16 %v7334, %v7330
    %v8523 = vpack.c.b16 %v7335, %v7331
    %v8524 = vpack.c.b16 %v7336, %v7332
    %v8525 = vpack.c.b16 %v7341, %v7337
    %v8526 = vpack.c.b16 %v7342, %v7338
    %v8527 = vpack.c.b16 %v7343, %v7339
    %v8528 = vpack.c.b16 %v7344, %v7340
    %v8529 = vpack.c.b16 %v7349, %v7345
    %v8530 = vpack.c.b16 %v7350, %v7346
    %v8531 = vpack.c.b16 %v7351, %v7347
    %v8532 = vpack.c.b16 %v7352, %v7348
    %v8533 = vpack.c.b16 %v7357, %v7353
    %v8534 = vpack.c.b16 %v7358, %v7354
    %v8535 = vpack.c.b16 %v7359, %v7355
    %v8536 = vpack.c.b16 %v7360, %v7356
    %v8537 = vpack.c.b16 %v7365, %v7361
    %v8538 = vpack.c.b16 %v7366, %v7362
    %v8539 = vpack.c.b16 %v7367, %v7363
    %v8540 = vpack.c.b16 %v7368, %v7364
    %v8541 = vpack.c.b16 %v7373, %v7369
    %v8542 = vpack.c.b16 %v7374, %v7370
    %v8543 = vpack.c.b16 %v7375, %v7371
    %v8544 = vpack.c.b16 %v7376, %v7372
    %v8545 = vpack.c.b16 %v7381, %v7377
    %v8546 = vpack.c.b16 %v7382, %v7378
    %v8547 = vpack.c.b16 %v7383, %v7379
    %v8548 = vpack.c.b16 %v7384, %v7380
    %v8549 = vpack.c.b16 %v7389, %v7385
    %v8550 = vpack.c.b16 %v7390, %v7386
    %v8551 = vpack.c.b16 %v7391, %v7387
    %v8552 = vpack.c.b16 %v7392, %v7388
    %v8553 = vpack.c.b16 %v7397, %v7393
    %v8554 = vpack.c.b16 %v7398, %v7394
    %v8555 = vpack.c.b16 %v7399, %v7395
    %v8556 = vpack.c.b16 %v7400, %v7396
    %v8557 = vpack.c.b16 %v7405, %v7401
    %v8558 = vpack.c.b16 %v7406, %v7402
    %v8559 = vpack.c.b16 %v7407, %v7403
    %v8560 = vpack.c.b16 %v7408, %v7404
    %v8561 = vpack.c.b16 %v7413, %v7409
    %v8562 = vpack.c.b16 %v7414, %v7410
    %v8563 = vpack.c.b16 %v7415, %v7411
    %v8564 = vpack.c.b16 %v7416, %v7412
    %v8565 = vpack.c.b16 %v7421, %v7417
    %v8566 = vpack.c.b16 %v7422, %v7418
    %v8567 = vpack.c.b16 %v7423, %v7419
    %v8568 = vpack.c.b16 %v7424, %v7420
    %v8569 = vpack.c.b16 %v7429, %v7425
    %v8570 = vpack.c.b16 %v7430, %v7426
    %v8571 = vpack.c.b16 %v7431, %v7427
    %v8572 = vpack.c.b16 %v7432, %v7428
    %v8573 = vpack.c.b16 %v7437, %v7433
    %v8574 = vpack.c.b16 %v7438, %v7434
    %v8575 = vpack.c.b16 %v7439, %v7435
    %v8576 = vpack.c.b16 %v7440, %v7436
    %v8577 = vpack.c.b16 %v7445, %v7441
    %v8578 = vpack.c.b16 %v7446, %v7442
    %v8579 = vpack.c.b16 %v7447, %v7443
    %v8580 = vpack.c.b16 %v7448, %v7444
    %v8581 = vpack.c.b16 %v7453, %v7449
    %v8582 = vpack.c.b16 %v7454, %v7450
    %v8583 = vpack.c.b16 %v7455, %v7451
    %v8584 = vpack.c.b16 %v7456, %v7452
    %v8585 = vpack.c.b16 %v7461, %v7457
    %v8586 = vpack.c.b16 %v7462, %v7458
    %v8587 = vpack.c.b16 %v7463, %v7459
    %v8588 = vpack.c.b16 %v7464, %v7460
    %v8589 = vpack.c.b16 %v7469, %v7465
    %v8590 = vpack.c.b16 %v7470, %v7466
    %v8591 = vpack.c.b16 %v7471, %v7467
    %v8592 = vpack.c.b16 %v7472, %v7468
    %v8593 = vpack.c.b16 %v7477, %v7473
    %v8594 = vpack.c.b16 %v7478, %v7474
    %v8595 = vpack.c.b16 %v7479, %v7475
    %v8596 = vpack.c.b16 %v7480, %v7476
    %v8597 = vpack.c.b16 %v7485, %v7481
    %v8598 = vpack.c.b16 %v7486, %v7482
    %v8599 = vpack.c.b16 %v7487, %v7483
    %v8600 = vpack.c.b16 %v7488, %v7484
    %v8601 = vpack.c.b16 %v7493, %v7489
    %v8602 = vpack.c.b16 %v7494, %v7490
    %v8603 = vpack.c.b16 %v7495, %v7491
    %v8604 = vpack.c.b16 %v7496, %v7492
    %v8605 = vpack.c.b16 %v7501, %v7497
    %v8606 = vpack.c.b16 %v7502, %v7498
    %v8607 = vpack.c.b16 %v7503, %v7499
    %v8608 = vpack.c.b16 %v7504, %v7500
    %v8609 = vpack.c.b16 %v7509, %v7505
    %v8610 = vpack.c.b16 %v7510, %v7506
    %v8611 = vpack.c.b16 %v7511, %v7507
    %v8612 = vpack.c.b16 %v7512, %v7508
    %v8613 = vpack.c.b16 %v7517, %v7513
    %v8614 = vpack.c.b16 %v7518, %v7514
    %v8615 = vpack.c.b16 %v7519, %v7515
    %v8616 = vpack.c.b16 %v7520, %v7516
    %v8617 = vpack.c.b16 %v7525, %v7521
    %v8618 = vpack.c.b16 %v7526, %v7522
    %v8619 = vpack.c.b16 %v7527, %v7523
    %v8620 = vpack.c.b16 %v7528, %v7524
    %v8621 = vpack.c.b16 %v7533, %v7529
    %v8622 = vpack.c.b16 %v7534, %v7530
    %v8623 = vpack.c.b16 %v7535, %v7531
    %v8624 = vpack.c.b16 %v7536, %v7532
    %v8625 = vpack.c.b16 %v7541, %v7537
    %v8626 = vpack.c.b16 %v7542, %v7538
    %v8627 = vpack.c.b16 %v7543, %v7539
    %v8628 = vpack.c.b16 %v7544, %v7540
    %v8629 = vpack.c.b16 %v7549, %v7545
    %v8630 = vpack.c.b16 %v7550, %v7546
    %v8631 = vpack.c.b16 %v7551, %v7547
    %v8632 = vpack.c.b16 %v7552, %v7548
    %v8633 = vpack.c.b16 %v7557, %v7553
    %v8634 = vpack.c.b16 %v7558, %v7554
    %v8635 = vpack.c.b16 %v7559, %v7555
    %v8636 = vpack.c.b16 %v7560, %v7556
    %v8637 = vpack.c.b16 %v7565, %v7561
    %v8638 = vpack.c.b16 %v7566, %v7562
    %v8639 = vpack.c.b16 %v7567, %v7563
    %v8640 = vpack.c.b16 %v7568, %v7564
    %v8641 = vpack.c.b16 %v7573, %v7569
    %v8642 = vpack.c.b16 %v7574, %v7570
    %v8643 = vpack.c.b16 %v7575, %v7571
    %v8644 = vpack.c.b16 %v7576, %v7572
    %v8645 = vpack.c.b16 %v7581, %v7577
    %v8646 = vpack.c.b16 %v7582, %v7578
    %v8647 = vpack.c.b16 %v7583, %v7579
    %v8648 = vpack.c.b16 %v7584, %v7580
    %v8649 = vpack.c.b16 %v7589, %v7585
    %v8650 = vpack.c.b16 %v7590, %v7586
    %v8651 = vpack.c.b16 %v7591, %v7587
    %v8652 = vpack.c.b16 %v7592, %v7588
    %v8653 = vpack.c.b16 %v7597, %v7593
    %v8654 = vpack.c.b16 %v7598, %v7594
    %v8655 = vpack.c.b16 %v7599, %v7595
    %v8656 = vpack.c.b16 %v7600, %v7596
    %v8657 = vpack.c.b16 %v7605, %v7601
    %v8658 = vpack.c.b16 %v7606, %v7602
    %v8659 = vpack.c.b16 %v7607, %v7603
    %v8660 = vpack.c.b16 %v7608, %v7604
    %v8661 = vpack.c.b16 %v7613, %v7609
    %v8662 = vpack.c.b16 %v7614, %v7610
    %v8663 = vpack.c.b16 %v7615, %v7611
    %v8664 = vpack.c.b16 %v7616, %v7612
    %v8665 = vpack.c.b16 %v7621, %v7617
    %v8666 = vpack.c.b16 %v7622, %v7618
    %v8667 = vpack.c.b16 %v7623, %v7619
    %v8668 = vpack.c.b16 %v7624, %v7620
    %v8669 = vpack.c.b16 %v7629, %v7625
    %v8670 = vpack.c.b16 %v7630, %v7626
    %v8671 = vpack.c.b16 %v7631, %v7627
    %v8672 = vpack.c.b16 %v7632, %v7628
    %v8673 = vpack.c.b16 %v7637, %v7633
    %v8674 = vpack.c.b16 %v7638, %v7634
    %v8675 = vpack.c.b16 %v7639, %v7635
    %v8676 = vpack.c.b16 %v7640, %v7636
    %v8677 = vpack.c.b16 %v7645, %v7641
    %v8678 = vpack.c.b16 %v7646, %v7642
    %v8679 = vpack.c.b16 %v7647, %v7643
    %v8680 = vpack.c.b16 %v7648, %v7644
    %v8681 = vpack.c.b16 %v7653, %v7649
    %v8682 = vpack.c.b16 %v7654, %v7650
    %v8683 = vpack.c.b16 %v7655, %v7651
    %v8684 = vpack.c.b16 %v7656, %v7652
    %v8685 = vpack.c.b16 %v7661, %v7657
    %v8686 = vpack.c.b16 %v7662, %v7658
    %v8687 = vpack.c.b16 %v7663, %v7659
    %v8688 = vpack.c.b16 %v7664, %v7660
    %v8689 = vpack.c.b16 %v7669, %v7665
    %v8690 = vpack.c.b16 %v7670, %v7666
    %v8691 = vpack.c.b16 %v7671, %v7667
    %v8692 = vpack.c.b16 %v7672, %v7668
    %v8693 = vpack.c.b16 %v7677, %v7673
    %v8694 = vpack.c.b16 %v7678, %v7674
    %v8695 = vpack.c.b16 %v7679, %v7675
    %v8696 = vpack.c.b16 %v7680, %v7676
    %v8697 = vpack.c.b16 %v7685, %v7681
    %v8698 = vpack.c.b16 %v7686, %v7682
    %v8699 = vpack.c.b16 %v7687, %v7683
    %v8700 = vpack.c.b16 %v7688, %v7684
    %v8701 = vpack.c.b16 %v7693, %v7689
    %v8702 = vpack.c.b16 %v7694, %v7690
    %v8703 = vpack.c.b16 %v7695, %v7691
    %v8704 = vpack.c.b16 %v7696, %v7692
    %v8705 = vpack.c.b16 %v7701, %v7697
    %v8706 = vpack.c.b16 %v7702, %v7698
    %v8707 = vpack.c.b16 %v7703, %v7699
    %v8708 = vpack.c.b16 %v7704, %v7700
    %v8709 = vpack.c.b16 %v7709, %v7705
    %v8710 = vpack.c.b16 %v7710, %v7706
    %v8711 = vpack.c.b16 %v7711, %v7707
    %v8712 = vpack.c.b16 %v7712, %v7708
    %v8713 = vpack.c.b16 %v7717, %v7713
    %v8714 = vpack.c.b16 %v7718, %v7714
    %v8715 = vpack.c.b16 %v7719, %v7715
    %v8716 = vpack.c.b16 %v7720, %v7716
    %v8717 = vpack.c.b16 %v7725, %v7721
    %v8718 = vpack.c.b16 %v7726, %v7722
    %v8719 = vpack.c.b16 %v7727, %v7723
    %v8720 = vpack.c.b16 %v7728, %v7724
    %v8721 = vpack.c.b16 %v7733, %v7729
    %v8722 = vpack.c.b16 %v7734, %v7730
    %v8723 = vpack.c.b16 %v7735, %v7731
    %v8724 = vpack.c.b16 %v7736, %v7732
    %v8725 = vpack.c.b16 %v7741, %v7737
    %v8726 = vpack.c.b16 %v7742, %v7738
    %v8727 = vpack.c.b16 %v7743, %v7739
    %v8728 = vpack.c.b16 %v7744, %v7740
    %v8729 = vpack.c.b16 %v7749, %v7745
    %v8730 = vpack.c.b16 %v7750, %v7746
    %v8731 = vpack.c.b16 %v7751, %v7747
    %v8732 = vpack.c.b16 %v7752, %v7748
    %v8733 = vpack.c.b16 %v7757, %v7753
    %v8734 = vpack.c.b16 %v7758, %v7754
    %v8735 = vpack.c.b16 %v7759, %v7755
    %v8736 = vpack.c.b16 %v7760, %v7756
    %v8737 = vpack.c.b16 %v7765, %v7761
    %v8738 = vpack.c.b16 %v7766, %v7762
    %v8739 = vpack.c.b16 %v7767, %v7763
    %v8740 = vpack.c.b16 %v7768, %v7764
    %v8741 = vpack.c.b16 %v7773, %v7769
    %v8742 = vpack.c.b16 %v7774, %v7770
    %v8743 = vpack.c.b16 %v7775, %v7771
    %v8744 = vpack.c.b16 %v7776, %v7772
    %v8745 = vpack.c.b16 %v7781, %v7777
    %v8746 = vpack.c.b16 %v7782, %v7778
    %v8747 = vpack.c.b16 %v7783, %v7779
    %v8748 = vpack.c.b16 %v7784, %v7780
    %v8749 = vpack.c.b16 %v7789, %v7785
    %v8750 = vpack.c.b16 %v7790, %v7786
    %v8751 = vpack.c.b16 %v7791, %v7787
    %v8752 = vpack.c.b16 %v7792, %v7788
    %v8753 = vpack.c.b16 %v7797, %v7793
    %v8754 = vpack.c.b16 %v7798, %v7794
    %v8755 = vpack.c.b16 %v7799, %v7795
    %v8756 = vpack.c.b16 %v7800, %v7796
    %v8757 = vpack.c.b16 %v7805, %v7801
    %v8758 = vpack.c.b16 %v7806, %v7802
    %v8759 = vpack.c.b16 %v7807, %v7803
    %v8760 = vpack.c.b16 %v7808, %v7804
    %v8761 = vpack.c.b16 %v7813, %v7809
    %v8762 = vpack.c.b16 %v7814, %v7810
    %v8763 = vpack.c.b16 %v7815, %v7811
    %v8764 = vpack.c.b16 %v7816, %v7812
    %v8765 = vpack.c.b16 %v7821, %v7817
    %v8766 = vpack.c.b16 %v7822, %v7818
    %v8767 = vpack.c.b16 %v7823, %v7819
    %v8768 = vpack.c.b16 %v7824, %v7820
    %v8769 = vpack.c.b16 %v7829, %v7825
    %v8770 = vpack.c.b16 %v7830, %v7826
    %v8771 = vpack.c.b16 %v7831, %v7827
    %v8772 = vpack.c.b16 %v7832, %v7828
    %v8773 = vpack.c.b16 %v7837, %v7833
    %v8774 = vpack.c.b16 %v7838, %v7834
    %v8775 = vpack.c.b16 %v7839, %v7835
    %v8776 = vpack.c.b16 %v7840, %v7836
    %v8777 = vpack.c.b16 %v7845, %v7841
    %v8778 = vpack.c.b16 %v7846, %v7842
    %v8779 = vpack.c.b16 %v7847, %v7843
    %v8780 = vpack.c.b16 %v7848, %v7844
    %v8781 = vpack.c.b16 %v7853, %v7849
    %v8782 = vpack.c.b16 %v7854, %v7850
    %v8783 = vpack.c.b16 %v7855, %v7851
    %v8784 = vpack.c.b16 %v7856, %v7852
    %v8785 = vpack.c.b16 %v7861, %v7857
    %v8786 = vpack.c.b16 %v7862, %v7858
    %v8787 = vpack.c.b16 %v7863, %v7859
    %v8788 = vpack.c.b16 %v7864, %v7860
    %v8789 = vpack.c.b16 %v7869, %v7865
    %v8790 = vpack.c.b16 %v7870, %v7866
    %v8791 = vpack.c.b16 %v7871, %v7867
    %v8792 = vpack.c.b16 %v7872, %v7868
    %v8793 = vpack.c.b16 %v7877, %v7873
    %v8794 = vpack.c.b16 %v7878, %v7874
    %v8795 = vpack.c.b16 %v7879, %v7875
    %v8796 = vpack.c.b16 %v7880, %v7876
    %v8797 = vpack.c.b16 %v7885, %v7881
    %v8798 = vpack.c.b16 %v7886, %v7882
    %v8799 = vpack.c.b16 %v7887, %v7883
    %v8800 = vpack.c.b16 %v7888, %v7884
    %v8801 = vpack.c.b16 %v7893, %v7889
    %v8802 = vpack.c.b16 %v7894, %v7890
    %v8803 = vpack.c.b16 %v7895, %v7891
    %v8804 = vpack.c.b16 %v7896, %v7892
    %v8805 = vpack.c.b16 %v7901, %v7897
    %v8806 = vpack.c.b16 %v7902, %v7898
    %v8807 = vpack.c.b16 %v7903, %v7899
    %v8808 = vpack.c.b16 %v7904, %v7900
    %v8809 = vpack.c.b16 %v7909, %v7905
    %v8810 = vpack.c.b16 %v7910, %v7906
    %v8811 = vpack.c.b16 %v7911, %v7907
    %v8812 = vpack.c.b16 %v7912, %v7908
    %v8813 = vpack.c.b16 %v7917, %v7913
    %v8814 = vpack.c.b16 %v7918, %v7914
    %v8815 = vpack.c.b16 %v7919, %v7915
    %v8816 = vpack.c.b16 %v7920, %v7916
    %v8817 = vpack.c.b16 %v7925, %v7921
    %v8818 = vpack.c.b16 %v7926, %v7922
    %v8819 = vpack.c.b16 %v7927, %v7923
    %v8820 = vpack.c.b16 %v7928, %v7924
    %v8821 = vpack.c.b16 %v7933, %v7929
    %v8822 = vpack.c.b16 %v7934, %v7930
    %v8823 = vpack.c.b16 %v7935, %v7931
    %v8824 = vpack.c.b16 %v7936, %v7932
    %v8825 = vpack.c.b16 %v7941, %v7937
    %v8826 = vpack.c.b16 %v7942, %v7938
    %v8827 = vpack.c.b16 %v7943, %v7939
    %v8828 = vpack.c.b16 %v7944, %v7940
    %v8829 = vpack.c.b16 %v7949, %v7945
    %v8830 = vpack.c.b16 %v7950, %v7946
    %v8831 = vpack.c.b16 %v7951, %v7947
    %v8832 = vpack.c.b16 %v7952, %v7948
    %v8833 = vpack.c.b16 %v7957, %v7953
    %v8834 = vpack.c.b16 %v7958, %v7954
    %v8835 = vpack.c.b16 %v7959, %v7955
    %v8836 = vpack.c.b16 %v7960, %v7956
    %v8837 = vpack.c.b16 %v7965, %v7961
    %v8838 = vpack.c.b16 %v7966, %v7962
    %v8839 = vpack.c.b16 %v7967, %v7963
    %v8840 = vpack.c.b16 %v7968, %v7964
    %v8841 = vpack.c.b16 %v7973, %v7969
    %v8842 = vpack.c.b16 %v7974, %v7970
    %v8843 = vpack.c.b16 %v7975, %v7971
    %v8844 = vpack.c.b16 %v7976, %v7972
    %v8845 = vpack.c.b16 %v7981, %v7977
    %v8846 = vpack.c.b16 %v7982, %v7978
    %v8847 = vpack.c.b16 %v7983, %v7979
    %v8848 = vpack.c.b16 %v7984, %v7980
    %v8849 = vpack.c.b16 %v7989, %v7985
    %v8850 = vpack.c.b16 %v7990, %v7986
    %v8851 = vpack.c.b16 %v7991, %v7987
    %v8852 = vpack.c.b16 %v7992, %v7988
    %v8853 = vpack.c.b16 %v7997, %v7993
    %v8854 = vpack.c.b16 %v7998, %v7994
    %v8855 = vpack.c.b16 %v7999, %v7995
    %v8856 = vpack.c.b16 %v8000, %v7996
    %v8857 = vpack.c.b16 %v8005, %v8001
    %v8858 = vpack.c.b16 %v8006, %v8002
    %v8859 = vpack.c.b16 %v8007, %v8003
    %v8860 = vpack.c.b16 %v8008, %v8004
    %v8861 = vpack.c.b16 %v8013, %v8009
    %v8862 = vpack.c.b16 %v8014, %v8010
    %v8863 = vpack.c.b16 %v8015, %v8011
    %v8864 = vpack.c.b16 %v8016, %v8012
    %v8865 = vpack.c.b16 %v8021, %v8017
    %v8866 = vpack.c.b16 %v8022, %v8018
    %v8867 = vpack.c.b16 %v8023, %v8019
    %v8868 = vpack.c.b16 %v8024, %v8020
    %v8869 = vpack.c.b16 %v8029, %v8025
    %v8870 = vpack.c.b16 %v8030, %v8026
    %v8871 = vpack.c.b16 %v8031, %v8027
    %v8872 = vpack.c.b16 %v8032, %v8028
    %v8873 = vpack.c.b16 %v8037, %v8033
    %v8874 = vpack.c.b16 %v8038, %v8034
    %v8875 = vpack.c.b16 %v8039, %v8035
    %v8876 = vpack.c.b16 %v8040, %v8036
    %v8877 = vpack.c.b16 %v8045, %v8041
    %v8878 = vpack.c.b16 %v8046, %v8042
    %v8879 = vpack.c.b16 %v8047, %v8043
    %v8880 = vpack.c.b16 %v8048, %v8044
    %v8881 = vpack.c.b16 %v8053, %v8049
    %v8882 = vpack.c.b16 %v8054, %v8050
    %v8883 = vpack.c.b16 %v8055, %v8051
    %v8884 = vpack.c.b16 %v8056, %v8052
    %v8885 = vpack.c.b16 %v8061, %v8057
    %v8886 = vpack.c.b16 %v8062, %v8058
    %v8887 = vpack.c.b16 %v8063, %v8059
    %v8888 = vpack.c.b16 %v8064, %v8060
    %v8889 = vpack.c.b16 %v8069, %v8065
    %v8890 = vpack.c.b16 %v8070, %v8066
    %v8891 = vpack.c.b16 %v8071, %v8067
    %v8892 = vpack.c.b16 %v8072, %v8068
    %v8893 = vpack.c.b16 %v8077, %v8073
    %v8894 = vpack.c.b16 %v8078, %v8074
    %v8895 = vpack.c.b16 %v8079, %v8075
    %v8896 = vpack.c.b16 %v8080, %v8076
    %v8897 = vpack.c.b16 %v8085, %v8081
    %v8898 = vpack.c.b16 %v8086, %v8082
    %v8899 = vpack.c.b16 %v8087, %v8083
    %v8900 = vpack.c.b16 %v8088, %v8084
    %v8901 = vpack.c.b16 %v8093, %v8089
    %v8902 = vpack.c.b16 %v8094, %v8090
    %v8903 = vpack.c.b16 %v8095, %v8091
    %v8904 = vpack.c.b16 %v8096, %v8092
    %v8905 = vpack.c.b16 %v8101, %v8097
    %v8906 = vpack.c.b16 %v8102, %v8098
    %v8907 = vpack.c.b16 %v8103, %v8099
    %v8908 = vpack.c.b16 %v8104, %v8100
    %v8909 = vpack.c.b16 %v8109, %v8105
    %v8910 = vpack.c.b16 %v8110, %v8106
    %v8911 = vpack.c.b16 %v8111, %v8107
    %v8912 = vpack.c.b16 %v8112, %v8108
    %v8913 = vpack.c.b16 %v8117, %v8113
    %v8914 = vpack.c.b16 %v8118, %v8114
    %v8915 = vpack.c.b16 %v8119, %v8115
    %v8916 = vpack.c.b16 %v8120, %v8116
    %v8917 = vpack.c.b16 %v8125, %v8121
    %v8918 = vpack.c.b16 %v8126, %v8122
    %v8919 = vpack.c.b16 %v8127, %v8123
    %v8920 = vpack.c.b16 %v8128, %v8124
    %v8921 = vpack.c.b16 %v8133, %v8129
    %v8922 = vpack.c.b16 %v8134, %v8130
    %v8923 = vpack.c.b16 %v8135, %v8131
    %v8924 = vpack.c.b16 %v8136, %v8132
    %v8925 = vpack.c.b16 %v8141, %v8137
    %v8926 = vpack.c.b16 %v8142, %v8138
    %v8927 = vpack.c.b16 %v8143, %v8139
    %v8928 = vpack.c.b16 %v8144, %v8140
    %v9714 = vlaneseq
    %v9715 = vshrl.u32 %v9714, 7
    %v9716 = vsub.s32 0, %v9715
    %v9717 = vrot.slane %v5603, %v9716
    %v9718 = vlaneseq
    %v9719 = vshrl.u32 %v9718, 7
    %v9720 = vsub.s32 1, %v9719
    %v9721 = vrot.slane %v5603, %v9720
    %v9722 = vlaneseq
    %v9723 = vshrl.u32 %v9722, 7
    %v9724 = vsub.s32 2, %v9723
    %v9725 = vrot.slane %v5603, %v9724
    %v9726 = vlaneseq
    %v9727 = vshrl.u32 %v9726, 7
    %v9728 = vsub.s32 3, %v9727
    %v9729 = vrot.slane %v5603, %v9728
    %v9735 = vsel %vm2858, %v5768, 0
    %9737 = vmatprep.subr.bf16.mxu0 %v8146
    %9738 = vmatpush1.bf16.msra.mxu0 %v8145
    %9739 = vmatprep.subr.bf16.mxu0 %v8150
    %9740 = vmatpush1.bf16.msra.mxu0 %v8149
    %9741 = vmatprep.subr.bf16.mxu0 %v8154
    %9742 = vmatpush1.bf16.msra.mxu0 %v8153
    %9743 = vmatprep.subr.bf16.mxu0 %v8158
    %9744 = vmatpush1.bf16.msra.mxu0 %v8157
    %9745 = vmatprep.subr.bf16.mxu0 %v8162
    %9746 = vmatpush1.bf16.msra.mxu0 %v8161
    %9747 = vmatprep.subr.bf16.mxu0 %v8166
    %9748 = vmatpush1.bf16.msra.mxu0 %v8165
    %9749 = vmatprep.subr.bf16.mxu0 %v8170
    %9750 = vmatpush1.bf16.msra.mxu0 %v8169
    %9751 = vmatprep.subr.bf16.mxu0 %v8174
    %9752 = vmatpush1.bf16.msra.mxu0 %v8173
    %9753 = vmatprep.subr.bf16.mxu0 %v8178
    %9754 = vmatpush1.bf16.msra.mxu0 %v8177
    %9755 = vmatprep.subr.bf16.mxu0 %v8182
    %9756 = vmatpush1.bf16.msra.mxu0 %v8181
    %9757 = vmatprep.subr.bf16.mxu0 %v8186
    %9758 = vmatpush1.bf16.msra.mxu0 %v8185
    %9759 = vmatprep.subr.bf16.mxu0 %v8190
    %9760 = vmatpush1.bf16.msra.mxu0 %v8189
    %9761 = vmatprep.subr.bf16.mxu0 %v8194
    %9762 = vmatpush1.bf16.msra.mxu0 %v8193
    %9763 = vmatprep.subr.bf16.mxu0 %v8198
    %9764 = vmatpush1.bf16.msra.mxu0 %v8197
    %9765 = vmatprep.subr.bf16.mxu0 %v8202
    %9766 = vmatpush1.bf16.msra.mxu0 %v8201
    %9767 = vmatprep.subr.bf16.mxu0 %v8206
    %9768 = vmatpush1.bf16.msra.mxu0 %v8205
    %9769 = vmatprep.mubr.bf16.mxu0 %v5645
    %9770 = vmatmul.mubr.bf16.gmra.mrb[0].mxu0 %v5631
    %v9771 = vpop.f32.mrb[0].mxu0
    %v9772 = vadd.f32 %v9717, %v9771
    %v9773 = vpop.f32.mrb[0].mxu0
    %v9774 = vadd.f32 %v9721, %v9773
    %v9775 = vpop.f32.mrb[0].mxu0
    %v9776 = vpop.f32.mrb[0].mxu0
    %9777 = vdwg.mxu0
    %9778 = vmatprep.subr.bf16.mxu0 %v8210
    %9779 = vmatpush1.bf16.msra.mxu0 %v8209
    %9780 = vmatprep.subr.bf16.mxu0 %v8214
    %9781 = vmatpush1.bf16.msra.mxu0 %v8213
    %9782 = vmatprep.subr.bf16.mxu0 %v8218
    %9783 = vmatpush1.bf16.msra.mxu0 %v8217
    %9784 = vmatprep.subr.bf16.mxu0 %v8222
    %9785 = vmatpush1.bf16.msra.mxu0 %v8221
    %9786 = vmatprep.subr.bf16.mxu0 %v8226
    %9787 = vmatpush1.bf16.msra.mxu0 %v8225
    %9788 = vmatprep.subr.bf16.mxu0 %v8230
    %9789 = vmatpush1.bf16.msra.mxu0 %v8229
    %9790 = vmatprep.subr.bf16.mxu0 %v8234
    %9791 = vmatpush1.bf16.msra.mxu0 %v8233
    %9792 = vmatprep.subr.bf16.mxu0 %v8238
    %9793 = vmatpush1.bf16.msra.mxu0 %v8237
    %9794 = vmatprep.subr.bf16.mxu0 %v8242
    %9795 = vmatpush1.bf16.msra.mxu0 %v8241
    %9796 = vmatprep.subr.bf16.mxu0 %v8246
    %9797 = vmatpush1.bf16.msra.mxu0 %v8245
    %9798 = vmatprep.subr.bf16.mxu0 %v8250
    %9799 = vmatpush1.bf16.msra.mxu0 %v8249
    %9800 = vmatprep.subr.bf16.mxu0 %v8254
    %9801 = vmatpush1.bf16.msra.mxu0 %v8253
    %9802 = vmatprep.subr.bf16.mxu0 %v8258
    %9803 = vmatpush1.bf16.msra.mxu0 %v8257
    %9804 = vmatprep.subr.bf16.mxu0 %v8262
    %9805 = vmatpush1.bf16.msra.mxu0 %v8261
    %9806 = vmatprep.subr.bf16.mxu0 %v8266
    %9807 = vmatpush1.bf16.msra.mxu0 %v8265
    %9808 = vmatprep.subr.bf16.mxu0 %v8270
    %9809 = vmatpush1.bf16.msra.mxu0 %v8269
    %9810 = vmatprep.mubr.bf16.mxu0 %v5655
    %9811 = vmatmul.mubr.bf16.gmra.mrb[0].mxu0 %v5653
    %v9812 = vpop.f32.mrb[0].mxu0
    %v9813 = vadd.f32 %v9772, %v9812
    %v9814 = vpop.f32.mrb[0].mxu0
    %v9815 = vadd.f32 %v9774, %v9814
    %v9816 = vpop.f32.mrb[0].mxu0
    %v9817 = vpop.f32.mrb[0].mxu0
    %9818 = vdwg.mxu0
    %9819 = vmatprep.subr.bf16.mxu0 %v8274
    %9820 = vmatpush1.bf16.msra.mxu0 %v8273
    %9821 = vmatprep.subr.bf16.mxu0 %v8278
    %9822 = vmatpush1.bf16.msra.mxu0 %v8277
    %9823 = vmatprep.subr.bf16.mxu0 %v8282
    %9824 = vmatpush1.bf16.msra.mxu0 %v8281
    %9825 = vmatprep.subr.bf16.mxu0 %v8286
    %9826 = vmatpush1.bf16.msra.mxu0 %v8285
    %9827 = vmatprep.subr.bf16.mxu0 %v8290
    %9828 = vmatpush1.bf16.msra.mxu0 %v8289
    %9829 = vmatprep.subr.bf16.mxu0 %v8294
    %9830 = vmatpush1.bf16.msra.mxu0 %v8293
    %9831 = vmatprep.subr.bf16.mxu0 %v8298
    %9832 = vmatpush1.bf16.msra.mxu0 %v8297
    %9833 = vmatprep.subr.bf16.mxu0 %v8302
    %9834 = vmatpush1.bf16.msra.mxu0 %v8301
    %9835 = vmatprep.subr.bf16.mxu0 %v8306
    %9836 = vmatpush1.bf16.msra.mxu0 %v8305
    %9837 = vmatprep.subr.bf16.mxu0 %v8310
    %9838 = vmatpush1.bf16.msra.mxu0 %v8309
    %9839 = vmatprep.subr.bf16.mxu0 %v8314
    %9840 = vmatpush1.bf16.msra.mxu0 %v8313
    %9841 = vmatprep.subr.bf16.mxu0 %v8318
    %9842 = vmatpush1.bf16.msra.mxu0 %v8317
    %9843 = vmatprep.subr.bf16.mxu0 %v8322
    %9844 = vmatpush1.bf16.msra.mxu0 %v8321
    %9845 = vmatprep.subr.bf16.mxu0 %v8326
    %9846 = vmatpush1.bf16.msra.mxu0 %v8325
    %9847 = vmatprep.subr.bf16.mxu0 %v8330
    %9848 = vmatpush1.bf16.msra.mxu0 %v8329
    %9849 = vmatprep.subr.bf16.mxu0 %v8334
    %9850 = vmatpush1.bf16.msra.mxu0 %v8333
    %9851 = vmatprep.mubr.bf16.mxu0 %v5652
    %9852 = vmatmul.mubr.bf16.gmra.mrb[0].mxu0 %v5638
    %v9853 = vpop.f32.mrb[0].mxu0
    %v9854 = vadd.f32 %v9813, %v9853
    %v9855 = vpop.f32.mrb[0].mxu0
    %v9856 = vadd.f32 %v9815, %v9855
    %v9857 = vpop.f32.mrb[0].mxu0
    %v9858 = vpop.f32.mrb[0].mxu0
    %9859 = vdwg.mxu0
    %9860 = vmatprep.subr.bf16.mxu0 %v8338
    %9861 = vmatpush1.bf16.msra.mxu0 %v8337
    %9862 = vmatprep.subr.bf16.mxu0 %v8342
    %9863 = vmatpush1.bf16.msra.mxu0 %v8341
    %9864 = vmatprep.subr.bf16.mxu0 %v8346
    %9865 = vmatpush1.bf16.msra.mxu0 %v8345
    %9866 = vmatprep.subr.bf16.mxu0 %v8350
    %9867 = vmatpush1.bf16.msra.mxu0 %v8349
    %9868 = vmatprep.subr.bf16.mxu0 %v8354
    %9869 = vmatpush1.bf16.msra.mxu0 %v8353
    %9870 = vmatprep.subr.bf16.mxu0 %v8358
    %9871 = vmatpush1.bf16.msra.mxu0 %v8357
    %9872 = vmatprep.subr.bf16.mxu0 %v8362
    %9873 = vmatpush1.bf16.msra.mxu0 %v8361
    %9874 = vmatprep.subr.bf16.mxu0 %v8366
    %9875 = vmatpush1.bf16.msra.mxu0 %v8365
    %9876 = vmatprep.subr.bf16.mxu0 %v8370
    %9877 = vmatpush1.bf16.msra.mxu0 %v8369
    %9878 = vmatprep.subr.bf16.mxu0 %v8374
    %9879 = vmatpush1.bf16.msra.mxu0 %v8373
    %9880 = vmatprep.subr.bf16.mxu0 %v8378
    %9881 = vmatpush1.bf16.msra.mxu0 %v8377
    %9882 = vmatprep.subr.bf16.mxu0 %v8382
    %9883 = vmatpush1.bf16.msra.mxu0 %v8381
    %9884 = vmatprep.subr.bf16.mxu0 %v8386
    %9885 = vmatpush1.bf16.msra.mxu0 %v8385
    %9886 = vmatprep.subr.bf16.mxu0 %v8390
    %9887 = vmatpush1.bf16.msra.mxu0 %v8389
    %9888 = vmatprep.subr.bf16.mxu0 %v8394
    %9889 = vmatpush1.bf16.msra.mxu0 %v8393
    %9890 = vmatprep.subr.bf16.mxu0 %v8398
    %9891 = vmatpush1.bf16.msra.mxu0 %v8397
    %9892 = vmatprep.mubr.bf16.mxu0 %v5656
    %9893 = vmatmul.mubr.bf16.gmra.mrb[0].mxu0 %v5654
    %v9894 = vpop.f32.mrb[0].mxu0
    %v9895 = vadd.f32 %v9854, %v9894
    %v9896 = vpop.f32.mrb[0].mxu0
    %v9897 = vadd.f32 %v9856, %v9896
    %v9898 = vpop.f32.mrb[0].mxu0
    %v9899 = vpop.f32.mrb[0].mxu0
    %9900 = vdwg.mxu0
    %9901 = vmatprep.subr.bf16.mxu0 %v8402
    %9902 = vmatpush1.bf16.msra.mxu0 %v8401
    %9903 = vmatprep.subr.bf16.mxu0 %v8406
    %9904 = vmatpush1.bf16.msra.mxu0 %v8405
    %9905 = vmatprep.subr.bf16.mxu0 %v8410
    %9906 = vmatpush1.bf16.msra.mxu0 %v8409
    %9907 = vmatprep.subr.bf16.mxu0 %v8414
    %9908 = vmatpush1.bf16.msra.mxu0 %v8413
    %9909 = vmatprep.subr.bf16.mxu0 %v8418
    %9910 = vmatpush1.bf16.msra.mxu0 %v8417
    %9911 = vmatprep.subr.bf16.mxu0 %v8422
    %9912 = vmatpush1.bf16.msra.mxu0 %v8421
    %9913 = vmatprep.subr.bf16.mxu0 %v8426
    %9914 = vmatpush1.bf16.msra.mxu0 %v8425
    %9915 = vmatprep.subr.bf16.mxu0 %v8430
    %9916 = vmatpush1.bf16.msra.mxu0 %v8429
    %9917 = vmatprep.subr.bf16.mxu0 %v8434
    %9918 = vmatpush1.bf16.msra.mxu0 %v8433
    %9919 = vmatprep.subr.bf16.mxu0 %v8438
    %9920 = vmatpush1.bf16.msra.mxu0 %v8437
    %9921 = vmatprep.subr.bf16.mxu0 %v8442
    %9922 = vmatpush1.bf16.msra.mxu0 %v8441
    %9923 = vmatprep.subr.bf16.mxu0 %v8446
    %9924 = vmatpush1.bf16.msra.mxu0 %v8445
    %9925 = vmatprep.subr.bf16.mxu0 %v8450
    %9926 = vmatpush1.bf16.msra.mxu0 %v8449
    %9927 = vmatprep.subr.bf16.mxu0 %v8454
    %9928 = vmatpush1.bf16.msra.mxu0 %v8453
    %9929 = vmatprep.subr.bf16.mxu0 %v8458
    %9930 = vmatpush1.bf16.msra.mxu0 %v8457
    %9931 = vmatprep.subr.bf16.mxu0 %v8462
    %9932 = vmatpush1.bf16.msra.mxu0 %v8461
    %9933 = vmatprep.mubr.bf16.mxu0 %v5694
    %9934 = vmatmul.mubr.bf16.gmra.mrb[0].mxu0 %v5680
    %v9935 = vpop.f32.mrb[0].mxu0
    %v9936 = vadd.f32 %v9895, %v9935
    %v9937 = vpop.f32.mrb[0].mxu0
    %v9938 = vadd.f32 %v9897, %v9937
    %v9939 = vpop.f32.mrb[0].mxu0
    %v9940 = vpop.f32.mrb[0].mxu0
    %9941 = vdwg.mxu0
    %9942 = vmatprep.subr.bf16.mxu0 %v8466
    %9943 = vmatpush1.bf16.msra.mxu0 %v8465
    %9944 = vmatprep.subr.bf16.mxu0 %v8470
    %9945 = vmatpush1.bf16.msra.mxu0 %v8469
    %9946 = vmatprep.subr.bf16.mxu0 %v8474
    %9947 = vmatpush1.bf16.msra.mxu0 %v8473
    %9948 = vmatprep.subr.bf16.mxu0 %v8478
    %9949 = vmatpush1.bf16.msra.mxu0 %v8477
    %9950 = vmatprep.subr.bf16.mxu0 %v8482
    %9951 = vmatpush1.bf16.msra.mxu0 %v8481
    %9952 = vmatprep.subr.bf16.mxu0 %v8486
    %9953 = vmatpush1.bf16.msra.mxu0 %v8485
    %9954 = vmatprep.subr.bf16.mxu0 %v8490
    %9955 = vmatpush1.bf16.msra.mxu0 %v8489
    %9956 = vmatprep.subr.bf16.mxu0 %v8494
    %9957 = vmatpush1.bf16.msra.mxu0 %v8493
    %9958 = vmatprep.subr.bf16.mxu0 %v8498
    %9959 = vmatpush1.bf16.msra.mxu0 %v8497
    %9960 = vmatprep.subr.bf16.mxu0 %v8502
    %9961 = vmatpush1.bf16.msra.mxu0 %v8501
    %9962 = vmatprep.subr.bf16.mxu0 %v8506
    %9963 = vmatpush1.bf16.msra.mxu0 %v8505
    %9964 = vmatprep.subr.bf16.mxu0 %v8510
    %9965 = vmatpush1.bf16.msra.mxu0 %v8509
    %9966 = vmatprep.subr.bf16.mxu0 %v8514
    %9967 = vmatpush1.bf16.msra.mxu0 %v8513
    %9968 = vmatprep.subr.bf16.mxu0 %v8518
    %9969 = vmatpush1.bf16.msra.mxu0 %v8517
    %9970 = vmatprep.subr.bf16.mxu0 %v8522
    %9971 = vmatpush1.bf16.msra.mxu0 %v8521
    %9972 = vmatprep.subr.bf16.mxu0 %v8526
    %9973 = vmatpush1.bf16.msra.mxu0 %v8525
    %9974 = vmatprep.mubr.bf16.mxu0 %v5704
    %9975 = vmatmul.mubr.bf16.gmra.mrb[0].mxu0 %v5702
    %v9976 = vpop.f32.mrb[0].mxu0
    %v9977 = vadd.f32 %v9936, %v9976
    %v9978 = vpop.f32.mrb[0].mxu0
    %v9979 = vadd.f32 %v9938, %v9978
    %v9980 = vpop.f32.mrb[0].mxu0
    %v9981 = vpop.f32.mrb[0].mxu0
    %9982 = vdwg.mxu0
    %9983 = vmatprep.subr.bf16.mxu0 %v8530
    %9984 = vmatpush1.bf16.msra.mxu0 %v8529
    %9985 = vmatprep.subr.bf16.mxu0 %v8534
    %9986 = vmatpush1.bf16.msra.mxu0 %v8533
    %9987 = vmatprep.subr.bf16.mxu0 %v8538
    %9988 = vmatpush1.bf16.msra.mxu0 %v8537
    %9989 = vmatprep.subr.bf16.mxu0 %v8542
    %9990 = vmatpush1.bf16.msra.mxu0 %v8541
    %9991 = vmatprep.subr.bf16.mxu0 %v8546
    %9992 = vmatpush1.bf16.msra.mxu0 %v8545
    %9993 = vmatprep.subr.bf16.mxu0 %v8550
    %9994 = vmatpush1.bf16.msra.mxu0 %v8549
    %9995 = vmatprep.subr.bf16.mxu0 %v8554
    %9996 = vmatpush1.bf16.msra.mxu0 %v8553
    %9997 = vmatprep.subr.bf16.mxu0 %v8558
    %9998 = vmatpush1.bf16.msra.mxu0 %v8557
    %9999 = vmatprep.subr.bf16.mxu0 %v8562
    %10000 = vmatpush1.bf16.msra.mxu0 %v8561
    %10001 = vmatprep.subr.bf16.mxu0 %v8566
    %10002 = vmatpush1.bf16.msra.mxu0 %v8565
    %10003 = vmatprep.subr.bf16.mxu0 %v8570
    %10004 = vmatpush1.bf16.msra.mxu0 %v8569
    %10005 = vmatprep.subr.bf16.mxu0 %v8574
    %10006 = vmatpush1.bf16.msra.mxu0 %v8573
    %10007 = vmatprep.subr.bf16.mxu0 %v8578
    %10008 = vmatpush1.bf16.msra.mxu0 %v8577
    %10009 = vmatprep.subr.bf16.mxu0 %v8582
    %10010 = vmatpush1.bf16.msra.mxu0 %v8581
    %10011 = vmatprep.subr.bf16.mxu0 %v8586
    %10012 = vmatpush1.bf16.msra.mxu0 %v8585
    %10013 = vmatprep.subr.bf16.mxu0 %v8590
    %10014 = vmatpush1.bf16.msra.mxu0 %v8589
    %10015 = vmatprep.mubr.bf16.mxu0 %v5701
    %10016 = vmatmul.mubr.bf16.gmra.mrb[0].mxu0 %v5687
    %v10017 = vpop.f32.mrb[0].mxu0
    %v10018 = vadd.f32 %v9977, %v10017
    %v10019 = vpop.f32.mrb[0].mxu0
    %v10020 = vadd.f32 %v9979, %v10019
    %v10021 = vpop.f32.mrb[0].mxu0
    %v10022 = vpop.f32.mrb[0].mxu0
    %10023 = vdwg.mxu0
    %10024 = vmatprep.subr.bf16.mxu0 %v8594
    %10025 = vmatpush1.bf16.msra.mxu0 %v8593
    %10026 = vmatprep.subr.bf16.mxu0 %v8598
    %10027 = vmatpush1.bf16.msra.mxu0 %v8597
    %10028 = vmatprep.subr.bf16.mxu0 %v8602
    %10029 = vmatpush1.bf16.msra.mxu0 %v8601
    %10030 = vmatprep.subr.bf16.mxu0 %v8606
    %10031 = vmatpush1.bf16.msra.mxu0 %v8605
    %10032 = vmatprep.subr.bf16.mxu0 %v8610
    %10033 = vmatpush1.bf16.msra.mxu0 %v8609
    %10034 = vmatprep.subr.bf16.mxu0 %v8614
    %10035 = vmatpush1.bf16.msra.mxu0 %v8613
    %10036 = vmatprep.subr.bf16.mxu0 %v8618
    %10037 = vmatpush1.bf16.msra.mxu0 %v8617
    %10038 = vmatprep.subr.bf16.mxu0 %v8622
    %10039 = vmatpush1.bf16.msra.mxu0 %v8621
    %10040 = vmatprep.subr.bf16.mxu0 %v8626
    %10041 = vmatpush1.bf16.msra.mxu0 %v8625
    %10042 = vmatprep.subr.bf16.mxu0 %v8630
    %10043 = vmatpush1.bf16.msra.mxu0 %v8629
    %10044 = vmatprep.subr.bf16.mxu0 %v8634
    %10045 = vmatpush1.bf16.msra.mxu0 %v8633
    %10046 = vmatprep.subr.bf16.mxu0 %v8638
    %10047 = vmatpush1.bf16.msra.mxu0 %v8637
    %10048 = vmatprep.subr.bf16.mxu0 %v8642
    %10049 = vmatpush1.bf16.msra.mxu0 %v8641
    %10050 = vmatprep.subr.bf16.mxu0 %v8646
    %10051 = vmatpush1.bf16.msra.mxu0 %v8645
    %10052 = vmatprep.subr.bf16.mxu0 %v8650
    %10053 = vmatpush1.bf16.msra.mxu0 %v8649
    %10054 = vmatprep.subr.bf16.mxu0 %v8654
    %10055 = vmatpush1.bf16.msra.mxu0 %v8653
    %10056 = vmatprep.mubr.bf16.mxu0 %v5705
    %10057 = vmatmul.mubr.bf16.gmra.mrb[0].mxu0 %v5703
    %v10058 = vpop.f32.mrb[0].mxu0
    %v10059 = vadd.f32 %v10018, %v10058
    %v10060 = vpop.f32.mrb[0].mxu0
    %v10061 = vadd.f32 %v10020, %v10060
    %v10062 = vpop.f32.mrb[0].mxu0
    %v10063 = vpop.f32.mrb[0].mxu0
    %10064 = vdwg.mxu0
    %10065 = vmatprep.subr.bf16.mxu0 %v8658
    %10066 = vmatpush1.bf16.msra.mxu0 %v8657
    %10067 = vmatprep.subr.bf16.mxu0 %v8662
    %10068 = vmatpush1.bf16.msra.mxu0 %v8661
    %10069 = vmatprep.subr.bf16.mxu0 %v8666
    %10070 = vmatpush1.bf16.msra.mxu0 %v8665
    %10071 = vmatprep.subr.bf16.mxu0 %v8670
    %10072 = vmatpush1.bf16.msra.mxu0 %v8669
    %10073 = vmatprep.subr.bf16.mxu0 %v8674
    %10074 = vmatpush1.bf16.msra.mxu0 %v8673
    %10075 = vmatprep.subr.bf16.mxu0 %v8678
    %10076 = vmatpush1.bf16.msra.mxu0 %v8677
    %10077 = vmatprep.subr.bf16.mxu0 %v8682
    %10078 = vmatpush1.bf16.msra.mxu0 %v8681
    %10079 = vmatprep.subr.bf16.mxu0 %v8686
    %10080 = vmatpush1.bf16.msra.mxu0 %v8685
    %10081 = vmatprep.subr.bf16.mxu0 %v8690
    %10082 = vmatpush1.bf16.msra.mxu0 %v8689
    %10083 = vmatprep.subr.bf16.mxu0 %v8694
    %10084 = vmatpush1.bf16.msra.mxu0 %v8693
    %10085 = vmatprep.subr.bf16.mxu0 %v8698
    %10086 = vmatpush1.bf16.msra.mxu0 %v8697
    %10087 = vmatprep.subr.bf16.mxu0 %v8702
    %10088 = vmatpush1.bf16.msra.mxu0 %v8701
    %10089 = vmatprep.subr.bf16.mxu0 %v8706
    %10090 = vmatpush1.bf16.msra.mxu0 %v8705
    %10091 = vmatprep.subr.bf16.mxu0 %v8710
    %10092 = vmatpush1.bf16.msra.mxu0 %v8709
    %10093 = vmatprep.subr.bf16.mxu0 %v8714
    %10094 = vmatpush1.bf16.msra.mxu0 %v8713
    %10095 = vmatprep.subr.bf16.mxu0 %v8718
    %10096 = vmatpush1.bf16.msra.mxu0 %v8717
    %10097 = vmatprep.mubr.bf16.mxu0 %v5743
    %10098 = vmatmul.mubr.bf16.gmra.mrb[0].mxu0 %v5729
    %v10099 = vpop.f32.mrb[0].mxu0
    %v10100 = vadd.f32 %v10059, %v10099
    %v10101 = vpop.f32.mrb[0].mxu0
    %v10102 = vadd.f32 %v10061, %v10101
    %v10103 = vpop.f32.mrb[0].mxu0
    %v10104 = vpop.f32.mrb[0].mxu0
    %10105 = vdwg.mxu0
    %10106 = vmatprep.subr.bf16.mxu0 %v8722
    %10107 = vmatpush1.bf16.msra.mxu0 %v8721
    %10108 = vmatprep.subr.bf16.mxu0 %v8726
    %10109 = vmatpush1.bf16.msra.mxu0 %v8725
    %10110 = vmatprep.subr.bf16.mxu0 %v8730
    %10111 = vmatpush1.bf16.msra.mxu0 %v8729
    %10112 = vmatprep.subr.bf16.mxu0 %v8734
    %10113 = vmatpush1.bf16.msra.mxu0 %v8733
    %10114 = vmatprep.subr.bf16.mxu0 %v8738
    %10115 = vmatpush1.bf16.msra.mxu0 %v8737
    %10116 = vmatprep.subr.bf16.mxu0 %v8742
    %10117 = vmatpush1.bf16.msra.mxu0 %v8741
    %10118 = vmatprep.subr.bf16.mxu0 %v8746
    %10119 = vmatpush1.bf16.msra.mxu0 %v8745
    %10120 = vmatprep.subr.bf16.mxu0 %v8750
    %10121 = vmatpush1.bf16.msra.mxu0 %v8749
    %10122 = vmatprep.subr.bf16.mxu0 %v8754
    %10123 = vmatpush1.bf16.msra.mxu0 %v8753
    %10124 = vmatprep.subr.bf16.mxu0 %v8758
    %10125 = vmatpush1.bf16.msra.mxu0 %v8757
    %10126 = vmatprep.subr.bf16.mxu0 %v8762
    %10127 = vmatpush1.bf16.msra.mxu0 %v8761
    %10128 = vmatprep.subr.bf16.mxu0 %v8766
    %10129 = vmatpush1.bf16.msra.mxu0 %v8765
    %10130 = vmatprep.subr.bf16.mxu0 %v8770
    %10131 = vmatpush1.bf16.msra.mxu0 %v8769
    %10132 = vmatprep.subr.bf16.mxu0 %v8774
    %10133 = vmatpush1.bf16.msra.mxu0 %v8773
    %10134 = vmatprep.subr.bf16.mxu0 %v8778
    %10135 = vmatpush1.bf16.msra.mxu0 %v8777
    %10136 = vmatprep.subr.bf16.mxu0 %v8782
    %10137 = vmatpush1.bf16.msra.mxu0 %v8781
    %10138 = vmatprep.mubr.bf16.mxu0 %v5753
    %10139 = vmatmul.mubr.bf16.gmra.mrb[0].mxu0 %v5751
    %v10140 = vpop.f32.mrb[0].mxu0
    %v10141 = vadd.f32 %v10100, %v10140
    %v10142 = vpop.f32.mrb[0].mxu0
    %v10143 = vadd.f32 %v10102, %v10142
    %v10144 = vpop.f32.mrb[0].mxu0
    %v10145 = vpop.f32.mrb[0].mxu0
    %10146 = vdwg.mxu0
    %10147 = vmatprep.subr.bf16.mxu0 %v8786
    %10148 = vmatpush1.bf16.msra.mxu0 %v8785
    %10149 = vmatprep.subr.bf16.mxu0 %v8790
    %10150 = vmatpush1.bf16.msra.mxu0 %v8789
    %10151 = vmatprep.subr.bf16.mxu0 %v8794
    %10152 = vmatpush1.bf16.msra.mxu0 %v8793
    %10153 = vmatprep.subr.bf16.mxu0 %v8798
    %10154 = vmatpush1.bf16.msra.mxu0 %v8797
    %10155 = vmatprep.subr.bf16.mxu0 %v8802
    %10156 = vmatpush1.bf16.msra.mxu0 %v8801
    %10157 = vmatprep.subr.bf16.mxu0 %v8806
    %10158 = vmatpush1.bf16.msra.mxu0 %v8805
    %10159 = vmatprep.subr.bf16.mxu0 %v8810
    %10160 = vmatpush1.bf16.msra.mxu0 %v8809
    %10161 = vmatprep.subr.bf16.mxu0 %v8814
    %10162 = vmatpush1.bf16.msra.mxu0 %v8813
    %10163 = vmatprep.subr.bf16.mxu0 %v8818
    %10164 = vmatpush1.bf16.msra.mxu0 %v8817
    %10165 = vmatprep.subr.bf16.mxu0 %v8822
    %10166 = vmatpush1.bf16.msra.mxu0 %v8821
    %10167 = vmatprep.subr.bf16.mxu0 %v8826
    %10168 = vmatpush1.bf16.msra.mxu0 %v8825
    %10169 = vmatprep.subr.bf16.mxu0 %v8830
    %10170 = vmatpush1.bf16.msra.mxu0 %v8829
    %10171 = vmatprep.subr.bf16.mxu0 %v8834
    %10172 = vmatpush1.bf16.msra.mxu0 %v8833
    %10173 = vmatprep.subr.bf16.mxu0 %v8838
    %10174 = vmatpush1.bf16.msra.mxu0 %v8837
    %10175 = vmatprep.subr.bf16.mxu0 %v8842
    %10176 = vmatpush1.bf16.msra.mxu0 %v8841
    %10177 = vmatprep.subr.bf16.mxu0 %v8846
    %10178 = vmatpush1.bf16.msra.mxu0 %v8845
    %10179 = vmatprep.mubr.bf16.mxu0 %v5750
    %10180 = vmatmul.mubr.bf16.gmra.mrb[0].mxu0 %v5736
    %v10181 = vpop.f32.mrb[0].mxu0
    %v10182 = vadd.f32 %v10141, %v10181
    %v10183 = vpop.f32.mrb[0].mxu0
    %v10184 = vadd.f32 %v10143, %v10183
    %v10185 = vpop.f32.mrb[0].mxu0
    %v10186 = vpop.f32.mrb[0].mxu0
    %10187 = vdwg.mxu0
    %10188 = vmatprep.subr.bf16.mxu0 %v8850
    %10189 = vmatpush1.bf16.msra.mxu0 %v8849
    %10190 = vmatprep.subr.bf16.mxu0 %v8854
    %10191 = vmatpush1.bf16.msra.mxu0 %v8853
    %10192 = vmatprep.subr.bf16.mxu0 %v8858
    %10193 = vmatpush1.bf16.msra.mxu0 %v8857
    %10194 = vmatprep.subr.bf16.mxu0 %v8862
    %10195 = vmatpush1.bf16.msra.mxu0 %v8861
    %10196 = vmatprep.subr.bf16.mxu0 %v8866
    %10197 = vmatpush1.bf16.msra.mxu0 %v8865
    %10198 = vmatprep.subr.bf16.mxu0 %v8870
    %10199 = vmatpush1.bf16.msra.mxu0 %v8869
    %10200 = vmatprep.subr.bf16.mxu0 %v8874
    %10201 = vmatpush1.bf16.msra.mxu0 %v8873
    %10202 = vmatprep.subr.bf16.mxu0 %v8878
    %10203 = vmatpush1.bf16.msra.mxu0 %v8877
    %10204 = vmatprep.subr.bf16.mxu0 %v8882
    %10205 = vmatpush1.bf16.msra.mxu0 %v8881
    %10206 = vmatprep.subr.bf16.mxu0 %v8886
    %10207 = vmatpush1.bf16.msra.mxu0 %v8885
    %10208 = vmatprep.subr.bf16.mxu0 %v8890
    %10209 = vmatpush1.bf16.msra.mxu0 %v8889
    %10210 = vmatprep.subr.bf16.mxu0 %v8894
    %10211 = vmatpush1.bf16.msra.mxu0 %v8893
    %10212 = vmatprep.subr.bf16.mxu0 %v8898
    %10213 = vmatpush1.bf16.msra.mxu0 %v8897
    %10214 = vmatprep.subr.bf16.mxu0 %v8902
    %10215 = vmatpush1.bf16.msra.mxu0 %v8901
    %10216 = vmatprep.subr.bf16.mxu0 %v8906
    %10217 = vmatpush1.bf16.msra.mxu0 %v8905
    %10218 = vmatprep.subr.bf16.mxu0 %v8910
    %10219 = vmatpush1.bf16.msra.mxu0 %v8909
    %10220 = vmatprep.mubr.bf16.mxu0 %v5754
    %10221 = vmatmul.mubr.bf16.gmra.mrb[0].mxu0 %v5752
    %v10222 = vpop.f32.mrb[0].mxu0
    %v10223 = vadd.f32 %v10182, %v10222
    %v10224 = vpop.f32.mrb[0].mxu0
    %v10225 = vadd.f32 %v10184, %v10224
    %v10226 = vpop.f32.mrb[0].mxu0
    %v10227 = vpop.f32.mrb[0].mxu0
    %10228 = vdwg.mxu0
    %10229 = vmatprep.subr.bf16.mxu0 %v8914
    %10230 = vmatpush1.bf16.msra.mxu0 %v8913
    %10231 = vmatprep.subr.bf16.mxu0 %v8918
    %10232 = vmatpush1.bf16.msra.mxu0 %v8917
    %10233 = vmatprep.subr.bf16.mxu0 %v8922
    %10234 = vmatpush1.bf16.msra.mxu0 %v8921
    %10235 = vmatprep.subr.bf16.mxu0 %v8926
    %10236 = vmatpush1.bf16.msra.mxu0 %v8925
    %10237 = vmatprep.subr.bf16.mxu0 0
    %10238 = vmatpush1.bf16.msra.mxu0 0
    %10239 = vmatprep.subr.bf16.mxu0 0
    %10240 = vmatpush1.bf16.msra.mxu0 0
    %10241 = vmatprep.subr.bf16.mxu0 0
    %10242 = vmatpush1.bf16.msra.mxu0 0
    %10243 = vmatprep.subr.bf16.mxu0 0
    %10244 = vmatpush1.bf16.msra.mxu0 0
    %10245 = vmatprep.subr.bf16.mxu0 0
    %10246 = vmatpush1.bf16.msra.mxu0 0
    %10247 = vmatprep.subr.bf16.mxu0 0
    %10248 = vmatpush1.bf16.msra.mxu0 0
    %10249 = vmatprep.subr.bf16.mxu0 0
    %10250 = vmatpush1.bf16.msra.mxu0 0
    %10251 = vmatprep.subr.bf16.mxu0 0
    %10252 = vmatpush1.bf16.msra.mxu0 0
    %10253 = vmatprep.subr.bf16.mxu0 0
    %10254 = vmatpush1.bf16.msra.mxu0 0
    %10255 = vmatprep.subr.bf16.mxu0 0
    %10256 = vmatpush1.bf16.msra.mxu0 0
    %10257 = vmatprep.subr.bf16.mxu0 0
    %10258 = vmatpush1.bf16.msra.mxu0 0
    %10259 = vmatprep.subr.bf16.mxu0 0
    %10260 = vmatpush1.bf16.msra.mxu0 0
    %10261 = vmatprep.mubr.bf16.mxu0 0
    %10262 = vmatmul.mubr.bf16.gmra.mrb[0].mxu0 %v9735
    %v10263 = vpop.f32.mrb[0].mxu0
    %v10264 = vadd.f32 %v10223, %v10263
    %v10265 = vpop.f32.mrb[0].mxu0
    %v10266 = vadd.f32 %v10225, %v10265
    %v10267 = vpop.f32.mrb[0].mxu0
    %v10268 = vpop.f32.mrb[0].mxu0
    %10269 = vdwg.mxu0
    %10270 = vmatprep.subr.bf16.mxu0 %v8148
    %10271 = vmatpush1.bf16.msra.mxu0 %v8147
    %10272 = vmatprep.subr.bf16.mxu0 %v8152
    %10273 = vmatpush1.bf16.msra.mxu0 %v8151
    %10274 = vmatprep.subr.bf16.mxu0 %v8156
    %10275 = vmatpush1.bf16.msra.mxu0 %v8155
    %10276 = vmatprep.subr.bf16.mxu0 %v8160
    %10277 = vmatpush1.bf16.msra.mxu0 %v8159
    %10278 = vmatprep.subr.bf16.mxu0 %v8164
    %10279 = vmatpush1.bf16.msra.mxu0 %v8163
    %10280 = vmatprep.subr.bf16.mxu0 %v8168
    %10281 = vmatpush1.bf16.msra.mxu0 %v8167
    %10282 = vmatprep.subr.bf16.mxu0 %v8172
    %10283 = vmatpush1.bf16.msra.mxu0 %v8171
    %10284 = vmatprep.subr.bf16.mxu0 %v8176
    %10285 = vmatpush1.bf16.msra.mxu0 %v8175
    %10286 = vmatprep.subr.bf16.mxu0 %v8180
    %10287 = vmatpush1.bf16.msra.mxu0 %v8179
    %10288 = vmatprep.subr.bf16.mxu0 %v8184
    %10289 = vmatpush1.bf16.msra.mxu0 %v8183
    %10290 = vmatprep.subr.bf16.mxu0 %v8188
    %10291 = vmatpush1.bf16.msra.mxu0 %v8187
    %10292 = vmatprep.subr.bf16.mxu0 %v8192
    %10293 = vmatpush1.bf16.msra.mxu0 %v8191
    %10294 = vmatprep.subr.bf16.mxu0 %v8196
    %10295 = vmatpush1.bf16.msra.mxu0 %v8195
    %10296 = vmatprep.subr.bf16.mxu0 %v8200
    %10297 = vmatpush1.bf16.msra.mxu0 %v8199
    %10298 = vmatprep.subr.bf16.mxu0 %v8204
    %10299 = vmatpush1.bf16.msra.mxu0 %v8203
    %10300 = vmatprep.subr.bf16.mxu0 %v8208
    %10301 = vmatpush1.bf16.msra.mxu0 %v8207
    %10302 = vmatprep.mubr.bf16.mxu0 %v5645
    %10303 = vmatmul.mubr.bf16.gmra.mrb[0].mxu0 %v5631
    %v10304 = vpop.f32.mrb[0].mxu0
    %v10305 = vadd.f32 %v9725, %v10304
    %v10306 = vpop.f32.mrb[0].mxu0
    %v10307 = vadd.f32 %v9729, %v10306
    %v10308 = vpop.f32.mrb[0].mxu0
    %v10309 = vpop.f32.mrb[0].mxu0
    %10310 = vdwg.mxu0
    %10311 = vmatprep.subr.bf16.mxu0 %v8212
    %10312 = vmatpush1.bf16.msra.mxu0 %v8211
    %10313 = vmatprep.subr.bf16.mxu0 %v8216
    %10314 = vmatpush1.bf16.msra.mxu0 %v8215
    %10315 = vmatprep.subr.bf16.mxu0 %v8220
    %10316 = vmatpush1.bf16.msra.mxu0 %v8219
    %10317 = vmatprep.subr.bf16.mxu0 %v8224
    %10318 = vmatpush1.bf16.msra.mxu0 %v8223
    %10319 = vmatprep.subr.bf16.mxu0 %v8228
    %10320 = vmatpush1.bf16.msra.mxu0 %v8227
    %10321 = vmatprep.subr.bf16.mxu0 %v8232
    %10322 = vmatpush1.bf16.msra.mxu0 %v8231
    %10323 = vmatprep.subr.bf16.mxu0 %v8236
    %10324 = vmatpush1.bf16.msra.mxu0 %v8235
    %10325 = vmatprep.subr.bf16.mxu0 %v8240
    %10326 = vmatpush1.bf16.msra.mxu0 %v8239
    %10327 = vmatprep.subr.bf16.mxu0 %v8244
    %10328 = vmatpush1.bf16.msra.mxu0 %v8243
    %10329 = vmatprep.subr.bf16.mxu0 %v8248
    %10330 = vmatpush1.bf16.msra.mxu0 %v8247
    %10331 = vmatprep.subr.bf16.mxu0 %v8252
    %10332 = vmatpush1.bf16.msra.mxu0 %v8251
    %10333 = vmatprep.subr.bf16.mxu0 %v8256
    %10334 = vmatpush1.bf16.msra.mxu0 %v8255
    %10335 = vmatprep.subr.bf16.mxu0 %v8260
    %10336 = vmatpush1.bf16.msra.mxu0 %v8259
    %10337 = vmatprep.subr.bf16.mxu0 %v8264
    %10338 = vmatpush1.bf16.msra.mxu0 %v8263
    %10339 = vmatprep.subr.bf16.mxu0 %v8268
    %10340 = vmatpush1.bf16.msra.mxu0 %v8267
    %10341 = vmatprep.subr.bf16.mxu0 %v8272
    %10342 = vmatpush1.bf16.msra.mxu0 %v8271
    %10343 = vmatprep.mubr.bf16.mxu0 %v5655
    %10344 = vmatmul.mubr.bf16.gmra.mrb[0].mxu0 %v5653
    %v10345 = vpop.f32.mrb[0].mxu0
    %v10346 = vadd.f32 %v10305, %v10345
    %v10347 = vpop.f32.mrb[0].mxu0
    %v10348 = vadd.f32 %v10307, %v10347
    %v10349 = vpop.f32.mrb[0].mxu0
    %v10350 = vpop.f32.mrb[0].mxu0
    %10351 = vdwg.mxu0
    %10352 = vmatprep.subr.bf16.mxu0 %v8276
    %10353 = vmatpush1.bf16.msra.mxu0 %v8275
    %10354 = vmatprep.subr.bf16.mxu0 %v8280
    %10355 = vmatpush1.bf16.msra.mxu0 %v8279
    %10356 = vmatprep.subr.bf16.mxu0 %v8284
    %10357 = vmatpush1.bf16.msra.mxu0 %v8283
    %10358 = vmatprep.subr.bf16.mxu0 %v8288
    %10359 = vmatpush1.bf16.msra.mxu0 %v8287
    %10360 = vmatprep.subr.bf16.mxu0 %v8292
    %10361 = vmatpush1.bf16.msra.mxu0 %v8291
    %10362 = vmatprep.subr.bf16.mxu0 %v8296
    %10363 = vmatpush1.bf16.msra.mxu0 %v8295
    %10364 = vmatprep.subr.bf16.mxu0 %v8300
    %10365 = vmatpush1.bf16.msra.mxu0 %v8299
    %10366 = vmatprep.subr.bf16.mxu0 %v8304
    %10367 = vmatpush1.bf16.msra.mxu0 %v8303
    %10368 = vmatprep.subr.bf16.mxu0 %v8308
    %10369 = vmatpush1.bf16.msra.mxu0 %v8307
    %10370 = vmatprep.subr.bf16.mxu0 %v8312
    %10371 = vmatpush1.bf16.msra.mxu0 %v8311
    %10372 = vmatprep.subr.bf16.mxu0 %v8316
    %10373 = vmatpush1.bf16.msra.mxu0 %v8315
    %10374 = vmatprep.subr.bf16.mxu0 %v8320
    %10375 = vmatpush1.bf16.msra.mxu0 %v8319
    %10376 = vmatprep.subr.bf16.mxu0 %v8324
    %10377 = vmatpush1.bf16.msra.mxu0 %v8323
    %10378 = vmatprep.subr.bf16.mxu0 %v8328
    %10379 = vmatpush1.bf16.msra.mxu0 %v8327
    %10380 = vmatprep.subr.bf16.mxu0 %v8332
    %10381 = vmatpush1.bf16.msra.mxu0 %v8331
    %10382 = vmatprep.subr.bf16.mxu0 %v8336
    %10383 = vmatpush1.bf16.msra.mxu0 %v8335
    %10384 = vmatprep.mubr.bf16.mxu0 %v5652
    %10385 = vmatmul.mubr.bf16.gmra.mrb[0].mxu0 %v5638
    %v10386 = vpop.f32.mrb[0].mxu0
    %v10387 = vadd.f32 %v10346, %v10386
    %v10388 = vpop.f32.mrb[0].mxu0
    %v10389 = vadd.f32 %v10348, %v10388
    %v10390 = vpop.f32.mrb[0].mxu0
    %v10391 = vpop.f32.mrb[0].mxu0
    %10392 = vdwg.mxu0
    %10393 = vmatprep.subr.bf16.mxu0 %v8340
    %10394 = vmatpush1.bf16.msra.mxu0 %v8339
    %10395 = vmatprep.subr.bf16.mxu0 %v8344
    %10396 = vmatpush1.bf16.msra.mxu0 %v8343
    %10397 = vmatprep.subr.bf16.mxu0 %v8348
    %10398 = vmatpush1.bf16.msra.mxu0 %v8347
    %10399 = vmatprep.subr.bf16.mxu0 %v8352
    %10400 = vmatpush1.bf16.msra.mxu0 %v8351
    %10401 = vmatprep.subr.bf16.mxu0 %v8356
    %10402 = vmatpush1.bf16.msra.mxu0 %v8355
    %10403 = vmatprep.subr.bf16.mxu0 %v8360
    %10404 = vmatpush1.bf16.msra.mxu0 %v8359
    %10405 = vmatprep.subr.bf16.mxu0 %v8364
    %10406 = vmatpush1.bf16.msra.mxu0 %v8363
    %10407 = vmatprep.subr.bf16.mxu0 %v8368
    %10408 = vmatpush1.bf16.msra.mxu0 %v8367
    %10409 = vmatprep.subr.bf16.mxu0 %v8372
    %10410 = vmatpush1.bf16.msra.mxu0 %v8371
    %10411 = vmatprep.subr.bf16.mxu0 %v8376
    %10412 = vmatpush1.bf16.msra.mxu0 %v8375
    %10413 = vmatprep.subr.bf16.mxu0 %v8380
    %10414 = vmatpush1.bf16.msra.mxu0 %v8379
    %10415 = vmatprep.subr.bf16.mxu0 %v8384
    %10416 = vmatpush1.bf16.msra.mxu0 %v8383
    %10417 = vmatprep.subr.bf16.mxu0 %v8388
    %10418 = vmatpush1.bf16.msra.mxu0 %v8387
    %10419 = vmatprep.subr.bf16.mxu0 %v8392
    %10420 = vmatpush1.bf16.msra.mxu0 %v8391
    %10421 = vmatprep.subr.bf16.mxu0 %v8396
    %10422 = vmatpush1.bf16.msra.mxu0 %v8395
    %10423 = vmatprep.subr.bf16.mxu0 %v8400
    %10424 = vmatpush1.bf16.msra.mxu0 %v8399
    %10425 = vmatprep.mubr.bf16.mxu0 %v5656
    %10426 = vmatmul.mubr.bf16.gmra.mrb[0].mxu0 %v5654
    %v10427 = vpop.f32.mrb[0].mxu0
    %v10428 = vadd.f32 %v10387, %v10427
    %v10429 = vpop.f32.mrb[0].mxu0
    %v10430 = vadd.f32 %v10389, %v10429
    %v10431 = vpop.f32.mrb[0].mxu0
    %v10432 = vpop.f32.mrb[0].mxu0
    %10433 = vdwg.mxu0
    %10434 = vmatprep.subr.bf16.mxu0 %v8404
    %10435 = vmatpush1.bf16.msra.mxu0 %v8403
    %10436 = vmatprep.subr.bf16.mxu0 %v8408
    %10437 = vmatpush1.bf16.msra.mxu0 %v8407
    %10438 = vmatprep.subr.bf16.mxu0 %v8412
    %10439 = vmatpush1.bf16.msra.mxu0 %v8411
    %10440 = vmatprep.subr.bf16.mxu0 %v8416
    %10441 = vmatpush1.bf16.msra.mxu0 %v8415
    %10442 = vmatprep.subr.bf16.mxu0 %v8420
    %10443 = vmatpush1.bf16.msra.mxu0 %v8419
    %10444 = vmatprep.subr.bf16.mxu0 %v8424
    %10445 = vmatpush1.bf16.msra.mxu0 %v8423
    %10446 = vmatprep.subr.bf16.mxu0 %v8428
    %10447 = vmatpush1.bf16.msra.mxu0 %v8427
    %10448 = vmatprep.subr.bf16.mxu0 %v8432
    %10449 = vmatpush1.bf16.msra.mxu0 %v8431
    %10450 = vmatprep.subr.bf16.mxu0 %v8436
    %10451 = vmatpush1.bf16.msra.mxu0 %v8435
    %10452 = vmatprep.subr.bf16.mxu0 %v8440
    %10453 = vmatpush1.bf16.msra.mxu0 %v8439
    %10454 = vmatprep.subr.bf16.mxu0 %v8444
    %10455 = vmatpush1.bf16.msra.mxu0 %v8443
    %10456 = vmatprep.subr.bf16.mxu0 %v8448
    %10457 = vmatpush1.bf16.msra.mxu0 %v8447
    %10458 = vmatprep.subr.bf16.mxu0 %v8452
    %10459 = vmatpush1.bf16.msra.mxu0 %v8451
    %10460 = vmatprep.subr.bf16.mxu0 %v8456
    %10461 = vmatpush1.bf16.msra.mxu0 %v8455
    %10462 = vmatprep.subr.bf16.mxu0 %v8460
    %10463 = vmatpush1.bf16.msra.mxu0 %v8459
    %10464 = vmatprep.subr.bf16.mxu0 %v8464
    %10465 = vmatpush1.bf16.msra.mxu0 %v8463
    %10466 = vmatprep.mubr.bf16.mxu0 %v5694
    %10467 = vmatmul.mubr.bf16.gmra.mrb[0].mxu0 %v5680
    %v10468 = vpop.f32.mrb[0].mxu0
    %v10469 = vadd.f32 %v10428, %v10468
    %v10470 = vpop.f32.mrb[0].mxu0
    %v10471 = vadd.f32 %v10430, %v10470
    %v10472 = vpop.f32.mrb[0].mxu0
    %v10473 = vpop.f32.mrb[0].mxu0
    %10474 = vdwg.mxu0
    %10475 = vmatprep.subr.bf16.mxu0 %v8468
    %10476 = vmatpush1.bf16.msra.mxu0 %v8467
    %10477 = vmatprep.subr.bf16.mxu0 %v8472
    %10478 = vmatpush1.bf16.msra.mxu0 %v8471
    %10479 = vmatprep.subr.bf16.mxu0 %v8476
    %10480 = vmatpush1.bf16.msra.mxu0 %v8475
    %10481 = vmatprep.subr.bf16.mxu0 %v8480
    %10482 = vmatpush1.bf16.msra.mxu0 %v8479
    %10483 = vmatprep.subr.bf16.mxu0 %v8484
    %10484 = vmatpush1.bf16.msra.mxu0 %v8483
    %10485 = vmatprep.subr.bf16.mxu0 %v8488
    %10486 = vmatpush1.bf16.msra.mxu0 %v8487
    %10487 = vmatprep.subr.bf16.mxu0 %v8492
    %10488 = vmatpush1.bf16.msra.mxu0 %v8491
    %10489 = vmatprep.subr.bf16.mxu0 %v8496
    %10490 = vmatpush1.bf16.msra.mxu0 %v8495
    %10491 = vmatprep.subr.bf16.mxu0 %v8500
    %10492 = vmatpush1.bf16.msra.mxu0 %v8499
    %10493 = vmatprep.subr.bf16.mxu0 %v8504
    %10494 = vmatpush1.bf16.msra.mxu0 %v8503
    %10495 = vmatprep.subr.bf16.mxu0 %v8508
    %10496 = vmatpush1.bf16.msra.mxu0 %v8507
    %10497 = vmatprep.subr.bf16.mxu0 %v8512
    %10498 = vmatpush1.bf16.msra.mxu0 %v8511
    %10499 = vmatprep.subr.bf16.mxu0 %v8516
    %10500 = vmatpush1.bf16.msra.mxu0 %v8515
    %10501 = vmatprep.subr.bf16.mxu0 %v8520
    %10502 = vmatpush1.bf16.msra.mxu0 %v8519
    %10503 = vmatprep.subr.bf16.mxu0 %v8524
    %10504 = vmatpush1.bf16.msra.mxu0 %v8523
    %10505 = vmatprep.subr.bf16.mxu0 %v8528
    %10506 = vmatpush1.bf16.msra.mxu0 %v8527
    %10507 = vmatprep.mubr.bf16.mxu0 %v5704
    %10508 = vmatmul.mubr.bf16.gmra.mrb[0].mxu0 %v5702
    %v10509 = vpop.f32.mrb[0].mxu0
    %v10510 = vadd.f32 %v10469, %v10509
    %v10511 = vpop.f32.mrb[0].mxu0
    %v10512 = vadd.f32 %v10471, %v10511
    %v10513 = vpop.f32.mrb[0].mxu0
    %v10514 = vpop.f32.mrb[0].mxu0
    %10515 = vdwg.mxu0
    %10516 = vmatprep.subr.bf16.mxu0 %v8532
    %10517 = vmatpush1.bf16.msra.mxu0 %v8531
    %10518 = vmatprep.subr.bf16.mxu0 %v8536
    %10519 = vmatpush1.bf16.msra.mxu0 %v8535
    %10520 = vmatprep.subr.bf16.mxu0 %v8540
    %10521 = vmatpush1.bf16.msra.mxu0 %v8539
    %10522 = vmatprep.subr.bf16.mxu0 %v8544
    %10523 = vmatpush1.bf16.msra.mxu0 %v8543
    %10524 = vmatprep.subr.bf16.mxu0 %v8548
    %10525 = vmatpush1.bf16.msra.mxu0 %v8547
    %10526 = vmatprep.subr.bf16.mxu0 %v8552
    %10527 = vmatpush1.bf16.msra.mxu0 %v8551
    %10528 = vmatprep.subr.bf16.mxu0 %v8556
    %10529 = vmatpush1.bf16.msra.mxu0 %v8555
    %10530 = vmatprep.subr.bf16.mxu0 %v8560
    %10531 = vmatpush1.bf16.msra.mxu0 %v8559
    %10532 = vmatprep.subr.bf16.mxu0 %v8564
    %10533 = vmatpush1.bf16.msra.mxu0 %v8563
    %10534 = vmatprep.subr.bf16.mxu0 %v8568
    %10535 = vmatpush1.bf16.msra.mxu0 %v8567
    %10536 = vmatprep.subr.bf16.mxu0 %v8572
    %10537 = vmatpush1.bf16.msra.mxu0 %v8571
    %10538 = vmatprep.subr.bf16.mxu0 %v8576
    %10539 = vmatpush1.bf16.msra.mxu0 %v8575
    %10540 = vmatprep.subr.bf16.mxu0 %v8580
    %10541 = vmatpush1.bf16.msra.mxu0 %v8579
    %10542 = vmatprep.subr.bf16.mxu0 %v8584
    %10543 = vmatpush1.bf16.msra.mxu0 %v8583
    %10544 = vmatprep.subr.bf16.mxu0 %v8588
    %10545 = vmatpush1.bf16.msra.mxu0 %v8587
    %10546 = vmatprep.subr.bf16.mxu0 %v8592
    %10547 = vmatpush1.bf16.msra.mxu0 %v8591
    %10548 = vmatprep.mubr.bf16.mxu0 %v5701
    %10549 = vmatmul.mubr.bf16.gmra.mrb[0].mxu0 %v5687
    %v10550 = vpop.f32.mrb[0].mxu0
    %v10551 = vadd.f32 %v10510, %v10550
    %v10552 = vpop.f32.mrb[0].mxu0
    %v10553 = vadd.f32 %v10512, %v10552
    %v10554 = vpop.f32.mrb[0].mxu0
    %v10555 = vpop.f32.mrb[0].mxu0
    %10556 = vdwg.mxu0
    %10557 = vmatprep.subr.bf16.mxu0 %v8596
    %10558 = vmatpush1.bf16.msra.mxu0 %v8595
    %10559 = vmatprep.subr.bf16.mxu0 %v8600
    %10560 = vmatpush1.bf16.msra.mxu0 %v8599
    %10561 = vmatprep.subr.bf16.mxu0 %v8604
    %10562 = vmatpush1.bf16.msra.mxu0 %v8603
    %10563 = vmatprep.subr.bf16.mxu0 %v8608
    %10564 = vmatpush1.bf16.msra.mxu0 %v8607
    %10565 = vmatprep.subr.bf16.mxu0 %v8612
    %10566 = vmatpush1.bf16.msra.mxu0 %v8611
    %10567 = vmatprep.subr.bf16.mxu0 %v8616
    %10568 = vmatpush1.bf16.msra.mxu0 %v8615
    %10569 = vmatprep.subr.bf16.mxu0 %v8620
    %10570 = vmatpush1.bf16.msra.mxu0 %v8619
    %10571 = vmatprep.subr.bf16.mxu0 %v8624
    %10572 = vmatpush1.bf16.msra.mxu0 %v8623
    %10573 = vmatprep.subr.bf16.mxu0 %v8628
    %10574 = vmatpush1.bf16.msra.mxu0 %v8627
    %10575 = vmatprep.subr.bf16.mxu0 %v8632
    %10576 = vmatpush1.bf16.msra.mxu0 %v8631
    %10577 = vmatprep.subr.bf16.mxu0 %v8636
    %10578 = vmatpush1.bf16.msra.mxu0 %v8635
    %10579 = vmatprep.subr.bf16.mxu0 %v8640
    %10580 = vmatpush1.bf16.msra.mxu0 %v8639
    %10581 = vmatprep.subr.bf16.mxu0 %v8644
    %10582 = vmatpush1.bf16.msra.mxu0 %v8643
    %10583 = vmatprep.subr.bf16.mxu0 %v8648
    %10584 = vmatpush1.bf16.msra.mxu0 %v8647
    %10585 = vmatprep.subr.bf16.mxu0 %v8652
    %10586 = vmatpush1.bf16.msra.mxu0 %v8651
    %10587 = vmatprep.subr.bf16.mxu0 %v8656
    %10588 = vmatpush1.bf16.msra.mxu0 %v8655
    %10589 = vmatprep.mubr.bf16.mxu0 %v5705
    %10590 = vmatmul.mubr.bf16.gmra.mrb[0].mxu0 %v5703
    %v10591 = vpop.f32.mrb[0].mxu0
    %v10592 = vadd.f32 %v10551, %v10591
    %v10593 = vpop.f32.mrb[0].mxu0
    %v10594 = vadd.f32 %v10553, %v10593
    %v10595 = vpop.f32.mrb[0].mxu0
    %v10596 = vpop.f32.mrb[0].mxu0
    %10597 = vdwg.mxu0
    %10598 = vmatprep.subr.bf16.mxu0 %v8660
    %10599 = vmatpush1.bf16.msra.mxu0 %v8659
    %10600 = vmatprep.subr.bf16.mxu0 %v8664
    %10601 = vmatpush1.bf16.msra.mxu0 %v8663
    %10602 = vmatprep.subr.bf16.mxu0 %v8668
    %10603 = vmatpush1.bf16.msra.mxu0 %v8667
    %10604 = vmatprep.subr.bf16.mxu0 %v8672
    %10605 = vmatpush1.bf16.msra.mxu0 %v8671
    %10606 = vmatprep.subr.bf16.mxu0 %v8676
    %10607 = vmatpush1.bf16.msra.mxu0 %v8675
    %10608 = vmatprep.subr.bf16.mxu0 %v8680
    %10609 = vmatpush1.bf16.msra.mxu0 %v8679
    %10610 = vmatprep.subr.bf16.mxu0 %v8684
    %10611 = vmatpush1.bf16.msra.mxu0 %v8683
    %10612 = vmatprep.subr.bf16.mxu0 %v8688
    %10613 = vmatpush1.bf16.msra.mxu0 %v8687
    %10614 = vmatprep.subr.bf16.mxu0 %v8692
    %10615 = vmatpush1.bf16.msra.mxu0 %v8691
    %10616 = vmatprep.subr.bf16.mxu0 %v8696
    %10617 = vmatpush1.bf16.msra.mxu0 %v8695
    %10618 = vmatprep.subr.bf16.mxu0 %v8700
    %10619 = vmatpush1.bf16.msra.mxu0 %v8699
    %10620 = vmatprep.subr.bf16.mxu0 %v8704
    %10621 = vmatpush1.bf16.msra.mxu0 %v8703
    %10622 = vmatprep.subr.bf16.mxu0 %v8708
    %10623 = vmatpush1.bf16.msra.mxu0 %v8707
    %10624 = vmatprep.subr.bf16.mxu0 %v8712
    %10625 = vmatpush1.bf16.msra.mxu0 %v8711
    %10626 = vmatprep.subr.bf16.mxu0 %v8716
    %10627 = vmatpush1.bf16.msra.mxu0 %v8715
    %10628 = vmatprep.subr.bf16.mxu0 %v8720
    %10629 = vmatpush1.bf16.msra.mxu0 %v8719
    %10630 = vmatprep.mubr.bf16.mxu0 %v5743
    %10631 = vmatmul.mubr.bf16.gmra.mrb[0].mxu0 %v5729
    %v10632 = vpop.f32.mrb[0].mxu0
    %v10633 = vadd.f32 %v10592, %v10632
    %v10634 = vpop.f32.mrb[0].mxu0
    %v10635 = vadd.f32 %v10594, %v10634
    %v10636 = vpop.f32.mrb[0].mxu0
    %v10637 = vpop.f32.mrb[0].mxu0
    %10638 = vdwg.mxu0
    %10639 = vmatprep.subr.bf16.mxu0 %v8724
    %10640 = vmatpush1.bf16.msra.mxu0 %v8723
    %10641 = vmatprep.subr.bf16.mxu0 %v8728
    %10642 = vmatpush1.bf16.msra.mxu0 %v8727
    %10643 = vmatprep.subr.bf16.mxu0 %v8732
    %10644 = vmatpush1.bf16.msra.mxu0 %v8731
    %10645 = vmatprep.subr.bf16.mxu0 %v8736
    %10646 = vmatpush1.bf16.msra.mxu0 %v8735
    %10647 = vmatprep.subr.bf16.mxu0 %v8740
    %10648 = vmatpush1.bf16.msra.mxu0 %v8739
    %10649 = vmatprep.subr.bf16.mxu0 %v8744
    %10650 = vmatpush1.bf16.msra.mxu0 %v8743
    %10651 = vmatprep.subr.bf16.mxu0 %v8748
    %10652 = vmatpush1.bf16.msra.mxu0 %v8747
    %10653 = vmatprep.subr.bf16.mxu0 %v8752
    %10654 = vmatpush1.bf16.msra.mxu0 %v8751
    %10655 = vmatprep.subr.bf16.mxu0 %v8756
    %10656 = vmatpush1.bf16.msra.mxu0 %v8755
    %10657 = vmatprep.subr.bf16.mxu0 %v8760
    %10658 = vmatpush1.bf16.msra.mxu0 %v8759
    %10659 = vmatprep.subr.bf16.mxu0 %v8764
    %10660 = vmatpush1.bf16.msra.mxu0 %v8763
    %10661 = vmatprep.subr.bf16.mxu0 %v8768
    %10662 = vmatpush1.bf16.msra.mxu0 %v8767
    %10663 = vmatprep.subr.bf16.mxu0 %v8772
    %10664 = vmatpush1.bf16.msra.mxu0 %v8771
    %10665 = vmatprep.subr.bf16.mxu0 %v8776
    %10666 = vmatpush1.bf16.msra.mxu0 %v8775
    %10667 = vmatprep.subr.bf16.mxu0 %v8780
    %10668 = vmatpush1.bf16.msra.mxu0 %v8779
    %10669 = vmatprep.subr.bf16.mxu0 %v8784
    %10670 = vmatpush1.bf16.msra.mxu0 %v8783
    %10671 = vmatprep.mubr.bf16.mxu0 %v5753
    %10672 = vmatmul.mubr.bf16.gmra.mrb[0].mxu0 %v5751
    %v10673 = vpop.f32.mrb[0].mxu0
    %v10674 = vadd.f32 %v10633, %v10673
    %v10675 = vpop.f32.mrb[0].mxu0
    %v10676 = vadd.f32 %v10635, %v10675
    %v10677 = vpop.f32.mrb[0].mxu0
    %v10678 = vpop.f32.mrb[0].mxu0
    %10679 = vdwg.mxu0
    %10680 = vmatprep.subr.bf16.mxu0 %v8788
    %10681 = vmatpush1.bf16.msra.mxu0 %v8787
    %10682 = vmatprep.subr.bf16.mxu0 %v8792
    %10683 = vmatpush1.bf16.msra.mxu0 %v8791
    %10684 = vmatprep.subr.bf16.mxu0 %v8796
    %10685 = vmatpush1.bf16.msra.mxu0 %v8795
    %10686 = vmatprep.subr.bf16.mxu0 %v8800
    %10687 = vmatpush1.bf16.msra.mxu0 %v8799
    %10688 = vmatprep.subr.bf16.mxu0 %v8804
    %10689 = vmatpush1.bf16.msra.mxu0 %v8803
    %10690 = vmatprep.subr.bf16.mxu0 %v8808
    %10691 = vmatpush1.bf16.msra.mxu0 %v8807
    %10692 = vmatprep.subr.bf16.mxu0 %v8812
    %10693 = vmatpush1.bf16.msra.mxu0 %v8811
    %10694 = vmatprep.subr.bf16.mxu0 %v8816
    %10695 = vmatpush1.bf16.msra.mxu0 %v8815
    %10696 = vmatprep.subr.bf16.mxu0 %v8820
    %10697 = vmatpush1.bf16.msra.mxu0 %v8819
    %10698 = vmatprep.subr.bf16.mxu0 %v8824
    %10699 = vmatpush1.bf16.msra.mxu0 %v8823
    %10700 = vmatprep.subr.bf16.mxu0 %v8828
    %10701 = vmatpush1.bf16.msra.mxu0 %v8827
    %10702 = vmatprep.subr.bf16.mxu0 %v8832
    %10703 = vmatpush1.bf16.msra.mxu0 %v8831
    %10704 = vmatprep.subr.bf16.mxu0 %v8836
    %10705 = vmatpush1.bf16.msra.mxu0 %v8835
    %10706 = vmatprep.subr.bf16.mxu0 %v8840
    %10707 = vmatpush1.bf16.msra.mxu0 %v8839
    %10708 = vmatprep.subr.bf16.mxu0 %v8844
    %10709 = vmatpush1.bf16.msra.mxu0 %v8843
    %10710 = vmatprep.subr.bf16.mxu0 %v8848
    %10711 = vmatpush1.bf16.msra.mxu0 %v8847
    %10712 = vmatprep.mubr.bf16.mxu0 %v5750
    %10713 = vmatmul.mubr.bf16.gmra.mrb[0].mxu0 %v5736
    %v10714 = vpop.f32.mrb[0].mxu0
    %v10715 = vadd.f32 %v10674, %v10714
    %v10716 = vpop.f32.mrb[0].mxu0
    %v10717 = vadd.f32 %v10676, %v10716
    %v10718 = vpop.f32.mrb[0].mxu0
    %v10719 = vpop.f32.mrb[0].mxu0
    %10720 = vdwg.mxu0
    %10721 = vmatprep.subr.bf16.mxu0 %v8852
    %10722 = vmatpush1.bf16.msra.mxu0 %v8851
    %10723 = vmatprep.subr.bf16.mxu0 %v8856
    %10724 = vmatpush1.bf16.msra.mxu0 %v8855
    %10725 = vmatprep.subr.bf16.mxu0 %v8860
    %10726 = vmatpush1.bf16.msra.mxu0 %v8859
    %10727 = vmatprep.subr.bf16.mxu0 %v8864
    %10728 = vmatpush1.bf16.msra.mxu0 %v8863
    %10729 = vmatprep.subr.bf16.mxu0 %v8868
    %10730 = vmatpush1.bf16.msra.mxu0 %v8867
    %10731 = vmatprep.subr.bf16.mxu0 %v8872
    %10732 = vmatpush1.bf16.msra.mxu0 %v8871
    %10733 = vmatprep.subr.bf16.mxu0 %v8876
    %10734 = vmatpush1.bf16.msra.mxu0 %v8875
    %10735 = vmatprep.subr.bf16.mxu0 %v8880
    %10736 = vmatpush1.bf16.msra.mxu0 %v8879
    %10737 = vmatprep.subr.bf16.mxu0 %v8884
    %10738 = vmatpush1.bf16.msra.mxu0 %v8883
    %10739 = vmatprep.subr.bf16.mxu0 %v8888
    %10740 = vmatpush1.bf16.msra.mxu0 %v8887
    %10741 = vmatprep.subr.bf16.mxu0 %v8892
    %10742 = vmatpush1.bf16.msra.mxu0 %v8891
    %10743 = vmatprep.subr.bf16.mxu0 %v8896
    %10744 = vmatpush1.bf16.msra.mxu0 %v8895
    %10745 = vmatprep.subr.bf16.mxu0 %v8900
    %10746 = vmatpush1.bf16.msra.mxu0 %v8899
    %10747 = vmatprep.subr.bf16.mxu0 %v8904
    %10748 = vmatpush1.bf16.msra.mxu0 %v8903
    %10749 = vmatprep.subr.bf16.mxu0 %v8908
    %10750 = vmatpush1.bf16.msra.mxu0 %v8907
    %10751 = vmatprep.subr.bf16.mxu0 %v8912
    %10752 = vmatpush1.bf16.msra.mxu0 %v8911
    %10753 = vmatprep.mubr.bf16.mxu0 %v5754
    %10754 = vmatmul.mubr.bf16.gmra.mrb[0].mxu0 %v5752
    %v10755 = vpop.f32.mrb[0].mxu0
    %v10756 = vadd.f32 %v10715, %v10755
    %v10757 = vpop.f32.mrb[0].mxu0
    %v10758 = vadd.f32 %v10717, %v10757
    %v10759 = vpop.f32.mrb[0].mxu0
    %v10760 = vpop.f32.mrb[0].mxu0
    %10761 = vdwg.mxu0
    %10762 = vmatprep.subr.bf16.mxu0 %v8916
    %10763 = vmatpush1.bf16.msra.mxu0 %v8915
    %10764 = vmatprep.subr.bf16.mxu0 %v8920
    %10765 = vmatpush1.bf16.msra.mxu0 %v8919
    %10766 = vmatprep.subr.bf16.mxu0 %v8924
    %10767 = vmatpush1.bf16.msra.mxu0 %v8923
    %10768 = vmatprep.subr.bf16.mxu0 %v8928
    %10769 = vmatpush1.bf16.msra.mxu0 %v8927
    %10770 = vmatprep.subr.bf16.mxu0 0
    %10771 = vmatpush1.bf16.msra.mxu0 0
    %10772 = vmatprep.subr.bf16.mxu0 0
    %10773 = vmatpush1.bf16.msra.mxu0 0
    %10774 = vmatprep.subr.bf16.mxu0 0
    %10775 = vmatpush1.bf16.msra.mxu0 0
    %10776 = vmatprep.subr.bf16.mxu0 0
    %10777 = vmatpush1.bf16.msra.mxu0 0
    %10778 = vmatprep.subr.bf16.mxu0 0
    %10779 = vmatpush1.bf16.msra.mxu0 0
    %10780 = vmatprep.subr.bf16.mxu0 0
    %10781 = vmatpush1.bf16.msra.mxu0 0
    %10782 = vmatprep.subr.bf16.mxu0 0
    %10783 = vmatpush1.bf16.msra.mxu0 0
    %10784 = vmatprep.subr.bf16.mxu0 0
    %10785 = vmatpush1.bf16.msra.mxu0 0
    %10786 = vmatprep.subr.bf16.mxu0 0
    %10787 = vmatpush1.bf16.msra.mxu0 0
    %10788 = vmatprep.subr.bf16.mxu0 0
    %10789 = vmatpush1.bf16.msra.mxu0 0
    %10790 = vmatprep.subr.bf16.mxu0 0
    %10791 = vmatpush1.bf16.msra.mxu0 0
    %10792 = vmatprep.subr.bf16.mxu0 0
    %10793 = vmatpush1.bf16.msra.mxu0 0
    %10794 = vmatprep.mubr.bf16.mxu0 0
    %10795 = vmatmul.mubr.bf16.gmra.mrb[0].mxu0 %v9735
    %v10796 = vpop.f32.mrb[0].mxu0
    %v10797 = vadd.f32 %v10756, %v10796
    %v10798 = vpop.f32.mrb[0].mxu0
    %v10799 = vadd.f32 %v10758, %v10798
    %v10800 = vpop.f32.mrb[0].mxu0
    %v10801 = vpop.f32.mrb[0].mxu0
    %10802 = vdwg.mxu0
    %v10803 = vmax.f32 %v10264, 0.0
    %v10804 = vmax.f32 %v10266, 0.0
    %v10805 = vmax.f32 %v10797, 0.0
    %v10806 = vmax.f32 %v10799, 0.0
    %v10807 = vpack.c.bf16 %v10803, %v10803
    %v10808 = vpack.c.bf16 %v10804, %v10804
    %v10809 = vpack.c.bf16 %v10805, %v10805
    %v10810 = vpack.c.bf16 %v10806, %v10806
    %v10811 = vld [vmem:[%s9] sm:$0xf]
    %v10812 = vld [vmem:[%s9 + $0x4] sm:$0xf]
    %v10813 = vld [vmem:[%s9 + $0x8] sm:$0xf]
    %v10814 = vld [vmem:[%s9 + $0xc] sm:$0xf]
    %v10815 = vld [vmem:[%s9 + $0x10] sm:$0xf]
    %v10816 = vld [vmem:[%s9 + $0x14] sm:$0xf]
    %v10817 = vld [vmem:[%s9 + $0x18] sm:$0xf]
    %v10818 = vld [vmem:[%s9 + $0x1c] sm:$0xf]
    %v10819 = vld [vmem:[%s9 + $0x20] sm:$0xf]
    %v10820 = vld [vmem:[%s9 + $0x24] sm:$0xf]
    %v10821 = vld [vmem:[%s9 + $0x28] sm:$0xf]
    %v10822 = vld [vmem:[%s9 + $0x2c] sm:$0xf]
    %v10823 = vld [vmem:[%s9 + $0x30] sm:$0xf]
    %v10824 = vld [vmem:[%s9 + $0x34] sm:$0xf]
    %v10825 = vld [vmem:[%s9 + $0x38] sm:$0xf]
    %v10826 = vld [vmem:[%s9 + $0x3c] sm:$0xf]
    %v10827 = vld [vmem:[%s9 + $0x40] sm:$0xf]
    %v10828 = vld [vmem:[%s9 + $0x44] sm:$0xf]
    %v10829 = vld [vmem:[%s9 + $0x48] sm:$0xf]
    %v10830 = vld [vmem:[%s9 + $0x4c] sm:$0xf]
    %v10831 = vld [vmem:[%s9 + $0x50] sm:$0xf]
    %v10832 = vld [vmem:[%s9 + $0x54] sm:$0xf]
    %v10833 = vld [vmem:[%s9 + $0x58] sm:$0xf]
    %v10834 = vld [vmem:[%s9 + $0x5c] sm:$0xf]
    %v10835 = vld [vmem:[%s9 + $0x60] sm:$0xf]
    %v10836 = vld [vmem:[%s9 + $0x64] sm:$0xf]
    %v10837 = vld [vmem:[%s9 + $0x68] sm:$0xf]
    %v10838 = vld [vmem:[%s9 + $0x6c] sm:$0xf]
    %v10839 = vld [vmem:[%s9 + $0x70] sm:$0xf]
    %v10840 = vld [vmem:[%s9 + $0x74] sm:$0xf]
    %v10841 = vld [vmem:[%s9 + $0x78] sm:$0xf]
    %v10842 = vld [vmem:[%s9 + $0x7c] sm:$0xf]
    %v10843 = vld [vmem:[%s9 + $0x80] sm:$0xf]
    %v10844 = vld [vmem:[%s9 + $0x84] sm:$0xf]
    %v10845 = vld [vmem:[%s9 + $0x88] sm:$0xf]
    %v10846 = vld [vmem:[%s9 + $0x8c] sm:$0xf]
    %v10847 = vld [vmem:[%s9 + $0x90] sm:$0xf]
    %v10848 = vld [vmem:[%s9 + $0x94] sm:$0xf]
    %v10849 = vld [vmem:[%s9 + $0x98] sm:$0xf]
    %v10850 = vld [vmem:[%s9 + $0x9c] sm:$0xf]
    %v10851 = vld [vmem:[%s9 + $0xa0] sm:$0xf]
    %v10852 = vld [vmem:[%s9 + $0xa4] sm:$0xf]
    %v10853 = vld [vmem:[%s9 + $0xa8] sm:$0xf]
    %v10854 = vld [vmem:[%s9 + $0xac] sm:$0xf]
    %v10855 = vld [vmem:[%s9 + $0xb0] sm:$0xf]
    %v10856 = vld [vmem:[%s9 + $0xb4] sm:$0xf]
    %v10857 = vld [vmem:[%s9 + $0xb8] sm:$0xf]
    %v10858 = vld [vmem:[%s9 + $0xbc] sm:$0xf]
    %v10859 = vld [vmem:[%s9 + $0xc0] sm:$0xf]
    %v10860 = vld [vmem:[%s9 + $0xc4] sm:$0xf]
    %v10861 = vld [vmem:[%s9 + $0xc8] sm:$0xf]
    %v10862 = vld [vmem:[%s9 + $0xcc] sm:$0xf]
    %v10863 = vld [vmem:[%s9 + $0xd0] sm:$0xf]
    %v10864 = vld [vmem:[%s9 + $0xd4] sm:$0xf]
    %v10865 = vld [vmem:[%s9 + $0xd8] sm:$0xf]
    %v10866 = vld [vmem:[%s9 + $0xdc] sm:$0xf]
    %v10867 = vld [vmem:[%s9 + $0xe0] sm:$0xf]
    %v10868 = vld [vmem:[%s9 + $0xe4] sm:$0xf]
    %v10869 = vld [vmem:[%s9 + $0xe8] sm:$0xf]
    %v10870 = vld [vmem:[%s9 + $0xec] sm:$0xf]
    %v10871 = vld [vmem:[%s9 + $0xf0] sm:$0xf]
    %v10872 = vld [vmem:[%s9 + $0xf4] sm:$0xf]
    %v10873 = vld [vmem:[%s9 + $0xf8] sm:$0xf]
    %v10874 = vld [vmem:[%s9 + $0xfc] sm:$0xf]
    %v10875 = vld [vmem:[%s10] sm:$0x1]
    %v10940 = vunpack.c.l.b16 %v10811
    %v10941 = vunpack.c.l.b16 %v10812
    %v10942 = vunpack.c.l.b16 %v10813
    %v10943 = vunpack.c.l.b16 %v10814
    %v10944 = vunpack.c.l.b16 %v10815
    %v10945 = vunpack.c.l.b16 %v10816
    %v10946 = vunpack.c.l.b16 %v10817
    %v10947 = vunpack.c.l.b16 %v10818
    %v10948 = vunpack.c.l.b16 %v10819
    %v10949 = vunpack.c.l.b16 %v10820
    %v10950 = vunpack.c.l.b16 %v10821
    %v10951 = vunpack.c.l.b16 %v10822
    %v10952 = vunpack.c.l.b16 %v10823
    %v10953 = vunpack.c.l.b16 %v10824
    %v10954 = vunpack.c.l.b16 %v10825
    %v10955 = vunpack.c.l.b16 %v10826
    %v10956 = vunpack.c.l.b16 %v10827
    %v10957 = vunpack.c.l.b16 %v10828
    %v10958 = vunpack.c.l.b16 %v10829
    %v10959 = vunpack.c.l.b16 %v10830
    %v10960 = vunpack.c.l.b16 %v10831
    %v10961 = vunpack.c.l.b16 %v10832
    %v10962 = vunpack.c.l.b16 %v10833
    %v10963 = vunpack.c.l.b16 %v10834
    %v10964 = vunpack.c.l.b16 %v10835
    %v10965 = vunpack.c.l.b16 %v10836
    %v10966 = vunpack.c.l.b16 %v10837
    %v10967 = vunpack.c.l.b16 %v10838
    %v10968 = vunpack.c.l.b16 %v10839
    %v10969 = vunpack.c.l.b16 %v10840
    %v10970 = vunpack.c.l.b16 %v10841
    %v10971 = vunpack.c.l.b16 %v10842
    %v10972 = vunpack.c.l.b16 %v10843
    %v10973 = vunpack.c.l.b16 %v10844
    %v10974 = vunpack.c.l.b16 %v10845
    %v10975 = vunpack.c.l.b16 %v10846
    %v10976 = vunpack.c.l.b16 %v10847
    %v10977 = vunpack.c.l.b16 %v10848
    %v10978 = vunpack.c.l.b16 %v10849
    %v10979 = vunpack.c.l.b16 %v10850
    %v10980 = vunpack.c.l.b16 %v10851
    %v10981 = vunpack.c.l.b16 %v10852
    %v10982 = vunpack.c.l.b16 %v10853
    %v10983 = vunpack.c.l.b16 %v10854
    %v10984 = vunpack.c.l.b16 %v10855
    %v10985 = vunpack.c.l.b16 %v10856
    %v10986 = vunpack.c.l.b16 %v10857
    %v10987 = vunpack.c.l.b16 %v10858
    %v10988 = vunpack.c.l.b16 %v10859
    %v10989 = vunpack.c.l.b16 %v10860
    %v10990 = vunpack.c.l.b16 %v10861
    %v10991 = vunpack.c.l.b16 %v10862
    %v10992 = vunpack.c.l.b16 %v10863
    %v10993 = vunpack.c.l.b16 %v10864
    %v10994 = vunpack.c.l.b16 %v10865
    %v10995 = vunpack.c.l.b16 %v10866
    %v10996 = vunpack.c.l.b16 %v10867
    %v10997 = vunpack.c.l.b16 %v10868
    %v10998 = vunpack.c.l.b16 %v10869
    %v10999 = vunpack.c.l.b16 %v10870
    %v11000 = vunpack.c.l.b16 %v10871
    %v11001 = vunpack.c.l.b16 %v10872
    %v11002 = vunpack.c.l.b16 %v10873
    %v11003 = vunpack.c.l.b16 %v10874
    %v11004 = vpack.c.b16 %v10941, %v10940
    %v11005 = vpack.c.b16 %v10943, %v10942
    %v11006 = vpack.c.b16 %v10945, %v10944
    %v11007 = vpack.c.b16 %v10947, %v10946
    %v11008 = vpack.c.b16 %v10949, %v10948
    %v11009 = vpack.c.b16 %v10951, %v10950
    %v11010 = vpack.c.b16 %v10953, %v10952
    %v11011 = vpack.c.b16 %v10955, %v10954
    %v11012 = vpack.c.b16 %v10957, %v10956
    %v11013 = vpack.c.b16 %v10959, %v10958
    %v11014 = vpack.c.b16 %v10961, %v10960
    %v11015 = vpack.c.b16 %v10963, %v10962
    %v11016 = vpack.c.b16 %v10965, %v10964
    %v11017 = vpack.c.b16 %v10967, %v10966
    %v11018 = vpack.c.b16 %v10969, %v10968
    %v11019 = vpack.c.b16 %v10971, %v10970
    %v11020 = vpack.c.b16 %v10973, %v10972
    %v11021 = vpack.c.b16 %v10975, %v10974
    %v11022 = vpack.c.b16 %v10977, %v10976
    %v11023 = vpack.c.b16 %v10979, %v10978
    %v11024 = vpack.c.b16 %v10981, %v10980
    %v11025 = vpack.c.b16 %v10983, %v10982
    %v11026 = vpack.c.b16 %v10985, %v10984
    %v11027 = vpack.c.b16 %v10987, %v10986
    %v11028 = vpack.c.b16 %v10989, %v10988
    %v11029 = vpack.c.b16 %v10991, %v10990
    %v11030 = vpack.c.b16 %v10993, %v10992
    %v11031 = vpack.c.b16 %v10995, %v10994
    %v11032 = vpack.c.b16 %v10997, %v10996
    %v11033 = vpack.c.b16 %v10999, %v10998
    %v11034 = vpack.c.b16 %v11001, %v11000
    %v11035 = vpack.c.b16 %v11003, %v11002
    %11068 = vmatprep.subr.bf16.mxu0 0
    %11069 = vmatpush1.bf16.msra.mxu0 %v11004
    %11070 = vmatprep.subr.bf16.mxu0 0
    %11071 = vmatpush1.bf16.msra.mxu0 %v11005
    %11072 = vmatprep.subr.bf16.mxu0 0
    %11073 = vmatpush1.bf16.msra.mxu0 %v11006
    %11074 = vmatprep.subr.bf16.mxu0 0
    %11075 = vmatpush1.bf16.msra.mxu0 %v11007
    %11076 = vmatprep.subr.bf16.mxu0 0
    %11077 = vmatpush1.bf16.msra.mxu0 %v11008
    %11078 = vmatprep.subr.bf16.mxu0 0
    %11079 = vmatpush1.bf16.msra.mxu0 %v11009
    %11080 = vmatprep.subr.bf16.mxu0 0
    %11081 = vmatpush1.bf16.msra.mxu0 %v11010
    %11082 = vmatprep.subr.bf16.mxu0 0
    %11083 = vmatpush1.bf16.msra.mxu0 %v11011
    %11084 = vmatprep.subr.bf16.mxu0 0
    %11085 = vmatpush1.bf16.msra.mxu0 %v11012
    %11086 = vmatprep.subr.bf16.mxu0 0
    %11087 = vmatpush1.bf16.msra.mxu0 %v11013
    %11088 = vmatprep.subr.bf16.mxu0 0
    %11089 = vmatpush1.bf16.msra.mxu0 %v11014
    %11090 = vmatprep.subr.bf16.mxu0 0
    %11091 = vmatpush1.bf16.msra.mxu0 %v11015
    %11092 = vmatprep.subr.bf16.mxu0 0
    %11093 = vmatpush1.bf16.msra.mxu0 %v11016
    %11094 = vmatprep.subr.bf16.mxu0 0
    %11095 = vmatpush1.bf16.msra.mxu0 %v11017
    %11096 = vmatprep.subr.bf16.mxu0 0
    %11097 = vmatpush1.bf16.msra.mxu0 %v11018
    %11098 = vmatprep.subr.bf16.mxu0 0
    %11099 = vmatpush1.bf16.msra.mxu0 %v11019
    %11100 = vmatprep.mubr.bf16.mxu0 %v10808
    %11101 = vmatmul.mubr.bf16.gmra.mrb[0].mxu0 %v10807
    %v11102 = vpop.f32.mrb[0].mxu0
    %v11103 = vadd.f32 %v10875, %v11102
    %v11104 = vpop.f32.mrb[0].mxu0
    %v11105 = vpop.f32.mrb[0].mxu0
    %v11106 = vpop.f32.mrb[0].mxu0
    %11107 = vdwg.mxu0
    %11108 = vmatprep.subr.bf16.mxu0 0
    %11109 = vmatpush1.bf16.msra.mxu0 %v11020
    %11110 = vmatprep.subr.bf16.mxu0 0
    %11111 = vmatpush1.bf16.msra.mxu0 %v11021
    %11112 = vmatprep.subr.bf16.mxu0 0
    %11113 = vmatpush1.bf16.msra.mxu0 %v11022
    %11114 = vmatprep.subr.bf16.mxu0 0
    %11115 = vmatpush1.bf16.msra.mxu0 %v11023
    %11116 = vmatprep.subr.bf16.mxu0 0
    %11117 = vmatpush1.bf16.msra.mxu0 %v11024
    %11118 = vmatprep.subr.bf16.mxu0 0
    %11119 = vmatpush1.bf16.msra.mxu0 %v11025
    %11120 = vmatprep.subr.bf16.mxu0 0
    %11121 = vmatpush1.bf16.msra.mxu0 %v11026
    %11122 = vmatprep.subr.bf16.mxu0 0
    %11123 = vmatpush1.bf16.msra.mxu0 %v11027
    %11124 = vmatprep.subr.bf16.mxu0 0
    %11125 = vmatpush1.bf16.msra.mxu0 %v11028
    %11126 = vmatprep.subr.bf16.mxu0 0
    %11127 = vmatpush1.bf16.msra.mxu0 %v11029
    %11128 = vmatprep.subr.bf16.mxu0 0
    %11129 = vmatpush1.bf16.msra.mxu0 %v11030
    %11130 = vmatprep.subr.bf16.mxu0 0
    %11131 = vmatpush1.bf16.msra.mxu0 %v11031
    %11132 = vmatprep.subr.bf16.mxu0 0
    %11133 = vmatpush1.bf16.msra.mxu0 %v11032
    %11134 = vmatprep.subr.bf16.mxu0 0
    %11135 = vmatpush1.bf16.msra.mxu0 %v11033
    %11136 = vmatprep.subr.bf16.mxu0 0
    %11137 = vmatpush1.bf16.msra.mxu0 %v11034
    %11138 = vmatprep.subr.bf16.mxu0 0
    %11139 = vmatpush1.bf16.msra.mxu0 %v11035
    %11140 = vmatprep.mubr.bf16.mxu0 %v10810
    %11141 = vmatmul.mubr.bf16.gmra.mrb[0].mxu0 %v10809
    %v11142 = vpop.f32.mrb[0].mxu0
    %v11143 = vadd.f32 %v11103, %v11142
    %v11144 = vpop.f32.mrb[0].mxu0
    %v11145 = vpop.f32.mrb[0].mxu0
    %v11146 = vpop.f32.mrb[0].mxu0
    %11147 = vdwg.mxu0
    %vm11148 = vcmask 40960
    %11149 = vst.msk [vmem:[#allocation8] sm:$0x1] %vm11148, %v11143
    %v11150 = vlaneseq
    %v11151 = vand.u32 %v11150, 127
    %v11152 = vsel %vm11148, %v11143, -inf
    %11153 = vmax.xlane.f32.xlu0 %v11152
    %v11154 = vpop.xlane.xlu0 %11153
    %vm11155 = vcmp.ge.f32.partialorder %v11143, %v11154
    %v11156 = vsel %vm11155, %v11151, 6
    %v11157 = vsel %vm11148, %v11156, 2147483647
    %v11158 = vand.u32 %v11157, 65535
    %v11159 = vshra.s32 %v11157, 16
    %v11160 = vcvt.s32.f32 %v11158
    %v11161 = vcvt.s32.f32 %v11159
    %11162 = vmin.xlane.f32.xlu0 %v11161
    %v11163 = vpop.xlane.xlu0 %11162
    %vm11164 = vcmp.eq.f32.partialorder %v11161, %v11163
    %v11165 = vsel %vm11164, %v11160, inf
    %11166 = vmin.xlane.f32.xlu0 %v11165
    %v11167 = vpop.xlane.xlu0 %11166
    %v11168 = vcvt.f32.s32 %v11167
    %v11169 = vcvt.f32.s32 %v11163
    %v11170 = vshll.u32 %v11169, 16
    %v11171 = vadd.s32 %v11170, %v11168
    %vm11172 = vcmask 0
    %11173 = vst.msk [vmem:[#allocation10] sm:$0x1] %vm11172, %v11171
    // Predicated region
    $region46: #{agent_forward_greedy.1} parent=1 // pred_check
      _
    $region47: #{agent_forward_greedy.1} parent=1 // pred_check_branch
      %11175 = sbr.rel (0) target = $region49
    $region48: #{agent_forward_greedy.1} parent=1 // pred_region
      %s11177 = ssub.s32 16, 16
      %11178 = vsyncadd [#allocation9], %s11177
      %s11180 = sshll.u32 [#allocation8], 4
      %s11181 = int_to_ptr.vmem [resolvable:$true] %s11180
      %11183 = dma.vmem_to_hbm [thread:$0]  %s11181, 16, %s11, [#allocation9]
    $region49: #{agent_forward_greedy.1} parent=1 // pred_fallthru
      _
    // Predicated region
    $region50: #{agent_forward_greedy.1} parent=1 // pred_check
      _
    $region51: #{agent_forward_greedy.1} parent=1 // pred_check_branch
      %11185 = sbr.rel (0) target = $region53
    $region52: #{agent_forward_greedy.1} parent=1 // pred_region
      %s11187 = ssub.s32 16, 16
      %11188 = vsyncadd [#allocation11], %s11187
      %s11190 = sshll.u32 [#allocation10], 4
      %s11191 = int_to_ptr.vmem [resolvable:$true] %s11190
      %11193 = dma.vmem_to_hbm [thread:$0]  %s11191, 16, %s12, [#allocation11]
    $region53: #{agent_forward_greedy.1} parent=1 // pred_fallthru
      _
    // Predicated region
    $region54: #{agent_forward_greedy.1} parent=1 // pred_check
      _
    $region55: #{agent_forward_greedy.1} parent=1 // pred_check_branch
      %11195 = sbr.rel (0) target = $region57
    $region56: #{agent_forward_greedy.1} parent=1 // pred_region
      %11196 = dma.done [#allocation9], 16
    $region57: #{agent_forward_greedy.1} parent=1 // pred_fallthru
      _
    // Predicated region
    $region58: #{agent_forward_greedy.1} parent=1 // pred_check
      _
    $region59: #{agent_forward_greedy.1} parent=1 // pred_check_branch
      %11198 = sbr.rel (0) target = $region61
    $region60: #{agent_forward_greedy.1} parent=1 // pred_region
      %11199 = dma.done [#allocation11], 16
    $region61: #{agent_forward_greedy.1} parent=1 // pred_fallthru
      _
    %11200 = vsyncpa [#allocation9], 1
    %11201 = vsyncpa [#allocation11], 1

</llo_original>
